<compile_context>
chip_gen: v7x
topology: tpu7x:2x2x1
jax: 0.10.0
libtpu: 0.0.40
codegen_flags: <defaults>
</compile_context>

<pallas_src>
import functools

import jax
import jax.numpy as jnp
from jax import lax
from jax.experimental import pallas as pl
from jax.experimental.pallas import tpu as pltpu


def _round_up(n, m):
    return ((n + m - 1) // m) * m


# ----------------------------- Pallas kernel ------------------------------ #

def bilstm_kernel(x_ref, sl_ref,
                  wx_ref, b_ref,
                  whf_ref, whb_ref,
                  wof_ref, wob_ref, bo_ref,
                  out_ref,
                  gx_scr, outf_scr, outb_scr):
    TB, G2 = gx_scr.shape          # TB = T * Bp,  G2 = 8 * Hp (fwd | bwd gates)
    Bp, Hp = sl_ref.shape
    G = G2 // 2                    # 4 * Hp
    T = TB // Bp

    # ---- Hoisted, fused input projection: one big MXU matmul for both dirs --
    x = x_ref[...]                                               # [T*Bp, Hp] bf16
    gx_scr[...] = (jnp.dot(x, wx_ref[...], preferred_element_type=jnp.float32)
                   + b_ref[...]).astype(jnp.bfloat16)            # [T*Bp, 8Hp] bf16

    num_valid = sl_ref[...]                                      # [Bp, Hp] int32

    def cell(gates, c_prev):
        # Each gate occupies whole 128-lane blocks -> slices are lane-aligned.
        i_g = jax.nn.sigmoid(gates[:, 0 * Hp:1 * Hp])
        f_g = jax.nn.sigmoid(gates[:, 1 * Hp:2 * Hp])
        g_g = jnp.tanh(gates[:, 2 * Hp:3 * Hp])
        o_g = jax.nn.sigmoid(gates[:, 3 * Hp:4 * Hp])
        c_new = f_g * c_prev + i_g * g_g
        h_new = o_g * jnp.tanh(c_new)
        return h_new, c_new

    def step(i, carry):
        hf, cf, hb, cb = carry                  # vreg-resident f32 [Bp, Hp] states
        tb = T - 1 - i
        rf = i * Bp                             # row offsets into time-major scratch
        rb = tb * Bp
        if not isinstance(i, int):              # rolled path: alignment hint for pl.ds
            rf = pl.multiple_of(rf, Bp)
            rb = pl.multiple_of(rb, Bp)

        # Interleaved fwd / bwd recurrences: two independent dependency chains.
        gf = gx_scr[pl.ds(rf, Bp), 0:G].astype(jnp.float32) + jnp.dot(
            hf.astype(jnp.bfloat16), whf_ref[...],
            preferred_element_type=jnp.float32)
        gb = gx_scr[pl.ds(rb, Bp), G:2 * G].astype(jnp.float32) + jnp.dot(
            hb.astype(jnp.bfloat16), whb_ref[...],
            preferred_element_type=jnp.float32)

        hf_new, cf_new = cell(gf, cf)
        hb_new, cb_new = cell(gb, cb)

        # Backward direction: hold state at zero until the last valid token
        # (packed-sequence start); forward needs no masking (see file header).
        valid_b = tb < num_valid
        hb_new = jnp.where(valid_b, hb_new, 0.0)
        cb_new = jnp.where(valid_b, cb_new, 0.0)

        outf_scr[pl.ds(rf, Bp), :] = hf_new.astype(jnp.bfloat16)
        outb_scr[pl.ds(rb, Bp), :] = hb_new.astype(jnp.bfloat16)
        return hf_new, cf_new, hb_new, cb_new

    zero = jnp.zeros((Bp, Hp), jnp.float32)
    carry = (zero, zero, zero, zero)
    if T <= 16:
        # Fully unrolled at trace time: static slice offsets, full scheduler
        # visibility, h/c live entirely in vector registers.
        for i in range(T):
            carry = step(i, carry)
    else:
        # Partial unroll keeps the two direction chains visible to the scheduler
        # without blowing vreg pressure.
        carry = lax.fori_loop(0, T, step, carry, unroll=2)

    # ---- Output projection: big lane-dense matmuls (Op is a multiple of 128) --
    out_ref[...] = (jnp.dot(outf_scr[...], wof_ref[...],
                            preferred_element_type=jnp.float32)
                    + jnp.dot(outb_scr[...], wob_ref[...],
                              preferred_element_type=jnp.float32)
                    + bo_ref[...])


# ------------------------------ JAX wrapper -------------------------------- #

@functools.partial(jax.jit, static_argnames=("output_size",))
def bilstm_forward(x_idx, seq_lens, params, *, output_size):
    """x_idx: [B, T] int32 token ids; seq_lens: [B] int32. Returns [B, T, O] f32."""
    emb = params["embedding"]                                  # [V, H]
    B, T = x_idx.shape
    H = emb.shape[1]
    O = output_size
    Hp = _round_up(H, 128)      # lane-aligned hidden / gate blocks
    Op = _round_up(O, 128)      # lane-dense output stores
    Bp = _round_up(B, 8)        # sublane-aligned batch slabs

    # Embedding lookup (XLA gather glue) -> time-major, zero-padded, bf16.
    x_emb = jnp.take(emb, x_idx, axis=0)                       # [B, T, H]
    x_tm = jnp.transpose(x_emb, (1, 0, 2))                     # [T, B, H]
    x_tm = jnp.pad(x_tm, ((0, 0), (0, Bp - B), (0, Hp - H)))
    x2d = x_tm.reshape(T * Bp, Hp).astype(jnp.bfloat16)        # [T*Bp, Hp]

    sl = jnp.pad(seq_lens.astype(jnp.int32), (0, Bp - B))      # pad rows -> len 0
    sl = jnp.broadcast_to(sl[:, None], (Bp, Hp))               # [Bp, Hp] int32

    def pad_gate_w(w):   # [H, 4H] (gate order i|f|g|o) -> [Hp, 4Hp]; gate g at cols [g*Hp, g*Hp+H)
        w4 = w.reshape(H, 4, H)
        wp = jnp.zeros((Hp, 4, Hp), jnp.float32).at[:H, :, :H].set(w4)
        return wp.reshape(Hp, 4 * Hp)

    def pad_gate_b(b):   # [1, 4H] -> [1, 4Hp] (kept f32; folded into the hoisted matmul)
        b4 = b.reshape(1, 4, H)
        bp = jnp.zeros((1, 4, Hp), jnp.float32).at[:, :, :H].set(b4)
        return bp.reshape(1, 4 * Hp)

    # Fused input-projection weight/bias: [Hp, 8Hp] = [fwd gates | bwd gates].
    wx = jnp.concatenate([pad_gate_w(params["wx_f"]),
                          pad_gate_w(params["wx_b"])], axis=1).astype(jnp.bfloat16)
    b_in = jnp.concatenate([pad_gate_b(params["b_f"]),
                            pad_gate_b(params["b_b"])], axis=1)          # [1, 8Hp] f32
    whf = pad_gate_w(params["wh_f"]).astype(jnp.bfloat16)                # [Hp, 4Hp]
    whb = pad_gate_w(params["wh_b"]).astype(jnp.bfloat16)

    w_out, b_out = params["w_out"], params["b_out"]            # [2H, O], [1, O]
    wof = jnp.zeros((Hp, Op), jnp.float32).at[:H, :O].set(w_out[:H]).astype(jnp.bfloat16)
    wob = jnp.zeros((Hp, Op), jnp.float32).at[:H, :O].set(w_out[H:]).astype(jnp.bfloat16)
    bo = jnp.zeros((1, Op), jnp.float32).at[:, :O].set(b_out)

    # Exact VMEM footprint (no grid -> no double buffering) + headroom,
    # capped generation-aware (v5e/v6e: 128 MiB phys, v7x: 64 MiB).
    vmem_bytes = (
        T * Bp * Hp * 2 + Bp * Hp * 4                          # x2d (bf16), seq_len
        + Hp * 8 * Hp * 2 + 8 * Hp * 4                         # fused wx (bf16), bias
        + 2 * Hp * 4 * Hp * 2                                  # whf, whb (bf16)
        + 2 * Hp * Op * 2 + Op * 4                             # output weights, bias
        + T * Bp * Op * 4                                      # output (f32)
        + T * Bp * 8 * Hp * 2                                  # gate scratch (bf16)
        + 2 * T * Bp * Hp * 2                                  # hidden-output scratch (bf16)
    )
    try:
        vmem_cap = int(pltpu.get_tpu_info().vmem_capacity_bytes)
    except Exception:
        vmem_cap = 64 << 20
    vmem_limit = int(min(max(vmem_bytes + (4 << 20), 32 << 20),
                         vmem_cap - (12 << 20)))

    vmem = pl.BlockSpec(memory_space=pltpu.MemorySpace.VMEM)
    out2d = pl.pallas_call(
        bilstm_kernel,
        out_shape=jax.ShapeDtypeStruct((T * Bp, Op), jnp.float32),
        in_specs=[vmem] * 9,
        out_specs=vmem,
        scratch_shapes=[
            pltpu.VMEM((T * Bp, 8 * Hp), jnp.bfloat16),   # hoisted x@Wx + b (fwd | bwd)
            pltpu.VMEM((T * Bp, Hp), jnp.bfloat16),       # per-step hidden outputs, fwd
            pltpu.VMEM((T * Bp, Hp), jnp.bfloat16),       # per-step hidden outputs, bwd
        ],
        compiler_params=pltpu.CompilerParams(vmem_limit_bytes=vmem_limit),
    )(x2d, sl, wx, b_in, whf, whb, wof, wob, bo)

    out_tm = out2d.reshape(T, Bp, Op)[:, :B, :O]               # [T, B, O]
    logits = jnp.transpose(out_tm, (1, 0, 2))                  # [B, T, O] (batch_first)

    # pad_packed_sequence zeros padded LSTM outputs, then the Linear adds its
    # bias, so padded positions of the final result equal b_out.
    valid = (jnp.arange(T, dtype=jnp.int32)[None, :] < seq_lens[:, None])[:, :, None]
    return jnp.where(valid, logits, b_out[0][None, None, :])


# --------------------------- pure-JAX reference ---------------------------- #

def bilstm_reference(x_idx, seq_lens, params, output_size):
    """f32 reference of the same forward pass (correctness check)."""
    x = jnp.take(params["embedding"], x_idx, axis=0)           # [B, T, H]
    B, T, H = x.shape

    def cell(x_t, h, c, wx, wh, b):
        g = x_t @ wx + h @ wh + b[0]
        i = jax.nn.sigmoid(g[:, 0:H]);      f = jax.nn.sigmoid(g[:, H:2 * H])
        gg = jnp.tanh(g[:, 2 * H:3 * H]);   o = jax.nn.sigmoid(g[:, 3 * H:4 * H])
        c = f * c + i * gg
        return o * jnp.tanh(c), c

    hf = cf = jnp.zeros((B, H), jnp.float32)
    outs_f = []
    for t in range(T):
        hf, cf = cell(x[:, t], hf, cf, params["wx_f"], params["wh_f"], params["b_f"])
        outs_f.append(hf)

    hb = cb = jnp.zeros((B, H), jnp.float32)
    outs_b = [None] * T
    for t in range(T - 1, -1, -1):
        hb_n, cb_n = cell(x[:, t], hb, cb, params["wx_b"], params["wh_b"], params["b_b"])
        m = (t < seq_lens)[:, None]
        hb = jnp.where(m, hb_n, 0.0)
        cb = jnp.where(m, cb_n, 0.0)
        outs_b[t] = hb

    h_cat = jnp.concatenate([jnp.stack(outs_f, 1), jnp.stack(outs_b, 1)], axis=-1)
    out = h_cat @ params["w_out"] + params["b_out"][0]
    valid = (jnp.arange(T)[None, :] < seq_lens[:, None])[:, :, None]
    return jnp.where(valid, out, params["b_out"][0][None, None, :])


# ------------------------- deterministic parameters ------------------------ #

def init_params(key, vocab_size, hidden_size, output_size):
    ks = jax.random.split(key, 10)
    H, O = hidden_size, output_size
    scale = 1.0 / jnp.sqrt(jnp.float32(H))

    def u(k, shape):
        return jax.random.uniform(k, shape, jnp.float32, -scale, scale)

    return {
        # frozen embedding table (stands in for the word2vec matrix)
        "embedding": jax.random.normal(ks[0], (vocab_size, H), jnp.float32),
        # forward-direction LSTM:  x @ wx + h @ wh + b,  gate order i|f|g|o
        "wx_f": u(ks[1], (H, 4 * H)),
        "wh_f": u(ks[2], (H, 4 * H)),
        "b_f":  u(ks[3], (1, 4 * H)),   # = b_ih + b_hh combined
        # backward-direction LSTM
        "wx_b": u(ks[4], (H, 4 * H)),
        "wh_b": u(ks[5], (H, 4 * H)),
        "b_b":  u(ks[6], (1, 4 * H)),
        # output Linear(2H -> O)
        "w_out": u(ks[7], (2 * H, O)),
        "b_out": u(ks[8], (1, O)),
    }


# ---------------------------------- main ----------------------------------- #

if __name__ == "__main__":
    B, T = 2, 8            # batch, max sequence length
    V, H, O = 16, 32, 8    # vocab (input_size), hidden_size, output_size

    key = jax.random.PRNGKey(0)
    k_par, k_tok = jax.random.split(key)

    params = init_params(k_par, V, H, O)
    x_idx = jax.random.randint(k_tok, (B, T), 0, V, dtype=jnp.int32)
    seq_lens = jnp.array([T, 5], dtype=jnp.int32)   # descending, as pack_padded expects

    out = bilstm_forward(x_idx, seq_lens, params, output_size=O)
    jax.block_until_ready(out)

    assert out.shape == (B, T, O), out.shape
    assert out.dtype == jnp.float32

    ref = bilstm_reference(x_idx, seq_lens, params, O)
    max_err = float(jnp.max(jnp.abs(out - ref)))
    assert jnp.allclose(out, ref, atol=5e-2, rtol=5e-2), max_err

    print("KERNEL_OK")
</pallas_src>

<mosaic_0001>
module attributes {stable_mosaic.version = 11 : i64} {
  func.func @bilstm_kernel(%arg0: memref<64x128xbf16, #tpu.memory_space<vmem>>, %arg1: memref<8x128xi32, #tpu.memory_space<vmem>>, %arg2: memref<128x1024xbf16, #tpu.memory_space<vmem>>, %arg3: memref<1x1024xf32, #tpu.memory_space<vmem>>, %arg4: memref<128x512xbf16, #tpu.memory_space<vmem>>, %arg5: memref<128x512xbf16, #tpu.memory_space<vmem>>, %arg6: memref<128x128xbf16, #tpu.memory_space<vmem>>, %arg7: memref<128x128xbf16, #tpu.memory_space<vmem>>, %arg8: memref<1x128xf32, #tpu.memory_space<vmem>>, %arg9: memref<64x128xf32, #tpu.memory_space<vmem>>, %arg10: memref<64x1024xbf16, #tpu.memory_space<vmem>>, %arg11: memref<64x128xbf16, #tpu.memory_space<vmem>>, %arg12: memref<64x128xbf16, #tpu.memory_space<vmem>>) attributes {dimension_semantics = [], scalar_prefetch = 0 : i64, scratch_operands = 3 : i64, tpu.core_type = #tpu.core_type<tc>} {
    %c0 = arith.constant 0 : index
    %c0_0 = arith.constant 0 : index
    %0 = vector.load %arg0[%c0, %c0_0] : memref<64x128xbf16, #tpu.memory_space<vmem>>, vector<64x128xbf16>
    %c0_1 = arith.constant 0 : index
    %c0_2 = arith.constant 0 : index
    %1 = vector.load %arg2[%c0_1, %c0_2] : memref<128x1024xbf16, #tpu.memory_space<vmem>>, vector<128x1024xbf16>
    %cst = arith.constant dense<0.000000e+00> : vector<64x1024xf32>
    %2 = tpu.matmul %0, %1, %cst {dimension_numbers = #tpu.dot_dimension_numbers<[1], [0], [0], [1], [0, 0, 1, 1], [], []>} : vector<64x128xbf16>, vector<128x1024xbf16>, vector<64x1024xf32> -> vector<64x1024xf32>
    %c0_3 = arith.constant 0 : index
    %c0_4 = arith.constant 0 : index
    %3 = vector.load %arg3[%c0_3, %c0_4] : memref<1x1024xf32, #tpu.memory_space<vmem>>, vector<1x1024xf32>
    %4 = vector.broadcast %3 : vector<1x1024xf32> to vector<64x1024xf32>
    %5 = arith.addf %2, %4 : vector<64x1024xf32>
    %6 = arith.truncf %5 : vector<64x1024xf32> to vector<64x1024xbf16>
    %c0_5 = arith.constant 0 : index
    %c0_6 = arith.constant 0 : index
    %7 = vector.load %arg10[%c0_5, %c0_6] : memref<64x1024xbf16, #tpu.memory_space<vmem>>, vector<64x1024xbf16>
    tpu.vector_store %arg10[%c0_5, %c0_6], %6 {strides = array<i32>} : memref<64x1024xbf16, #tpu.memory_space<vmem>>, vector<64x1024xbf16>,
    %c0_7 = arith.constant 0 : index
    %c0_8 = arith.constant 0 : index
    %8 = vector.load %arg1[%c0_7, %c0_8] : memref<8x128xi32, #tpu.memory_space<vmem>>, vector<8x128xi32>
    %cst_9 = arith.constant 0.000000e+00 : f32
    %9 = vector.broadcast %cst_9 : f32 to vector<8x128xf32>
    %c0_10 = arith.constant 0 : index
    %c0_11 = arith.constant 0 : index
    %10 = vector.load %arg10[%c0_10, %c0_11] : memref<64x1024xbf16, #tpu.memory_space<vmem>>, vector<8x512xbf16>
    %11 = arith.extf %10 : vector<8x512xbf16> to vector<8x512xf32>
    %12 = arith.truncf %9 : vector<8x128xf32> to vector<8x128xbf16>
    %c0_12 = arith.constant 0 : index
    %c0_13 = arith.constant 0 : index
    %13 = vector.load %arg4[%c0_12, %c0_13] : memref<128x512xbf16, #tpu.memory_space<vmem>>, vector<128x512xbf16>
    %cst_14 = arith.constant dense<0.000000e+00> : vector<8x512xf32>
    %14 = tpu.matmul %12, %13, %cst_14 {dimension_numbers = #tpu.dot_dimension_numbers<[1], [0], [0], [1], [0, 0, 1, 1], [], []>} : vector<8x128xbf16>, vector<128x512xbf16>, vector<8x512xf32> -> vector<8x512xf32>
    %15 = arith.addf %11, %14 : vector<8x512xf32>
    %c56 = arith.constant 56 : index
    %c512 = arith.constant 512 : index
    %16 = vector.load %arg10[%c56, %c512] : memref<64x1024xbf16, #tpu.memory_space<vmem>>, vector<8x512xbf16>
    %17 = arith.extf %16 : vector<8x512xbf16> to vector<8x512xf32>
    %18 = arith.truncf %9 : vector<8x128xf32> to vector<8x128xbf16>
    %c0_15 = arith.constant 0 : index
    %c0_16 = arith.constant 0 : index
    %19 = vector.load %arg5[%c0_15, %c0_16] : memref<128x512xbf16, #tpu.memory_space<vmem>>, vector<128x512xbf16>
    %cst_17 = arith.constant dense<0.000000e+00> : vector<8x512xf32>
    %20 = tpu.matmul %18, %19, %cst_17 {dimension_numbers = #tpu.dot_dimension_numbers<[1], [0], [0], [1], [0, 0, 1, 1], [], []>} : vector<8x128xbf16>, vector<128x512xbf16>, vector<8x512xf32> -> vector<8x512xf32>
    %21 = arith.addf %17, %20 : vector<8x512xf32>
    %22 = vector.extract_strided_slice %15 {offsets = [0, 0], sizes = [8, 128], strides = [1, 1]} : vector<8x512xf32> to vector<8x128xf32>
    %23 = arith.negf %22 : vector<8x128xf32>
    %24 = math.exp %23 : vector<8x128xf32>
    %cst_18 = arith.constant 1.000000e+00 : f32
    %25 = vector.broadcast %cst_18 : f32 to vector<8x128xf32>
    %26 = arith.addf %25, %24 : vector<8x128xf32>
    %27 = arith.divf %25, %26 : vector<8x128xf32>
    %28 = vector.extract_strided_slice %15 {offsets = [0, 128], sizes = [8, 128], strides = [1, 1]} : vector<8x512xf32> to vector<8x128xf32>
    %29 = arith.negf %28 : vector<8x128xf32>
    %30 = math.exp %29 : vector<8x128xf32>
    %cst_19 = arith.constant 1.000000e+00 : f32
    %31 = vector.broadcast %cst_19 : f32 to vector<8x128xf32>
    %32 = arith.addf %31, %30 : vector<8x128xf32>
    %33 = arith.divf %31, %32 : vector<8x128xf32>
    %34 = vector.extract_strided_slice %15 {offsets = [0, 256], sizes = [8, 128], strides = [1, 1]} : vector<8x512xf32> to vector<8x128xf32>
    %35 = math.tanh %34 : vector<8x128xf32>
    %36 = vector.extract_strided_slice %15 {offsets = [0, 384], sizes = [8, 128], strides = [1, 1]} : vector<8x512xf32> to vector<8x128xf32>
    %37 = arith.negf %36 : vector<8x128xf32>
    %38 = math.exp %37 : vector<8x128xf32>
    %cst_20 = arith.constant 1.000000e+00 : f32
    %39 = vector.broadcast %cst_20 : f32 to vector<8x128xf32>
    %40 = arith.addf %39, %38 : vector<8x128xf32>
    %41 = arith.divf %39, %40 : vector<8x128xf32>
    %42 = arith.mulf %33, %9 : vector<8x128xf32>
    %43 = arith.mulf %27, %35 : vector<8x128xf32>
    %44 = arith.addf %42, %43 : vector<8x128xf32>
    %45 = math.tanh %44 : vector<8x128xf32>
    %46 = arith.mulf %41, %45 : vector<8x128xf32>
    %47 = vector.extract_strided_slice %21 {offsets = [0, 0], sizes = [8, 128], strides = [1, 1]} : vector<8x512xf32> to vector<8x128xf32>
    %48 = arith.negf %47 : vector<8x128xf32>
    %49 = math.exp %48 : vector<8x128xf32>
    %cst_21 = arith.constant 1.000000e+00 : f32
    %50 = vector.broadcast %cst_21 : f32 to vector<8x128xf32>
    %51 = arith.addf %50, %49 : vector<8x128xf32>
    %52 = arith.divf %50, %51 : vector<8x128xf32>
    %53 = vector.extract_strided_slice %21 {offsets = [0, 128], sizes = [8, 128], strides = [1, 1]} : vector<8x512xf32> to vector<8x128xf32>
    %54 = arith.negf %53 : vector<8x128xf32>
    %55 = math.exp %54 : vector<8x128xf32>
    %cst_22 = arith.constant 1.000000e+00 : f32
    %56 = vector.broadcast %cst_22 : f32 to vector<8x128xf32>
    %57 = arith.addf %56, %55 : vector<8x128xf32>
    %58 = arith.divf %56, %57 : vector<8x128xf32>
    %59 = vector.extract_strided_slice %21 {offsets = [0, 256], sizes = [8, 128], strides = [1, 1]} : vector<8x512xf32> to vector<8x128xf32>
    %60 = math.tanh %59 : vector<8x128xf32>
    %61 = vector.extract_strided_slice %21 {offsets = [0, 384], sizes = [8, 128], strides = [1, 1]} : vector<8x512xf32> to vector<8x128xf32>
    %62 = arith.negf %61 : vector<8x128xf32>
    %63 = math.exp %62 : vector<8x128xf32>
    %cst_23 = arith.constant 1.000000e+00 : f32
    %64 = vector.broadcast %cst_23 : f32 to vector<8x128xf32>
    %65 = arith.addf %64, %63 : vector<8x128xf32>
    %66 = arith.divf %64, %65 : vector<8x128xf32>
    %67 = arith.mulf %58, %9 : vector<8x128xf32>
    %68 = arith.mulf %52, %60 : vector<8x128xf32>
    %69 = arith.addf %67, %68 : vector<8x128xf32>
    %70 = math.tanh %69 : vector<8x128xf32>
    %71 = arith.mulf %66, %70 : vector<8x128xf32>
    %c7_i32 = arith.constant 7 : i32
    %72 = vector.broadcast %c7_i32 : i32 to vector<8x128xi32>
    %73 = arith.cmpi sgt, %8, %72 : vector<8x128xi32>
    %cst_24 = arith.constant 0.000000e+00 : f32
    %74 = vector.broadcast %cst_24 : f32 to vector<8x128xf32>
    %75 = arith.select %73, %71, %74 : vector<8x128xi1>, vector<8x128xf32>
    %cst_25 = arith.constant 0.000000e+00 : f32
    %76 = vector.broadcast %cst_25 : f32 to vector<8x128xf32>
    %77 = arith.select %73, %69, %76 : vector<8x128xi1>, vector<8x128xf32>
    %78 = arith.truncf %46 : vector<8x128xf32> to vector<8x128xbf16>
    %c0_26 = arith.constant 0 : index
    %c0_27 = arith.constant 0 : index
    %79 = vector.load %arg11[%c0_26, %c0_27] : memref<64x128xbf16, #tpu.memory_space<vmem>>, vector<8x128xbf16>
    tpu.vector_store %arg11[%c0_26, %c0_27], %78 {strides = array<i32>} : memref<64x128xbf16, #tpu.memory_space<vmem>>, vector<8x128xbf16>,
    %80 = arith.truncf %75 : vector<8x128xf32> to vector<8x128xbf16>
    %c56_28 = arith.constant 56 : index
    %c0_29 = arith.constant 0 : index
    %81 = vector.load %arg12[%c56_28, %c0_29] : memref<64x128xbf16, #tpu.memory_space<vmem>>, vector<8x128xbf16>
    tpu.vector_store %arg12[%c56_28, %c0_29], %80 {strides = array<i32>} : memref<64x128xbf16, #tpu.memory_space<vmem>>, vector<8x128xbf16>,
    %c8 = arith.constant 8 : index
    %c0_30 = arith.constant 0 : index
    %82 = vector.load %arg10[%c8, %c0_30] : memref<64x1024xbf16, #tpu.memory_space<vmem>>, vector<8x512xbf16>
    %83 = arith.extf %82 : vector<8x512xbf16> to vector<8x512xf32>
    %84 = arith.truncf %46 : vector<8x128xf32> to vector<8x128xbf16>
    %c0_31 = arith.constant 0 : index
    %c0_32 = arith.constant 0 : index
    %85 = vector.load %arg4[%c0_31, %c0_32] : memref<128x512xbf16, #tpu.memory_space<vmem>>, vector<128x512xbf16>
    %cst_33 = arith.constant dense<0.000000e+00> : vector<8x512xf32>
    %86 = tpu.matmul %84, %85, %cst_33 {dimension_numbers = #tpu.dot_dimension_numbers<[1], [0], [0], [1], [0, 0, 1, 1], [], []>} : vector<8x128xbf16>, vector<128x512xbf16>, vector<8x512xf32> -> vector<8x512xf32>
    %87 = arith.addf %83, %86 : vector<8x512xf32>
    %c48 = arith.constant 48 : index
    %c512_34 = arith.constant 512 : index
    %88 = vector.load %arg10[%c48, %c512_34] : memref<64x1024xbf16, #tpu.memory_space<vmem>>, vector<8x512xbf16>
    %89 = arith.extf %88 : vector<8x512xbf16> to vector<8x512xf32>
    %90 = arith.truncf %75 : vector<8x128xf32> to vector<8x128xbf16>
    %c0_35 = arith.constant 0 : index
    %c0_36 = arith.constant 0 : index
    %91 = vector.load %arg5[%c0_35, %c0_36] : memref<128x512xbf16, #tpu.memory_space<vmem>>, vector<128x512xbf16>
    %cst_37 = arith.constant dense<0.000000e+00> : vector<8x512xf32>
    %92 = tpu.matmul %90, %91, %cst_37 {dimension_numbers = #tpu.dot_dimension_numbers<[1], [0], [0], [1], [0, 0, 1, 1], [], []>} : vector<8x128xbf16>, vector<128x512xbf16>, vector<8x512xf32> -> vector<8x512xf32>
    %93 = arith.addf %89, %92 : vector<8x512xf32>
    %94 = vector.extract_strided_slice %87 {offsets = [0, 0], sizes = [8, 128], strides = [1, 1]} : vector<8x512xf32> to vector<8x128xf32>
    %95 = arith.negf %94 : vector<8x128xf32>
    %96 = math.exp %95 : vector<8x128xf32>
    %cst_38 = arith.constant 1.000000e+00 : f32
    %97 = vector.broadcast %cst_38 : f32 to vector<8x128xf32>
    %98 = arith.addf %97, %96 : vector<8x128xf32>
    %99 = arith.divf %97, %98 : vector<8x128xf32>
    %100 = vector.extract_strided_slice %87 {offsets = [0, 128], sizes = [8, 128], strides = [1, 1]} : vector<8x512xf32> to vector<8x128xf32>
    %101 = arith.negf %100 : vector<8x128xf32>
    %102 = math.exp %101 : vector<8x128xf32>
    %cst_39 = arith.constant 1.000000e+00 : f32
    %103 = vector.broadcast %cst_39 : f32 to vector<8x128xf32>
    %104 = arith.addf %103, %102 : vector<8x128xf32>
    %105 = arith.divf %103, %104 : vector<8x128xf32>
    %106 = vector.extract_strided_slice %87 {offsets = [0, 256], sizes = [8, 128], strides = [1, 1]} : vector<8x512xf32> to vector<8x128xf32>
    %107 = math.tanh %106 : vector<8x128xf32>
    %108 = vector.extract_strided_slice %87 {offsets = [0, 384], sizes = [8, 128], strides = [1, 1]} : vector<8x512xf32> to vector<8x128xf32>
    %109 = arith.negf %108 : vector<8x128xf32>
    %110 = math.exp %109 : vector<8x128xf32>
    %cst_40 = arith.constant 1.000000e+00 : f32
    %111 = vector.broadcast %cst_40 : f32 to vector<8x128xf32>
    %112 = arith.addf %111, %110 : vector<8x128xf32>
    %113 = arith.divf %111, %112 : vector<8x128xf32>
    %114 = arith.mulf %105, %44 : vector<8x128xf32>
    %115 = arith.mulf %99, %107 : vector<8x128xf32>
    %116 = arith.addf %114, %115 : vector<8x128xf32>
    %117 = math.tanh %116 : vector<8x128xf32>
    %118 = arith.mulf %113, %117 : vector<8x128xf32>
    %119 = vector.extract_strided_slice %93 {offsets = [0, 0], sizes = [8, 128], strides = [1, 1]} : vector<8x512xf32> to vector<8x128xf32>
    %120 = arith.negf %119 : vector<8x128xf32>
    %121 = math.exp %120 : vector<8x128xf32>
    %cst_41 = arith.constant 1.000000e+00 : f32
    %122 = vector.broadcast %cst_41 : f32 to vector<8x128xf32>
    %123 = arith.addf %122, %121 : vector<8x128xf32>
    %124 = arith.divf %122, %123 : vector<8x128xf32>
    %125 = vector.extract_strided_slice %93 {offsets = [0, 128], sizes = [8, 128], strides = [1, 1]} : vector<8x512xf32> to vector<8x128xf32>
    %126 = arith.negf %125 : vector<8x128xf32>
    %127 = math.exp %126 : vector<8x128xf32>
    %cst_42 = arith.constant 1.000000e+00 : f32
    %128 = vector.broadcast %cst_42 : f32 to vector<8x128xf32>
    %129 = arith.addf %128, %127 : vector<8x128xf32>
    %130 = arith.divf %128, %129 : vector<8x128xf32>
    %131 = vector.extract_strided_slice %93 {offsets = [0, 256], sizes = [8, 128], strides = [1, 1]} : vector<8x512xf32> to vector<8x128xf32>
    %132 = math.tanh %131 : vector<8x128xf32>
    %133 = vector.extract_strided_slice %93 {offsets = [0, 384], sizes = [8, 128], strides = [1, 1]} : vector<8x512xf32> to vector<8x128xf32>
    %134 = arith.negf %133 : vector<8x128xf32>
    %135 = math.exp %134 : vector<8x128xf32>
    %cst_43 = arith.constant 1.000000e+00 : f32
    %136 = vector.broadcast %cst_43 : f32 to vector<8x128xf32>
    %137 = arith.addf %136, %135 : vector<8x128xf32>
    %138 = arith.divf %136, %137 : vector<8x128xf32>
    %139 = arith.mulf %130, %77 : vector<8x128xf32>
    %140 = arith.mulf %124, %132 : vector<8x128xf32>
    %141 = arith.addf %139, %140 : vector<8x128xf32>
    %142 = math.tanh %141 : vector<8x128xf32>
    %143 = arith.mulf %138, %142 : vector<8x128xf32>
    %c6_i32 = arith.constant 6 : i32
    %144 = vector.broadcast %c6_i32 : i32 to vector<8x128xi32>
    %145 = arith.cmpi sgt, %8, %144 : vector<8x128xi32>
    %cst_44 = arith.constant 0.000000e+00 : f32
    %146 = vector.broadcast %cst_44 : f32 to vector<8x128xf32>
    %147 = arith.select %145, %143, %146 : vector<8x128xi1>, vector<8x128xf32>
    %cst_45 = arith.constant 0.000000e+00 : f32
    %148 = vector.broadcast %cst_45 : f32 to vector<8x128xf32>
    %149 = arith.select %145, %141, %148 : vector<8x128xi1>, vector<8x128xf32>
    %150 = arith.truncf %118 : vector<8x128xf32> to vector<8x128xbf16>
    %c8_46 = arith.constant 8 : index
    %c0_47 = arith.constant 0 : index
    %151 = vector.load %arg11[%c8_46, %c0_47] : memref<64x128xbf16, #tpu.memory_space<vmem>>, vector<8x128xbf16>
    tpu.vector_store %arg11[%c8_46, %c0_47], %150 {strides = array<i32>} : memref<64x128xbf16, #tpu.memory_space<vmem>>, vector<8x128xbf16>,
    %152 = arith.truncf %147 : vector<8x128xf32> to vector<8x128xbf16>
    %c48_48 = arith.constant 48 : index
    %c0_49 = arith.constant 0 : index
    %153 = vector.load %arg12[%c48_48, %c0_49] : memref<64x128xbf16, #tpu.memory_space<vmem>>, vector<8x128xbf16>
    tpu.vector_store %arg12[%c48_48, %c0_49], %152 {strides = array<i32>} : memref<64x128xbf16, #tpu.memory_space<vmem>>, vector<8x128xbf16>,
    %c16 = arith.constant 16 : index
    %c0_50 = arith.constant 0 : index
    %154 = vector.load %arg10[%c16, %c0_50] : memref<64x1024xbf16, #tpu.memory_space<vmem>>, vector<8x512xbf16>
    %155 = arith.extf %154 : vector<8x512xbf16> to vector<8x512xf32>
    %156 = arith.truncf %118 : vector<8x128xf32> to vector<8x128xbf16>
    %c0_51 = arith.constant 0 : index
    %c0_52 = arith.constant 0 : index
    %157 = vector.load %arg4[%c0_51, %c0_52] : memref<128x512xbf16, #tpu.memory_space<vmem>>, vector<128x512xbf16>
    %cst_53 = arith.constant dense<0.000000e+00> : vector<8x512xf32>
    %158 = tpu.matmul %156, %157, %cst_53 {dimension_numbers = #tpu.dot_dimension_numbers<[1], [0], [0], [1], [0, 0, 1, 1], [], []>} : vector<8x128xbf16>, vector<128x512xbf16>, vector<8x512xf32> -> vector<8x512xf32>
    %159 = arith.addf %155, %158 : vector<8x512xf32>
    %c40 = arith.constant 40 : index
    %c512_54 = arith.constant 512 : index
    %160 = vector.load %arg10[%c40, %c512_54] : memref<64x1024xbf16, #tpu.memory_space<vmem>>, vector<8x512xbf16>
    %161 = arith.extf %160 : vector<8x512xbf16> to vector<8x512xf32>
    %162 = arith.truncf %147 : vector<8x128xf32> to vector<8x128xbf16>
    %c0_55 = arith.constant 0 : index
    %c0_56 = arith.constant 0 : index
    %163 = vector.load %arg5[%c0_55, %c0_56] : memref<128x512xbf16, #tpu.memory_space<vmem>>, vector<128x512xbf16>
    %cst_57 = arith.constant dense<0.000000e+00> : vector<8x512xf32>
    %164 = tpu.matmul %162, %163, %cst_57 {dimension_numbers = #tpu.dot_dimension_numbers<[1], [0], [0], [1], [0, 0, 1, 1], [], []>} : vector<8x128xbf16>, vector<128x512xbf16>, vector<8x512xf32> -> vector<8x512xf32>
    %165 = arith.addf %161, %164 : vector<8x512xf32>
    %166 = vector.extract_strided_slice %159 {offsets = [0, 0], sizes = [8, 128], strides = [1, 1]} : vector<8x512xf32> to vector<8x128xf32>
    %167 = arith.negf %166 : vector<8x128xf32>
    %168 = math.exp %167 : vector<8x128xf32>
    %cst_58 = arith.constant 1.000000e+00 : f32
    %169 = vector.broadcast %cst_58 : f32 to vector<8x128xf32>
    %170 = arith.addf %169, %168 : vector<8x128xf32>
    %171 = arith.divf %169, %170 : vector<8x128xf32>
    %172 = vector.extract_strided_slice %159 {offsets = [0, 128], sizes = [8, 128], strides = [1, 1]} : vector<8x512xf32> to vector<8x128xf32>
    %173 = arith.negf %172 : vector<8x128xf32>
    %174 = math.exp %173 : vector<8x128xf32>
    %cst_59 = arith.constant 1.000000e+00 : f32
    %175 = vector.broadcast %cst_59 : f32 to vector<8x128xf32>
    %176 = arith.addf %175, %174 : vector<8x128xf32>
    %177 = arith.divf %175, %176 : vector<8x128xf32>
    %178 = vector.extract_strided_slice %159 {offsets = [0, 256], sizes = [8, 128], strides = [1, 1]} : vector<8x512xf32> to vector<8x128xf32>
    %179 = math.tanh %178 : vector<8x128xf32>
    %180 = vector.extract_strided_slice %159 {offsets = [0, 384], sizes = [8, 128], strides = [1, 1]} : vector<8x512xf32> to vector<8x128xf32>
    %181 = arith.negf %180 : vector<8x128xf32>
    %182 = math.exp %181 : vector<8x128xf32>
    %cst_60 = arith.constant 1.000000e+00 : f32
    %183 = vector.broadcast %cst_60 : f32 to vector<8x128xf32>
    %184 = arith.addf %183, %182 : vector<8x128xf32>
    %185 = arith.divf %183, %184 : vector<8x128xf32>
    %186 = arith.mulf %177, %116 : vector<8x128xf32>
    %187 = arith.mulf %171, %179 : vector<8x128xf32>
    %188 = arith.addf %186, %187 : vector<8x128xf32>
    %189 = math.tanh %188 : vector<8x128xf32>
    %190 = arith.mulf %185, %189 : vector<8x128xf32>
    %191 = vector.extract_strided_slice %165 {offsets = [0, 0], sizes = [8, 128], strides = [1, 1]} : vector<8x512xf32> to vector<8x128xf32>
    %192 = arith.negf %191 : vector<8x128xf32>
    %193 = math.exp %192 : vector<8x128xf32>
    %cst_61 = arith.constant 1.000000e+00 : f32
    %194 = vector.broadcast %cst_61 : f32 to vector<8x128xf32>
    %195 = arith.addf %194, %193 : vector<8x128xf32>
    %196 = arith.divf %194, %195 : vector<8x128xf32>
    %197 = vector.extract_strided_slice %165 {offsets = [0, 128], sizes = [8, 128], strides = [1, 1]} : vector<8x512xf32> to vector<8x128xf32>
    %198 = arith.negf %197 : vector<8x128xf32>
    %199 = math.exp %198 : vector<8x128xf32>
    %cst_62 = arith.constant 1.000000e+00 : f32
    %200 = vector.broadcast %cst_62 : f32 to vector<8x128xf32>
    %201 = arith.addf %200, %199 : vector<8x128xf32>
    %202 = arith.divf %200, %201 : vector<8x128xf32>
    %203 = vector.extract_strided_slice %165 {offsets = [0, 256], sizes = [8, 128], strides = [1, 1]} : vector<8x512xf32> to vector<8x128xf32>
    %204 = math.tanh %203 : vector<8x128xf32>
    %205 = vector.extract_strided_slice %165 {offsets = [0, 384], sizes = [8, 128], strides = [1, 1]} : vector<8x512xf32> to vector<8x128xf32>
    %206 = arith.negf %205 : vector<8x128xf32>
    %207 = math.exp %206 : vector<8x128xf32>
    %cst_63 = arith.constant 1.000000e+00 : f32
    %208 = vector.broadcast %cst_63 : f32 to vector<8x128xf32>
    %209 = arith.addf %208, %207 : vector<8x128xf32>
    %210 = arith.divf %208, %209 : vector<8x128xf32>
    %211 = arith.mulf %202, %149 : vector<8x128xf32>
    %212 = arith.mulf %196, %204 : vector<8x128xf32>
    %213 = arith.addf %211, %212 : vector<8x128xf32>
    %214 = math.tanh %213 : vector<8x128xf32>
    %215 = arith.mulf %210, %214 : vector<8x128xf32>
    %c5_i32 = arith.constant 5 : i32
    %216 = vector.broadcast %c5_i32 : i32 to vector<8x128xi32>
    %217 = arith.cmpi sgt, %8, %216 : vector<8x128xi32>
    %cst_64 = arith.constant 0.000000e+00 : f32
    %218 = vector.broadcast %cst_64 : f32 to vector<8x128xf32>
    %219 = arith.select %217, %215, %218 : vector<8x128xi1>, vector<8x128xf32>
    %cst_65 = arith.constant 0.000000e+00 : f32
    %220 = vector.broadcast %cst_65 : f32 to vector<8x128xf32>
    %221 = arith.select %217, %213, %220 : vector<8x128xi1>, vector<8x128xf32>
    %222 = arith.truncf %190 : vector<8x128xf32> to vector<8x128xbf16>
    %c16_66 = arith.constant 16 : index
    %c0_67 = arith.constant 0 : index
    %223 = vector.load %arg11[%c16_66, %c0_67] : memref<64x128xbf16, #tpu.memory_space<vmem>>, vector<8x128xbf16>
    tpu.vector_store %arg11[%c16_66, %c0_67], %222 {strides = array<i32>} : memref<64x128xbf16, #tpu.memory_space<vmem>>, vector<8x128xbf16>,
    %224 = arith.truncf %219 : vector<8x128xf32> to vector<8x128xbf16>
    %c40_68 = arith.constant 40 : index
    %c0_69 = arith.constant 0 : index
    %225 = vector.load %arg12[%c40_68, %c0_69] : memref<64x128xbf16, #tpu.memory_space<vmem>>, vector<8x128xbf16>
    tpu.vector_store %arg12[%c40_68, %c0_69], %224 {strides = array<i32>} : memref<64x128xbf16, #tpu.memory_space<vmem>>, vector<8x128xbf16>,
    %c24 = arith.constant 24 : index
    %c0_70 = arith.constant 0 : index
    %226 = vector.load %arg10[%c24, %c0_70] : memref<64x1024xbf16, #tpu.memory_space<vmem>>, vector<8x512xbf16>
    %227 = arith.extf %226 : vector<8x512xbf16> to vector<8x512xf32>
    %228 = arith.truncf %190 : vector<8x128xf32> to vector<8x128xbf16>
    %c0_71 = arith.constant 0 : index
    %c0_72 = arith.constant 0 : index
    %229 = vector.load %arg4[%c0_71, %c0_72] : memref<128x512xbf16, #tpu.memory_space<vmem>>, vector<128x512xbf16>
    %cst_73 = arith.constant dense<0.000000e+00> : vector<8x512xf32>
    %230 = tpu.matmul %228, %229, %cst_73 {dimension_numbers = #tpu.dot_dimension_numbers<[1], [0], [0], [1], [0, 0, 1, 1], [], []>} : vector<8x128xbf16>, vector<128x512xbf16>, vector<8x512xf32> -> vector<8x512xf32>
    %231 = arith.addf %227, %230 : vector<8x512xf32>
    %c32 = arith.constant 32 : index
    %c512_74 = arith.constant 512 : index
    %232 = vector.load %arg10[%c32, %c512_74] : memref<64x1024xbf16, #tpu.memory_space<vmem>>, vector<8x512xbf16>
    %233 = arith.extf %232 : vector<8x512xbf16> to vector<8x512xf32>
    %234 = arith.truncf %219 : vector<8x128xf32> to vector<8x128xbf16>
    %c0_75 = arith.constant 0 : index
    %c0_76 = arith.constant 0 : index
    %235 = vector.load %arg5[%c0_75, %c0_76] : memref<128x512xbf16, #tpu.memory_space<vmem>>, vector<128x512xbf16>
    %cst_77 = arith.constant dense<0.000000e+00> : vector<8x512xf32>
    %236 = tpu.matmul %234, %235, %cst_77 {dimension_numbers = #tpu.dot_dimension_numbers<[1], [0], [0], [1], [0, 0, 1, 1], [], []>} : vector<8x128xbf16>, vector<128x512xbf16>, vector<8x512xf32> -> vector<8x512xf32>
    %237 = arith.addf %233, %236 : vector<8x512xf32>
    %238 = vector.extract_strided_slice %231 {offsets = [0, 0], sizes = [8, 128], strides = [1, 1]} : vector<8x512xf32> to vector<8x128xf32>
    %239 = arith.negf %238 : vector<8x128xf32>
    %240 = math.exp %239 : vector<8x128xf32>
    %cst_78 = arith.constant 1.000000e+00 : f32
    %241 = vector.broadcast %cst_78 : f32 to vector<8x128xf32>
    %242 = arith.addf %241, %240 : vector<8x128xf32>
    %243 = arith.divf %241, %242 : vector<8x128xf32>
    %244 = vector.extract_strided_slice %231 {offsets = [0, 128], sizes = [8, 128], strides = [1, 1]} : vector<8x512xf32> to vector<8x128xf32>
    %245 = arith.negf %244 : vector<8x128xf32>
    %246 = math.exp %245 : vector<8x128xf32>
    %cst_79 = arith.constant 1.000000e+00 : f32
    %247 = vector.broadcast %cst_79 : f32 to vector<8x128xf32>
    %248 = arith.addf %247, %246 : vector<8x128xf32>
    %249 = arith.divf %247, %248 : vector<8x128xf32>
    %250 = vector.extract_strided_slice %231 {offsets = [0, 256], sizes = [8, 128], strides = [1, 1]} : vector<8x512xf32> to vector<8x128xf32>
    %251 = math.tanh %250 : vector<8x128xf32>
    %252 = vector.extract_strided_slice %231 {offsets = [0, 384], sizes = [8, 128], strides = [1, 1]} : vector<8x512xf32> to vector<8x128xf32>
    %253 = arith.negf %252 : vector<8x128xf32>
    %254 = math.exp %253 : vector<8x128xf32>
    %cst_80 = arith.constant 1.000000e+00 : f32
    %255 = vector.broadcast %cst_80 : f32 to vector<8x128xf32>
    %256 = arith.addf %255, %254 : vector<8x128xf32>
    %257 = arith.divf %255, %256 : vector<8x128xf32>
    %258 = arith.mulf %249, %188 : vector<8x128xf32>
    %259 = arith.mulf %243, %251 : vector<8x128xf32>
    %260 = arith.addf %258, %259 : vector<8x128xf32>
    %261 = math.tanh %260 : vector<8x128xf32>
    %262 = arith.mulf %257, %261 : vector<8x128xf32>
    %263 = vector.extract_strided_slice %237 {offsets = [0, 0], sizes = [8, 128], strides = [1, 1]} : vector<8x512xf32> to vector<8x128xf32>
    %264 = arith.negf %263 : vector<8x128xf32>
    %265 = math.exp %264 : vector<8x128xf32>
    %cst_81 = arith.constant 1.000000e+00 : f32
    %266 = vector.broadcast %cst_81 : f32 to vector<8x128xf32>
    %267 = arith.addf %266, %265 : vector<8x128xf32>
    %268 = arith.divf %266, %267 : vector<8x128xf32>
    %269 = vector.extract_strided_slice %237 {offsets = [0, 128], sizes = [8, 128], strides = [1, 1]} : vector<8x512xf32> to vector<8x128xf32>
    %270 = arith.negf %269 : vector<8x128xf32>
    %271 = math.exp %270 : vector<8x128xf32>
    %cst_82 = arith.constant 1.000000e+00 : f32
    %272 = vector.broadcast %cst_82 : f32 to vector<8x128xf32>
    %273 = arith.addf %272, %271 : vector<8x128xf32>
    %274 = arith.divf %272, %273 : vector<8x128xf32>
    %275 = vector.extract_strided_slice %237 {offsets = [0, 256], sizes = [8, 128], strides = [1, 1]} : vector<8x512xf32> to vector<8x128xf32>
    %276 = math.tanh %275 : vector<8x128xf32>
    %277 = vector.extract_strided_slice %237 {offsets = [0, 384], sizes = [8, 128], strides = [1, 1]} : vector<8x512xf32> to vector<8x128xf32>
    %278 = arith.negf %277 : vector<8x128xf32>
    %279 = math.exp %278 : vector<8x128xf32>
    %cst_83 = arith.constant 1.000000e+00 : f32
    %280 = vector.broadcast %cst_83 : f32 to vector<8x128xf32>
    %281 = arith.addf %280, %279 : vector<8x128xf32>
    %282 = arith.divf %280, %281 : vector<8x128xf32>
    %283 = arith.mulf %274, %221 : vector<8x128xf32>
    %284 = arith.mulf %268, %276 : vector<8x128xf32>
    %285 = arith.addf %283, %284 : vector<8x128xf32>
    %286 = math.tanh %285 : vector<8x128xf32>
    %287 = arith.mulf %282, %286 : vector<8x128xf32>
    %c4_i32 = arith.constant 4 : i32
    %288 = vector.broadcast %c4_i32 : i32 to vector<8x128xi32>
    %289 = arith.cmpi sgt, %8, %288 : vector<8x128xi32>
    %cst_84 = arith.constant 0.000000e+00 : f32
    %290 = vector.broadcast %cst_84 : f32 to vector<8x128xf32>
    %291 = arith.select %289, %287, %290 : vector<8x128xi1>, vector<8x128xf32>
    %cst_85 = arith.constant 0.000000e+00 : f32
    %292 = vector.broadcast %cst_85 : f32 to vector<8x128xf32>
    %293 = arith.select %289, %285, %292 : vector<8x128xi1>, vector<8x128xf32>
    %294 = arith.truncf %262 : vector<8x128xf32> to vector<8x128xbf16>
    %c24_86 = arith.constant 24 : index
    %c0_87 = arith.constant 0 : index
    %295 = vector.load %arg11[%c24_86, %c0_87] : memref<64x128xbf16, #tpu.memory_space<vmem>>, vector<8x128xbf16>
    tpu.vector_store %arg11[%c24_86, %c0_87], %294 {strides = array<i32>} : memref<64x128xbf16, #tpu.memory_space<vmem>>, vector<8x128xbf16>,
    %296 = arith.truncf %291 : vector<8x128xf32> to vector<8x128xbf16>
    %c32_88 = arith.constant 32 : index
    %c0_89 = arith.constant 0 : index
    %297 = vector.load %arg12[%c32_88, %c0_89] : memref<64x128xbf16, #tpu.memory_space<vmem>>, vector<8x128xbf16>
    tpu.vector_store %arg12[%c32_88, %c0_89], %296 {strides = array<i32>} : memref<64x128xbf16, #tpu.memory_space<vmem>>, vector<8x128xbf16>,
    %c32_90 = arith.constant 32 : index
    %c0_91 = arith.constant 0 : index
    %298 = vector.load %arg10[%c32_90, %c0_91] : memref<64x1024xbf16, #tpu.memory_space<vmem>>, vector<8x512xbf16>
    %299 = arith.extf %298 : vector<8x512xbf16> to vector<8x512xf32>
    %300 = arith.truncf %262 : vector<8x128xf32> to vector<8x128xbf16>
    %c0_92 = arith.constant 0 : index
    %c0_93 = arith.constant 0 : index
    %301 = vector.load %arg4[%c0_92, %c0_93] : memref<128x512xbf16, #tpu.memory_space<vmem>>, vector<128x512xbf16>
    %cst_94 = arith.constant dense<0.000000e+00> : vector<8x512xf32>
    %302 = tpu.matmul %300, %301, %cst_94 {dimension_numbers = #tpu.dot_dimension_numbers<[1], [0], [0], [1], [0, 0, 1, 1], [], []>} : vector<8x128xbf16>, vector<128x512xbf16>, vector<8x512xf32> -> vector<8x512xf32>
    %303 = arith.addf %299, %302 : vector<8x512xf32>
    %c24_95 = arith.constant 24 : index
    %c512_96 = arith.constant 512 : index
    %304 = vector.load %arg10[%c24_95, %c512_96] : memref<64x1024xbf16, #tpu.memory_space<vmem>>, vector<8x512xbf16>
    %305 = arith.extf %304 : vector<8x512xbf16> to vector<8x512xf32>
    %306 = arith.truncf %291 : vector<8x128xf32> to vector<8x128xbf16>
    %c0_97 = arith.constant 0 : index
    %c0_98 = arith.constant 0 : index
    %307 = vector.load %arg5[%c0_97, %c0_98] : memref<128x512xbf16, #tpu.memory_space<vmem>>, vector<128x512xbf16>
    %cst_99 = arith.constant dense<0.000000e+00> : vector<8x512xf32>
    %308 = tpu.matmul %306, %307, %cst_99 {dimension_numbers = #tpu.dot_dimension_numbers<[1], [0], [0], [1], [0, 0, 1, 1], [], []>} : vector<8x128xbf16>, vector<128x512xbf16>, vector<8x512xf32> -> vector<8x512xf32>
    %309 = arith.addf %305, %308 : vector<8x512xf32>
    %310 = vector.extract_strided_slice %303 {offsets = [0, 0], sizes = [8, 128], strides = [1, 1]} : vector<8x512xf32> to vector<8x128xf32>
    %311 = arith.negf %310 : vector<8x128xf32>
    %312 = math.exp %311 : vector<8x128xf32>
    %cst_100 = arith.constant 1.000000e+00 : f32
    %313 = vector.broadcast %cst_100 : f32 to vector<8x128xf32>
    %314 = arith.addf %313, %312 : vector<8x128xf32>
    %315 = arith.divf %313, %314 : vector<8x128xf32>
    %316 = vector.extract_strided_slice %303 {offsets = [0, 128], sizes = [8, 128], strides = [1, 1]} : vector<8x512xf32> to vector<8x128xf32>
    %317 = arith.negf %316 : vector<8x128xf32>
    %318 = math.exp %317 : vector<8x128xf32>
    %cst_101 = arith.constant 1.000000e+00 : f32
    %319 = vector.broadcast %cst_101 : f32 to vector<8x128xf32>
    %320 = arith.addf %319, %318 : vector<8x128xf32>
    %321 = arith.divf %319, %320 : vector<8x128xf32>
    %322 = vector.extract_strided_slice %303 {offsets = [0, 256], sizes = [8, 128], strides = [1, 1]} : vector<8x512xf32> to vector<8x128xf32>
    %323 = math.tanh %322 : vector<8x128xf32>
    %324 = vector.extract_strided_slice %303 {offsets = [0, 384], sizes = [8, 128], strides = [1, 1]} : vector<8x512xf32> to vector<8x128xf32>
    %325 = arith.negf %324 : vector<8x128xf32>
    %326 = math.exp %325 : vector<8x128xf32>
    %cst_102 = arith.constant 1.000000e+00 : f32
    %327 = vector.broadcast %cst_102 : f32 to vector<8x128xf32>
    %328 = arith.addf %327, %326 : vector<8x128xf32>
    %329 = arith.divf %327, %328 : vector<8x128xf32>
    %330 = arith.mulf %321, %260 : vector<8x128xf32>
    %331 = arith.mulf %315, %323 : vector<8x128xf32>
    %332 = arith.addf %330, %331 : vector<8x128xf32>
    %333 = math.tanh %332 : vector<8x128xf32>
    %334 = arith.mulf %329, %333 : vector<8x128xf32>
    %335 = vector.extract_strided_slice %309 {offsets = [0, 0], sizes = [8, 128], strides = [1, 1]} : vector<8x512xf32> to vector<8x128xf32>
    %336 = arith.negf %335 : vector<8x128xf32>
    %337 = math.exp %336 : vector<8x128xf32>
    %cst_103 = arith.constant 1.000000e+00 : f32
    %338 = vector.broadcast %cst_103 : f32 to vector<8x128xf32>
    %339 = arith.addf %338, %337 : vector<8x128xf32>
    %340 = arith.divf %338, %339 : vector<8x128xf32>
    %341 = vector.extract_strided_slice %309 {offsets = [0, 128], sizes = [8, 128], strides = [1, 1]} : vector<8x512xf32> to vector<8x128xf32>
    %342 = arith.negf %341 : vector<8x128xf32>
    %343 = math.exp %342 : vector<8x128xf32>
    %cst_104 = arith.constant 1.000000e+00 : f32
    %344 = vector.broadcast %cst_104 : f32 to vector<8x128xf32>
    %345 = arith.addf %344, %343 : vector<8x128xf32>
    %346 = arith.divf %344, %345 : vector<8x128xf32>
    %347 = vector.extract_strided_slice %309 {offsets = [0, 256], sizes = [8, 128], strides = [1, 1]} : vector<8x512xf32> to vector<8x128xf32>
    %348 = math.tanh %347 : vector<8x128xf32>
    %349 = vector.extract_strided_slice %309 {offsets = [0, 384], sizes = [8, 128], strides = [1, 1]} : vector<8x512xf32> to vector<8x128xf32>
    %350 = arith.negf %349 : vector<8x128xf32>
    %351 = math.exp %350 : vector<8x128xf32>
    %cst_105 = arith.constant 1.000000e+00 : f32
    %352 = vector.broadcast %cst_105 : f32 to vector<8x128xf32>
    %353 = arith.addf %352, %351 : vector<8x128xf32>
    %354 = arith.divf %352, %353 : vector<8x128xf32>
    %355 = arith.mulf %346, %293 : vector<8x128xf32>
    %356 = arith.mulf %340, %348 : vector<8x128xf32>
    %357 = arith.addf %355, %356 : vector<8x128xf32>
    %358 = math.tanh %357 : vector<8x128xf32>
    %359 = arith.mulf %354, %358 : vector<8x128xf32>
    %c3_i32 = arith.constant 3 : i32
    %360 = vector.broadcast %c3_i32 : i32 to vector<8x128xi32>
    %361 = arith.cmpi sgt, %8, %360 : vector<8x128xi32>
    %cst_106 = arith.constant 0.000000e+00 : f32
    %362 = vector.broadcast %cst_106 : f32 to vector<8x128xf32>
    %363 = arith.select %361, %359, %362 : vector<8x128xi1>, vector<8x128xf32>
    %cst_107 = arith.constant 0.000000e+00 : f32
    %364 = vector.broadcast %cst_107 : f32 to vector<8x128xf32>
    %365 = arith.select %361, %357, %364 : vector<8x128xi1>, vector<8x128xf32>
    %366 = arith.truncf %334 : vector<8x128xf32> to vector<8x128xbf16>
    %c32_108 = arith.constant 32 : index
    %c0_109 = arith.constant 0 : index
    %367 = vector.load %arg11[%c32_108, %c0_109] : memref<64x128xbf16, #tpu.memory_space<vmem>>, vector<8x128xbf16>
    tpu.vector_store %arg11[%c32_108, %c0_109], %366 {strides = array<i32>} : memref<64x128xbf16, #tpu.memory_space<vmem>>, vector<8x128xbf16>,
    %368 = arith.truncf %363 : vector<8x128xf32> to vector<8x128xbf16>
    %c24_110 = arith.constant 24 : index
    %c0_111 = arith.constant 0 : index
    %369 = vector.load %arg12[%c24_110, %c0_111] : memref<64x128xbf16, #tpu.memory_space<vmem>>, vector<8x128xbf16>
    tpu.vector_store %arg12[%c24_110, %c0_111], %368 {strides = array<i32>} : memref<64x128xbf16, #tpu.memory_space<vmem>>, vector<8x128xbf16>,
    %c40_112 = arith.constant 40 : index
    %c0_113 = arith.constant 0 : index
    %370 = vector.load %arg10[%c40_112, %c0_113] : memref<64x1024xbf16, #tpu.memory_space<vmem>>, vector<8x512xbf16>
    %371 = arith.extf %370 : vector<8x512xbf16> to vector<8x512xf32>
    %372 = arith.truncf %334 : vector<8x128xf32> to vector<8x128xbf16>
    %c0_114 = arith.constant 0 : index
    %c0_115 = arith.constant 0 : index
    %373 = vector.load %arg4[%c0_114, %c0_115] : memref<128x512xbf16, #tpu.memory_space<vmem>>, vector<128x512xbf16>
    %cst_116 = arith.constant dense<0.000000e+00> : vector<8x512xf32>
    %374 = tpu.matmul %372, %373, %cst_116 {dimension_numbers = #tpu.dot_dimension_numbers<[1], [0], [0], [1], [0, 0, 1, 1], [], []>} : vector<8x128xbf16>, vector<128x512xbf16>, vector<8x512xf32> -> vector<8x512xf32>
    %375 = arith.addf %371, %374 : vector<8x512xf32>
    %c16_117 = arith.constant 16 : index
    %c512_118 = arith.constant 512 : index
    %376 = vector.load %arg10[%c16_117, %c512_118] : memref<64x1024xbf16, #tpu.memory_space<vmem>>, vector<8x512xbf16>
    %377 = arith.extf %376 : vector<8x512xbf16> to vector<8x512xf32>
    %378 = arith.truncf %363 : vector<8x128xf32> to vector<8x128xbf16>
    %c0_119 = arith.constant 0 : index
    %c0_120 = arith.constant 0 : index
    %379 = vector.load %arg5[%c0_119, %c0_120] : memref<128x512xbf16, #tpu.memory_space<vmem>>, vector<128x512xbf16>
    %cst_121 = arith.constant dense<0.000000e+00> : vector<8x512xf32>
    %380 = tpu.matmul %378, %379, %cst_121 {dimension_numbers = #tpu.dot_dimension_numbers<[1], [0], [0], [1], [0, 0, 1, 1], [], []>} : vector<8x128xbf16>, vector<128x512xbf16>, vector<8x512xf32> -> vector<8x512xf32>
    %381 = arith.addf %377, %380 : vector<8x512xf32>
    %382 = vector.extract_strided_slice %375 {offsets = [0, 0], sizes = [8, 128], strides = [1, 1]} : vector<8x512xf32> to vector<8x128xf32>
    %383 = arith.negf %382 : vector<8x128xf32>
    %384 = math.exp %383 : vector<8x128xf32>
    %cst_122 = arith.constant 1.000000e+00 : f32
    %385 = vector.broadcast %cst_122 : f32 to vector<8x128xf32>
    %386 = arith.addf %385, %384 : vector<8x128xf32>
    %387 = arith.divf %385, %386 : vector<8x128xf32>
    %388 = vector.extract_strided_slice %375 {offsets = [0, 128], sizes = [8, 128], strides = [1, 1]} : vector<8x512xf32> to vector<8x128xf32>
    %389 = arith.negf %388 : vector<8x128xf32>
    %390 = math.exp %389 : vector<8x128xf32>
    %cst_123 = arith.constant 1.000000e+00 : f32
    %391 = vector.broadcast %cst_123 : f32 to vector<8x128xf32>
    %392 = arith.addf %391, %390 : vector<8x128xf32>
    %393 = arith.divf %391, %392 : vector<8x128xf32>
    %394 = vector.extract_strided_slice %375 {offsets = [0, 256], sizes = [8, 128], strides = [1, 1]} : vector<8x512xf32> to vector<8x128xf32>
    %395 = math.tanh %394 : vector<8x128xf32>
    %396 = vector.extract_strided_slice %375 {offsets = [0, 384], sizes = [8, 128], strides = [1, 1]} : vector<8x512xf32> to vector<8x128xf32>
    %397 = arith.negf %396 : vector<8x128xf32>
    %398 = math.exp %397 : vector<8x128xf32>
    %cst_124 = arith.constant 1.000000e+00 : f32
    %399 = vector.broadcast %cst_124 : f32 to vector<8x128xf32>
    %400 = arith.addf %399, %398 : vector<8x128xf32>
    %401 = arith.divf %399, %400 : vector<8x128xf32>
    %402 = arith.mulf %393, %332 : vector<8x128xf32>
    %403 = arith.mulf %387, %395 : vector<8x128xf32>
    %404 = arith.addf %402, %403 : vector<8x128xf32>
    %405 = math.tanh %404 : vector<8x128xf32>
    %406 = arith.mulf %401, %405 : vector<8x128xf32>
    %407 = vector.extract_strided_slice %381 {offsets = [0, 0], sizes = [8, 128], strides = [1, 1]} : vector<8x512xf32> to vector<8x128xf32>
    %408 = arith.negf %407 : vector<8x128xf32>
    %409 = math.exp %408 : vector<8x128xf32>
    %cst_125 = arith.constant 1.000000e+00 : f32
    %410 = vector.broadcast %cst_125 : f32 to vector<8x128xf32>
    %411 = arith.addf %410, %409 : vector<8x128xf32>
    %412 = arith.divf %410, %411 : vector<8x128xf32>
    %413 = vector.extract_strided_slice %381 {offsets = [0, 128], sizes = [8, 128], strides = [1, 1]} : vector<8x512xf32> to vector<8x128xf32>
    %414 = arith.negf %413 : vector<8x128xf32>
    %415 = math.exp %414 : vector<8x128xf32>
    %cst_126 = arith.constant 1.000000e+00 : f32
    %416 = vector.broadcast %cst_126 : f32 to vector<8x128xf32>
    %417 = arith.addf %416, %415 : vector<8x128xf32>
    %418 = arith.divf %416, %417 : vector<8x128xf32>
    %419 = vector.extract_strided_slice %381 {offsets = [0, 256], sizes = [8, 128], strides = [1, 1]} : vector<8x512xf32> to vector<8x128xf32>
    %420 = math.tanh %419 : vector<8x128xf32>
    %421 = vector.extract_strided_slice %381 {offsets = [0, 384], sizes = [8, 128], strides = [1, 1]} : vector<8x512xf32> to vector<8x128xf32>
    %422 = arith.negf %421 : vector<8x128xf32>
    %423 = math.exp %422 : vector<8x128xf32>
    %cst_127 = arith.constant 1.000000e+00 : f32
    %424 = vector.broadcast %cst_127 : f32 to vector<8x128xf32>
    %425 = arith.addf %424, %423 : vector<8x128xf32>
    %426 = arith.divf %424, %425 : vector<8x128xf32>
    %427 = arith.mulf %418, %365 : vector<8x128xf32>
    %428 = arith.mulf %412, %420 : vector<8x128xf32>
    %429 = arith.addf %427, %428 : vector<8x128xf32>
    %430 = math.tanh %429 : vector<8x128xf32>
    %431 = arith.mulf %426, %430 : vector<8x128xf32>
    %c2_i32 = arith.constant 2 : i32
    %432 = vector.broadcast %c2_i32 : i32 to vector<8x128xi32>
    %433 = arith.cmpi sgt, %8, %432 : vector<8x128xi32>
    %cst_128 = arith.constant 0.000000e+00 : f32
    %434 = vector.broadcast %cst_128 : f32 to vector<8x128xf32>
    %435 = arith.select %433, %431, %434 : vector<8x128xi1>, vector<8x128xf32>
    %cst_129 = arith.constant 0.000000e+00 : f32
    %436 = vector.broadcast %cst_129 : f32 to vector<8x128xf32>
    %437 = arith.select %433, %429, %436 : vector<8x128xi1>, vector<8x128xf32>
    %438 = arith.truncf %406 : vector<8x128xf32> to vector<8x128xbf16>
    %c40_130 = arith.constant 40 : index
    %c0_131 = arith.constant 0 : index
    %439 = vector.load %arg11[%c40_130, %c0_131] : memref<64x128xbf16, #tpu.memory_space<vmem>>, vector<8x128xbf16>
    tpu.vector_store %arg11[%c40_130, %c0_131], %438 {strides = array<i32>} : memref<64x128xbf16, #tpu.memory_space<vmem>>, vector<8x128xbf16>,
    %440 = arith.truncf %435 : vector<8x128xf32> to vector<8x128xbf16>
    %c16_132 = arith.constant 16 : index
    %c0_133 = arith.constant 0 : index
    %441 = vector.load %arg12[%c16_132, %c0_133] : memref<64x128xbf16, #tpu.memory_space<vmem>>, vector<8x128xbf16>
    tpu.vector_store %arg12[%c16_132, %c0_133], %440 {strides = array<i32>} : memref<64x128xbf16, #tpu.memory_space<vmem>>, vector<8x128xbf16>,
    %c48_134 = arith.constant 48 : index
    %c0_135 = arith.constant 0 : index
    %442 = vector.load %arg10[%c48_134, %c0_135] : memref<64x1024xbf16, #tpu.memory_space<vmem>>, vector<8x512xbf16>
    %443 = arith.extf %442 : vector<8x512xbf16> to vector<8x512xf32>
    %444 = arith.truncf %406 : vector<8x128xf32> to vector<8x128xbf16>
    %c0_136 = arith.constant 0 : index
    %c0_137 = arith.constant 0 : index
    %445 = vector.load %arg4[%c0_136, %c0_137] : memref<128x512xbf16, #tpu.memory_space<vmem>>, vector<128x512xbf16>
    %cst_138 = arith.constant dense<0.000000e+00> : vector<8x512xf32>
    %446 = tpu.matmul %444, %445, %cst_138 {dimension_numbers = #tpu.dot_dimension_numbers<[1], [0], [0], [1], [0, 0, 1, 1], [], []>} : vector<8x128xbf16>, vector<128x512xbf16>, vector<8x512xf32> -> vector<8x512xf32>
    %447 = arith.addf %443, %446 : vector<8x512xf32>
    %c8_139 = arith.constant 8 : index
    %c512_140 = arith.constant 512 : index
    %448 = vector.load %arg10[%c8_139, %c512_140] : memref<64x1024xbf16, #tpu.memory_space<vmem>>, vector<8x512xbf16>
    %449 = arith.extf %448 : vector<8x512xbf16> to vector<8x512xf32>
    %450 = arith.truncf %435 : vector<8x128xf32> to vector<8x128xbf16>
    %c0_141 = arith.constant 0 : index
    %c0_142 = arith.constant 0 : index
    %451 = vector.load %arg5[%c0_141, %c0_142] : memref<128x512xbf16, #tpu.memory_space<vmem>>, vector<128x512xbf16>
    %cst_143 = arith.constant dense<0.000000e+00> : vector<8x512xf32>
    %452 = tpu.matmul %450, %451, %cst_143 {dimension_numbers = #tpu.dot_dimension_numbers<[1], [0], [0], [1], [0, 0, 1, 1], [], []>} : vector<8x128xbf16>, vector<128x512xbf16>, vector<8x512xf32> -> vector<8x512xf32>
    %453 = arith.addf %449, %452 : vector<8x512xf32>
    %454 = vector.extract_strided_slice %447 {offsets = [0, 0], sizes = [8, 128], strides = [1, 1]} : vector<8x512xf32> to vector<8x128xf32>
    %455 = arith.negf %454 : vector<8x128xf32>
    %456 = math.exp %455 : vector<8x128xf32>
    %cst_144 = arith.constant 1.000000e+00 : f32
    %457 = vector.broadcast %cst_144 : f32 to vector<8x128xf32>
    %458 = arith.addf %457, %456 : vector<8x128xf32>
    %459 = arith.divf %457, %458 : vector<8x128xf32>
    %460 = vector.extract_strided_slice %447 {offsets = [0, 128], sizes = [8, 128], strides = [1, 1]} : vector<8x512xf32> to vector<8x128xf32>
    %461 = arith.negf %460 : vector<8x128xf32>
    %462 = math.exp %461 : vector<8x128xf32>
    %cst_145 = arith.constant 1.000000e+00 : f32
    %463 = vector.broadcast %cst_145 : f32 to vector<8x128xf32>
    %464 = arith.addf %463, %462 : vector<8x128xf32>
    %465 = arith.divf %463, %464 : vector<8x128xf32>
    %466 = vector.extract_strided_slice %447 {offsets = [0, 256], sizes = [8, 128], strides = [1, 1]} : vector<8x512xf32> to vector<8x128xf32>
    %467 = math.tanh %466 : vector<8x128xf32>
    %468 = vector.extract_strided_slice %447 {offsets = [0, 384], sizes = [8, 128], strides = [1, 1]} : vector<8x512xf32> to vector<8x128xf32>
    %469 = arith.negf %468 : vector<8x128xf32>
    %470 = math.exp %469 : vector<8x128xf32>
    %cst_146 = arith.constant 1.000000e+00 : f32
    %471 = vector.broadcast %cst_146 : f32 to vector<8x128xf32>
    %472 = arith.addf %471, %470 : vector<8x128xf32>
    %473 = arith.divf %471, %472 : vector<8x128xf32>
    %474 = arith.mulf %465, %404 : vector<8x128xf32>
    %475 = arith.mulf %459, %467 : vector<8x128xf32>
    %476 = arith.addf %474, %475 : vector<8x128xf32>
    %477 = math.tanh %476 : vector<8x128xf32>
    %478 = arith.mulf %473, %477 : vector<8x128xf32>
    %479 = vector.extract_strided_slice %453 {offsets = [0, 0], sizes = [8, 128], strides = [1, 1]} : vector<8x512xf32> to vector<8x128xf32>
    %480 = arith.negf %479 : vector<8x128xf32>
    %481 = math.exp %480 : vector<8x128xf32>
    %cst_147 = arith.constant 1.000000e+00 : f32
    %482 = vector.broadcast %cst_147 : f32 to vector<8x128xf32>
    %483 = arith.addf %482, %481 : vector<8x128xf32>
    %484 = arith.divf %482, %483 : vector<8x128xf32>
    %485 = vector.extract_strided_slice %453 {offsets = [0, 128], sizes = [8, 128], strides = [1, 1]} : vector<8x512xf32> to vector<8x128xf32>
    %486 = arith.negf %485 : vector<8x128xf32>
    %487 = math.exp %486 : vector<8x128xf32>
    %cst_148 = arith.constant 1.000000e+00 : f32
    %488 = vector.broadcast %cst_148 : f32 to vector<8x128xf32>
    %489 = arith.addf %488, %487 : vector<8x128xf32>
    %490 = arith.divf %488, %489 : vector<8x128xf32>
    %491 = vector.extract_strided_slice %453 {offsets = [0, 256], sizes = [8, 128], strides = [1, 1]} : vector<8x512xf32> to vector<8x128xf32>
    %492 = math.tanh %491 : vector<8x128xf32>
    %493 = vector.extract_strided_slice %453 {offsets = [0, 384], sizes = [8, 128], strides = [1, 1]} : vector<8x512xf32> to vector<8x128xf32>
    %494 = arith.negf %493 : vector<8x128xf32>
    %495 = math.exp %494 : vector<8x128xf32>
    %cst_149 = arith.constant 1.000000e+00 : f32
    %496 = vector.broadcast %cst_149 : f32 to vector<8x128xf32>
    %497 = arith.addf %496, %495 : vector<8x128xf32>
    %498 = arith.divf %496, %497 : vector<8x128xf32>
    %499 = arith.mulf %490, %437 : vector<8x128xf32>
    %500 = arith.mulf %484, %492 : vector<8x128xf32>
    %501 = arith.addf %499, %500 : vector<8x128xf32>
    %502 = math.tanh %501 : vector<8x128xf32>
    %503 = arith.mulf %498, %502 : vector<8x128xf32>
    %c1_i32 = arith.constant 1 : i32
    %504 = vector.broadcast %c1_i32 : i32 to vector<8x128xi32>
    %505 = arith.cmpi sgt, %8, %504 : vector<8x128xi32>
    %cst_150 = arith.constant 0.000000e+00 : f32
    %506 = vector.broadcast %cst_150 : f32 to vector<8x128xf32>
    %507 = arith.select %505, %503, %506 : vector<8x128xi1>, vector<8x128xf32>
    %cst_151 = arith.constant 0.000000e+00 : f32
    %508 = vector.broadcast %cst_151 : f32 to vector<8x128xf32>
    %509 = arith.select %505, %501, %508 : vector<8x128xi1>, vector<8x128xf32>
    %510 = arith.truncf %478 : vector<8x128xf32> to vector<8x128xbf16>
    %c48_152 = arith.constant 48 : index
    %c0_153 = arith.constant 0 : index
    %511 = vector.load %arg11[%c48_152, %c0_153] : memref<64x128xbf16, #tpu.memory_space<vmem>>, vector<8x128xbf16>
    tpu.vector_store %arg11[%c48_152, %c0_153], %510 {strides = array<i32>} : memref<64x128xbf16, #tpu.memory_space<vmem>>, vector<8x128xbf16>,
    %512 = arith.truncf %507 : vector<8x128xf32> to vector<8x128xbf16>
    %c8_154 = arith.constant 8 : index
    %c0_155 = arith.constant 0 : index
    %513 = vector.load %arg12[%c8_154, %c0_155] : memref<64x128xbf16, #tpu.memory_space<vmem>>, vector<8x128xbf16>
    tpu.vector_store %arg12[%c8_154, %c0_155], %512 {strides = array<i32>} : memref<64x128xbf16, #tpu.memory_space<vmem>>, vector<8x128xbf16>,
    %c56_156 = arith.constant 56 : index
    %c0_157 = arith.constant 0 : index
    %514 = vector.load %arg10[%c56_156, %c0_157] : memref<64x1024xbf16, #tpu.memory_space<vmem>>, vector<8x512xbf16>
    %515 = arith.extf %514 : vector<8x512xbf16> to vector<8x512xf32>
    %516 = arith.truncf %478 : vector<8x128xf32> to vector<8x128xbf16>
    %c0_158 = arith.constant 0 : index
    %c0_159 = arith.constant 0 : index
    %517 = vector.load %arg4[%c0_158, %c0_159] : memref<128x512xbf16, #tpu.memory_space<vmem>>, vector<128x512xbf16>
    %cst_160 = arith.constant dense<0.000000e+00> : vector<8x512xf32>
    %518 = tpu.matmul %516, %517, %cst_160 {dimension_numbers = #tpu.dot_dimension_numbers<[1], [0], [0], [1], [0, 0, 1, 1], [], []>} : vector<8x128xbf16>, vector<128x512xbf16>, vector<8x512xf32> -> vector<8x512xf32>
    %519 = arith.addf %515, %518 : vector<8x512xf32>
    %c0_161 = arith.constant 0 : index
    %c512_162 = arith.constant 512 : index
    %520 = vector.load %arg10[%c0_161, %c512_162] : memref<64x1024xbf16, #tpu.memory_space<vmem>>, vector<8x512xbf16>
    %521 = arith.extf %520 : vector<8x512xbf16> to vector<8x512xf32>
    %522 = arith.truncf %507 : vector<8x128xf32> to vector<8x128xbf16>
    %c0_163 = arith.constant 0 : index
    %c0_164 = arith.constant 0 : index
    %523 = vector.load %arg5[%c0_163, %c0_164] : memref<128x512xbf16, #tpu.memory_space<vmem>>, vector<128x512xbf16>
    %cst_165 = arith.constant dense<0.000000e+00> : vector<8x512xf32>
    %524 = tpu.matmul %522, %523, %cst_165 {dimension_numbers = #tpu.dot_dimension_numbers<[1], [0], [0], [1], [0, 0, 1, 1], [], []>} : vector<8x128xbf16>, vector<128x512xbf16>, vector<8x512xf32> -> vector<8x512xf32>
    %525 = arith.addf %521, %524 : vector<8x512xf32>
    %526 = vector.extract_strided_slice %519 {offsets = [0, 0], sizes = [8, 128], strides = [1, 1]} : vector<8x512xf32> to vector<8x128xf32>
    %527 = arith.negf %526 : vector<8x128xf32>
    %528 = math.exp %527 : vector<8x128xf32>
    %cst_166 = arith.constant 1.000000e+00 : f32
    %529 = vector.broadcast %cst_166 : f32 to vector<8x128xf32>
    %530 = arith.addf %529, %528 : vector<8x128xf32>
    %531 = arith.divf %529, %530 : vector<8x128xf32>
    %532 = vector.extract_strided_slice %519 {offsets = [0, 128], sizes = [8, 128], strides = [1, 1]} : vector<8x512xf32> to vector<8x128xf32>
    %533 = arith.negf %532 : vector<8x128xf32>
    %534 = math.exp %533 : vector<8x128xf32>
    %cst_167 = arith.constant 1.000000e+00 : f32
    %535 = vector.broadcast %cst_167 : f32 to vector<8x128xf32>
    %536 = arith.addf %535, %534 : vector<8x128xf32>
    %537 = arith.divf %535, %536 : vector<8x128xf32>
    %538 = vector.extract_strided_slice %519 {offsets = [0, 256], sizes = [8, 128], strides = [1, 1]} : vector<8x512xf32> to vector<8x128xf32>
    %539 = math.tanh %538 : vector<8x128xf32>
    %540 = vector.extract_strided_slice %519 {offsets = [0, 384], sizes = [8, 128], strides = [1, 1]} : vector<8x512xf32> to vector<8x128xf32>
    %541 = arith.negf %540 : vector<8x128xf32>
    %542 = math.exp %541 : vector<8x128xf32>
    %cst_168 = arith.constant 1.000000e+00 : f32
    %543 = vector.broadcast %cst_168 : f32 to vector<8x128xf32>
    %544 = arith.addf %543, %542 : vector<8x128xf32>
    %545 = arith.divf %543, %544 : vector<8x128xf32>
    %546 = arith.mulf %537, %476 : vector<8x128xf32>
    %547 = arith.mulf %531, %539 : vector<8x128xf32>
    %548 = arith.addf %546, %547 : vector<8x128xf32>
    %549 = math.tanh %548 : vector<8x128xf32>
    %550 = arith.mulf %545, %549 : vector<8x128xf32>
    %551 = vector.extract_strided_slice %525 {offsets = [0, 0], sizes = [8, 128], strides = [1, 1]} : vector<8x512xf32> to vector<8x128xf32>
    %552 = arith.negf %551 : vector<8x128xf32>
    %553 = math.exp %552 : vector<8x128xf32>
    %cst_169 = arith.constant 1.000000e+00 : f32
    %554 = vector.broadcast %cst_169 : f32 to vector<8x128xf32>
    %555 = arith.addf %554, %553 : vector<8x128xf32>
    %556 = arith.divf %554, %555 : vector<8x128xf32>
    %557 = vector.extract_strided_slice %525 {offsets = [0, 128], sizes = [8, 128], strides = [1, 1]} : vector<8x512xf32> to vector<8x128xf32>
    %558 = arith.negf %557 : vector<8x128xf32>
    %559 = math.exp %558 : vector<8x128xf32>
    %cst_170 = arith.constant 1.000000e+00 : f32
    %560 = vector.broadcast %cst_170 : f32 to vector<8x128xf32>
    %561 = arith.addf %560, %559 : vector<8x128xf32>
    %562 = arith.divf %560, %561 : vector<8x128xf32>
    %563 = vector.extract_strided_slice %525 {offsets = [0, 256], sizes = [8, 128], strides = [1, 1]} : vector<8x512xf32> to vector<8x128xf32>
    %564 = math.tanh %563 : vector<8x128xf32>
    %565 = vector.extract_strided_slice %525 {offsets = [0, 384], sizes = [8, 128], strides = [1, 1]} : vector<8x512xf32> to vector<8x128xf32>
    %566 = arith.negf %565 : vector<8x128xf32>
    %567 = math.exp %566 : vector<8x128xf32>
    %cst_171 = arith.constant 1.000000e+00 : f32
    %568 = vector.broadcast %cst_171 : f32 to vector<8x128xf32>
    %569 = arith.addf %568, %567 : vector<8x128xf32>
    %570 = arith.divf %568, %569 : vector<8x128xf32>
    %571 = arith.mulf %562, %509 : vector<8x128xf32>
    %572 = arith.mulf %556, %564 : vector<8x128xf32>
    %573 = arith.addf %571, %572 : vector<8x128xf32>
    %574 = math.tanh %573 : vector<8x128xf32>
    %575 = arith.mulf %570, %574 : vector<8x128xf32>
    %c0_i32 = arith.constant 0 : i32
    %576 = vector.broadcast %c0_i32 : i32 to vector<8x128xi32>
    %577 = arith.cmpi sgt, %8, %576 : vector<8x128xi32>
    %cst_172 = arith.constant 0.000000e+00 : f32
    %578 = vector.broadcast %cst_172 : f32 to vector<8x128xf32>
    %579 = arith.select %577, %575, %578 : vector<8x128xi1>, vector<8x128xf32>
    %580 = arith.truncf %550 : vector<8x128xf32> to vector<8x128xbf16>
    %c56_173 = arith.constant 56 : index
    %c0_174 = arith.constant 0 : index
    %581 = vector.load %arg11[%c56_173, %c0_174] : memref<64x128xbf16, #tpu.memory_space<vmem>>, vector<8x128xbf16>
    tpu.vector_store %arg11[%c56_173, %c0_174], %580 {strides = array<i32>} : memref<64x128xbf16, #tpu.memory_space<vmem>>, vector<8x128xbf16>,
    %582 = arith.truncf %579 : vector<8x128xf32> to vector<8x128xbf16>
    %c0_175 = arith.constant 0 : index
    %c0_176 = arith.constant 0 : index
    %583 = vector.load %arg12[%c0_175, %c0_176] : memref<64x128xbf16, #tpu.memory_space<vmem>>, vector<8x128xbf16>
    tpu.vector_store %arg12[%c0_175, %c0_176], %582 {strides = array<i32>} : memref<64x128xbf16, #tpu.memory_space<vmem>>, vector<8x128xbf16>,
    %c0_177 = arith.constant 0 : index
    %c0_178 = arith.constant 0 : index
    %584 = vector.load %arg11[%c0_177, %c0_178] : memref<64x128xbf16, #tpu.memory_space<vmem>>, vector<64x128xbf16>
    %c0_179 = arith.constant 0 : index
    %c0_180 = arith.constant 0 : index
    %585 = vector.load %arg6[%c0_179, %c0_180] : memref<128x128xbf16, #tpu.memory_space<vmem>>, vector<128x128xbf16>
    %cst_181 = arith.constant dense<0.000000e+00> : vector<64x128xf32>
    %586 = tpu.matmul %584, %585, %cst_181 {dimension_numbers = #tpu.dot_dimension_numbers<[1], [0], [0], [1], [0, 0, 1, 1], [], []>} : vector<64x128xbf16>, vector<128x128xbf16>, vector<64x128xf32> -> vector<64x128xf32>
    %c0_182 = arith.constant 0 : index
    %c0_183 = arith.constant 0 : index
    %587 = vector.load %arg12[%c0_182, %c0_183] : memref<64x128xbf16, #tpu.memory_space<vmem>>, vector<64x128xbf16>
    %c0_184 = arith.constant 0 : index
    %c0_185 = arith.constant 0 : index
    %588 = vector.load %arg7[%c0_184, %c0_185] : memref<128x128xbf16, #tpu.memory_space<vmem>>, vector<128x128xbf16>
    %cst_186 = arith.constant dense<0.000000e+00> : vector<64x128xf32>
    %589 = tpu.matmul %587, %588, %cst_186 {dimension_numbers = #tpu.dot_dimension_numbers<[1], [0], [0], [1], [0, 0, 1, 1], [], []>} : vector<64x128xbf16>, vector<128x128xbf16>, vector<64x128xf32> -> vector<64x128xf32>
    %590 = arith.addf %586, %589 : vector<64x128xf32>
    %c0_187 = arith.constant 0 : index
    %c0_188 = arith.constant 0 : index
    %591 = vector.load %arg8[%c0_187, %c0_188] : memref<1x128xf32, #tpu.memory_space<vmem>>, vector<1x128xf32>
    %592 = vector.broadcast %591 : vector<1x128xf32> to vector<64x128xf32>
    %593 = arith.addf %590, %592 : vector<64x128xf32>
    %c0_189 = arith.constant 0 : index
    %c0_190 = arith.constant 0 : index
    %594 = vector.load %arg9[%c0_189, %c0_190] : memref<64x128xf32, #tpu.memory_space<vmem>>, vector<64x128xf32>
    tpu.vector_store %arg9[%c0_189, %c0_190], %593 {strides = array<i32>} : memref<64x128xf32, #tpu.memory_space<vmem>>, vector<64x128xf32>,
    return
  }
}

</mosaic_0001>

<llo_original>
// kernel: bilstm_forward.1
$region0: #{bilstm_forward.1}
  #allocation0 [shape = 'u32[]', space=smem, size = 0x4, offset = 0x4, fixed_abs, tag = 'smem constant byte address 0x4 - core index']
  #allocation1 [shape = 'u32[144,128]{1,0:T(1,128)}', space=vmem, size = 0x12000, scoped, tag = 'internal scratch']
  #allocation2 [shape = 'bf16[64,1024]{1,0:T(16,128)(2,1)}', space=vmem, size = 0x20000, scoped, tag = 'scratch operand']
  #allocation3 [shape = 'bf16[64,128]{1,0:T(16,128)(2,1)}', space=vmem, size = 0x4000, scoped, tag = 'scratch operand']
  #allocation4 [shape = 'bf16[64,128]{1,0:T(16,128)(2,1)}', space=vmem, size = 0x4000, scoped, tag = 'scratch operand']
  %s0 = inlined_call_operand.vmem [shape: bf16[64,128], index: 0, kind: input, shape index: {}]
  %s1 = inlined_call_operand.vmem [shape: s32[8,128], index: 1, kind: input, shape index: {}]
  %s2 = inlined_call_operand.vmem [shape: bf16[128,1024], index: 2, kind: input, shape index: {}]
  %s3 = inlined_call_operand.vmem [shape: f32[1,1024], index: 3, kind: input, shape index: {}]
  %s4 = inlined_call_operand.vmem [shape: bf16[128,512], index: 4, kind: input, shape index: {}]
  %s5 = inlined_call_operand.vmem [shape: bf16[128,512], index: 5, kind: input, shape index: {}]
  %s6 = inlined_call_operand.vmem [shape: bf16[128,128], index: 6, kind: input, shape index: {}]
  %s7 = inlined_call_operand.vmem [shape: bf16[128,128], index: 7, kind: input, shape index: {}]
  %s8 = inlined_call_operand.vmem [shape: f32[1,128], index: 8, kind: input, shape index: {}]
  %s9 = inlined_call_operand.vmem [shape: f32[64,128], index: 9, kind: output, shape index: {}]
  %s10 = sld [smem:[#allocation0]]
  $region46: #{bilstm_forward.1} parent=0
    _
  %s12 = ssub.s32 1, %s10
  %s13 = scalar_select 0, %s12, %s10
  // Predicated region
  $region2: #{bilstm_forward.1} parent=0 // pred_check
    _
  $region3: #{bilstm_forward.1} parent=0 // pred_check_branch
    %15 = sbr.rel (0) target = $region5
  $region4: #{bilstm_forward.1} parent=0 // pred_region
    _
  $region5: #{bilstm_forward.1} parent=0 // pred_fallthru
    _
  // Predicated region
  $region6: #{bilstm_forward.1} parent=0 // pred_check
    _
  $region7: #{bilstm_forward.1} parent=0 // pred_check_branch
    %17 = sbr.rel (0) target = $region9
  $region8: #{bilstm_forward.1} parent=0 // pred_region
    _
  $region9: #{bilstm_forward.1} parent=0 // pred_fallthru
    _
  // Predicated region
  $region10: #{bilstm_forward.1} parent=0 // pred_check
    _
  $region11: #{bilstm_forward.1} parent=0 // pred_check_branch
    %19 = sbr.rel (0) target = $region13
  $region12: #{bilstm_forward.1} parent=0 // pred_region
    _
  $region13: #{bilstm_forward.1} parent=0 // pred_fallthru
    _
  // Predicated region
  $region14: #{bilstm_forward.1} parent=0 // pred_check
    _
  $region15: #{bilstm_forward.1} parent=0 // pred_check_branch
    %21 = sbr.rel (0) target = $region17
  $region16: #{bilstm_forward.1} parent=0 // pred_region
    _
  $region17: #{bilstm_forward.1} parent=0 // pred_fallthru
    _
  // Predicated region
  $region18: #{bilstm_forward.1} parent=0 // pred_check
    _
  $region19: #{bilstm_forward.1} parent=0 // pred_check_branch
    %23 = sbr.rel (0) target = $region21
  $region20: #{bilstm_forward.1} parent=0 // pred_region
    _
  $region21: #{bilstm_forward.1} parent=0 // pred_fallthru
    _
  // Predicated region
  $region22: #{bilstm_forward.1} parent=0 // pred_check
    _
  $region23: #{bilstm_forward.1} parent=0 // pred_check_branch
    %25 = sbr.rel (0) target = $region25
  $region24: #{bilstm_forward.1} parent=0 // pred_region
    _
  $region25: #{bilstm_forward.1} parent=0 // pred_fallthru
    _
  // Predicated region
  $region26: #{bilstm_forward.1} parent=0 // pred_check
    _
  $region27: #{bilstm_forward.1} parent=0 // pred_check_branch
    %27 = sbr.rel (0) target = $region29
  $region28: #{bilstm_forward.1} parent=0 // pred_region
    _
  $region29: #{bilstm_forward.1} parent=0 // pred_fallthru
    _
  // Predicated region
  $region30: #{bilstm_forward.1} parent=0 // pred_check
    _
  $region31: #{bilstm_forward.1} parent=0 // pred_check_branch
    %29 = sbr.rel (0) target = $region33
  $region32: #{bilstm_forward.1} parent=0 // pred_region
    _
  $region33: #{bilstm_forward.1} parent=0 // pred_fallthru
    _
  // Predicated region
  $region34: #{bilstm_forward.1} parent=0 // pred_check
    _
  $region35: #{bilstm_forward.1} parent=0 // pred_check_branch
    %31 = sbr.rel (0) target = $region37
  $region36: #{bilstm_forward.1} parent=0 // pred_region
    _
  $region37: #{bilstm_forward.1} parent=0 // pred_fallthru
    _
  %v33 = vld [vmem:[%s0] sm:$0xf]
  %v34 = vld [vmem:[%s0 + $0x4] sm:$0xf]
  %v35 = vld [vmem:[%s0 + $0x8] sm:$0xf]
  %v36 = vld [vmem:[%s0 + $0xc] sm:$0xf]
  %v37 = vld [vmem:[%s0 + $0x10] sm:$0xf]
  %v38 = vld [vmem:[%s0 + $0x14] sm:$0xf]
  %v39 = vld [vmem:[%s0 + $0x18] sm:$0xf]
  %v40 = vld [vmem:[%s0 + $0x1c] sm:$0xf]
  %v41 = vld [vmem:[%s2] sm:$0xff]
  %v42 = vld [vmem:[%s2 + $0x8] sm:$0xff]
  %v43 = vld [vmem:[%s2 + $0x10] sm:$0xff]
  %v44 = vld [vmem:[%s2 + $0x18] sm:$0xff]
  %v45 = vld [vmem:[%s2 + $0x20] sm:$0xff]
  %v46 = vld [vmem:[%s2 + $0x28] sm:$0xff]
  %v47 = vld [vmem:[%s2 + $0x30] sm:$0xff]
  %v48 = vld [vmem:[%s2 + $0x38] sm:$0xff]
  %v49 = vld [vmem:[%s2 + $0x40] sm:$0xff]
  %v50 = vld [vmem:[%s2 + $0x48] sm:$0xff]
  %v51 = vld [vmem:[%s2 + $0x50] sm:$0xff]
  %v52 = vld [vmem:[%s2 + $0x58] sm:$0xff]
  %v53 = vld [vmem:[%s2 + $0x60] sm:$0xff]
  %v54 = vld [vmem:[%s2 + $0x68] sm:$0xff]
  %v55 = vld [vmem:[%s2 + $0x70] sm:$0xff]
  %v56 = vld [vmem:[%s2 + $0x78] sm:$0xff]
  %v57 = vld [vmem:[%s2 + $0x80] sm:$0xff]
  %v58 = vld [vmem:[%s2 + $0x88] sm:$0xff]
  %v59 = vld [vmem:[%s2 + $0x90] sm:$0xff]
  %v60 = vld [vmem:[%s2 + $0x98] sm:$0xff]
  %v61 = vld [vmem:[%s2 + $0xa0] sm:$0xff]
  %v62 = vld [vmem:[%s2 + $0xa8] sm:$0xff]
  %v63 = vld [vmem:[%s2 + $0xb0] sm:$0xff]
  %v64 = vld [vmem:[%s2 + $0xb8] sm:$0xff]
  %v65 = vld [vmem:[%s2 + $0xc0] sm:$0xff]
  %v66 = vld [vmem:[%s2 + $0xc8] sm:$0xff]
  %v67 = vld [vmem:[%s2 + $0xd0] sm:$0xff]
  %v68 = vld [vmem:[%s2 + $0xd8] sm:$0xff]
  %v69 = vld [vmem:[%s2 + $0xe0] sm:$0xff]
  %v70 = vld [vmem:[%s2 + $0xe8] sm:$0xff]
  %v71 = vld [vmem:[%s2 + $0xf0] sm:$0xff]
  %v72 = vld [vmem:[%s2 + $0xf8] sm:$0xff]
  %v73 = vld [vmem:[%s2 + $0x100] sm:$0xff]
  %v74 = vld [vmem:[%s2 + $0x108] sm:$0xff]
  %v75 = vld [vmem:[%s2 + $0x110] sm:$0xff]
  %v76 = vld [vmem:[%s2 + $0x118] sm:$0xff]
  %v77 = vld [vmem:[%s2 + $0x120] sm:$0xff]
  %v78 = vld [vmem:[%s2 + $0x128] sm:$0xff]
  %v79 = vld [vmem:[%s2 + $0x130] sm:$0xff]
  %v80 = vld [vmem:[%s2 + $0x138] sm:$0xff]
  %v81 = vld [vmem:[%s2 + $0x140] sm:$0xff]
  %v82 = vld [vmem:[%s2 + $0x148] sm:$0xff]
  %v83 = vld [vmem:[%s2 + $0x150] sm:$0xff]
  %v84 = vld [vmem:[%s2 + $0x158] sm:$0xff]
  %v85 = vld [vmem:[%s2 + $0x160] sm:$0xff]
  %v86 = vld [vmem:[%s2 + $0x168] sm:$0xff]
  %v87 = vld [vmem:[%s2 + $0x170] sm:$0xff]
  %v88 = vld [vmem:[%s2 + $0x178] sm:$0xff]
  %v89 = vld [vmem:[%s2 + $0x180] sm:$0xff]
  %v90 = vld [vmem:[%s2 + $0x188] sm:$0xff]
  %v91 = vld [vmem:[%s2 + $0x190] sm:$0xff]
  %v92 = vld [vmem:[%s2 + $0x198] sm:$0xff]
  %v93 = vld [vmem:[%s2 + $0x1a0] sm:$0xff]
  %v94 = vld [vmem:[%s2 + $0x1a8] sm:$0xff]
  %v95 = vld [vmem:[%s2 + $0x1b0] sm:$0xff]
  %v96 = vld [vmem:[%s2 + $0x1b8] sm:$0xff]
  %v97 = vld [vmem:[%s2 + $0x1c0] sm:$0xff]
  %v98 = vld [vmem:[%s2 + $0x1c8] sm:$0xff]
  %v99 = vld [vmem:[%s2 + $0x1d0] sm:$0xff]
  %v100 = vld [vmem:[%s2 + $0x1d8] sm:$0xff]
  %v101 = vld [vmem:[%s2 + $0x1e0] sm:$0xff]
  %v102 = vld [vmem:[%s2 + $0x1e8] sm:$0xff]
  %v103 = vld [vmem:[%s2 + $0x1f0] sm:$0xff]
  %v104 = vld [vmem:[%s2 + $0x1f8] sm:$0xff]
  %v105 = vld [vmem:[%s3] sm:$0xff]
  %v107 = vlaneseq
  %v108 = vshrl.u32 %v107, 7
  %v109 = vsub.s32 0, %v108
  %v110 = vrot.slane %v105, %v109
  %v111 = vlaneseq
  %v112 = vshrl.u32 %v111, 7
  %v113 = vsub.s32 1, %v112
  %v114 = vrot.slane %v105, %v113
  %v115 = vlaneseq
  %v116 = vshrl.u32 %v115, 7
  %v117 = vsub.s32 2, %v116
  %v118 = vrot.slane %v105, %v117
  %v119 = vlaneseq
  %v120 = vshrl.u32 %v119, 7
  %v121 = vsub.s32 3, %v120
  %v122 = vrot.slane %v105, %v121
  %v123 = vlaneseq
  %v124 = vshrl.u32 %v123, 7
  %v125 = vsub.s32 4, %v124
  %v126 = vrot.slane %v105, %v125
  %v127 = vlaneseq
  %v128 = vshrl.u32 %v127, 7
  %v129 = vsub.s32 5, %v128
  %v130 = vrot.slane %v105, %v129
  %v131 = vlaneseq
  %v132 = vshrl.u32 %v131, 7
  %v133 = vsub.s32 6, %v132
  %v134 = vrot.slane %v105, %v133
  %v135 = vlaneseq
  %v136 = vshrl.u32 %v135, 7
  %v137 = vsub.s32 7, %v136
  %v138 = vrot.slane %v105, %v137
  %v155 = vunpack.c.l.b16 %v33
  %v156 = vunpack.c.l.b16 %v34
  %v157 = vunpack.c.l.b16 %v35
  %v158 = vunpack.c.l.b16 %v36
  %v159 = vunpack.c.l.b16 %v37
  %v160 = vunpack.c.l.b16 %v38
  %v161 = vunpack.c.l.b16 %v39
  %v162 = vunpack.c.l.b16 %v40
  %v163 = vpack.c.b16 %v156, %v155
  %v164 = vpack.c.b16 %v158, %v157
  %v165 = vpack.c.b16 %v160, %v159
  %v166 = vpack.c.b16 %v162, %v161
  %v235 = vunpack.c.l.b16 %v41
  %v236 = vunpack.c.h.b16 %v41
  %v237 = vunpack.c.l.b16 %v42
  %v238 = vunpack.c.h.b16 %v42
  %v239 = vunpack.c.l.b16 %v43
  %v240 = vunpack.c.h.b16 %v43
  %v241 = vunpack.c.l.b16 %v44
  %v242 = vunpack.c.h.b16 %v44
  %v243 = vunpack.c.l.b16 %v45
  %v244 = vunpack.c.h.b16 %v45
  %v245 = vunpack.c.l.b16 %v46
  %v246 = vunpack.c.h.b16 %v46
  %v247 = vunpack.c.l.b16 %v47
  %v248 = vunpack.c.h.b16 %v47
  %v249 = vunpack.c.l.b16 %v48
  %v250 = vunpack.c.h.b16 %v48
  %v251 = vunpack.c.l.b16 %v49
  %v252 = vunpack.c.h.b16 %v49
  %v253 = vunpack.c.l.b16 %v50
  %v254 = vunpack.c.h.b16 %v50
  %v255 = vunpack.c.l.b16 %v51
  %v256 = vunpack.c.h.b16 %v51
  %v257 = vunpack.c.l.b16 %v52
  %v258 = vunpack.c.h.b16 %v52
  %v259 = vunpack.c.l.b16 %v53
  %v260 = vunpack.c.h.b16 %v53
  %v261 = vunpack.c.l.b16 %v54
  %v262 = vunpack.c.h.b16 %v54
  %v263 = vunpack.c.l.b16 %v55
  %v264 = vunpack.c.h.b16 %v55
  %v265 = vunpack.c.l.b16 %v56
  %v266 = vunpack.c.h.b16 %v56
  %v267 = vunpack.c.l.b16 %v57
  %v268 = vunpack.c.h.b16 %v57
  %v269 = vunpack.c.l.b16 %v58
  %v270 = vunpack.c.h.b16 %v58
  %v271 = vunpack.c.l.b16 %v59
  %v272 = vunpack.c.h.b16 %v59
  %v273 = vunpack.c.l.b16 %v60
  %v274 = vunpack.c.h.b16 %v60
  %v275 = vunpack.c.l.b16 %v61
  %v276 = vunpack.c.h.b16 %v61
  %v277 = vunpack.c.l.b16 %v62
  %v278 = vunpack.c.h.b16 %v62
  %v279 = vunpack.c.l.b16 %v63
  %v280 = vunpack.c.h.b16 %v63
  %v281 = vunpack.c.l.b16 %v64
  %v282 = vunpack.c.h.b16 %v64
  %v283 = vunpack.c.l.b16 %v65
  %v284 = vunpack.c.h.b16 %v65
  %v285 = vunpack.c.l.b16 %v66
  %v286 = vunpack.c.h.b16 %v66
  %v287 = vunpack.c.l.b16 %v67
  %v288 = vunpack.c.h.b16 %v67
  %v289 = vunpack.c.l.b16 %v68
  %v290 = vunpack.c.h.b16 %v68
  %v291 = vunpack.c.l.b16 %v69
  %v292 = vunpack.c.h.b16 %v69
  %v293 = vunpack.c.l.b16 %v70
  %v294 = vunpack.c.h.b16 %v70
  %v295 = vunpack.c.l.b16 %v71
  %v296 = vunpack.c.h.b16 %v71
  %v297 = vunpack.c.l.b16 %v72
  %v298 = vunpack.c.h.b16 %v72
  %v299 = vunpack.c.l.b16 %v73
  %v300 = vunpack.c.h.b16 %v73
  %v301 = vunpack.c.l.b16 %v74
  %v302 = vunpack.c.h.b16 %v74
  %v303 = vunpack.c.l.b16 %v75
  %v304 = vunpack.c.h.b16 %v75
  %v305 = vunpack.c.l.b16 %v76
  %v306 = vunpack.c.h.b16 %v76
  %v307 = vunpack.c.l.b16 %v77
  %v308 = vunpack.c.h.b16 %v77
  %v309 = vunpack.c.l.b16 %v78
  %v310 = vunpack.c.h.b16 %v78
  %v311 = vunpack.c.l.b16 %v79
  %v312 = vunpack.c.h.b16 %v79
  %v313 = vunpack.c.l.b16 %v80
  %v314 = vunpack.c.h.b16 %v80
  %v315 = vunpack.c.l.b16 %v81
  %v316 = vunpack.c.h.b16 %v81
  %v317 = vunpack.c.l.b16 %v82
  %v318 = vunpack.c.h.b16 %v82
  %v319 = vunpack.c.l.b16 %v83
  %v320 = vunpack.c.h.b16 %v83
  %v321 = vunpack.c.l.b16 %v84
  %v322 = vunpack.c.h.b16 %v84
  %v323 = vunpack.c.l.b16 %v85
  %v324 = vunpack.c.h.b16 %v85
  %v325 = vunpack.c.l.b16 %v86
  %v326 = vunpack.c.h.b16 %v86
  %v327 = vunpack.c.l.b16 %v87
  %v328 = vunpack.c.h.b16 %v87
  %v329 = vunpack.c.l.b16 %v88
  %v330 = vunpack.c.h.b16 %v88
  %v331 = vunpack.c.l.b16 %v89
  %v332 = vunpack.c.h.b16 %v89
  %v333 = vunpack.c.l.b16 %v90
  %v334 = vunpack.c.h.b16 %v90
  %v335 = vunpack.c.l.b16 %v91
  %v336 = vunpack.c.h.b16 %v91
  %v337 = vunpack.c.l.b16 %v92
  %v338 = vunpack.c.h.b16 %v92
  %v339 = vunpack.c.l.b16 %v93
  %v340 = vunpack.c.h.b16 %v93
  %v341 = vunpack.c.l.b16 %v94
  %v342 = vunpack.c.h.b16 %v94
  %v343 = vunpack.c.l.b16 %v95
  %v344 = vunpack.c.h.b16 %v95
  %v345 = vunpack.c.l.b16 %v96
  %v346 = vunpack.c.h.b16 %v96
  %v347 = vunpack.c.l.b16 %v97
  %v348 = vunpack.c.h.b16 %v97
  %v349 = vunpack.c.l.b16 %v98
  %v350 = vunpack.c.h.b16 %v98
  %v351 = vunpack.c.l.b16 %v99
  %v352 = vunpack.c.h.b16 %v99
  %v353 = vunpack.c.l.b16 %v100
  %v354 = vunpack.c.h.b16 %v100
  %v355 = vunpack.c.l.b16 %v101
  %v356 = vunpack.c.h.b16 %v101
  %v357 = vunpack.c.l.b16 %v102
  %v358 = vunpack.c.h.b16 %v102
  %v359 = vunpack.c.l.b16 %v103
  %v360 = vunpack.c.h.b16 %v103
  %v361 = vunpack.c.l.b16 %v104
  %v362 = vunpack.c.h.b16 %v104
  %v363 = vpack.c.b16 %v243, %v235
  %v364 = vpack.c.b16 %v244, %v236
  %v365 = vpack.c.b16 %v245, %v237
  %v366 = vpack.c.b16 %v246, %v238
  %v367 = vpack.c.b16 %v247, %v239
  %v368 = vpack.c.b16 %v248, %v240
  %v369 = vpack.c.b16 %v249, %v241
  %v370 = vpack.c.b16 %v250, %v242
  %v371 = vpack.c.b16 %v259, %v251
  %v372 = vpack.c.b16 %v260, %v252
  %v373 = vpack.c.b16 %v261, %v253
  %v374 = vpack.c.b16 %v262, %v254
  %v375 = vpack.c.b16 %v263, %v255
  %v376 = vpack.c.b16 %v264, %v256
  %v377 = vpack.c.b16 %v265, %v257
  %v378 = vpack.c.b16 %v266, %v258
  %v379 = vpack.c.b16 %v275, %v267
  %v380 = vpack.c.b16 %v276, %v268
  %v381 = vpack.c.b16 %v277, %v269
  %v382 = vpack.c.b16 %v278, %v270
  %v383 = vpack.c.b16 %v279, %v271
  %v384 = vpack.c.b16 %v280, %v272
  %v385 = vpack.c.b16 %v281, %v273
  %v386 = vpack.c.b16 %v282, %v274
  %v387 = vpack.c.b16 %v291, %v283
  %v388 = vpack.c.b16 %v292, %v284
  %v389 = vpack.c.b16 %v293, %v285
  %v390 = vpack.c.b16 %v294, %v286
  %v391 = vpack.c.b16 %v295, %v287
  %v392 = vpack.c.b16 %v296, %v288
  %v393 = vpack.c.b16 %v297, %v289
  %v394 = vpack.c.b16 %v298, %v290
  %v395 = vpack.c.b16 %v307, %v299
  %v396 = vpack.c.b16 %v308, %v300
  %v397 = vpack.c.b16 %v309, %v301
  %v398 = vpack.c.b16 %v310, %v302
  %v399 = vpack.c.b16 %v311, %v303
  %v400 = vpack.c.b16 %v312, %v304
  %v401 = vpack.c.b16 %v313, %v305
  %v402 = vpack.c.b16 %v314, %v306
  %v403 = vpack.c.b16 %v323, %v315
  %v404 = vpack.c.b16 %v324, %v316
  %v405 = vpack.c.b16 %v325, %v317
  %v406 = vpack.c.b16 %v326, %v318
  %v407 = vpack.c.b16 %v327, %v319
  %v408 = vpack.c.b16 %v328, %v320
  %v409 = vpack.c.b16 %v329, %v321
  %v410 = vpack.c.b16 %v330, %v322
  %v411 = vpack.c.b16 %v339, %v331
  %v412 = vpack.c.b16 %v340, %v332
  %v413 = vpack.c.b16 %v341, %v333
  %v414 = vpack.c.b16 %v342, %v334
  %v415 = vpack.c.b16 %v343, %v335
  %v416 = vpack.c.b16 %v344, %v336
  %v417 = vpack.c.b16 %v345, %v337
  %v418 = vpack.c.b16 %v346, %v338
  %v419 = vpack.c.b16 %v355, %v347
  %v420 = vpack.c.b16 %v356, %v348
  %v421 = vpack.c.b16 %v357, %v349
  %v422 = vpack.c.b16 %v358, %v350
  %v423 = vpack.c.b16 %v359, %v351
  %v424 = vpack.c.b16 %v360, %v352
  %v425 = vpack.c.b16 %v361, %v353
  %v426 = vpack.c.b16 %v362, %v354
  %491 = vmatprep.subr.bf16.mxu0 %v364
  %492 = vmatpush1.bf16.msra.mxu0 %v363
  %493 = vmatprep.subr.bf16.mxu0 %v372
  %494 = vmatpush1.bf16.msra.mxu0 %v371
  %495 = vmatprep.subr.bf16.mxu0 %v380
  %496 = vmatpush1.bf16.msra.mxu0 %v379
  %497 = vmatprep.subr.bf16.mxu0 %v388
  %498 = vmatpush1.bf16.msra.mxu0 %v387
  %499 = vmatprep.subr.bf16.mxu0 %v396
  %500 = vmatpush1.bf16.msra.mxu0 %v395
  %501 = vmatprep.subr.bf16.mxu0 %v404
  %502 = vmatpush1.bf16.msra.mxu0 %v403
  %503 = vmatprep.subr.bf16.mxu0 %v412
  %504 = vmatpush1.bf16.msra.mxu0 %v411
  %505 = vmatprep.subr.bf16.mxu0 %v420
  %506 = vmatpush1.bf16.msra.mxu0 %v419
  %507 = vmatprep.subr.bf16.mxu0 0
  %508 = vmatpush1.bf16.msra.mxu0 0
  %509 = vmatprep.subr.bf16.mxu0 0
  %510 = vmatpush1.bf16.msra.mxu0 0
  %511 = vmatprep.subr.bf16.mxu0 0
  %512 = vmatpush1.bf16.msra.mxu0 0
  %513 = vmatprep.subr.bf16.mxu0 0
  %514 = vmatpush1.bf16.msra.mxu0 0
  %515 = vmatprep.subr.bf16.mxu0 0
  %516 = vmatpush1.bf16.msra.mxu0 0
  %517 = vmatprep.subr.bf16.mxu0 0
  %518 = vmatpush1.bf16.msra.mxu0 0
  %519 = vmatprep.subr.bf16.mxu0 0
  %520 = vmatpush1.bf16.msra.mxu0 0
  %521 = vmatprep.subr.bf16.mxu0 0
  %522 = vmatpush1.bf16.msra.mxu0 0
  %523 = vmatprep.mubr.bf16.mxu0 0
  %524 = vmatmul.mubr.bf16.gmra.mrb[0].mxu0 %v163
  %v525 = vpop.f32.mrb[0].mxu0
  %v526 = vadd.f32 %v110, %v525
  %v527 = vpop.f32.mrb[0].mxu0
  %v528 = vadd.f32 %v114, %v527
  %v529 = vpop.f32.mrb[0].mxu0
  %v530 = vadd.f32 %v110, %v529
  %v531 = vpop.f32.mrb[0].mxu0
  %v532 = vadd.f32 %v114, %v531
  %533 = vmatprep.mubr.bf16.mxu0 0
  %534 = vmatmul.mubr.bf16.gmra.mrb[0].mxu0 %v164
  %v535 = vpop.f32.mrb[0].mxu0
  %v536 = vadd.f32 %v110, %v535
  %v537 = vpop.f32.mrb[0].mxu0
  %v538 = vadd.f32 %v114, %v537
  %v539 = vpop.f32.mrb[0].mxu0
  %v540 = vadd.f32 %v110, %v539
  %v541 = vpop.f32.mrb[0].mxu0
  %v542 = vadd.f32 %v114, %v541
  %543 = vmatprep.mubr.bf16.mxu0 0
  %544 = vmatmul.mubr.bf16.gmra.mrb[0].mxu0 %v165
  %v545 = vpop.f32.mrb[0].mxu0
  %v546 = vadd.f32 %v110, %v545
  %v547 = vpop.f32.mrb[0].mxu0
  %v548 = vadd.f32 %v114, %v547
  %v549 = vpop.f32.mrb[0].mxu0
  %v550 = vadd.f32 %v110, %v549
  %v551 = vpop.f32.mrb[0].mxu0
  %v552 = vadd.f32 %v114, %v551
  %553 = vmatprep.mubr.bf16.mxu0 0
  %554 = vmatmul.mubr.bf16.gmra.mrb[0].mxu0 %v166
  %v555 = vpop.f32.mrb[0].mxu0
  %v556 = vadd.f32 %v110, %v555
  %v557 = vpop.f32.mrb[0].mxu0
  %v558 = vadd.f32 %v114, %v557
  %v559 = vpop.f32.mrb[0].mxu0
  %v560 = vadd.f32 %v110, %v559
  %v561 = vpop.f32.mrb[0].mxu0
  %v562 = vadd.f32 %v114, %v561
  %563 = vdwg.mxu0
  %564 = vmatprep.subr.bf16.mxu0 %v366
  %565 = vmatpush1.bf16.msra.mxu0 %v365
  %566 = vmatprep.subr.bf16.mxu0 %v374
  %567 = vmatpush1.bf16.msra.mxu0 %v373
  %568 = vmatprep.subr.bf16.mxu0 %v382
  %569 = vmatpush1.bf16.msra.mxu0 %v381
  %570 = vmatprep.subr.bf16.mxu0 %v390
  %571 = vmatpush1.bf16.msra.mxu0 %v389
  %572 = vmatprep.subr.bf16.mxu0 %v398
  %573 = vmatpush1.bf16.msra.mxu0 %v397
  %574 = vmatprep.subr.bf16.mxu0 %v406
  %575 = vmatpush1.bf16.msra.mxu0 %v405
  %576 = vmatprep.subr.bf16.mxu0 %v414
  %577 = vmatpush1.bf16.msra.mxu0 %v413
  %578 = vmatprep.subr.bf16.mxu0 %v422
  %579 = vmatpush1.bf16.msra.mxu0 %v421
  %580 = vmatprep.subr.bf16.mxu0 0
  %581 = vmatpush1.bf16.msra.mxu0 0
  %582 = vmatprep.subr.bf16.mxu0 0
  %583 = vmatpush1.bf16.msra.mxu0 0
  %584 = vmatprep.subr.bf16.mxu0 0
  %585 = vmatpush1.bf16.msra.mxu0 0
  %586 = vmatprep.subr.bf16.mxu0 0
  %587 = vmatpush1.bf16.msra.mxu0 0
  %588 = vmatprep.subr.bf16.mxu0 0
  %589 = vmatpush1.bf16.msra.mxu0 0
  %590 = vmatprep.subr.bf16.mxu0 0
  %591 = vmatpush1.bf16.msra.mxu0 0
  %592 = vmatprep.subr.bf16.mxu0 0
  %593 = vmatpush1.bf16.msra.mxu0 0
  %594 = vmatprep.subr.bf16.mxu0 0
  %595 = vmatpush1.bf16.msra.mxu0 0
  %596 = vmatprep.mubr.bf16.mxu0 0
  %597 = vmatmul.mubr.bf16.gmra.mrb[0].mxu0 %v163
  %v598 = vpop.f32.mrb[0].mxu0
  %v599 = vadd.f32 %v118, %v598
  %v600 = vpop.f32.mrb[0].mxu0
  %v601 = vadd.f32 %v122, %v600
  %v602 = vpop.f32.mrb[0].mxu0
  %v603 = vadd.f32 %v118, %v602
  %v604 = vpop.f32.mrb[0].mxu0
  %v605 = vadd.f32 %v122, %v604
  %606 = vmatprep.mubr.bf16.mxu0 0
  %607 = vmatmul.mubr.bf16.gmra.mrb[0].mxu0 %v164
  %v608 = vpop.f32.mrb[0].mxu0
  %v609 = vadd.f32 %v118, %v608
  %v610 = vpop.f32.mrb[0].mxu0
  %v611 = vadd.f32 %v122, %v610
  %v612 = vpop.f32.mrb[0].mxu0
  %v613 = vadd.f32 %v118, %v612
  %v614 = vpop.f32.mrb[0].mxu0
  %v615 = vadd.f32 %v122, %v614
  %616 = vmatprep.mubr.bf16.mxu0 0
  %617 = vmatmul.mubr.bf16.gmra.mrb[0].mxu0 %v165
  %v618 = vpop.f32.mrb[0].mxu0
  %v619 = vadd.f32 %v118, %v618
  %v620 = vpop.f32.mrb[0].mxu0
  %v621 = vadd.f32 %v122, %v620
  %v622 = vpop.f32.mrb[0].mxu0
  %v623 = vadd.f32 %v118, %v622
  %v624 = vpop.f32.mrb[0].mxu0
  %v625 = vadd.f32 %v122, %v624
  %626 = vmatprep.mubr.bf16.mxu0 0
  %627 = vmatmul.mubr.bf16.gmra.mrb[0].mxu0 %v166
  %v628 = vpop.f32.mrb[0].mxu0
  %v629 = vadd.f32 %v118, %v628
  %v630 = vpop.f32.mrb[0].mxu0
  %v631 = vadd.f32 %v122, %v630
  %v632 = vpop.f32.mrb[0].mxu0
  %v633 = vadd.f32 %v118, %v632
  %v634 = vpop.f32.mrb[0].mxu0
  %v635 = vadd.f32 %v122, %v634
  %636 = vdwg.mxu0
  %637 = vmatprep.subr.bf16.mxu0 %v368
  %638 = vmatpush1.bf16.msra.mxu0 %v367
  %639 = vmatprep.subr.bf16.mxu0 %v376
  %640 = vmatpush1.bf16.msra.mxu0 %v375
  %641 = vmatprep.subr.bf16.mxu0 %v384
  %642 = vmatpush1.bf16.msra.mxu0 %v383
  %643 = vmatprep.subr.bf16.mxu0 %v392
  %644 = vmatpush1.bf16.msra.mxu0 %v391
  %645 = vmatprep.subr.bf16.mxu0 %v400
  %646 = vmatpush1.bf16.msra.mxu0 %v399
  %647 = vmatprep.subr.bf16.mxu0 %v408
  %648 = vmatpush1.bf16.msra.mxu0 %v407
  %649 = vmatprep.subr.bf16.mxu0 %v416
  %650 = vmatpush1.bf16.msra.mxu0 %v415
  %651 = vmatprep.subr.bf16.mxu0 %v424
  %652 = vmatpush1.bf16.msra.mxu0 %v423
  %653 = vmatprep.subr.bf16.mxu0 0
  %654 = vmatpush1.bf16.msra.mxu0 0
  %655 = vmatprep.subr.bf16.mxu0 0
  %656 = vmatpush1.bf16.msra.mxu0 0
  %657 = vmatprep.subr.bf16.mxu0 0
  %658 = vmatpush1.bf16.msra.mxu0 0
  %659 = vmatprep.subr.bf16.mxu0 0
  %660 = vmatpush1.bf16.msra.mxu0 0
  %661 = vmatprep.subr.bf16.mxu0 0
  %662 = vmatpush1.bf16.msra.mxu0 0
  %663 = vmatprep.subr.bf16.mxu0 0
  %664 = vmatpush1.bf16.msra.mxu0 0
  %665 = vmatprep.subr.bf16.mxu0 0
  %666 = vmatpush1.bf16.msra.mxu0 0
  %667 = vmatprep.subr.bf16.mxu0 0
  %668 = vmatpush1.bf16.msra.mxu0 0
  %669 = vmatprep.mubr.bf16.mxu0 0
  %670 = vmatmul.mubr.bf16.gmra.mrb[0].mxu0 %v163
  %v671 = vpop.f32.mrb[0].mxu0
  %v672 = vadd.f32 %v126, %v671
  %v673 = vpop.f32.mrb[0].mxu0
  %v674 = vadd.f32 %v130, %v673
  %v675 = vpop.f32.mrb[0].mxu0
  %v676 = vadd.f32 %v126, %v675
  %v677 = vpop.f32.mrb[0].mxu0
  %v678 = vadd.f32 %v130, %v677
  %679 = vmatprep.mubr.bf16.mxu0 0
  %680 = vmatmul.mubr.bf16.gmra.mrb[0].mxu0 %v164
  %v681 = vpop.f32.mrb[0].mxu0
  %v682 = vadd.f32 %v126, %v681
  %v683 = vpop.f32.mrb[0].mxu0
  %v684 = vadd.f32 %v130, %v683
  %v685 = vpop.f32.mrb[0].mxu0
  %v686 = vadd.f32 %v126, %v685
  %v687 = vpop.f32.mrb[0].mxu0
  %v688 = vadd.f32 %v130, %v687
  %689 = vmatprep.mubr.bf16.mxu0 0
  %690 = vmatmul.mubr.bf16.gmra.mrb[0].mxu0 %v165
  %v691 = vpop.f32.mrb[0].mxu0
  %v692 = vadd.f32 %v126, %v691
  %v693 = vpop.f32.mrb[0].mxu0
  %v694 = vadd.f32 %v130, %v693
  %v695 = vpop.f32.mrb[0].mxu0
  %v696 = vadd.f32 %v126, %v695
  %v697 = vpop.f32.mrb[0].mxu0
  %v698 = vadd.f32 %v130, %v697
  %699 = vmatprep.mubr.bf16.mxu0 0
  %700 = vmatmul.mubr.bf16.gmra.mrb[0].mxu0 %v166
  %v701 = vpop.f32.mrb[0].mxu0
  %v702 = vadd.f32 %v126, %v701
  %v703 = vpop.f32.mrb[0].mxu0
  %v704 = vadd.f32 %v130, %v703
  %v705 = vpop.f32.mrb[0].mxu0
  %v706 = vadd.f32 %v126, %v705
  %v707 = vpop.f32.mrb[0].mxu0
  %v708 = vadd.f32 %v130, %v707
  %709 = vdwg.mxu0
  %710 = vmatprep.subr.bf16.mxu0 %v370
  %711 = vmatpush1.bf16.msra.mxu0 %v369
  %712 = vmatprep.subr.bf16.mxu0 %v378
  %713 = vmatpush1.bf16.msra.mxu0 %v377
  %714 = vmatprep.subr.bf16.mxu0 %v386
  %715 = vmatpush1.bf16.msra.mxu0 %v385
  %716 = vmatprep.subr.bf16.mxu0 %v394
  %717 = vmatpush1.bf16.msra.mxu0 %v393
  %718 = vmatprep.subr.bf16.mxu0 %v402
  %719 = vmatpush1.bf16.msra.mxu0 %v401
  %720 = vmatprep.subr.bf16.mxu0 %v410
  %721 = vmatpush1.bf16.msra.mxu0 %v409
  %722 = vmatprep.subr.bf16.mxu0 %v418
  %723 = vmatpush1.bf16.msra.mxu0 %v417
  %724 = vmatprep.subr.bf16.mxu0 %v426
  %725 = vmatpush1.bf16.msra.mxu0 %v425
  %726 = vmatprep.subr.bf16.mxu0 0
  %727 = vmatpush1.bf16.msra.mxu0 0
  %728 = vmatprep.subr.bf16.mxu0 0
  %729 = vmatpush1.bf16.msra.mxu0 0
  %730 = vmatprep.subr.bf16.mxu0 0
  %731 = vmatpush1.bf16.msra.mxu0 0
  %732 = vmatprep.subr.bf16.mxu0 0
  %733 = vmatpush1.bf16.msra.mxu0 0
  %734 = vmatprep.subr.bf16.mxu0 0
  %735 = vmatpush1.bf16.msra.mxu0 0
  %736 = vmatprep.subr.bf16.mxu0 0
  %737 = vmatpush1.bf16.msra.mxu0 0
  %738 = vmatprep.subr.bf16.mxu0 0
  %739 = vmatpush1.bf16.msra.mxu0 0
  %740 = vmatprep.subr.bf16.mxu0 0
  %741 = vmatpush1.bf16.msra.mxu0 0
  %742 = vmatprep.mubr.bf16.mxu0 0
  %743 = vmatmul.mubr.bf16.gmra.mrb[0].mxu0 %v163
  %v744 = vpop.f32.mrb[0].mxu0
  %v745 = vadd.f32 %v134, %v744
  %v746 = vpop.f32.mrb[0].mxu0
  %v747 = vadd.f32 %v138, %v746
  %v748 = vpop.f32.mrb[0].mxu0
  %v749 = vadd.f32 %v134, %v748
  %v750 = vpop.f32.mrb[0].mxu0
  %v751 = vadd.f32 %v138, %v750
  %752 = vmatprep.mubr.bf16.mxu0 0
  %753 = vmatmul.mubr.bf16.gmra.mrb[0].mxu0 %v164
  %v754 = vpop.f32.mrb[0].mxu0
  %v755 = vadd.f32 %v134, %v754
  %v756 = vpop.f32.mrb[0].mxu0
  %v757 = vadd.f32 %v138, %v756
  %v758 = vpop.f32.mrb[0].mxu0
  %v759 = vadd.f32 %v134, %v758
  %v760 = vpop.f32.mrb[0].mxu0
  %v761 = vadd.f32 %v138, %v760
  %762 = vmatprep.mubr.bf16.mxu0 0
  %763 = vmatmul.mubr.bf16.gmra.mrb[0].mxu0 %v165
  %v764 = vpop.f32.mrb[0].mxu0
  %v765 = vadd.f32 %v134, %v764
  %v766 = vpop.f32.mrb[0].mxu0
  %v767 = vadd.f32 %v138, %v766
  %v768 = vpop.f32.mrb[0].mxu0
  %v769 = vadd.f32 %v134, %v768
  %v770 = vpop.f32.mrb[0].mxu0
  %v771 = vadd.f32 %v138, %v770
  %772 = vmatprep.mubr.bf16.mxu0 0
  %773 = vmatmul.mubr.bf16.gmra.mrb[0].mxu0 %v166
  %v774 = vpop.f32.mrb[0].mxu0
  %v775 = vadd.f32 %v134, %v774
  %v776 = vpop.f32.mrb[0].mxu0
  %v777 = vadd.f32 %v138, %v776
  %v778 = vpop.f32.mrb[0].mxu0
  %v779 = vadd.f32 %v134, %v778
  %v780 = vpop.f32.mrb[0].mxu0
  %v781 = vadd.f32 %v138, %v780
  %782 = vdwg.mxu0
  %v783 = vpack.c.bf16 %v530, %v526
  %v784 = vpack.c.bf16 %v532, %v528
  %v785 = vpack.c.bf16 %v603, %v599
  %v786 = vpack.c.bf16 %v605, %v601
  %v787 = vpack.c.bf16 %v676, %v672
  %v788 = vpack.c.bf16 %v678, %v674
  %v789 = vpack.c.bf16 %v749, %v745
  %v790 = vpack.c.bf16 %v751, %v747
  %v791 = vpack.c.bf16 %v540, %v536
  %v792 = vpack.c.bf16 %v542, %v538
  %v793 = vpack.c.bf16 %v613, %v609
  %v794 = vpack.c.bf16 %v615, %v611
  %v795 = vpack.c.bf16 %v686, %v682
  %v796 = vpack.c.bf16 %v688, %v684
  %v797 = vpack.c.bf16 %v759, %v755
  %v798 = vpack.c.bf16 %v761, %v757
  %v799 = vpack.c.bf16 %v550, %v546
  %v800 = vpack.c.bf16 %v552, %v548
  %v801 = vpack.c.bf16 %v623, %v619
  %v802 = vpack.c.bf16 %v625, %v621
  %v803 = vpack.c.bf16 %v696, %v692
  %v804 = vpack.c.bf16 %v698, %v694
  %v805 = vpack.c.bf16 %v769, %v765
  %v806 = vpack.c.bf16 %v771, %v767
  %v807 = vpack.c.bf16 %v560, %v556
  %v808 = vpack.c.bf16 %v562, %v558
  %v809 = vpack.c.bf16 %v633, %v629
  %v810 = vpack.c.bf16 %v635, %v631
  %v811 = vpack.c.bf16 %v706, %v702
  %v812 = vpack.c.bf16 %v708, %v704
  %v813 = vpack.c.bf16 %v779, %v775
  %v814 = vpack.c.bf16 %v781, %v777
  %815 = vst [vmem:[#allocation2] sm:$0xff] %v783
  %816 = vst [vmem:[#allocation2 + $0x8] sm:$0xff] %v784
  %817 = vst [vmem:[#allocation2 + $0x10] sm:$0xff] %v785
  %818 = vst [vmem:[#allocation2 + $0x18] sm:$0xff] %v786
  %819 = vst [vmem:[#allocation2 + $0x20] sm:$0xff] %v787
  %820 = vst [vmem:[#allocation2 + $0x28] sm:$0xff] %v788
  %821 = vst [vmem:[#allocation2 + $0x30] sm:$0xff] %v789
  %822 = vst [vmem:[#allocation2 + $0x38] sm:$0xff] %v790
  %823 = vst [vmem:[#allocation2 + $0x40] sm:$0xff] %v791
  %824 = vst [vmem:[#allocation2 + $0x48] sm:$0xff] %v792
  %825 = vst [vmem:[#allocation2 + $0x50] sm:$0xff] %v793
  %826 = vst [vmem:[#allocation2 + $0x58] sm:$0xff] %v794
  %827 = vst [vmem:[#allocation2 + $0x60] sm:$0xff] %v795
  %828 = vst [vmem:[#allocation2 + $0x68] sm:$0xff] %v796
  %829 = vst [vmem:[#allocation2 + $0x70] sm:$0xff] %v797
  %830 = vst [vmem:[#allocation2 + $0x78] sm:$0xff] %v798
  %831 = vst [vmem:[#allocation2 + $0x80] sm:$0xff] %v799
  %832 = vst [vmem:[#allocation2 + $0x88] sm:$0xff] %v800
  %833 = vst [vmem:[#allocation2 + $0x90] sm:$0xff] %v801
  %834 = vst [vmem:[#allocation2 + $0x98] sm:$0xff] %v802
  %835 = vst [vmem:[#allocation2 + $0xa0] sm:$0xff] %v803
  %836 = vst [vmem:[#allocation2 + $0xa8] sm:$0xff] %v804
  %837 = vst [vmem:[#allocation2 + $0xb0] sm:$0xff] %v805
  %838 = vst [vmem:[#allocation2 + $0xb8] sm:$0xff] %v806
  %839 = vst [vmem:[#allocation2 + $0xc0] sm:$0xff] %v807
  %840 = vst [vmem:[#allocation2 + $0xc8] sm:$0xff] %v808
  %841 = vst [vmem:[#allocation2 + $0xd0] sm:$0xff] %v809
  %842 = vst [vmem:[#allocation2 + $0xd8] sm:$0xff] %v810
  %843 = vst [vmem:[#allocation2 + $0xe0] sm:$0xff] %v811
  %844 = vst [vmem:[#allocation2 + $0xe8] sm:$0xff] %v812
  %845 = vst [vmem:[#allocation2 + $0xf0] sm:$0xff] %v813
  %846 = vst [vmem:[#allocation2 + $0xf8] sm:$0xff] %v814
  %v847 = vld [vmem:[%s1] sm:$0xff]
  %v848 = vld [vmem:[#allocation2] sm:$0xf]
  %v849 = vld [vmem:[#allocation2 + $0x8] sm:$0xf]
  %v850 = vld [vmem:[#allocation2 + $0x10] sm:$0xf]
  %v851 = vld [vmem:[#allocation2 + $0x18] sm:$0xf]
  %v852 = vunpack.c.l.bf16 %v848
  %v853 = vunpack.c.l.bf16 %v849
  %v854 = vunpack.c.l.bf16 %v850
  %v855 = vunpack.c.l.bf16 %v851
  %v856 = vld [vmem:[%s4] sm:$0xff]
  %v857 = vld [vmem:[%s4 + $0x8] sm:$0xff]
  %v858 = vld [vmem:[%s4 + $0x10] sm:$0xff]
  %v859 = vld [vmem:[%s4 + $0x18] sm:$0xff]
  %v860 = vld [vmem:[%s4 + $0x20] sm:$0xff]
  %v861 = vld [vmem:[%s4 + $0x28] sm:$0xff]
  %v862 = vld [vmem:[%s4 + $0x30] sm:$0xff]
  %v863 = vld [vmem:[%s4 + $0x38] sm:$0xff]
  %v864 = vld [vmem:[%s4 + $0x40] sm:$0xff]
  %v865 = vld [vmem:[%s4 + $0x48] sm:$0xff]
  %v866 = vld [vmem:[%s4 + $0x50] sm:$0xff]
  %v867 = vld [vmem:[%s4 + $0x58] sm:$0xff]
  %v868 = vld [vmem:[%s4 + $0x60] sm:$0xff]
  %v869 = vld [vmem:[%s4 + $0x68] sm:$0xff]
  %v870 = vld [vmem:[%s4 + $0x70] sm:$0xff]
  %v871 = vld [vmem:[%s4 + $0x78] sm:$0xff]
  %v872 = vld [vmem:[%s4 + $0x80] sm:$0xff]
  %v873 = vld [vmem:[%s4 + $0x88] sm:$0xff]
  %v874 = vld [vmem:[%s4 + $0x90] sm:$0xff]
  %v875 = vld [vmem:[%s4 + $0x98] sm:$0xff]
  %v876 = vld [vmem:[%s4 + $0xa0] sm:$0xff]
  %v877 = vld [vmem:[%s4 + $0xa8] sm:$0xff]
  %v878 = vld [vmem:[%s4 + $0xb0] sm:$0xff]
  %v879 = vld [vmem:[%s4 + $0xb8] sm:$0xff]
  %v880 = vld [vmem:[%s4 + $0xc0] sm:$0xff]
  %v881 = vld [vmem:[%s4 + $0xc8] sm:$0xff]
  %v882 = vld [vmem:[%s4 + $0xd0] sm:$0xff]
  %v883 = vld [vmem:[%s4 + $0xd8] sm:$0xff]
  %v884 = vld [vmem:[%s4 + $0xe0] sm:$0xff]
  %v885 = vld [vmem:[%s4 + $0xe8] sm:$0xff]
  %v886 = vld [vmem:[%s4 + $0xf0] sm:$0xff]
  %v887 = vld [vmem:[%s4 + $0xf8] sm:$0xff]
  %v920 = vunpack.c.l.b16 %v856
  %v921 = vunpack.c.h.b16 %v856
  %v922 = vunpack.c.l.b16 %v857
  %v923 = vunpack.c.h.b16 %v857
  %v924 = vunpack.c.l.b16 %v858
  %v925 = vunpack.c.h.b16 %v858
  %v926 = vunpack.c.l.b16 %v859
  %v927 = vunpack.c.h.b16 %v859
  %v928 = vunpack.c.l.b16 %v860
  %v929 = vunpack.c.h.b16 %v860
  %v930 = vunpack.c.l.b16 %v861
  %v931 = vunpack.c.h.b16 %v861
  %v932 = vunpack.c.l.b16 %v862
  %v933 = vunpack.c.h.b16 %v862
  %v934 = vunpack.c.l.b16 %v863
  %v935 = vunpack.c.h.b16 %v863
  %v936 = vunpack.c.l.b16 %v864
  %v937 = vunpack.c.h.b16 %v864
  %v938 = vunpack.c.l.b16 %v865
  %v939 = vunpack.c.h.b16 %v865
  %v940 = vunpack.c.l.b16 %v866
  %v941 = vunpack.c.h.b16 %v866
  %v942 = vunpack.c.l.b16 %v867
  %v943 = vunpack.c.h.b16 %v867
  %v944 = vunpack.c.l.b16 %v868
  %v945 = vunpack.c.h.b16 %v868
  %v946 = vunpack.c.l.b16 %v869
  %v947 = vunpack.c.h.b16 %v869
  %v948 = vunpack.c.l.b16 %v870
  %v949 = vunpack.c.h.b16 %v870
  %v950 = vunpack.c.l.b16 %v871
  %v951 = vunpack.c.h.b16 %v871
  %v952 = vunpack.c.l.b16 %v872
  %v953 = vunpack.c.h.b16 %v872
  %v954 = vunpack.c.l.b16 %v873
  %v955 = vunpack.c.h.b16 %v873
  %v956 = vunpack.c.l.b16 %v874
  %v957 = vunpack.c.h.b16 %v874
  %v958 = vunpack.c.l.b16 %v875
  %v959 = vunpack.c.h.b16 %v875
  %v960 = vunpack.c.l.b16 %v876
  %v961 = vunpack.c.h.b16 %v876
  %v962 = vunpack.c.l.b16 %v877
  %v963 = vunpack.c.h.b16 %v877
  %v964 = vunpack.c.l.b16 %v878
  %v965 = vunpack.c.h.b16 %v878
  %v966 = vunpack.c.l.b16 %v879
  %v967 = vunpack.c.h.b16 %v879
  %v968 = vunpack.c.l.b16 %v880
  %v969 = vunpack.c.h.b16 %v880
  %v970 = vunpack.c.l.b16 %v881
  %v971 = vunpack.c.h.b16 %v881
  %v972 = vunpack.c.l.b16 %v882
  %v973 = vunpack.c.h.b16 %v882
  %v974 = vunpack.c.l.b16 %v883
  %v975 = vunpack.c.h.b16 %v883
  %v976 = vunpack.c.l.b16 %v884
  %v977 = vunpack.c.h.b16 %v884
  %v978 = vunpack.c.l.b16 %v885
  %v979 = vunpack.c.h.b16 %v885
  %v980 = vunpack.c.l.b16 %v886
  %v981 = vunpack.c.h.b16 %v886
  %v982 = vunpack.c.l.b16 %v887
  %v983 = vunpack.c.h.b16 %v887
  %v984 = vpack.c.b16 %v924, %v920
  %v985 = vpack.c.b16 %v925, %v921
  %v986 = vpack.c.b16 %v926, %v922
  %v987 = vpack.c.b16 %v927, %v923
  %v988 = vpack.c.b16 %v932, %v928
  %v989 = vpack.c.b16 %v933, %v929
  %v990 = vpack.c.b16 %v934, %v930
  %v991 = vpack.c.b16 %v935, %v931
  %v992 = vpack.c.b16 %v940, %v936
  %v993 = vpack.c.b16 %v941, %v937
  %v994 = vpack.c.b16 %v942, %v938
  %v995 = vpack.c.b16 %v943, %v939
  %v996 = vpack.c.b16 %v948, %v944
  %v997 = vpack.c.b16 %v949, %v945
  %v998 = vpack.c.b16 %v950, %v946
  %v999 = vpack.c.b16 %v951, %v947
  %v1000 = vpack.c.b16 %v956, %v952
  %v1001 = vpack.c.b16 %v957, %v953
  %v1002 = vpack.c.b16 %v958, %v954
  %v1003 = vpack.c.b16 %v959, %v955
  %v1004 = vpack.c.b16 %v964, %v960
  %v1005 = vpack.c.b16 %v965, %v961
  %v1006 = vpack.c.b16 %v966, %v962
  %v1007 = vpack.c.b16 %v967, %v963
  %v1008 = vpack.c.b16 %v972, %v968
  %v1009 = vpack.c.b16 %v973, %v969
  %v1010 = vpack.c.b16 %v974, %v970
  %v1011 = vpack.c.b16 %v975, %v971
  %v1012 = vpack.c.b16 %v980, %v976
  %v1013 = vpack.c.b16 %v981, %v977
  %v1014 = vpack.c.b16 %v982, %v978
  %v1015 = vpack.c.b16 %v983, %v979
  %1048 = vmatprep.subr.bf16.mxu0 %v985
  %1049 = vmatpush1.bf16.msra.mxu0 %v984
  %1050 = vmatprep.subr.bf16.mxu0 %v989
  %1051 = vmatpush1.bf16.msra.mxu0 %v988
  %1052 = vmatprep.subr.bf16.mxu0 %v993
  %1053 = vmatpush1.bf16.msra.mxu0 %v992
  %1054 = vmatprep.subr.bf16.mxu0 %v997
  %1055 = vmatpush1.bf16.msra.mxu0 %v996
  %1056 = vmatprep.subr.bf16.mxu0 %v1001
  %1057 = vmatpush1.bf16.msra.mxu0 %v1000
  %1058 = vmatprep.subr.bf16.mxu0 %v1005
  %1059 = vmatpush1.bf16.msra.mxu0 %v1004
  %1060 = vmatprep.subr.bf16.mxu0 %v1009
  %1061 = vmatpush1.bf16.msra.mxu0 %v1008
  %1062 = vmatprep.subr.bf16.mxu0 %v1013
  %1063 = vmatpush1.bf16.msra.mxu0 %v1012
  %1064 = vmatprep.subr.bf16.mxu0 0
  %1065 = vmatpush1.bf16.msra.mxu0 0
  %1066 = vmatprep.subr.bf16.mxu0 0
  %1067 = vmatpush1.bf16.msra.mxu0 0
  %1068 = vmatprep.subr.bf16.mxu0 0
  %1069 = vmatpush1.bf16.msra.mxu0 0
  %1070 = vmatprep.subr.bf16.mxu0 0
  %1071 = vmatpush1.bf16.msra.mxu0 0
  %1072 = vmatprep.subr.bf16.mxu0 0
  %1073 = vmatpush1.bf16.msra.mxu0 0
  %1074 = vmatprep.subr.bf16.mxu0 0
  %1075 = vmatpush1.bf16.msra.mxu0 0
  %1076 = vmatprep.subr.bf16.mxu0 0
  %1077 = vmatpush1.bf16.msra.mxu0 0
  %1078 = vmatprep.subr.bf16.mxu0 0
  %1079 = vmatpush1.bf16.msra.mxu0 0
  %1080 = vmatprep.mubr.bf16.mxu0 0
  %1081 = vmatmul.mubr.bf16.gmra.mrb[0].mxu0 0
  %v1082 = vpop.f32.mrb[0].mxu0
  %v1083 = vadd.f32 0.0, %v1082
  %v1084 = vpop.f32.mrb[0].mxu0
  %v1085 = vadd.f32 0.0, %v1084
  %v1086 = vpop.f32.mrb[0].mxu0
  %v1087 = vpop.f32.mrb[0].mxu0
  %1088 = vdwg.mxu0
  %1089 = vmatprep.subr.bf16.mxu0 %v987
  %1090 = vmatpush1.bf16.msra.mxu0 %v986
  %1091 = vmatprep.subr.bf16.mxu0 %v991
  %1092 = vmatpush1.bf16.msra.mxu0 %v990
  %1093 = vmatprep.subr.bf16.mxu0 %v995
  %1094 = vmatpush1.bf16.msra.mxu0 %v994
  %1095 = vmatprep.subr.bf16.mxu0 %v999
  %1096 = vmatpush1.bf16.msra.mxu0 %v998
  %1097 = vmatprep.subr.bf16.mxu0 %v1003
  %1098 = vmatpush1.bf16.msra.mxu0 %v1002
  %1099 = vmatprep.subr.bf16.mxu0 %v1007
  %1100 = vmatpush1.bf16.msra.mxu0 %v1006
  %1101 = vmatprep.subr.bf16.mxu0 %v1011
  %1102 = vmatpush1.bf16.msra.mxu0 %v1010
  %1103 = vmatprep.subr.bf16.mxu0 %v1015
  %1104 = vmatpush1.bf16.msra.mxu0 %v1014
  %1105 = vmatprep.subr.bf16.mxu0 0
  %1106 = vmatpush1.bf16.msra.mxu0 0
  %1107 = vmatprep.subr.bf16.mxu0 0
  %1108 = vmatpush1.bf16.msra.mxu0 0
  %1109 = vmatprep.subr.bf16.mxu0 0
  %1110 = vmatpush1.bf16.msra.mxu0 0
  %1111 = vmatprep.subr.bf16.mxu0 0
  %1112 = vmatpush1.bf16.msra.mxu0 0
  %1113 = vmatprep.subr.bf16.mxu0 0
  %1114 = vmatpush1.bf16.msra.mxu0 0
  %1115 = vmatprep.subr.bf16.mxu0 0
  %1116 = vmatpush1.bf16.msra.mxu0 0
  %1117 = vmatprep.subr.bf16.mxu0 0
  %1118 = vmatpush1.bf16.msra.mxu0 0
  %1119 = vmatprep.subr.bf16.mxu0 0
  %1120 = vmatpush1.bf16.msra.mxu0 0
  %1121 = vmatprep.mubr.bf16.mxu0 0
  %1122 = vmatmul.mubr.bf16.gmra.mrb[0].mxu0 0
  %v1123 = vpop.f32.mrb[0].mxu0
  %v1124 = vadd.f32 0.0, %v1123
  %v1125 = vpop.f32.mrb[0].mxu0
  %v1126 = vadd.f32 0.0, %v1125
  %v1127 = vpop.f32.mrb[0].mxu0
  %v1128 = vpop.f32.mrb[0].mxu0
  %1129 = vdwg.mxu0
  %v1130 = vadd.f32 %v852, %v1083
  %v1131 = vadd.f32 %v853, %v1085
  %v1132 = vadd.f32 %v854, %v1124
  %v1133 = vadd.f32 %v855, %v1126
  %v1134 = vld [vmem:[#allocation2 + $0xe0] sm:$0xf0]
  %v1135 = vld [vmem:[#allocation2 + $0xe8] sm:$0xf0]
  %v1136 = vld [vmem:[#allocation2 + $0xf0] sm:$0xf0]
  %v1137 = vld [vmem:[#allocation2 + $0xf8] sm:$0xf0]
  %v1142 = vrot.slane %v1134, 4
  %v1143 = vrot.slane %v1135, 4
  %v1144 = vrot.slane %v1136, 4
  %v1145 = vrot.slane %v1137, 4
  %v1150 = vunpack.c.l.bf16 %v1142
  %v1151 = vunpack.c.l.bf16 %v1143
  %v1152 = vunpack.c.l.bf16 %v1144
  %v1153 = vunpack.c.l.bf16 %v1145
  %v1154 = vld [vmem:[%s5] sm:$0xff]
  %v1155 = vld [vmem:[%s5 + $0x8] sm:$0xff]
  %v1156 = vld [vmem:[%s5 + $0x10] sm:$0xff]
  %v1157 = vld [vmem:[%s5 + $0x18] sm:$0xff]
  %v1158 = vld [vmem:[%s5 + $0x20] sm:$0xff]
  %v1159 = vld [vmem:[%s5 + $0x28] sm:$0xff]
  %v1160 = vld [vmem:[%s5 + $0x30] sm:$0xff]
  %v1161 = vld [vmem:[%s5 + $0x38] sm:$0xff]
  %v1162 = vld [vmem:[%s5 + $0x40] sm:$0xff]
  %v1163 = vld [vmem:[%s5 + $0x48] sm:$0xff]
  %v1164 = vld [vmem:[%s5 + $0x50] sm:$0xff]
  %v1165 = vld [vmem:[%s5 + $0x58] sm:$0xff]
  %v1166 = vld [vmem:[%s5 + $0x60] sm:$0xff]
  %v1167 = vld [vmem:[%s5 + $0x68] sm:$0xff]
  %v1168 = vld [vmem:[%s5 + $0x70] sm:$0xff]
  %v1169 = vld [vmem:[%s5 + $0x78] sm:$0xff]
  %v1170 = vld [vmem:[%s5 + $0x80] sm:$0xff]
  %v1171 = vld [vmem:[%s5 + $0x88] sm:$0xff]
  %v1172 = vld [vmem:[%s5 + $0x90] sm:$0xff]
  %v1173 = vld [vmem:[%s5 + $0x98] sm:$0xff]
  %v1174 = vld [vmem:[%s5 + $0xa0] sm:$0xff]
  %v1175 = vld [vmem:[%s5 + $0xa8] sm:$0xff]
  %v1176 = vld [vmem:[%s5 + $0xb0] sm:$0xff]
  %v1177 = vld [vmem:[%s5 + $0xb8] sm:$0xff]
  %v1178 = vld [vmem:[%s5 + $0xc0] sm:$0xff]
  %v1179 = vld [vmem:[%s5 + $0xc8] sm:$0xff]
  %v1180 = vld [vmem:[%s5 + $0xd0] sm:$0xff]
  %v1181 = vld [vmem:[%s5 + $0xd8] sm:$0xff]
  %v1182 = vld [vmem:[%s5 + $0xe0] sm:$0xff]
  %v1183 = vld [vmem:[%s5 + $0xe8] sm:$0xff]
  %v1184 = vld [vmem:[%s5 + $0xf0] sm:$0xff]
  %v1185 = vld [vmem:[%s5 + $0xf8] sm:$0xff]
  %v1218 = vunpack.c.l.b16 %v1154
  %v1219 = vunpack.c.h.b16 %v1154
  %v1220 = vunpack.c.l.b16 %v1155
  %v1221 = vunpack.c.h.b16 %v1155
  %v1222 = vunpack.c.l.b16 %v1156
  %v1223 = vunpack.c.h.b16 %v1156
  %v1224 = vunpack.c.l.b16 %v1157
  %v1225 = vunpack.c.h.b16 %v1157
  %v1226 = vunpack.c.l.b16 %v1158
  %v1227 = vunpack.c.h.b16 %v1158
  %v1228 = vunpack.c.l.b16 %v1159
  %v1229 = vunpack.c.h.b16 %v1159
  %v1230 = vunpack.c.l.b16 %v1160
  %v1231 = vunpack.c.h.b16 %v1160
  %v1232 = vunpack.c.l.b16 %v1161
  %v1233 = vunpack.c.h.b16 %v1161
  %v1234 = vunpack.c.l.b16 %v1162
  %v1235 = vunpack.c.h.b16 %v1162
  %v1236 = vunpack.c.l.b16 %v1163
  %v1237 = vunpack.c.h.b16 %v1163
  %v1238 = vunpack.c.l.b16 %v1164
  %v1239 = vunpack.c.h.b16 %v1164
  %v1240 = vunpack.c.l.b16 %v1165
  %v1241 = vunpack.c.h.b16 %v1165
  %v1242 = vunpack.c.l.b16 %v1166
  %v1243 = vunpack.c.h.b16 %v1166
  %v1244 = vunpack.c.l.b16 %v1167
  %v1245 = vunpack.c.h.b16 %v1167
  %v1246 = vunpack.c.l.b16 %v1168
  %v1247 = vunpack.c.h.b16 %v1168
  %v1248 = vunpack.c.l.b16 %v1169
  %v1249 = vunpack.c.h.b16 %v1169
  %v1250 = vunpack.c.l.b16 %v1170
  %v1251 = vunpack.c.h.b16 %v1170
  %v1252 = vunpack.c.l.b16 %v1171
  %v1253 = vunpack.c.h.b16 %v1171
  %v1254 = vunpack.c.l.b16 %v1172
  %v1255 = vunpack.c.h.b16 %v1172
  %v1256 = vunpack.c.l.b16 %v1173
  %v1257 = vunpack.c.h.b16 %v1173
  %v1258 = vunpack.c.l.b16 %v1174
  %v1259 = vunpack.c.h.b16 %v1174
  %v1260 = vunpack.c.l.b16 %v1175
  %v1261 = vunpack.c.h.b16 %v1175
  %v1262 = vunpack.c.l.b16 %v1176
  %v1263 = vunpack.c.h.b16 %v1176
  %v1264 = vunpack.c.l.b16 %v1177
  %v1265 = vunpack.c.h.b16 %v1177
  %v1266 = vunpack.c.l.b16 %v1178
  %v1267 = vunpack.c.h.b16 %v1178
  %v1268 = vunpack.c.l.b16 %v1179
  %v1269 = vunpack.c.h.b16 %v1179
  %v1270 = vunpack.c.l.b16 %v1180
  %v1271 = vunpack.c.h.b16 %v1180
  %v1272 = vunpack.c.l.b16 %v1181
  %v1273 = vunpack.c.h.b16 %v1181
  %v1274 = vunpack.c.l.b16 %v1182
  %v1275 = vunpack.c.h.b16 %v1182
  %v1276 = vunpack.c.l.b16 %v1183
  %v1277 = vunpack.c.h.b16 %v1183
  %v1278 = vunpack.c.l.b16 %v1184
  %v1279 = vunpack.c.h.b16 %v1184
  %v1280 = vunpack.c.l.b16 %v1185
  %v1281 = vunpack.c.h.b16 %v1185
  %v1282 = vpack.c.b16 %v1222, %v1218
  %v1283 = vpack.c.b16 %v1223, %v1219
  %v1284 = vpack.c.b16 %v1224, %v1220
  %v1285 = vpack.c.b16 %v1225, %v1221
  %v1286 = vpack.c.b16 %v1230, %v1226
  %v1287 = vpack.c.b16 %v1231, %v1227
  %v1288 = vpack.c.b16 %v1232, %v1228
  %v1289 = vpack.c.b16 %v1233, %v1229
  %v1290 = vpack.c.b16 %v1238, %v1234
  %v1291 = vpack.c.b16 %v1239, %v1235
  %v1292 = vpack.c.b16 %v1240, %v1236
  %v1293 = vpack.c.b16 %v1241, %v1237
  %v1294 = vpack.c.b16 %v1246, %v1242
  %v1295 = vpack.c.b16 %v1247, %v1243
  %v1296 = vpack.c.b16 %v1248, %v1244
  %v1297 = vpack.c.b16 %v1249, %v1245
  %v1298 = vpack.c.b16 %v1254, %v1250
  %v1299 = vpack.c.b16 %v1255, %v1251
  %v1300 = vpack.c.b16 %v1256, %v1252
  %v1301 = vpack.c.b16 %v1257, %v1253
  %v1302 = vpack.c.b16 %v1262, %v1258
  %v1303 = vpack.c.b16 %v1263, %v1259
  %v1304 = vpack.c.b16 %v1264, %v1260
  %v1305 = vpack.c.b16 %v1265, %v1261
  %v1306 = vpack.c.b16 %v1270, %v1266
  %v1307 = vpack.c.b16 %v1271, %v1267
  %v1308 = vpack.c.b16 %v1272, %v1268
  %v1309 = vpack.c.b16 %v1273, %v1269
  %v1310 = vpack.c.b16 %v1278, %v1274
  %v1311 = vpack.c.b16 %v1279, %v1275
  %v1312 = vpack.c.b16 %v1280, %v1276
  %v1313 = vpack.c.b16 %v1281, %v1277
  %1346 = vmatprep.subr.bf16.mxu0 %v1283
  %1347 = vmatpush1.bf16.msra.mxu0 %v1282
  %1348 = vmatprep.subr.bf16.mxu0 %v1287
  %1349 = vmatpush1.bf16.msra.mxu0 %v1286
  %1350 = vmatprep.subr.bf16.mxu0 %v1291
  %1351 = vmatpush1.bf16.msra.mxu0 %v1290
  %1352 = vmatprep.subr.bf16.mxu0 %v1295
  %1353 = vmatpush1.bf16.msra.mxu0 %v1294
  %1354 = vmatprep.subr.bf16.mxu0 %v1299
  %1355 = vmatpush1.bf16.msra.mxu0 %v1298
  %1356 = vmatprep.subr.bf16.mxu0 %v1303
  %1357 = vmatpush1.bf16.msra.mxu0 %v1302
  %1358 = vmatprep.subr.bf16.mxu0 %v1307
  %1359 = vmatpush1.bf16.msra.mxu0 %v1306
  %1360 = vmatprep.subr.bf16.mxu0 %v1311
  %1361 = vmatpush1.bf16.msra.mxu0 %v1310
  %1362 = vmatprep.subr.bf16.mxu0 0
  %1363 = vmatpush1.bf16.msra.mxu0 0
  %1364 = vmatprep.subr.bf16.mxu0 0
  %1365 = vmatpush1.bf16.msra.mxu0 0
  %1366 = vmatprep.subr.bf16.mxu0 0
  %1367 = vmatpush1.bf16.msra.mxu0 0
  %1368 = vmatprep.subr.bf16.mxu0 0
  %1369 = vmatpush1.bf16.msra.mxu0 0
  %1370 = vmatprep.subr.bf16.mxu0 0
  %1371 = vmatpush1.bf16.msra.mxu0 0
  %1372 = vmatprep.subr.bf16.mxu0 0
  %1373 = vmatpush1.bf16.msra.mxu0 0
  %1374 = vmatprep.subr.bf16.mxu0 0
  %1375 = vmatpush1.bf16.msra.mxu0 0
  %1376 = vmatprep.subr.bf16.mxu0 0
  %1377 = vmatpush1.bf16.msra.mxu0 0
  %1378 = vmatprep.mubr.bf16.mxu0 0
  %1379 = vmatmul.mubr.bf16.gmra.mrb[0].mxu0 0
  %v1380 = vpop.f32.mrb[0].mxu0
  %v1381 = vadd.f32 0.0, %v1380
  %v1382 = vpop.f32.mrb[0].mxu0
  %v1383 = vadd.f32 0.0, %v1382
  %v1384 = vpop.f32.mrb[0].mxu0
  %v1385 = vpop.f32.mrb[0].mxu0
  %1386 = vdwg.mxu0
  %1387 = vmatprep.subr.bf16.mxu0 %v1285
  %1388 = vmatpush1.bf16.msra.mxu0 %v1284
  %1389 = vmatprep.subr.bf16.mxu0 %v1289
  %1390 = vmatpush1.bf16.msra.mxu0 %v1288
  %1391 = vmatprep.subr.bf16.mxu0 %v1293
  %1392 = vmatpush1.bf16.msra.mxu0 %v1292
  %1393 = vmatprep.subr.bf16.mxu0 %v1297
  %1394 = vmatpush1.bf16.msra.mxu0 %v1296
  %1395 = vmatprep.subr.bf16.mxu0 %v1301
  %1396 = vmatpush1.bf16.msra.mxu0 %v1300
  %1397 = vmatprep.subr.bf16.mxu0 %v1305
  %1398 = vmatpush1.bf16.msra.mxu0 %v1304
  %1399 = vmatprep.subr.bf16.mxu0 %v1309
  %1400 = vmatpush1.bf16.msra.mxu0 %v1308
  %1401 = vmatprep.subr.bf16.mxu0 %v1313
  %1402 = vmatpush1.bf16.msra.mxu0 %v1312
  %1403 = vmatprep.subr.bf16.mxu0 0
  %1404 = vmatpush1.bf16.msra.mxu0 0
  %1405 = vmatprep.subr.bf16.mxu0 0
  %1406 = vmatpush1.bf16.msra.mxu0 0
  %1407 = vmatprep.subr.bf16.mxu0 0
  %1408 = vmatpush1.bf16.msra.mxu0 0
  %1409 = vmatprep.subr.bf16.mxu0 0
  %1410 = vmatpush1.bf16.msra.mxu0 0
  %1411 = vmatprep.subr.bf16.mxu0 0
  %1412 = vmatpush1.bf16.msra.mxu0 0
  %1413 = vmatprep.subr.bf16.mxu0 0
  %1414 = vmatpush1.bf16.msra.mxu0 0
  %1415 = vmatprep.subr.bf16.mxu0 0
  %1416 = vmatpush1.bf16.msra.mxu0 0
  %1417 = vmatprep.subr.bf16.mxu0 0
  %1418 = vmatpush1.bf16.msra.mxu0 0
  %1419 = vmatprep.mubr.bf16.mxu0 0
  %1420 = vmatmul.mubr.bf16.gmra.mrb[0].mxu0 0
  %v1421 = vpop.f32.mrb[0].mxu0
  %v1422 = vadd.f32 0.0, %v1421
  %v1423 = vpop.f32.mrb[0].mxu0
  %v1424 = vadd.f32 0.0, %v1423
  %v1425 = vpop.f32.mrb[0].mxu0
  %v1426 = vpop.f32.mrb[0].mxu0
  %1427 = vdwg.mxu0
  %v1428 = vadd.f32 %v1150, %v1381
  %v1429 = vadd.f32 %v1151, %v1383
  %v1430 = vadd.f32 %v1152, %v1422
  %v1431 = vadd.f32 %v1153, %v1424
  %v1432 = vxor.u32 %v1130, 2147483648
  %v1433 = vmul.f32 %v1432, 1.442695
  %v1434 = vpow.pop %v1433
  %v1435 = vadd.f32 %v1434, 1.0
  %v1436 = vrcp.pop %v1435
  %v1437 = vmul.f32 1.0, %v1436
  %v1438 = vxor.u32 %v1131, 2147483648
  %v1439 = vmul.f32 %v1438, 1.442695
  %v1440 = vpow.pop %v1439
  %v1441 = vadd.f32 %v1440, 1.0
  %v1442 = vrcp.pop %v1441
  %v1443 = vmul.f32 1.0, %v1442
  %v1444 = vtanh.pop %v1132
  %v1445 = vxor.u32 %v1133, 2147483648
  %v1446 = vmul.f32 %v1445, 1.442695
  %v1447 = vpow.pop %v1446
  %v1448 = vadd.f32 %v1447, 1.0
  %v1449 = vrcp.pop %v1448
  %v1450 = vmul.f32 1.0, %v1449
  %v1451 = vmul.f32 %v1443, 0.0
  %v1452 = vmul.f32 %v1437, %v1444
  %v1453 = vadd.f32 %v1451, %v1452
  %v1454 = vtanh.pop %v1453
  %v1455 = vmul.f32 %v1450, %v1454
  %v1456 = vxor.u32 %v1428, 2147483648
  %v1457 = vmul.f32 %v1456, 1.442695
  %v1458 = vpow.pop %v1457
  %v1459 = vadd.f32 %v1458, 1.0
  %v1460 = vrcp.pop %v1459
  %v1461 = vmul.f32 1.0, %v1460
  %v1462 = vxor.u32 %v1429, 2147483648
  %v1463 = vmul.f32 %v1462, 1.442695
  %v1464 = vpow.pop %v1463
  %v1465 = vadd.f32 %v1464, 1.0
  %v1466 = vrcp.pop %v1465
  %v1467 = vmul.f32 1.0, %v1466
  %v1468 = vtanh.pop %v1430
  %v1469 = vxor.u32 %v1431, 2147483648
  %v1470 = vmul.f32 %v1469, 1.442695
  %v1471 = vpow.pop %v1470
  %v1472 = vadd.f32 %v1471, 1.0
  %v1473 = vrcp.pop %v1472
  %v1474 = vmul.f32 1.0, %v1473
  %v1475 = vmul.f32 %v1467, 0.0
  %v1476 = vmul.f32 %v1461, %v1468
  %v1477 = vadd.f32 %v1475, %v1476
  %v1478 = vtanh.pop %v1477
  %v1479 = vmul.f32 %v1474, %v1478
  %vm1480 = vcmp.gt.s32.totalorder %v847, 7
  %v1481 = vsel %vm1480, %v1479, 0.0
  %v1482 = vsel %vm1480, %v1477, 0.0
  %v1483 = vpack.c.bf16 %v1455, %v1455
  %1484 = vst [vmem:[#allocation3] sm:$0xf] %v1483
  %v1485 = vpack.c.bf16 %v1481, %v1481
  %v1487 = vrot.slane %v1485, 4
  %1489 = vst [vmem:[#allocation4 + $0x18] sm:$0xf0] %v1487
  %v1490 = vld [vmem:[#allocation2] sm:$0xf0]
  %v1491 = vld [vmem:[#allocation2 + $0x8] sm:$0xf0]
  %v1492 = vld [vmem:[#allocation2 + $0x10] sm:$0xf0]
  %v1493 = vld [vmem:[#allocation2 + $0x18] sm:$0xf0]
  %v1498 = vrot.slane %v1490, 4
  %v1499 = vrot.slane %v1491, 4
  %v1500 = vrot.slane %v1492, 4
  %v1501 = vrot.slane %v1493, 4
  %v1506 = vunpack.c.l.bf16 %v1498
  %v1507 = vunpack.c.l.bf16 %v1499
  %v1508 = vunpack.c.l.bf16 %v1500
  %v1509 = vunpack.c.l.bf16 %v1501
  %v1510 = vld [vmem:[%s4] sm:$0xff]
  %v1511 = vld [vmem:[%s4 + $0x8] sm:$0xff]
  %v1512 = vld [vmem:[%s4 + $0x10] sm:$0xff]
  %v1513 = vld [vmem:[%s4 + $0x18] sm:$0xff]
  %v1514 = vld [vmem:[%s4 + $0x20] sm:$0xff]
  %v1515 = vld [vmem:[%s4 + $0x28] sm:$0xff]
  %v1516 = vld [vmem:[%s4 + $0x30] sm:$0xff]
  %v1517 = vld [vmem:[%s4 + $0x38] sm:$0xff]
  %v1518 = vld [vmem:[%s4 + $0x40] sm:$0xff]
  %v1519 = vld [vmem:[%s4 + $0x48] sm:$0xff]
  %v1520 = vld [vmem:[%s4 + $0x50] sm:$0xff]
  %v1521 = vld [vmem:[%s4 + $0x58] sm:$0xff]
  %v1522 = vld [vmem:[%s4 + $0x60] sm:$0xff]
  %v1523 = vld [vmem:[%s4 + $0x68] sm:$0xff]
  %v1524 = vld [vmem:[%s4 + $0x70] sm:$0xff]
  %v1525 = vld [vmem:[%s4 + $0x78] sm:$0xff]
  %v1526 = vld [vmem:[%s4 + $0x80] sm:$0xff]
  %v1527 = vld [vmem:[%s4 + $0x88] sm:$0xff]
  %v1528 = vld [vmem:[%s4 + $0x90] sm:$0xff]
  %v1529 = vld [vmem:[%s4 + $0x98] sm:$0xff]
  %v1530 = vld [vmem:[%s4 + $0xa0] sm:$0xff]
  %v1531 = vld [vmem:[%s4 + $0xa8] sm:$0xff]
  %v1532 = vld [vmem:[%s4 + $0xb0] sm:$0xff]
  %v1533 = vld [vmem:[%s4 + $0xb8] sm:$0xff]
  %v1534 = vld [vmem:[%s4 + $0xc0] sm:$0xff]
  %v1535 = vld [vmem:[%s4 + $0xc8] sm:$0xff]
  %v1536 = vld [vmem:[%s4 + $0xd0] sm:$0xff]
  %v1537 = vld [vmem:[%s4 + $0xd8] sm:$0xff]
  %v1538 = vld [vmem:[%s4 + $0xe0] sm:$0xff]
  %v1539 = vld [vmem:[%s4 + $0xe8] sm:$0xff]
  %v1540 = vld [vmem:[%s4 + $0xf0] sm:$0xff]
  %v1541 = vld [vmem:[%s4 + $0xf8] sm:$0xff]
  %v1574 = vunpack.c.l.b16 %v1510
  %v1575 = vunpack.c.h.b16 %v1510
  %v1576 = vunpack.c.l.b16 %v1511
  %v1577 = vunpack.c.h.b16 %v1511
  %v1578 = vunpack.c.l.b16 %v1512
  %v1579 = vunpack.c.h.b16 %v1512
  %v1580 = vunpack.c.l.b16 %v1513
  %v1581 = vunpack.c.h.b16 %v1513
  %v1582 = vunpack.c.l.b16 %v1514
  %v1583 = vunpack.c.h.b16 %v1514
  %v1584 = vunpack.c.l.b16 %v1515
  %v1585 = vunpack.c.h.b16 %v1515
  %v1586 = vunpack.c.l.b16 %v1516
  %v1587 = vunpack.c.h.b16 %v1516
  %v1588 = vunpack.c.l.b16 %v1517
  %v1589 = vunpack.c.h.b16 %v1517
  %v1590 = vunpack.c.l.b16 %v1518
  %v1591 = vunpack.c.h.b16 %v1518
  %v1592 = vunpack.c.l.b16 %v1519
  %v1593 = vunpack.c.h.b16 %v1519
  %v1594 = vunpack.c.l.b16 %v1520
  %v1595 = vunpack.c.h.b16 %v1520
  %v1596 = vunpack.c.l.b16 %v1521
  %v1597 = vunpack.c.h.b16 %v1521
  %v1598 = vunpack.c.l.b16 %v1522
  %v1599 = vunpack.c.h.b16 %v1522
  %v1600 = vunpack.c.l.b16 %v1523
  %v1601 = vunpack.c.h.b16 %v1523
  %v1602 = vunpack.c.l.b16 %v1524
  %v1603 = vunpack.c.h.b16 %v1524
  %v1604 = vunpack.c.l.b16 %v1525
  %v1605 = vunpack.c.h.b16 %v1525
  %v1606 = vunpack.c.l.b16 %v1526
  %v1607 = vunpack.c.h.b16 %v1526
  %v1608 = vunpack.c.l.b16 %v1527
  %v1609 = vunpack.c.h.b16 %v1527
  %v1610 = vunpack.c.l.b16 %v1528
  %v1611 = vunpack.c.h.b16 %v1528
  %v1612 = vunpack.c.l.b16 %v1529
  %v1613 = vunpack.c.h.b16 %v1529
  %v1614 = vunpack.c.l.b16 %v1530
  %v1615 = vunpack.c.h.b16 %v1530
  %v1616 = vunpack.c.l.b16 %v1531
  %v1617 = vunpack.c.h.b16 %v1531
  %v1618 = vunpack.c.l.b16 %v1532
  %v1619 = vunpack.c.h.b16 %v1532
  %v1620 = vunpack.c.l.b16 %v1533
  %v1621 = vunpack.c.h.b16 %v1533
  %v1622 = vunpack.c.l.b16 %v1534
  %v1623 = vunpack.c.h.b16 %v1534
  %v1624 = vunpack.c.l.b16 %v1535
  %v1625 = vunpack.c.h.b16 %v1535
  %v1626 = vunpack.c.l.b16 %v1536
  %v1627 = vunpack.c.h.b16 %v1536
  %v1628 = vunpack.c.l.b16 %v1537
  %v1629 = vunpack.c.h.b16 %v1537
  %v1630 = vunpack.c.l.b16 %v1538
  %v1631 = vunpack.c.h.b16 %v1538
  %v1632 = vunpack.c.l.b16 %v1539
  %v1633 = vunpack.c.h.b16 %v1539
  %v1634 = vunpack.c.l.b16 %v1540
  %v1635 = vunpack.c.h.b16 %v1540
  %v1636 = vunpack.c.l.b16 %v1541
  %v1637 = vunpack.c.h.b16 %v1541
  %v1638 = vpack.c.b16 %v1578, %v1574
  %v1639 = vpack.c.b16 %v1579, %v1575
  %v1640 = vpack.c.b16 %v1580, %v1576
  %v1641 = vpack.c.b16 %v1581, %v1577
  %v1642 = vpack.c.b16 %v1586, %v1582
  %v1643 = vpack.c.b16 %v1587, %v1583
  %v1644 = vpack.c.b16 %v1588, %v1584
  %v1645 = vpack.c.b16 %v1589, %v1585
  %v1646 = vpack.c.b16 %v1594, %v1590
  %v1647 = vpack.c.b16 %v1595, %v1591
  %v1648 = vpack.c.b16 %v1596, %v1592
  %v1649 = vpack.c.b16 %v1597, %v1593
  %v1650 = vpack.c.b16 %v1602, %v1598
  %v1651 = vpack.c.b16 %v1603, %v1599
  %v1652 = vpack.c.b16 %v1604, %v1600
  %v1653 = vpack.c.b16 %v1605, %v1601
  %v1654 = vpack.c.b16 %v1610, %v1606
  %v1655 = vpack.c.b16 %v1611, %v1607
  %v1656 = vpack.c.b16 %v1612, %v1608
  %v1657 = vpack.c.b16 %v1613, %v1609
  %v1658 = vpack.c.b16 %v1618, %v1614
  %v1659 = vpack.c.b16 %v1619, %v1615
  %v1660 = vpack.c.b16 %v1620, %v1616
  %v1661 = vpack.c.b16 %v1621, %v1617
  %v1662 = vpack.c.b16 %v1626, %v1622
  %v1663 = vpack.c.b16 %v1627, %v1623
  %v1664 = vpack.c.b16 %v1628, %v1624
  %v1665 = vpack.c.b16 %v1629, %v1625
  %v1666 = vpack.c.b16 %v1634, %v1630
  %v1667 = vpack.c.b16 %v1635, %v1631
  %v1668 = vpack.c.b16 %v1636, %v1632
  %v1669 = vpack.c.b16 %v1637, %v1633
  %1702 = vmatprep.subr.bf16.mxu0 %v1639
  %1703 = vmatpush1.bf16.msra.mxu0 %v1638
  %1704 = vmatprep.subr.bf16.mxu0 %v1643
  %1705 = vmatpush1.bf16.msra.mxu0 %v1642
  %1706 = vmatprep.subr.bf16.mxu0 %v1647
  %1707 = vmatpush1.bf16.msra.mxu0 %v1646
  %1708 = vmatprep.subr.bf16.mxu0 %v1651
  %1709 = vmatpush1.bf16.msra.mxu0 %v1650
  %1710 = vmatprep.subr.bf16.mxu0 %v1655
  %1711 = vmatpush1.bf16.msra.mxu0 %v1654
  %1712 = vmatprep.subr.bf16.mxu0 %v1659
  %1713 = vmatpush1.bf16.msra.mxu0 %v1658
  %1714 = vmatprep.subr.bf16.mxu0 %v1663
  %1715 = vmatpush1.bf16.msra.mxu0 %v1662
  %1716 = vmatprep.subr.bf16.mxu0 %v1667
  %1717 = vmatpush1.bf16.msra.mxu0 %v1666
  %1718 = vmatprep.subr.bf16.mxu0 0
  %1719 = vmatpush1.bf16.msra.mxu0 0
  %1720 = vmatprep.subr.bf16.mxu0 0
  %1721 = vmatpush1.bf16.msra.mxu0 0
  %1722 = vmatprep.subr.bf16.mxu0 0
  %1723 = vmatpush1.bf16.msra.mxu0 0
  %1724 = vmatprep.subr.bf16.mxu0 0
  %1725 = vmatpush1.bf16.msra.mxu0 0
  %1726 = vmatprep.subr.bf16.mxu0 0
  %1727 = vmatpush1.bf16.msra.mxu0 0
  %1728 = vmatprep.subr.bf16.mxu0 0
  %1729 = vmatpush1.bf16.msra.mxu0 0
  %1730 = vmatprep.subr.bf16.mxu0 0
  %1731 = vmatpush1.bf16.msra.mxu0 0
  %1732 = vmatprep.subr.bf16.mxu0 0
  %1733 = vmatpush1.bf16.msra.mxu0 0
  %1734 = vmatprep.mubr.bf16.mxu0 0
  %1735 = vmatmul.mubr.bf16.gmra.mrb[0].mxu0 %v1483
  %v1736 = vpop.f32.mrb[0].mxu0
  %v1737 = vadd.f32 0.0, %v1736
  %v1738 = vpop.f32.mrb[0].mxu0
  %v1739 = vadd.f32 0.0, %v1738
  %v1740 = vpop.f32.mrb[0].mxu0
  %v1741 = vpop.f32.mrb[0].mxu0
  %1742 = vdwg.mxu0
  %1743 = vmatprep.subr.bf16.mxu0 %v1641
  %1744 = vmatpush1.bf16.msra.mxu0 %v1640
  %1745 = vmatprep.subr.bf16.mxu0 %v1645
  %1746 = vmatpush1.bf16.msra.mxu0 %v1644
  %1747 = vmatprep.subr.bf16.mxu0 %v1649
  %1748 = vmatpush1.bf16.msra.mxu0 %v1648
  %1749 = vmatprep.subr.bf16.mxu0 %v1653
  %1750 = vmatpush1.bf16.msra.mxu0 %v1652
  %1751 = vmatprep.subr.bf16.mxu0 %v1657
  %1752 = vmatpush1.bf16.msra.mxu0 %v1656
  %1753 = vmatprep.subr.bf16.mxu0 %v1661
  %1754 = vmatpush1.bf16.msra.mxu0 %v1660
  %1755 = vmatprep.subr.bf16.mxu0 %v1665
  %1756 = vmatpush1.bf16.msra.mxu0 %v1664
  %1757 = vmatprep.subr.bf16.mxu0 %v1669
  %1758 = vmatpush1.bf16.msra.mxu0 %v1668
  %1759 = vmatprep.subr.bf16.mxu0 0
  %1760 = vmatpush1.bf16.msra.mxu0 0
  %1761 = vmatprep.subr.bf16.mxu0 0
  %1762 = vmatpush1.bf16.msra.mxu0 0
  %1763 = vmatprep.subr.bf16.mxu0 0
  %1764 = vmatpush1.bf16.msra.mxu0 0
  %1765 = vmatprep.subr.bf16.mxu0 0
  %1766 = vmatpush1.bf16.msra.mxu0 0
  %1767 = vmatprep.subr.bf16.mxu0 0
  %1768 = vmatpush1.bf16.msra.mxu0 0
  %1769 = vmatprep.subr.bf16.mxu0 0
  %1770 = vmatpush1.bf16.msra.mxu0 0
  %1771 = vmatprep.subr.bf16.mxu0 0
  %1772 = vmatpush1.bf16.msra.mxu0 0
  %1773 = vmatprep.subr.bf16.mxu0 0
  %1774 = vmatpush1.bf16.msra.mxu0 0
  %1775 = vmatprep.mubr.bf16.mxu0 0
  %1776 = vmatmul.mubr.bf16.gmra.mrb[0].mxu0 %v1483
  %v1777 = vpop.f32.mrb[0].mxu0
  %v1778 = vadd.f32 0.0, %v1777
  %v1779 = vpop.f32.mrb[0].mxu0
  %v1780 = vadd.f32 0.0, %v1779
  %v1781 = vpop.f32.mrb[0].mxu0
  %v1782 = vpop.f32.mrb[0].mxu0
  %1783 = vdwg.mxu0
  %v1784 = vadd.f32 %v1506, %v1737
  %v1785 = vadd.f32 %v1507, %v1739
  %v1786 = vadd.f32 %v1508, %v1778
  %v1787 = vadd.f32 %v1509, %v1780
  %v1788 = vld [vmem:[#allocation2 + $0xe0] sm:$0xf]
  %v1789 = vld [vmem:[#allocation2 + $0xe8] sm:$0xf]
  %v1790 = vld [vmem:[#allocation2 + $0xf0] sm:$0xf]
  %v1791 = vld [vmem:[#allocation2 + $0xf8] sm:$0xf]
  %v1792 = vunpack.c.l.bf16 %v1788
  %v1793 = vunpack.c.l.bf16 %v1789
  %v1794 = vunpack.c.l.bf16 %v1790
  %v1795 = vunpack.c.l.bf16 %v1791
  %v1796 = vld [vmem:[%s5] sm:$0xff]
  %v1797 = vld [vmem:[%s5 + $0x8] sm:$0xff]
  %v1798 = vld [vmem:[%s5 + $0x10] sm:$0xff]
  %v1799 = vld [vmem:[%s5 + $0x18] sm:$0xff]
  %v1800 = vld [vmem:[%s5 + $0x20] sm:$0xff]
  %v1801 = vld [vmem:[%s5 + $0x28] sm:$0xff]
  %v1802 = vld [vmem:[%s5 + $0x30] sm:$0xff]
  %v1803 = vld [vmem:[%s5 + $0x38] sm:$0xff]
  %v1804 = vld [vmem:[%s5 + $0x40] sm:$0xff]
  %v1805 = vld [vmem:[%s5 + $0x48] sm:$0xff]
  %v1806 = vld [vmem:[%s5 + $0x50] sm:$0xff]
  %v1807 = vld [vmem:[%s5 + $0x58] sm:$0xff]
  %v1808 = vld [vmem:[%s5 + $0x60] sm:$0xff]
  %v1809 = vld [vmem:[%s5 + $0x68] sm:$0xff]
  %v1810 = vld [vmem:[%s5 + $0x70] sm:$0xff]
  %v1811 = vld [vmem:[%s5 + $0x78] sm:$0xff]
  %v1812 = vld [vmem:[%s5 + $0x80] sm:$0xff]
  %v1813 = vld [vmem:[%s5 + $0x88] sm:$0xff]
  %v1814 = vld [vmem:[%s5 + $0x90] sm:$0xff]
  %v1815 = vld [vmem:[%s5 + $0x98] sm:$0xff]
  %v1816 = vld [vmem:[%s5 + $0xa0] sm:$0xff]
  %v1817 = vld [vmem:[%s5 + $0xa8] sm:$0xff]
  %v1818 = vld [vmem:[%s5 + $0xb0] sm:$0xff]
  %v1819 = vld [vmem:[%s5 + $0xb8] sm:$0xff]
  %v1820 = vld [vmem:[%s5 + $0xc0] sm:$0xff]
  %v1821 = vld [vmem:[%s5 + $0xc8] sm:$0xff]
  %v1822 = vld [vmem:[%s5 + $0xd0] sm:$0xff]
  %v1823 = vld [vmem:[%s5 + $0xd8] sm:$0xff]
  %v1824 = vld [vmem:[%s5 + $0xe0] sm:$0xff]
  %v1825 = vld [vmem:[%s5 + $0xe8] sm:$0xff]
  %v1826 = vld [vmem:[%s5 + $0xf0] sm:$0xff]
  %v1827 = vld [vmem:[%s5 + $0xf8] sm:$0xff]
  %v1860 = vunpack.c.l.b16 %v1796
  %v1861 = vunpack.c.h.b16 %v1796
  %v1862 = vunpack.c.l.b16 %v1797
  %v1863 = vunpack.c.h.b16 %v1797
  %v1864 = vunpack.c.l.b16 %v1798
  %v1865 = vunpack.c.h.b16 %v1798
  %v1866 = vunpack.c.l.b16 %v1799
  %v1867 = vunpack.c.h.b16 %v1799
  %v1868 = vunpack.c.l.b16 %v1800
  %v1869 = vunpack.c.h.b16 %v1800
  %v1870 = vunpack.c.l.b16 %v1801
  %v1871 = vunpack.c.h.b16 %v1801
  %v1872 = vunpack.c.l.b16 %v1802
  %v1873 = vunpack.c.h.b16 %v1802
  %v1874 = vunpack.c.l.b16 %v1803
  %v1875 = vunpack.c.h.b16 %v1803
  %v1876 = vunpack.c.l.b16 %v1804
  %v1877 = vunpack.c.h.b16 %v1804
  %v1878 = vunpack.c.l.b16 %v1805
  %v1879 = vunpack.c.h.b16 %v1805
  %v1880 = vunpack.c.l.b16 %v1806
  %v1881 = vunpack.c.h.b16 %v1806
  %v1882 = vunpack.c.l.b16 %v1807
  %v1883 = vunpack.c.h.b16 %v1807
  %v1884 = vunpack.c.l.b16 %v1808
  %v1885 = vunpack.c.h.b16 %v1808
  %v1886 = vunpack.c.l.b16 %v1809
  %v1887 = vunpack.c.h.b16 %v1809
  %v1888 = vunpack.c.l.b16 %v1810
  %v1889 = vunpack.c.h.b16 %v1810
  %v1890 = vunpack.c.l.b16 %v1811
  %v1891 = vunpack.c.h.b16 %v1811
  %v1892 = vunpack.c.l.b16 %v1812
  %v1893 = vunpack.c.h.b16 %v1812
  %v1894 = vunpack.c.l.b16 %v1813
  %v1895 = vunpack.c.h.b16 %v1813
  %v1896 = vunpack.c.l.b16 %v1814
  %v1897 = vunpack.c.h.b16 %v1814
  %v1898 = vunpack.c.l.b16 %v1815
  %v1899 = vunpack.c.h.b16 %v1815
  %v1900 = vunpack.c.l.b16 %v1816
  %v1901 = vunpack.c.h.b16 %v1816
  %v1902 = vunpack.c.l.b16 %v1817
  %v1903 = vunpack.c.h.b16 %v1817
  %v1904 = vunpack.c.l.b16 %v1818
  %v1905 = vunpack.c.h.b16 %v1818
  %v1906 = vunpack.c.l.b16 %v1819
  %v1907 = vunpack.c.h.b16 %v1819
  %v1908 = vunpack.c.l.b16 %v1820
  %v1909 = vunpack.c.h.b16 %v1820
  %v1910 = vunpack.c.l.b16 %v1821
  %v1911 = vunpack.c.h.b16 %v1821
  %v1912 = vunpack.c.l.b16 %v1822
  %v1913 = vunpack.c.h.b16 %v1822
  %v1914 = vunpack.c.l.b16 %v1823
  %v1915 = vunpack.c.h.b16 %v1823
  %v1916 = vunpack.c.l.b16 %v1824
  %v1917 = vunpack.c.h.b16 %v1824
  %v1918 = vunpack.c.l.b16 %v1825
  %v1919 = vunpack.c.h.b16 %v1825
  %v1920 = vunpack.c.l.b16 %v1826
  %v1921 = vunpack.c.h.b16 %v1826
  %v1922 = vunpack.c.l.b16 %v1827
  %v1923 = vunpack.c.h.b16 %v1827
  %v1924 = vpack.c.b16 %v1864, %v1860
  %v1925 = vpack.c.b16 %v1865, %v1861
  %v1926 = vpack.c.b16 %v1866, %v1862
  %v1927 = vpack.c.b16 %v1867, %v1863
  %v1928 = vpack.c.b16 %v1872, %v1868
  %v1929 = vpack.c.b16 %v1873, %v1869
  %v1930 = vpack.c.b16 %v1874, %v1870
  %v1931 = vpack.c.b16 %v1875, %v1871
  %v1932 = vpack.c.b16 %v1880, %v1876
  %v1933 = vpack.c.b16 %v1881, %v1877
  %v1934 = vpack.c.b16 %v1882, %v1878
  %v1935 = vpack.c.b16 %v1883, %v1879
  %v1936 = vpack.c.b16 %v1888, %v1884
  %v1937 = vpack.c.b16 %v1889, %v1885
  %v1938 = vpack.c.b16 %v1890, %v1886
  %v1939 = vpack.c.b16 %v1891, %v1887
  %v1940 = vpack.c.b16 %v1896, %v1892
  %v1941 = vpack.c.b16 %v1897, %v1893
  %v1942 = vpack.c.b16 %v1898, %v1894
  %v1943 = vpack.c.b16 %v1899, %v1895
  %v1944 = vpack.c.b16 %v1904, %v1900
  %v1945 = vpack.c.b16 %v1905, %v1901
  %v1946 = vpack.c.b16 %v1906, %v1902
  %v1947 = vpack.c.b16 %v1907, %v1903
  %v1948 = vpack.c.b16 %v1912, %v1908
  %v1949 = vpack.c.b16 %v1913, %v1909
  %v1950 = vpack.c.b16 %v1914, %v1910
  %v1951 = vpack.c.b16 %v1915, %v1911
  %v1952 = vpack.c.b16 %v1920, %v1916
  %v1953 = vpack.c.b16 %v1921, %v1917
  %v1954 = vpack.c.b16 %v1922, %v1918
  %v1955 = vpack.c.b16 %v1923, %v1919
  %1988 = vmatprep.subr.bf16.mxu0 %v1925
  %1989 = vmatpush1.bf16.msra.mxu0 %v1924
  %1990 = vmatprep.subr.bf16.mxu0 %v1929
  %1991 = vmatpush1.bf16.msra.mxu0 %v1928
  %1992 = vmatprep.subr.bf16.mxu0 %v1933
  %1993 = vmatpush1.bf16.msra.mxu0 %v1932
  %1994 = vmatprep.subr.bf16.mxu0 %v1937
  %1995 = vmatpush1.bf16.msra.mxu0 %v1936
  %1996 = vmatprep.subr.bf16.mxu0 %v1941
  %1997 = vmatpush1.bf16.msra.mxu0 %v1940
  %1998 = vmatprep.subr.bf16.mxu0 %v1945
  %1999 = vmatpush1.bf16.msra.mxu0 %v1944
  %2000 = vmatprep.subr.bf16.mxu0 %v1949
  %2001 = vmatpush1.bf16.msra.mxu0 %v1948
  %2002 = vmatprep.subr.bf16.mxu0 %v1953
  %2003 = vmatpush1.bf16.msra.mxu0 %v1952
  %2004 = vmatprep.subr.bf16.mxu0 0
  %2005 = vmatpush1.bf16.msra.mxu0 0
  %2006 = vmatprep.subr.bf16.mxu0 0
  %2007 = vmatpush1.bf16.msra.mxu0 0
  %2008 = vmatprep.subr.bf16.mxu0 0
  %2009 = vmatpush1.bf16.msra.mxu0 0
  %2010 = vmatprep.subr.bf16.mxu0 0
  %2011 = vmatpush1.bf16.msra.mxu0 0
  %2012 = vmatprep.subr.bf16.mxu0 0
  %2013 = vmatpush1.bf16.msra.mxu0 0
  %2014 = vmatprep.subr.bf16.mxu0 0
  %2015 = vmatpush1.bf16.msra.mxu0 0
  %2016 = vmatprep.subr.bf16.mxu0 0
  %2017 = vmatpush1.bf16.msra.mxu0 0
  %2018 = vmatprep.subr.bf16.mxu0 0
  %2019 = vmatpush1.bf16.msra.mxu0 0
  %2020 = vmatprep.mubr.bf16.mxu0 0
  %2021 = vmatmul.mubr.bf16.gmra.mrb[0].mxu0 %v1485
  %v2022 = vpop.f32.mrb[0].mxu0
  %v2023 = vadd.f32 0.0, %v2022
  %v2024 = vpop.f32.mrb[0].mxu0
  %v2025 = vadd.f32 0.0, %v2024
  %v2026 = vpop.f32.mrb[0].mxu0
  %v2027 = vpop.f32.mrb[0].mxu0
  %2028 = vdwg.mxu0
  %2029 = vmatprep.subr.bf16.mxu0 %v1927
  %2030 = vmatpush1.bf16.msra.mxu0 %v1926
  %2031 = vmatprep.subr.bf16.mxu0 %v1931
  %2032 = vmatpush1.bf16.msra.mxu0 %v1930
  %2033 = vmatprep.subr.bf16.mxu0 %v1935
  %2034 = vmatpush1.bf16.msra.mxu0 %v1934
  %2035 = vmatprep.subr.bf16.mxu0 %v1939
  %2036 = vmatpush1.bf16.msra.mxu0 %v1938
  %2037 = vmatprep.subr.bf16.mxu0 %v1943
  %2038 = vmatpush1.bf16.msra.mxu0 %v1942
  %2039 = vmatprep.subr.bf16.mxu0 %v1947
  %2040 = vmatpush1.bf16.msra.mxu0 %v1946
  %2041 = vmatprep.subr.bf16.mxu0 %v1951
  %2042 = vmatpush1.bf16.msra.mxu0 %v1950
  %2043 = vmatprep.subr.bf16.mxu0 %v1955
  %2044 = vmatpush1.bf16.msra.mxu0 %v1954
  %2045 = vmatprep.subr.bf16.mxu0 0
  %2046 = vmatpush1.bf16.msra.mxu0 0
  %2047 = vmatprep.subr.bf16.mxu0 0
  %2048 = vmatpush1.bf16.msra.mxu0 0
  %2049 = vmatprep.subr.bf16.mxu0 0
  %2050 = vmatpush1.bf16.msra.mxu0 0
  %2051 = vmatprep.subr.bf16.mxu0 0
  %2052 = vmatpush1.bf16.msra.mxu0 0
  %2053 = vmatprep.subr.bf16.mxu0 0
  %2054 = vmatpush1.bf16.msra.mxu0 0
  %2055 = vmatprep.subr.bf16.mxu0 0
  %2056 = vmatpush1.bf16.msra.mxu0 0
  %2057 = vmatprep.subr.bf16.mxu0 0
  %2058 = vmatpush1.bf16.msra.mxu0 0
  %2059 = vmatprep.subr.bf16.mxu0 0
  %2060 = vmatpush1.bf16.msra.mxu0 0
  %2061 = vmatprep.mubr.bf16.mxu0 0
  %2062 = vmatmul.mubr.bf16.gmra.mrb[0].mxu0 %v1485
  %v2063 = vpop.f32.mrb[0].mxu0
  %v2064 = vadd.f32 0.0, %v2063
  %v2065 = vpop.f32.mrb[0].mxu0
  %v2066 = vadd.f32 0.0, %v2065
  %v2067 = vpop.f32.mrb[0].mxu0
  %v2068 = vpop.f32.mrb[0].mxu0
  %2069 = vdwg.mxu0
  %v2070 = vadd.f32 %v1792, %v2023
  %v2071 = vadd.f32 %v1793, %v2025
  %v2072 = vadd.f32 %v1794, %v2064
  %v2073 = vadd.f32 %v1795, %v2066
  %v2074 = vxor.u32 %v1784, 2147483648
  %v2075 = vmul.f32 %v2074, 1.442695
  %v2076 = vpow.pop %v2075
  %v2077 = vadd.f32 %v2076, 1.0
  %v2078 = vrcp.pop %v2077
  %v2079 = vmul.f32 1.0, %v2078
  %v2080 = vxor.u32 %v1785, 2147483648
  %v2081 = vmul.f32 %v2080, 1.442695
  %v2082 = vpow.pop %v2081
  %v2083 = vadd.f32 %v2082, 1.0
  %v2084 = vrcp.pop %v2083
  %v2085 = vmul.f32 1.0, %v2084
  %v2086 = vtanh.pop %v1786
  %v2087 = vxor.u32 %v1787, 2147483648
  %v2088 = vmul.f32 %v2087, 1.442695
  %v2089 = vpow.pop %v2088
  %v2090 = vadd.f32 %v2089, 1.0
  %v2091 = vrcp.pop %v2090
  %v2092 = vmul.f32 1.0, %v2091
  %v2093 = vmul.f32 %v2085, %v1453
  %v2094 = vmul.f32 %v2079, %v2086
  %v2095 = vadd.f32 %v2093, %v2094
  %v2096 = vtanh.pop %v2095
  %v2097 = vmul.f32 %v2092, %v2096
  %v2098 = vxor.u32 %v2070, 2147483648
  %v2099 = vmul.f32 %v2098, 1.442695
  %v2100 = vpow.pop %v2099
  %v2101 = vadd.f32 %v2100, 1.0
  %v2102 = vrcp.pop %v2101
  %v2103 = vmul.f32 1.0, %v2102
  %v2104 = vxor.u32 %v2071, 2147483648
  %v2105 = vmul.f32 %v2104, 1.442695
  %v2106 = vpow.pop %v2105
  %v2107 = vadd.f32 %v2106, 1.0
  %v2108 = vrcp.pop %v2107
  %v2109 = vmul.f32 1.0, %v2108
  %v2110 = vtanh.pop %v2072
  %v2111 = vxor.u32 %v2073, 2147483648
  %v2112 = vmul.f32 %v2111, 1.442695
  %v2113 = vpow.pop %v2112
  %v2114 = vadd.f32 %v2113, 1.0
  %v2115 = vrcp.pop %v2114
  %v2116 = vmul.f32 1.0, %v2115
  %v2117 = vmul.f32 %v2109, %v1482
  %v2118 = vmul.f32 %v2103, %v2110
  %v2119 = vadd.f32 %v2117, %v2118
  %v2120 = vtanh.pop %v2119
  %v2121 = vmul.f32 %v2116, %v2120
  %vm2122 = vcmp.gt.s32.totalorder %v847, 6
  %v2123 = vsel %vm2122, %v2121, 0.0
  %v2124 = vsel %vm2122, %v2119, 0.0
  %v2125 = vpack.c.bf16 %v2097, %v2097
  %v2127 = vrot.slane %v2125, 4
  %2129 = vst [vmem:[#allocation3] sm:$0xf0] %v2127
  %v2130 = vpack.c.bf16 %v2123, %v2123
  %2131 = vst [vmem:[#allocation4 + $0x18] sm:$0xf] %v2130
  %v2132 = vld [vmem:[#allocation2 + $0x40] sm:$0xf]
  %v2133 = vld [vmem:[#allocation2 + $0x48] sm:$0xf]
  %v2134 = vld [vmem:[#allocation2 + $0x50] sm:$0xf]
  %v2135 = vld [vmem:[#allocation2 + $0x58] sm:$0xf]
  %v2136 = vunpack.c.l.bf16 %v2132
  %v2137 = vunpack.c.l.bf16 %v2133
  %v2138 = vunpack.c.l.bf16 %v2134
  %v2139 = vunpack.c.l.bf16 %v2135
  %v2140 = vld [vmem:[%s4] sm:$0xff]
  %v2141 = vld [vmem:[%s4 + $0x8] sm:$0xff]
  %v2142 = vld [vmem:[%s4 + $0x10] sm:$0xff]
  %v2143 = vld [vmem:[%s4 + $0x18] sm:$0xff]
  %v2144 = vld [vmem:[%s4 + $0x20] sm:$0xff]
  %v2145 = vld [vmem:[%s4 + $0x28] sm:$0xff]
  %v2146 = vld [vmem:[%s4 + $0x30] sm:$0xff]
  %v2147 = vld [vmem:[%s4 + $0x38] sm:$0xff]
  %v2148 = vld [vmem:[%s4 + $0x40] sm:$0xff]
  %v2149 = vld [vmem:[%s4 + $0x48] sm:$0xff]
  %v2150 = vld [vmem:[%s4 + $0x50] sm:$0xff]
  %v2151 = vld [vmem:[%s4 + $0x58] sm:$0xff]
  %v2152 = vld [vmem:[%s4 + $0x60] sm:$0xff]
  %v2153 = vld [vmem:[%s4 + $0x68] sm:$0xff]
  %v2154 = vld [vmem:[%s4 + $0x70] sm:$0xff]
  %v2155 = vld [vmem:[%s4 + $0x78] sm:$0xff]
  %v2156 = vld [vmem:[%s4 + $0x80] sm:$0xff]
  %v2157 = vld [vmem:[%s4 + $0x88] sm:$0xff]
  %v2158 = vld [vmem:[%s4 + $0x90] sm:$0xff]
  %v2159 = vld [vmem:[%s4 + $0x98] sm:$0xff]
  %v2160 = vld [vmem:[%s4 + $0xa0] sm:$0xff]
  %v2161 = vld [vmem:[%s4 + $0xa8] sm:$0xff]
  %v2162 = vld [vmem:[%s4 + $0xb0] sm:$0xff]
  %v2163 = vld [vmem:[%s4 + $0xb8] sm:$0xff]
  %v2164 = vld [vmem:[%s4 + $0xc0] sm:$0xff]
  %v2165 = vld [vmem:[%s4 + $0xc8] sm:$0xff]
  %v2166 = vld [vmem:[%s4 + $0xd0] sm:$0xff]
  %v2167 = vld [vmem:[%s4 + $0xd8] sm:$0xff]
  %v2168 = vld [vmem:[%s4 + $0xe0] sm:$0xff]
  %v2169 = vld [vmem:[%s4 + $0xe8] sm:$0xff]
  %v2170 = vld [vmem:[%s4 + $0xf0] sm:$0xff]
  %v2171 = vld [vmem:[%s4 + $0xf8] sm:$0xff]
  %v2204 = vunpack.c.l.b16 %v2140
  %v2205 = vunpack.c.h.b16 %v2140
  %v2206 = vunpack.c.l.b16 %v2141
  %v2207 = vunpack.c.h.b16 %v2141
  %v2208 = vunpack.c.l.b16 %v2142
  %v2209 = vunpack.c.h.b16 %v2142
  %v2210 = vunpack.c.l.b16 %v2143
  %v2211 = vunpack.c.h.b16 %v2143
  %v2212 = vunpack.c.l.b16 %v2144
  %v2213 = vunpack.c.h.b16 %v2144
  %v2214 = vunpack.c.l.b16 %v2145
  %v2215 = vunpack.c.h.b16 %v2145
  %v2216 = vunpack.c.l.b16 %v2146
  %v2217 = vunpack.c.h.b16 %v2146
  %v2218 = vunpack.c.l.b16 %v2147
  %v2219 = vunpack.c.h.b16 %v2147
  %v2220 = vunpack.c.l.b16 %v2148
  %v2221 = vunpack.c.h.b16 %v2148
  %v2222 = vunpack.c.l.b16 %v2149
  %v2223 = vunpack.c.h.b16 %v2149
  %v2224 = vunpack.c.l.b16 %v2150
  %v2225 = vunpack.c.h.b16 %v2150
  %v2226 = vunpack.c.l.b16 %v2151
  %v2227 = vunpack.c.h.b16 %v2151
  %v2228 = vunpack.c.l.b16 %v2152
  %v2229 = vunpack.c.h.b16 %v2152
  %v2230 = vunpack.c.l.b16 %v2153
  %v2231 = vunpack.c.h.b16 %v2153
  %v2232 = vunpack.c.l.b16 %v2154
  %v2233 = vunpack.c.h.b16 %v2154
  %v2234 = vunpack.c.l.b16 %v2155
  %v2235 = vunpack.c.h.b16 %v2155
  %v2236 = vunpack.c.l.b16 %v2156
  %v2237 = vunpack.c.h.b16 %v2156
  %v2238 = vunpack.c.l.b16 %v2157
  %v2239 = vunpack.c.h.b16 %v2157
  %v2240 = vunpack.c.l.b16 %v2158
  %v2241 = vunpack.c.h.b16 %v2158
  %v2242 = vunpack.c.l.b16 %v2159
  %v2243 = vunpack.c.h.b16 %v2159
  %v2244 = vunpack.c.l.b16 %v2160
  %v2245 = vunpack.c.h.b16 %v2160
  %v2246 = vunpack.c.l.b16 %v2161
  %v2247 = vunpack.c.h.b16 %v2161
  %v2248 = vunpack.c.l.b16 %v2162
  %v2249 = vunpack.c.h.b16 %v2162
  %v2250 = vunpack.c.l.b16 %v2163
  %v2251 = vunpack.c.h.b16 %v2163
  %v2252 = vunpack.c.l.b16 %v2164
  %v2253 = vunpack.c.h.b16 %v2164
  %v2254 = vunpack.c.l.b16 %v2165
  %v2255 = vunpack.c.h.b16 %v2165
  %v2256 = vunpack.c.l.b16 %v2166
  %v2257 = vunpack.c.h.b16 %v2166
  %v2258 = vunpack.c.l.b16 %v2167
  %v2259 = vunpack.c.h.b16 %v2167
  %v2260 = vunpack.c.l.b16 %v2168
  %v2261 = vunpack.c.h.b16 %v2168
  %v2262 = vunpack.c.l.b16 %v2169
  %v2263 = vunpack.c.h.b16 %v2169
  %v2264 = vunpack.c.l.b16 %v2170
  %v2265 = vunpack.c.h.b16 %v2170
  %v2266 = vunpack.c.l.b16 %v2171
  %v2267 = vunpack.c.h.b16 %v2171
  %v2268 = vpack.c.b16 %v2208, %v2204
  %v2269 = vpack.c.b16 %v2209, %v2205
  %v2270 = vpack.c.b16 %v2210, %v2206
  %v2271 = vpack.c.b16 %v2211, %v2207
  %v2272 = vpack.c.b16 %v2216, %v2212
  %v2273 = vpack.c.b16 %v2217, %v2213
  %v2274 = vpack.c.b16 %v2218, %v2214
  %v2275 = vpack.c.b16 %v2219, %v2215
  %v2276 = vpack.c.b16 %v2224, %v2220
  %v2277 = vpack.c.b16 %v2225, %v2221
  %v2278 = vpack.c.b16 %v2226, %v2222
  %v2279 = vpack.c.b16 %v2227, %v2223
  %v2280 = vpack.c.b16 %v2232, %v2228
  %v2281 = vpack.c.b16 %v2233, %v2229
  %v2282 = vpack.c.b16 %v2234, %v2230
  %v2283 = vpack.c.b16 %v2235, %v2231
  %v2284 = vpack.c.b16 %v2240, %v2236
  %v2285 = vpack.c.b16 %v2241, %v2237
  %v2286 = vpack.c.b16 %v2242, %v2238
  %v2287 = vpack.c.b16 %v2243, %v2239
  %v2288 = vpack.c.b16 %v2248, %v2244
  %v2289 = vpack.c.b16 %v2249, %v2245
  %v2290 = vpack.c.b16 %v2250, %v2246
  %v2291 = vpack.c.b16 %v2251, %v2247
  %v2292 = vpack.c.b16 %v2256, %v2252
  %v2293 = vpack.c.b16 %v2257, %v2253
  %v2294 = vpack.c.b16 %v2258, %v2254
  %v2295 = vpack.c.b16 %v2259, %v2255
  %v2296 = vpack.c.b16 %v2264, %v2260
  %v2297 = vpack.c.b16 %v2265, %v2261
  %v2298 = vpack.c.b16 %v2266, %v2262
  %v2299 = vpack.c.b16 %v2267, %v2263
  %2332 = vmatprep.subr.bf16.mxu0 %v2269
  %2333 = vmatpush1.bf16.msra.mxu0 %v2268
  %2334 = vmatprep.subr.bf16.mxu0 %v2273
  %2335 = vmatpush1.bf16.msra.mxu0 %v2272
  %2336 = vmatprep.subr.bf16.mxu0 %v2277
  %2337 = vmatpush1.bf16.msra.mxu0 %v2276
  %2338 = vmatprep.subr.bf16.mxu0 %v2281
  %2339 = vmatpush1.bf16.msra.mxu0 %v2280
  %2340 = vmatprep.subr.bf16.mxu0 %v2285
  %2341 = vmatpush1.bf16.msra.mxu0 %v2284
  %2342 = vmatprep.subr.bf16.mxu0 %v2289
  %2343 = vmatpush1.bf16.msra.mxu0 %v2288
  %2344 = vmatprep.subr.bf16.mxu0 %v2293
  %2345 = vmatpush1.bf16.msra.mxu0 %v2292
  %2346 = vmatprep.subr.bf16.mxu0 %v2297
  %2347 = vmatpush1.bf16.msra.mxu0 %v2296
  %2348 = vmatprep.subr.bf16.mxu0 0
  %2349 = vmatpush1.bf16.msra.mxu0 0
  %2350 = vmatprep.subr.bf16.mxu0 0
  %2351 = vmatpush1.bf16.msra.mxu0 0
  %2352 = vmatprep.subr.bf16.mxu0 0
  %2353 = vmatpush1.bf16.msra.mxu0 0
  %2354 = vmatprep.subr.bf16.mxu0 0
  %2355 = vmatpush1.bf16.msra.mxu0 0
  %2356 = vmatprep.subr.bf16.mxu0 0
  %2357 = vmatpush1.bf16.msra.mxu0 0
  %2358 = vmatprep.subr.bf16.mxu0 0
  %2359 = vmatpush1.bf16.msra.mxu0 0
  %2360 = vmatprep.subr.bf16.mxu0 0
  %2361 = vmatpush1.bf16.msra.mxu0 0
  %2362 = vmatprep.subr.bf16.mxu0 0
  %2363 = vmatpush1.bf16.msra.mxu0 0
  %2364 = vmatprep.mubr.bf16.mxu0 0
  %2365 = vmatmul.mubr.bf16.gmra.mrb[0].mxu0 %v2125
  %v2366 = vpop.f32.mrb[0].mxu0
  %v2367 = vadd.f32 0.0, %v2366
  %v2368 = vpop.f32.mrb[0].mxu0
  %v2369 = vadd.f32 0.0, %v2368
  %v2370 = vpop.f32.mrb[0].mxu0
  %v2371 = vpop.f32.mrb[0].mxu0
  %2372 = vdwg.mxu0
  %2373 = vmatprep.subr.bf16.mxu0 %v2271
  %2374 = vmatpush1.bf16.msra.mxu0 %v2270
  %2375 = vmatprep.subr.bf16.mxu0 %v2275
  %2376 = vmatpush1.bf16.msra.mxu0 %v2274
  %2377 = vmatprep.subr.bf16.mxu0 %v2279
  %2378 = vmatpush1.bf16.msra.mxu0 %v2278
  %2379 = vmatprep.subr.bf16.mxu0 %v2283
  %2380 = vmatpush1.bf16.msra.mxu0 %v2282
  %2381 = vmatprep.subr.bf16.mxu0 %v2287
  %2382 = vmatpush1.bf16.msra.mxu0 %v2286
  %2383 = vmatprep.subr.bf16.mxu0 %v2291
  %2384 = vmatpush1.bf16.msra.mxu0 %v2290
  %2385 = vmatprep.subr.bf16.mxu0 %v2295
  %2386 = vmatpush1.bf16.msra.mxu0 %v2294
  %2387 = vmatprep.subr.bf16.mxu0 %v2299
  %2388 = vmatpush1.bf16.msra.mxu0 %v2298
  %2389 = vmatprep.subr.bf16.mxu0 0
  %2390 = vmatpush1.bf16.msra.mxu0 0
  %2391 = vmatprep.subr.bf16.mxu0 0
  %2392 = vmatpush1.bf16.msra.mxu0 0
  %2393 = vmatprep.subr.bf16.mxu0 0
  %2394 = vmatpush1.bf16.msra.mxu0 0
  %2395 = vmatprep.subr.bf16.mxu0 0
  %2396 = vmatpush1.bf16.msra.mxu0 0
  %2397 = vmatprep.subr.bf16.mxu0 0
  %2398 = vmatpush1.bf16.msra.mxu0 0
  %2399 = vmatprep.subr.bf16.mxu0 0
  %2400 = vmatpush1.bf16.msra.mxu0 0
  %2401 = vmatprep.subr.bf16.mxu0 0
  %2402 = vmatpush1.bf16.msra.mxu0 0
  %2403 = vmatprep.subr.bf16.mxu0 0
  %2404 = vmatpush1.bf16.msra.mxu0 0
  %2405 = vmatprep.mubr.bf16.mxu0 0
  %2406 = vmatmul.mubr.bf16.gmra.mrb[0].mxu0 %v2125
  %v2407 = vpop.f32.mrb[0].mxu0
  %v2408 = vadd.f32 0.0, %v2407
  %v2409 = vpop.f32.mrb[0].mxu0
  %v2410 = vadd.f32 0.0, %v2409
  %v2411 = vpop.f32.mrb[0].mxu0
  %v2412 = vpop.f32.mrb[0].mxu0
  %2413 = vdwg.mxu0
  %v2414 = vadd.f32 %v2136, %v2367
  %v2415 = vadd.f32 %v2137, %v2369
  %v2416 = vadd.f32 %v2138, %v2408
  %v2417 = vadd.f32 %v2139, %v2410
  %v2418 = vld [vmem:[#allocation2 + $0xa0] sm:$0xf0]
  %v2419 = vld [vmem:[#allocation2 + $0xa8] sm:$0xf0]
  %v2420 = vld [vmem:[#allocation2 + $0xb0] sm:$0xf0]
  %v2421 = vld [vmem:[#allocation2 + $0xb8] sm:$0xf0]
  %v2426 = vrot.slane %v2418, 4
  %v2427 = vrot.slane %v2419, 4
  %v2428 = vrot.slane %v2420, 4
  %v2429 = vrot.slane %v2421, 4
  %v2434 = vunpack.c.l.bf16 %v2426
  %v2435 = vunpack.c.l.bf16 %v2427
  %v2436 = vunpack.c.l.bf16 %v2428
  %v2437 = vunpack.c.l.bf16 %v2429
  %v2438 = vld [vmem:[%s5] sm:$0xff]
  %v2439 = vld [vmem:[%s5 + $0x8] sm:$0xff]
  %v2440 = vld [vmem:[%s5 + $0x10] sm:$0xff]
  %v2441 = vld [vmem:[%s5 + $0x18] sm:$0xff]
  %v2442 = vld [vmem:[%s5 + $0x20] sm:$0xff]
  %v2443 = vld [vmem:[%s5 + $0x28] sm:$0xff]
  %v2444 = vld [vmem:[%s5 + $0x30] sm:$0xff]
  %v2445 = vld [vmem:[%s5 + $0x38] sm:$0xff]
  %v2446 = vld [vmem:[%s5 + $0x40] sm:$0xff]
  %v2447 = vld [vmem:[%s5 + $0x48] sm:$0xff]
  %v2448 = vld [vmem:[%s5 + $0x50] sm:$0xff]
  %v2449 = vld [vmem:[%s5 + $0x58] sm:$0xff]
  %v2450 = vld [vmem:[%s5 + $0x60] sm:$0xff]
  %v2451 = vld [vmem:[%s5 + $0x68] sm:$0xff]
  %v2452 = vld [vmem:[%s5 + $0x70] sm:$0xff]
  %v2453 = vld [vmem:[%s5 + $0x78] sm:$0xff]
  %v2454 = vld [vmem:[%s5 + $0x80] sm:$0xff]
  %v2455 = vld [vmem:[%s5 + $0x88] sm:$0xff]
  %v2456 = vld [vmem:[%s5 + $0x90] sm:$0xff]
  %v2457 = vld [vmem:[%s5 + $0x98] sm:$0xff]
  %v2458 = vld [vmem:[%s5 + $0xa0] sm:$0xff]
  %v2459 = vld [vmem:[%s5 + $0xa8] sm:$0xff]
  %v2460 = vld [vmem:[%s5 + $0xb0] sm:$0xff]
  %v2461 = vld [vmem:[%s5 + $0xb8] sm:$0xff]
  %v2462 = vld [vmem:[%s5 + $0xc0] sm:$0xff]
  %v2463 = vld [vmem:[%s5 + $0xc8] sm:$0xff]
  %v2464 = vld [vmem:[%s5 + $0xd0] sm:$0xff]
  %v2465 = vld [vmem:[%s5 + $0xd8] sm:$0xff]
  %v2466 = vld [vmem:[%s5 + $0xe0] sm:$0xff]
  %v2467 = vld [vmem:[%s5 + $0xe8] sm:$0xff]
  %v2468 = vld [vmem:[%s5 + $0xf0] sm:$0xff]
  %v2469 = vld [vmem:[%s5 + $0xf8] sm:$0xff]
  %v2502 = vunpack.c.l.b16 %v2438
  %v2503 = vunpack.c.h.b16 %v2438
  %v2504 = vunpack.c.l.b16 %v2439
  %v2505 = vunpack.c.h.b16 %v2439
  %v2506 = vunpack.c.l.b16 %v2440
  %v2507 = vunpack.c.h.b16 %v2440
  %v2508 = vunpack.c.l.b16 %v2441
  %v2509 = vunpack.c.h.b16 %v2441
  %v2510 = vunpack.c.l.b16 %v2442
  %v2511 = vunpack.c.h.b16 %v2442
  %v2512 = vunpack.c.l.b16 %v2443
  %v2513 = vunpack.c.h.b16 %v2443
  %v2514 = vunpack.c.l.b16 %v2444
  %v2515 = vunpack.c.h.b16 %v2444
  %v2516 = vunpack.c.l.b16 %v2445
  %v2517 = vunpack.c.h.b16 %v2445
  %v2518 = vunpack.c.l.b16 %v2446
  %v2519 = vunpack.c.h.b16 %v2446
  %v2520 = vunpack.c.l.b16 %v2447
  %v2521 = vunpack.c.h.b16 %v2447
  %v2522 = vunpack.c.l.b16 %v2448
  %v2523 = vunpack.c.h.b16 %v2448
  %v2524 = vunpack.c.l.b16 %v2449
  %v2525 = vunpack.c.h.b16 %v2449
  %v2526 = vunpack.c.l.b16 %v2450
  %v2527 = vunpack.c.h.b16 %v2450
  %v2528 = vunpack.c.l.b16 %v2451
  %v2529 = vunpack.c.h.b16 %v2451
  %v2530 = vunpack.c.l.b16 %v2452
  %v2531 = vunpack.c.h.b16 %v2452
  %v2532 = vunpack.c.l.b16 %v2453
  %v2533 = vunpack.c.h.b16 %v2453
  %v2534 = vunpack.c.l.b16 %v2454
  %v2535 = vunpack.c.h.b16 %v2454
  %v2536 = vunpack.c.l.b16 %v2455
  %v2537 = vunpack.c.h.b16 %v2455
  %v2538 = vunpack.c.l.b16 %v2456
  %v2539 = vunpack.c.h.b16 %v2456
  %v2540 = vunpack.c.l.b16 %v2457
  %v2541 = vunpack.c.h.b16 %v2457
  %v2542 = vunpack.c.l.b16 %v2458
  %v2543 = vunpack.c.h.b16 %v2458
  %v2544 = vunpack.c.l.b16 %v2459
  %v2545 = vunpack.c.h.b16 %v2459
  %v2546 = vunpack.c.l.b16 %v2460
  %v2547 = vunpack.c.h.b16 %v2460
  %v2548 = vunpack.c.l.b16 %v2461
  %v2549 = vunpack.c.h.b16 %v2461
  %v2550 = vunpack.c.l.b16 %v2462
  %v2551 = vunpack.c.h.b16 %v2462
  %v2552 = vunpack.c.l.b16 %v2463
  %v2553 = vunpack.c.h.b16 %v2463
  %v2554 = vunpack.c.l.b16 %v2464
  %v2555 = vunpack.c.h.b16 %v2464
  %v2556 = vunpack.c.l.b16 %v2465
  %v2557 = vunpack.c.h.b16 %v2465
  %v2558 = vunpack.c.l.b16 %v2466
  %v2559 = vunpack.c.h.b16 %v2466
  %v2560 = vunpack.c.l.b16 %v2467
  %v2561 = vunpack.c.h.b16 %v2467
  %v2562 = vunpack.c.l.b16 %v2468
  %v2563 = vunpack.c.h.b16 %v2468
  %v2564 = vunpack.c.l.b16 %v2469
  %v2565 = vunpack.c.h.b16 %v2469
  %v2566 = vpack.c.b16 %v2506, %v2502
  %v2567 = vpack.c.b16 %v2507, %v2503
  %v2568 = vpack.c.b16 %v2508, %v2504
  %v2569 = vpack.c.b16 %v2509, %v2505
  %v2570 = vpack.c.b16 %v2514, %v2510
  %v2571 = vpack.c.b16 %v2515, %v2511
  %v2572 = vpack.c.b16 %v2516, %v2512
  %v2573 = vpack.c.b16 %v2517, %v2513
  %v2574 = vpack.c.b16 %v2522, %v2518
  %v2575 = vpack.c.b16 %v2523, %v2519
  %v2576 = vpack.c.b16 %v2524, %v2520
  %v2577 = vpack.c.b16 %v2525, %v2521
  %v2578 = vpack.c.b16 %v2530, %v2526
  %v2579 = vpack.c.b16 %v2531, %v2527
  %v2580 = vpack.c.b16 %v2532, %v2528
  %v2581 = vpack.c.b16 %v2533, %v2529
  %v2582 = vpack.c.b16 %v2538, %v2534
  %v2583 = vpack.c.b16 %v2539, %v2535
  %v2584 = vpack.c.b16 %v2540, %v2536
  %v2585 = vpack.c.b16 %v2541, %v2537
  %v2586 = vpack.c.b16 %v2546, %v2542
  %v2587 = vpack.c.b16 %v2547, %v2543
  %v2588 = vpack.c.b16 %v2548, %v2544
  %v2589 = vpack.c.b16 %v2549, %v2545
  %v2590 = vpack.c.b16 %v2554, %v2550
  %v2591 = vpack.c.b16 %v2555, %v2551
  %v2592 = vpack.c.b16 %v2556, %v2552
  %v2593 = vpack.c.b16 %v2557, %v2553
  %v2594 = vpack.c.b16 %v2562, %v2558
  %v2595 = vpack.c.b16 %v2563, %v2559
  %v2596 = vpack.c.b16 %v2564, %v2560
  %v2597 = vpack.c.b16 %v2565, %v2561
  %2630 = vmatprep.subr.bf16.mxu0 %v2567
  %2631 = vmatpush1.bf16.msra.mxu0 %v2566
  %2632 = vmatprep.subr.bf16.mxu0 %v2571
  %2633 = vmatpush1.bf16.msra.mxu0 %v2570
  %2634 = vmatprep.subr.bf16.mxu0 %v2575
  %2635 = vmatpush1.bf16.msra.mxu0 %v2574
  %2636 = vmatprep.subr.bf16.mxu0 %v2579
  %2637 = vmatpush1.bf16.msra.mxu0 %v2578
  %2638 = vmatprep.subr.bf16.mxu0 %v2583
  %2639 = vmatpush1.bf16.msra.mxu0 %v2582
  %2640 = vmatprep.subr.bf16.mxu0 %v2587
  %2641 = vmatpush1.bf16.msra.mxu0 %v2586
  %2642 = vmatprep.subr.bf16.mxu0 %v2591
  %2643 = vmatpush1.bf16.msra.mxu0 %v2590
  %2644 = vmatprep.subr.bf16.mxu0 %v2595
  %2645 = vmatpush1.bf16.msra.mxu0 %v2594
  %2646 = vmatprep.subr.bf16.mxu0 0
  %2647 = vmatpush1.bf16.msra.mxu0 0
  %2648 = vmatprep.subr.bf16.mxu0 0
  %2649 = vmatpush1.bf16.msra.mxu0 0
  %2650 = vmatprep.subr.bf16.mxu0 0
  %2651 = vmatpush1.bf16.msra.mxu0 0
  %2652 = vmatprep.subr.bf16.mxu0 0
  %2653 = vmatpush1.bf16.msra.mxu0 0
  %2654 = vmatprep.subr.bf16.mxu0 0
  %2655 = vmatpush1.bf16.msra.mxu0 0
  %2656 = vmatprep.subr.bf16.mxu0 0
  %2657 = vmatpush1.bf16.msra.mxu0 0
  %2658 = vmatprep.subr.bf16.mxu0 0
  %2659 = vmatpush1.bf16.msra.mxu0 0
  %2660 = vmatprep.subr.bf16.mxu0 0
  %2661 = vmatpush1.bf16.msra.mxu0 0
  %2662 = vmatprep.mubr.bf16.mxu0 0
  %2663 = vmatmul.mubr.bf16.gmra.mrb[0].mxu0 %v2130
  %v2664 = vpop.f32.mrb[0].mxu0
  %v2665 = vadd.f32 0.0, %v2664
  %v2666 = vpop.f32.mrb[0].mxu0
  %v2667 = vadd.f32 0.0, %v2666
  %v2668 = vpop.f32.mrb[0].mxu0
  %v2669 = vpop.f32.mrb[0].mxu0
  %2670 = vdwg.mxu0
  %2671 = vmatprep.subr.bf16.mxu0 %v2569
  %2672 = vmatpush1.bf16.msra.mxu0 %v2568
  %2673 = vmatprep.subr.bf16.mxu0 %v2573
  %2674 = vmatpush1.bf16.msra.mxu0 %v2572
  %2675 = vmatprep.subr.bf16.mxu0 %v2577
  %2676 = vmatpush1.bf16.msra.mxu0 %v2576
  %2677 = vmatprep.subr.bf16.mxu0 %v2581
  %2678 = vmatpush1.bf16.msra.mxu0 %v2580
  %2679 = vmatprep.subr.bf16.mxu0 %v2585
  %2680 = vmatpush1.bf16.msra.mxu0 %v2584
  %2681 = vmatprep.subr.bf16.mxu0 %v2589
  %2682 = vmatpush1.bf16.msra.mxu0 %v2588
  %2683 = vmatprep.subr.bf16.mxu0 %v2593
  %2684 = vmatpush1.bf16.msra.mxu0 %v2592
  %2685 = vmatprep.subr.bf16.mxu0 %v2597
  %2686 = vmatpush1.bf16.msra.mxu0 %v2596
  %2687 = vmatprep.subr.bf16.mxu0 0
  %2688 = vmatpush1.bf16.msra.mxu0 0
  %2689 = vmatprep.subr.bf16.mxu0 0
  %2690 = vmatpush1.bf16.msra.mxu0 0
  %2691 = vmatprep.subr.bf16.mxu0 0
  %2692 = vmatpush1.bf16.msra.mxu0 0
  %2693 = vmatprep.subr.bf16.mxu0 0
  %2694 = vmatpush1.bf16.msra.mxu0 0
  %2695 = vmatprep.subr.bf16.mxu0 0
  %2696 = vmatpush1.bf16.msra.mxu0 0
  %2697 = vmatprep.subr.bf16.mxu0 0
  %2698 = vmatpush1.bf16.msra.mxu0 0
  %2699 = vmatprep.subr.bf16.mxu0 0
  %2700 = vmatpush1.bf16.msra.mxu0 0
  %2701 = vmatprep.subr.bf16.mxu0 0
  %2702 = vmatpush1.bf16.msra.mxu0 0
  %2703 = vmatprep.mubr.bf16.mxu0 0
  %2704 = vmatmul.mubr.bf16.gmra.mrb[0].mxu0 %v2130
  %v2705 = vpop.f32.mrb[0].mxu0
  %v2706 = vadd.f32 0.0, %v2705
  %v2707 = vpop.f32.mrb[0].mxu0
  %v2708 = vadd.f32 0.0, %v2707
  %v2709 = vpop.f32.mrb[0].mxu0
  %v2710 = vpop.f32.mrb[0].mxu0
  %2711 = vdwg.mxu0
  %v2712 = vadd.f32 %v2434, %v2665
  %v2713 = vadd.f32 %v2435, %v2667
  %v2714 = vadd.f32 %v2436, %v2706
  %v2715 = vadd.f32 %v2437, %v2708
  %v2716 = vxor.u32 %v2414, 2147483648
  %v2717 = vmul.f32 %v2716, 1.442695
  %v2718 = vpow.pop %v2717
  %v2719 = vadd.f32 %v2718, 1.0
  %v2720 = vrcp.pop %v2719
  %v2721 = vmul.f32 1.0, %v2720
  %v2722 = vxor.u32 %v2415, 2147483648
  %v2723 = vmul.f32 %v2722, 1.442695
  %v2724 = vpow.pop %v2723
  %v2725 = vadd.f32 %v2724, 1.0
  %v2726 = vrcp.pop %v2725
  %v2727 = vmul.f32 1.0, %v2726
  %v2728 = vtanh.pop %v2416
  %v2729 = vxor.u32 %v2417, 2147483648
  %v2730 = vmul.f32 %v2729, 1.442695
  %v2731 = vpow.pop %v2730
  %v2732 = vadd.f32 %v2731, 1.0
  %v2733 = vrcp.pop %v2732
  %v2734 = vmul.f32 1.0, %v2733
  %v2735 = vmul.f32 %v2727, %v2095
  %v2736 = vmul.f32 %v2721, %v2728
  %v2737 = vadd.f32 %v2735, %v2736
  %v2738 = vtanh.pop %v2737
  %v2739 = vmul.f32 %v2734, %v2738
  %v2740 = vxor.u32 %v2712, 2147483648
  %v2741 = vmul.f32 %v2740, 1.442695
  %v2742 = vpow.pop %v2741
  %v2743 = vadd.f32 %v2742, 1.0
  %v2744 = vrcp.pop %v2743
  %v2745 = vmul.f32 1.0, %v2744
  %v2746 = vxor.u32 %v2713, 2147483648
  %v2747 = vmul.f32 %v2746, 1.442695
  %v2748 = vpow.pop %v2747
  %v2749 = vadd.f32 %v2748, 1.0
  %v2750 = vrcp.pop %v2749
  %v2751 = vmul.f32 1.0, %v2750
  %v2752 = vtanh.pop %v2714
  %v2753 = vxor.u32 %v2715, 2147483648
  %v2754 = vmul.f32 %v2753, 1.442695
  %v2755 = vpow.pop %v2754
  %v2756 = vadd.f32 %v2755, 1.0
  %v2757 = vrcp.pop %v2756
  %v2758 = vmul.f32 1.0, %v2757
  %v2759 = vmul.f32 %v2751, %v2124
  %v2760 = vmul.f32 %v2745, %v2752
  %v2761 = vadd.f32 %v2759, %v2760
  %v2762 = vtanh.pop %v2761
  %v2763 = vmul.f32 %v2758, %v2762
  %vm2764 = vcmp.gt.s32.totalorder %v847, 5
  %v2765 = vsel %vm2764, %v2763, 0.0
  %v2766 = vsel %vm2764, %v2761, 0.0
  %v2767 = vpack.c.bf16 %v2739, %v2739
  %2768 = vst [vmem:[#allocation3 + $0x8] sm:$0xf] %v2767
  %v2769 = vpack.c.bf16 %v2765, %v2765
  %v2771 = vrot.slane %v2769, 4
  %2773 = vst [vmem:[#allocation4 + $0x10] sm:$0xf0] %v2771
  %v2774 = vld [vmem:[#allocation2 + $0x40] sm:$0xf0]
  %v2775 = vld [vmem:[#allocation2 + $0x48] sm:$0xf0]
  %v2776 = vld [vmem:[#allocation2 + $0x50] sm:$0xf0]
  %v2777 = vld [vmem:[#allocation2 + $0x58] sm:$0xf0]
  %v2782 = vrot.slane %v2774, 4
  %v2783 = vrot.slane %v2775, 4
  %v2784 = vrot.slane %v2776, 4
  %v2785 = vrot.slane %v2777, 4
  %v2790 = vunpack.c.l.bf16 %v2782
  %v2791 = vunpack.c.l.bf16 %v2783
  %v2792 = vunpack.c.l.bf16 %v2784
  %v2793 = vunpack.c.l.bf16 %v2785
  %v2794 = vld [vmem:[%s4] sm:$0xff]
  %v2795 = vld [vmem:[%s4 + $0x8] sm:$0xff]
  %v2796 = vld [vmem:[%s4 + $0x10] sm:$0xff]
  %v2797 = vld [vmem:[%s4 + $0x18] sm:$0xff]
  %v2798 = vld [vmem:[%s4 + $0x20] sm:$0xff]
  %v2799 = vld [vmem:[%s4 + $0x28] sm:$0xff]
  %v2800 = vld [vmem:[%s4 + $0x30] sm:$0xff]
  %v2801 = vld [vmem:[%s4 + $0x38] sm:$0xff]
  %v2802 = vld [vmem:[%s4 + $0x40] sm:$0xff]
  %v2803 = vld [vmem:[%s4 + $0x48] sm:$0xff]
  %v2804 = vld [vmem:[%s4 + $0x50] sm:$0xff]
  %v2805 = vld [vmem:[%s4 + $0x58] sm:$0xff]
  %v2806 = vld [vmem:[%s4 + $0x60] sm:$0xff]
  %v2807 = vld [vmem:[%s4 + $0x68] sm:$0xff]
  %v2808 = vld [vmem:[%s4 + $0x70] sm:$0xff]
  %v2809 = vld [vmem:[%s4 + $0x78] sm:$0xff]
  %v2810 = vld [vmem:[%s4 + $0x80] sm:$0xff]
  %v2811 = vld [vmem:[%s4 + $0x88] sm:$0xff]
  %v2812 = vld [vmem:[%s4 + $0x90] sm:$0xff]
  %v2813 = vld [vmem:[%s4 + $0x98] sm:$0xff]
  %v2814 = vld [vmem:[%s4 + $0xa0] sm:$0xff]
  %v2815 = vld [vmem:[%s4 + $0xa8] sm:$0xff]
  %v2816 = vld [vmem:[%s4 + $0xb0] sm:$0xff]
  %v2817 = vld [vmem:[%s4 + $0xb8] sm:$0xff]
  %v2818 = vld [vmem:[%s4 + $0xc0] sm:$0xff]
  %v2819 = vld [vmem:[%s4 + $0xc8] sm:$0xff]
  %v2820 = vld [vmem:[%s4 + $0xd0] sm:$0xff]
  %v2821 = vld [vmem:[%s4 + $0xd8] sm:$0xff]
  %v2822 = vld [vmem:[%s4 + $0xe0] sm:$0xff]
  %v2823 = vld [vmem:[%s4 + $0xe8] sm:$0xff]
  %v2824 = vld [vmem:[%s4 + $0xf0] sm:$0xff]
  %v2825 = vld [vmem:[%s4 + $0xf8] sm:$0xff]
  %v2858 = vunpack.c.l.b16 %v2794
  %v2859 = vunpack.c.h.b16 %v2794
  %v2860 = vunpack.c.l.b16 %v2795
  %v2861 = vunpack.c.h.b16 %v2795
  %v2862 = vunpack.c.l.b16 %v2796
  %v2863 = vunpack.c.h.b16 %v2796
  %v2864 = vunpack.c.l.b16 %v2797
  %v2865 = vunpack.c.h.b16 %v2797
  %v2866 = vunpack.c.l.b16 %v2798
  %v2867 = vunpack.c.h.b16 %v2798
  %v2868 = vunpack.c.l.b16 %v2799
  %v2869 = vunpack.c.h.b16 %v2799
  %v2870 = vunpack.c.l.b16 %v2800
  %v2871 = vunpack.c.h.b16 %v2800
  %v2872 = vunpack.c.l.b16 %v2801
  %v2873 = vunpack.c.h.b16 %v2801
  %v2874 = vunpack.c.l.b16 %v2802
  %v2875 = vunpack.c.h.b16 %v2802
  %v2876 = vunpack.c.l.b16 %v2803
  %v2877 = vunpack.c.h.b16 %v2803
  %v2878 = vunpack.c.l.b16 %v2804
  %v2879 = vunpack.c.h.b16 %v2804
  %v2880 = vunpack.c.l.b16 %v2805
  %v2881 = vunpack.c.h.b16 %v2805
  %v2882 = vunpack.c.l.b16 %v2806
  %v2883 = vunpack.c.h.b16 %v2806
  %v2884 = vunpack.c.l.b16 %v2807
  %v2885 = vunpack.c.h.b16 %v2807
  %v2886 = vunpack.c.l.b16 %v2808
  %v2887 = vunpack.c.h.b16 %v2808
  %v2888 = vunpack.c.l.b16 %v2809
  %v2889 = vunpack.c.h.b16 %v2809
  %v2890 = vunpack.c.l.b16 %v2810
  %v2891 = vunpack.c.h.b16 %v2810
  %v2892 = vunpack.c.l.b16 %v2811
  %v2893 = vunpack.c.h.b16 %v2811
  %v2894 = vunpack.c.l.b16 %v2812
  %v2895 = vunpack.c.h.b16 %v2812
  %v2896 = vunpack.c.l.b16 %v2813
  %v2897 = vunpack.c.h.b16 %v2813
  %v2898 = vunpack.c.l.b16 %v2814
  %v2899 = vunpack.c.h.b16 %v2814
  %v2900 = vunpack.c.l.b16 %v2815
  %v2901 = vunpack.c.h.b16 %v2815
  %v2902 = vunpack.c.l.b16 %v2816
  %v2903 = vunpack.c.h.b16 %v2816
  %v2904 = vunpack.c.l.b16 %v2817
  %v2905 = vunpack.c.h.b16 %v2817
  %v2906 = vunpack.c.l.b16 %v2818
  %v2907 = vunpack.c.h.b16 %v2818
  %v2908 = vunpack.c.l.b16 %v2819
  %v2909 = vunpack.c.h.b16 %v2819
  %v2910 = vunpack.c.l.b16 %v2820
  %v2911 = vunpack.c.h.b16 %v2820
  %v2912 = vunpack.c.l.b16 %v2821
  %v2913 = vunpack.c.h.b16 %v2821
  %v2914 = vunpack.c.l.b16 %v2822
  %v2915 = vunpack.c.h.b16 %v2822
  %v2916 = vunpack.c.l.b16 %v2823
  %v2917 = vunpack.c.h.b16 %v2823
  %v2918 = vunpack.c.l.b16 %v2824
  %v2919 = vunpack.c.h.b16 %v2824
  %v2920 = vunpack.c.l.b16 %v2825
  %v2921 = vunpack.c.h.b16 %v2825
  %v2922 = vpack.c.b16 %v2862, %v2858
  %v2923 = vpack.c.b16 %v2863, %v2859
  %v2924 = vpack.c.b16 %v2864, %v2860
  %v2925 = vpack.c.b16 %v2865, %v2861
  %v2926 = vpack.c.b16 %v2870, %v2866
  %v2927 = vpack.c.b16 %v2871, %v2867
  %v2928 = vpack.c.b16 %v2872, %v2868
  %v2929 = vpack.c.b16 %v2873, %v2869
  %v2930 = vpack.c.b16 %v2878, %v2874
  %v2931 = vpack.c.b16 %v2879, %v2875
  %v2932 = vpack.c.b16 %v2880, %v2876
  %v2933 = vpack.c.b16 %v2881, %v2877
  %v2934 = vpack.c.b16 %v2886, %v2882
  %v2935 = vpack.c.b16 %v2887, %v2883
  %v2936 = vpack.c.b16 %v2888, %v2884
  %v2937 = vpack.c.b16 %v2889, %v2885
  %v2938 = vpack.c.b16 %v2894, %v2890
  %v2939 = vpack.c.b16 %v2895, %v2891
  %v2940 = vpack.c.b16 %v2896, %v2892
  %v2941 = vpack.c.b16 %v2897, %v2893
  %v2942 = vpack.c.b16 %v2902, %v2898
  %v2943 = vpack.c.b16 %v2903, %v2899
  %v2944 = vpack.c.b16 %v2904, %v2900
  %v2945 = vpack.c.b16 %v2905, %v2901
  %v2946 = vpack.c.b16 %v2910, %v2906
  %v2947 = vpack.c.b16 %v2911, %v2907
  %v2948 = vpack.c.b16 %v2912, %v2908
  %v2949 = vpack.c.b16 %v2913, %v2909
  %v2950 = vpack.c.b16 %v2918, %v2914
  %v2951 = vpack.c.b16 %v2919, %v2915
  %v2952 = vpack.c.b16 %v2920, %v2916
  %v2953 = vpack.c.b16 %v2921, %v2917
  %2986 = vmatprep.subr.bf16.mxu0 %v2923
  %2987 = vmatpush1.bf16.msra.mxu0 %v2922
  %2988 = vmatprep.subr.bf16.mxu0 %v2927
  %2989 = vmatpush1.bf16.msra.mxu0 %v2926
  %2990 = vmatprep.subr.bf16.mxu0 %v2931
  %2991 = vmatpush1.bf16.msra.mxu0 %v2930
  %2992 = vmatprep.subr.bf16.mxu0 %v2935
  %2993 = vmatpush1.bf16.msra.mxu0 %v2934
  %2994 = vmatprep.subr.bf16.mxu0 %v2939
  %2995 = vmatpush1.bf16.msra.mxu0 %v2938
  %2996 = vmatprep.subr.bf16.mxu0 %v2943
  %2997 = vmatpush1.bf16.msra.mxu0 %v2942
  %2998 = vmatprep.subr.bf16.mxu0 %v2947
  %2999 = vmatpush1.bf16.msra.mxu0 %v2946
  %3000 = vmatprep.subr.bf16.mxu0 %v2951
  %3001 = vmatpush1.bf16.msra.mxu0 %v2950
  %3002 = vmatprep.subr.bf16.mxu0 0
  %3003 = vmatpush1.bf16.msra.mxu0 0
  %3004 = vmatprep.subr.bf16.mxu0 0
  %3005 = vmatpush1.bf16.msra.mxu0 0
  %3006 = vmatprep.subr.bf16.mxu0 0
  %3007 = vmatpush1.bf16.msra.mxu0 0
  %3008 = vmatprep.subr.bf16.mxu0 0
  %3009 = vmatpush1.bf16.msra.mxu0 0
  %3010 = vmatprep.subr.bf16.mxu0 0
  %3011 = vmatpush1.bf16.msra.mxu0 0
  %3012 = vmatprep.subr.bf16.mxu0 0
  %3013 = vmatpush1.bf16.msra.mxu0 0
  %3014 = vmatprep.subr.bf16.mxu0 0
  %3015 = vmatpush1.bf16.msra.mxu0 0
  %3016 = vmatprep.subr.bf16.mxu0 0
  %3017 = vmatpush1.bf16.msra.mxu0 0
  %3018 = vmatprep.mubr.bf16.mxu0 0
  %3019 = vmatmul.mubr.bf16.gmra.mrb[0].mxu0 %v2767
  %v3020 = vpop.f32.mrb[0].mxu0
  %v3021 = vadd.f32 0.0, %v3020
  %v3022 = vpop.f32.mrb[0].mxu0
  %v3023 = vadd.f32 0.0, %v3022
  %v3024 = vpop.f32.mrb[0].mxu0
  %v3025 = vpop.f32.mrb[0].mxu0
  %3026 = vdwg.mxu0
  %3027 = vmatprep.subr.bf16.mxu0 %v2925
  %3028 = vmatpush1.bf16.msra.mxu0 %v2924
  %3029 = vmatprep.subr.bf16.mxu0 %v2929
  %3030 = vmatpush1.bf16.msra.mxu0 %v2928
  %3031 = vmatprep.subr.bf16.mxu0 %v2933
  %3032 = vmatpush1.bf16.msra.mxu0 %v2932
  %3033 = vmatprep.subr.bf16.mxu0 %v2937
  %3034 = vmatpush1.bf16.msra.mxu0 %v2936
  %3035 = vmatprep.subr.bf16.mxu0 %v2941
  %3036 = vmatpush1.bf16.msra.mxu0 %v2940
  %3037 = vmatprep.subr.bf16.mxu0 %v2945
  %3038 = vmatpush1.bf16.msra.mxu0 %v2944
  %3039 = vmatprep.subr.bf16.mxu0 %v2949
  %3040 = vmatpush1.bf16.msra.mxu0 %v2948
  %3041 = vmatprep.subr.bf16.mxu0 %v2953
  %3042 = vmatpush1.bf16.msra.mxu0 %v2952
  %3043 = vmatprep.subr.bf16.mxu0 0
  %3044 = vmatpush1.bf16.msra.mxu0 0
  %3045 = vmatprep.subr.bf16.mxu0 0
  %3046 = vmatpush1.bf16.msra.mxu0 0
  %3047 = vmatprep.subr.bf16.mxu0 0
  %3048 = vmatpush1.bf16.msra.mxu0 0
  %3049 = vmatprep.subr.bf16.mxu0 0
  %3050 = vmatpush1.bf16.msra.mxu0 0
  %3051 = vmatprep.subr.bf16.mxu0 0
  %3052 = vmatpush1.bf16.msra.mxu0 0
  %3053 = vmatprep.subr.bf16.mxu0 0
  %3054 = vmatpush1.bf16.msra.mxu0 0
  %3055 = vmatprep.subr.bf16.mxu0 0
  %3056 = vmatpush1.bf16.msra.mxu0 0
  %3057 = vmatprep.subr.bf16.mxu0 0
  %3058 = vmatpush1.bf16.msra.mxu0 0
  %3059 = vmatprep.mubr.bf16.mxu0 0
  %3060 = vmatmul.mubr.bf16.gmra.mrb[0].mxu0 %v2767
  %v3061 = vpop.f32.mrb[0].mxu0
  %v3062 = vadd.f32 0.0, %v3061
  %v3063 = vpop.f32.mrb[0].mxu0
  %v3064 = vadd.f32 0.0, %v3063
  %v3065 = vpop.f32.mrb[0].mxu0
  %v3066 = vpop.f32.mrb[0].mxu0
  %3067 = vdwg.mxu0
  %v3068 = vadd.f32 %v2790, %v3021
  %v3069 = vadd.f32 %v2791, %v3023
  %v3070 = vadd.f32 %v2792, %v3062
  %v3071 = vadd.f32 %v2793, %v3064
  %v3072 = vld [vmem:[#allocation2 + $0xa0] sm:$0xf]
  %v3073 = vld [vmem:[#allocation2 + $0xa8] sm:$0xf]
  %v3074 = vld [vmem:[#allocation2 + $0xb0] sm:$0xf]
  %v3075 = vld [vmem:[#allocation2 + $0xb8] sm:$0xf]
  %v3076 = vunpack.c.l.bf16 %v3072
  %v3077 = vunpack.c.l.bf16 %v3073
  %v3078 = vunpack.c.l.bf16 %v3074
  %v3079 = vunpack.c.l.bf16 %v3075
  %v3080 = vld [vmem:[%s5] sm:$0xff]
  %v3081 = vld [vmem:[%s5 + $0x8] sm:$0xff]
  %v3082 = vld [vmem:[%s5 + $0x10] sm:$0xff]
  %v3083 = vld [vmem:[%s5 + $0x18] sm:$0xff]
  %v3084 = vld [vmem:[%s5 + $0x20] sm:$0xff]
  %v3085 = vld [vmem:[%s5 + $0x28] sm:$0xff]
  %v3086 = vld [vmem:[%s5 + $0x30] sm:$0xff]
  %v3087 = vld [vmem:[%s5 + $0x38] sm:$0xff]
  %v3088 = vld [vmem:[%s5 + $0x40] sm:$0xff]
  %v3089 = vld [vmem:[%s5 + $0x48] sm:$0xff]
  %v3090 = vld [vmem:[%s5 + $0x50] sm:$0xff]
  %v3091 = vld [vmem:[%s5 + $0x58] sm:$0xff]
  %v3092 = vld [vmem:[%s5 + $0x60] sm:$0xff]
  %v3093 = vld [vmem:[%s5 + $0x68] sm:$0xff]
  %v3094 = vld [vmem:[%s5 + $0x70] sm:$0xff]
  %v3095 = vld [vmem:[%s5 + $0x78] sm:$0xff]
  %v3096 = vld [vmem:[%s5 + $0x80] sm:$0xff]
  %v3097 = vld [vmem:[%s5 + $0x88] sm:$0xff]
  %v3098 = vld [vmem:[%s5 + $0x90] sm:$0xff]
  %v3099 = vld [vmem:[%s5 + $0x98] sm:$0xff]
  %v3100 = vld [vmem:[%s5 + $0xa0] sm:$0xff]
  %v3101 = vld [vmem:[%s5 + $0xa8] sm:$0xff]
  %v3102 = vld [vmem:[%s5 + $0xb0] sm:$0xff]
  %v3103 = vld [vmem:[%s5 + $0xb8] sm:$0xff]
  %v3104 = vld [vmem:[%s5 + $0xc0] sm:$0xff]
  %v3105 = vld [vmem:[%s5 + $0xc8] sm:$0xff]
  %v3106 = vld [vmem:[%s5 + $0xd0] sm:$0xff]
  %v3107 = vld [vmem:[%s5 + $0xd8] sm:$0xff]
  %v3108 = vld [vmem:[%s5 + $0xe0] sm:$0xff]
  %v3109 = vld [vmem:[%s5 + $0xe8] sm:$0xff]
  %v3110 = vld [vmem:[%s5 + $0xf0] sm:$0xff]
  %v3111 = vld [vmem:[%s5 + $0xf8] sm:$0xff]
  %v3144 = vunpack.c.l.b16 %v3080
  %v3145 = vunpack.c.h.b16 %v3080
  %v3146 = vunpack.c.l.b16 %v3081
  %v3147 = vunpack.c.h.b16 %v3081
  %v3148 = vunpack.c.l.b16 %v3082
  %v3149 = vunpack.c.h.b16 %v3082
  %v3150 = vunpack.c.l.b16 %v3083
  %v3151 = vunpack.c.h.b16 %v3083
  %v3152 = vunpack.c.l.b16 %v3084
  %v3153 = vunpack.c.h.b16 %v3084
  %v3154 = vunpack.c.l.b16 %v3085
  %v3155 = vunpack.c.h.b16 %v3085
  %v3156 = vunpack.c.l.b16 %v3086
  %v3157 = vunpack.c.h.b16 %v3086
  %v3158 = vunpack.c.l.b16 %v3087
  %v3159 = vunpack.c.h.b16 %v3087
  %v3160 = vunpack.c.l.b16 %v3088
  %v3161 = vunpack.c.h.b16 %v3088
  %v3162 = vunpack.c.l.b16 %v3089
  %v3163 = vunpack.c.h.b16 %v3089
  %v3164 = vunpack.c.l.b16 %v3090
  %v3165 = vunpack.c.h.b16 %v3090
  %v3166 = vunpack.c.l.b16 %v3091
  %v3167 = vunpack.c.h.b16 %v3091
  %v3168 = vunpack.c.l.b16 %v3092
  %v3169 = vunpack.c.h.b16 %v3092
  %v3170 = vunpack.c.l.b16 %v3093
  %v3171 = vunpack.c.h.b16 %v3093
  %v3172 = vunpack.c.l.b16 %v3094
  %v3173 = vunpack.c.h.b16 %v3094
  %v3174 = vunpack.c.l.b16 %v3095
  %v3175 = vunpack.c.h.b16 %v3095
  %v3176 = vunpack.c.l.b16 %v3096
  %v3177 = vunpack.c.h.b16 %v3096
  %v3178 = vunpack.c.l.b16 %v3097
  %v3179 = vunpack.c.h.b16 %v3097
  %v3180 = vunpack.c.l.b16 %v3098
  %v3181 = vunpack.c.h.b16 %v3098
  %v3182 = vunpack.c.l.b16 %v3099
  %v3183 = vunpack.c.h.b16 %v3099
  %v3184 = vunpack.c.l.b16 %v3100
  %v3185 = vunpack.c.h.b16 %v3100
  %v3186 = vunpack.c.l.b16 %v3101
  %v3187 = vunpack.c.h.b16 %v3101
  %v3188 = vunpack.c.l.b16 %v3102
  %v3189 = vunpack.c.h.b16 %v3102
  %v3190 = vunpack.c.l.b16 %v3103
  %v3191 = vunpack.c.h.b16 %v3103
  %v3192 = vunpack.c.l.b16 %v3104
  %v3193 = vunpack.c.h.b16 %v3104
  %v3194 = vunpack.c.l.b16 %v3105
  %v3195 = vunpack.c.h.b16 %v3105
  %v3196 = vunpack.c.l.b16 %v3106
  %v3197 = vunpack.c.h.b16 %v3106
  %v3198 = vunpack.c.l.b16 %v3107
  %v3199 = vunpack.c.h.b16 %v3107
  %v3200 = vunpack.c.l.b16 %v3108
  %v3201 = vunpack.c.h.b16 %v3108
  %v3202 = vunpack.c.l.b16 %v3109
  %v3203 = vunpack.c.h.b16 %v3109
  %v3204 = vunpack.c.l.b16 %v3110
  %v3205 = vunpack.c.h.b16 %v3110
  %v3206 = vunpack.c.l.b16 %v3111
  %v3207 = vunpack.c.h.b16 %v3111
  %v3208 = vpack.c.b16 %v3148, %v3144
  %v3209 = vpack.c.b16 %v3149, %v3145
  %v3210 = vpack.c.b16 %v3150, %v3146
  %v3211 = vpack.c.b16 %v3151, %v3147
  %v3212 = vpack.c.b16 %v3156, %v3152
  %v3213 = vpack.c.b16 %v3157, %v3153
  %v3214 = vpack.c.b16 %v3158, %v3154
  %v3215 = vpack.c.b16 %v3159, %v3155
  %v3216 = vpack.c.b16 %v3164, %v3160
  %v3217 = vpack.c.b16 %v3165, %v3161
  %v3218 = vpack.c.b16 %v3166, %v3162
  %v3219 = vpack.c.b16 %v3167, %v3163
  %v3220 = vpack.c.b16 %v3172, %v3168
  %v3221 = vpack.c.b16 %v3173, %v3169
  %v3222 = vpack.c.b16 %v3174, %v3170
  %v3223 = vpack.c.b16 %v3175, %v3171
  %v3224 = vpack.c.b16 %v3180, %v3176
  %v3225 = vpack.c.b16 %v3181, %v3177
  %v3226 = vpack.c.b16 %v3182, %v3178
  %v3227 = vpack.c.b16 %v3183, %v3179
  %v3228 = vpack.c.b16 %v3188, %v3184
  %v3229 = vpack.c.b16 %v3189, %v3185
  %v3230 = vpack.c.b16 %v3190, %v3186
  %v3231 = vpack.c.b16 %v3191, %v3187
  %v3232 = vpack.c.b16 %v3196, %v3192
  %v3233 = vpack.c.b16 %v3197, %v3193
  %v3234 = vpack.c.b16 %v3198, %v3194
  %v3235 = vpack.c.b16 %v3199, %v3195
  %v3236 = vpack.c.b16 %v3204, %v3200
  %v3237 = vpack.c.b16 %v3205, %v3201
  %v3238 = vpack.c.b16 %v3206, %v3202
  %v3239 = vpack.c.b16 %v3207, %v3203
  %3272 = vmatprep.subr.bf16.mxu0 %v3209
  %3273 = vmatpush1.bf16.msra.mxu0 %v3208
  %3274 = vmatprep.subr.bf16.mxu0 %v3213
  %3275 = vmatpush1.bf16.msra.mxu0 %v3212
  %3276 = vmatprep.subr.bf16.mxu0 %v3217
  %3277 = vmatpush1.bf16.msra.mxu0 %v3216
  %3278 = vmatprep.subr.bf16.mxu0 %v3221
  %3279 = vmatpush1.bf16.msra.mxu0 %v3220
  %3280 = vmatprep.subr.bf16.mxu0 %v3225
  %3281 = vmatpush1.bf16.msra.mxu0 %v3224
  %3282 = vmatprep.subr.bf16.mxu0 %v3229
  %3283 = vmatpush1.bf16.msra.mxu0 %v3228
  %3284 = vmatprep.subr.bf16.mxu0 %v3233
  %3285 = vmatpush1.bf16.msra.mxu0 %v3232
  %3286 = vmatprep.subr.bf16.mxu0 %v3237
  %3287 = vmatpush1.bf16.msra.mxu0 %v3236
  %3288 = vmatprep.subr.bf16.mxu0 0
  %3289 = vmatpush1.bf16.msra.mxu0 0
  %3290 = vmatprep.subr.bf16.mxu0 0
  %3291 = vmatpush1.bf16.msra.mxu0 0
  %3292 = vmatprep.subr.bf16.mxu0 0
  %3293 = vmatpush1.bf16.msra.mxu0 0
  %3294 = vmatprep.subr.bf16.mxu0 0
  %3295 = vmatpush1.bf16.msra.mxu0 0
  %3296 = vmatprep.subr.bf16.mxu0 0
  %3297 = vmatpush1.bf16.msra.mxu0 0
  %3298 = vmatprep.subr.bf16.mxu0 0
  %3299 = vmatpush1.bf16.msra.mxu0 0
  %3300 = vmatprep.subr.bf16.mxu0 0
  %3301 = vmatpush1.bf16.msra.mxu0 0
  %3302 = vmatprep.subr.bf16.mxu0 0
  %3303 = vmatpush1.bf16.msra.mxu0 0
  %3304 = vmatprep.mubr.bf16.mxu0 0
  %3305 = vmatmul.mubr.bf16.gmra.mrb[0].mxu0 %v2769
  %v3306 = vpop.f32.mrb[0].mxu0
  %v3307 = vadd.f32 0.0, %v3306
  %v3308 = vpop.f32.mrb[0].mxu0
  %v3309 = vadd.f32 0.0, %v3308
  %v3310 = vpop.f32.mrb[0].mxu0
  %v3311 = vpop.f32.mrb[0].mxu0
  %3312 = vdwg.mxu0
  %3313 = vmatprep.subr.bf16.mxu0 %v3211
  %3314 = vmatpush1.bf16.msra.mxu0 %v3210
  %3315 = vmatprep.subr.bf16.mxu0 %v3215
  %3316 = vmatpush1.bf16.msra.mxu0 %v3214
  %3317 = vmatprep.subr.bf16.mxu0 %v3219
  %3318 = vmatpush1.bf16.msra.mxu0 %v3218
  %3319 = vmatprep.subr.bf16.mxu0 %v3223
  %3320 = vmatpush1.bf16.msra.mxu0 %v3222
  %3321 = vmatprep.subr.bf16.mxu0 %v3227
  %3322 = vmatpush1.bf16.msra.mxu0 %v3226
  %3323 = vmatprep.subr.bf16.mxu0 %v3231
  %3324 = vmatpush1.bf16.msra.mxu0 %v3230
  %3325 = vmatprep.subr.bf16.mxu0 %v3235
  %3326 = vmatpush1.bf16.msra.mxu0 %v3234
  %3327 = vmatprep.subr.bf16.mxu0 %v3239
  %3328 = vmatpush1.bf16.msra.mxu0 %v3238
  %3329 = vmatprep.subr.bf16.mxu0 0
  %3330 = vmatpush1.bf16.msra.mxu0 0
  %3331 = vmatprep.subr.bf16.mxu0 0
  %3332 = vmatpush1.bf16.msra.mxu0 0
  %3333 = vmatprep.subr.bf16.mxu0 0
  %3334 = vmatpush1.bf16.msra.mxu0 0
  %3335 = vmatprep.subr.bf16.mxu0 0
  %3336 = vmatpush1.bf16.msra.mxu0 0
  %3337 = vmatprep.subr.bf16.mxu0 0
  %3338 = vmatpush1.bf16.msra.mxu0 0
  %3339 = vmatprep.subr.bf16.mxu0 0
  %3340 = vmatpush1.bf16.msra.mxu0 0
  %3341 = vmatprep.subr.bf16.mxu0 0
  %3342 = vmatpush1.bf16.msra.mxu0 0
  %3343 = vmatprep.subr.bf16.mxu0 0
  %3344 = vmatpush1.bf16.msra.mxu0 0
  %3345 = vmatprep.mubr.bf16.mxu0 0
  %3346 = vmatmul.mubr.bf16.gmra.mrb[0].mxu0 %v2769
  %v3347 = vpop.f32.mrb[0].mxu0
  %v3348 = vadd.f32 0.0, %v3347
  %v3349 = vpop.f32.mrb[0].mxu0
  %v3350 = vadd.f32 0.0, %v3349
  %v3351 = vpop.f32.mrb[0].mxu0
  %v3352 = vpop.f32.mrb[0].mxu0
  %3353 = vdwg.mxu0
  %v3354 = vadd.f32 %v3076, %v3307
  %v3355 = vadd.f32 %v3077, %v3309
  %v3356 = vadd.f32 %v3078, %v3348
  %v3357 = vadd.f32 %v3079, %v3350
  %v3358 = vxor.u32 %v3068, 2147483648
  %v3359 = vmul.f32 %v3358, 1.442695
  %v3360 = vpow.pop %v3359
  %v3361 = vadd.f32 %v3360, 1.0
  %v3362 = vrcp.pop %v3361
  %v3363 = vmul.f32 1.0, %v3362
  %v3364 = vxor.u32 %v3069, 2147483648
  %v3365 = vmul.f32 %v3364, 1.442695
  %v3366 = vpow.pop %v3365
  %v3367 = vadd.f32 %v3366, 1.0
  %v3368 = vrcp.pop %v3367
  %v3369 = vmul.f32 1.0, %v3368
  %v3370 = vtanh.pop %v3070
  %v3371 = vxor.u32 %v3071, 2147483648
  %v3372 = vmul.f32 %v3371, 1.442695
  %v3373 = vpow.pop %v3372
  %v3374 = vadd.f32 %v3373, 1.0
  %v3375 = vrcp.pop %v3374
  %v3376 = vmul.f32 1.0, %v3375
  %v3377 = vmul.f32 %v3369, %v2737
  %v3378 = vmul.f32 %v3363, %v3370
  %v3379 = vadd.f32 %v3377, %v3378
  %v3380 = vtanh.pop %v3379
  %v3381 = vmul.f32 %v3376, %v3380
  %v3382 = vxor.u32 %v3354, 2147483648
  %v3383 = vmul.f32 %v3382, 1.442695
  %v3384 = vpow.pop %v3383
  %v3385 = vadd.f32 %v3384, 1.0
  %v3386 = vrcp.pop %v3385
  %v3387 = vmul.f32 1.0, %v3386
  %v3388 = vxor.u32 %v3355, 2147483648
  %v3389 = vmul.f32 %v3388, 1.442695
  %v3390 = vpow.pop %v3389
  %v3391 = vadd.f32 %v3390, 1.0
  %v3392 = vrcp.pop %v3391
  %v3393 = vmul.f32 1.0, %v3392
  %v3394 = vtanh.pop %v3356
  %v3395 = vxor.u32 %v3357, 2147483648
  %v3396 = vmul.f32 %v3395, 1.442695
  %v3397 = vpow.pop %v3396
  %v3398 = vadd.f32 %v3397, 1.0
  %v3399 = vrcp.pop %v3398
  %v3400 = vmul.f32 1.0, %v3399
  %v3401 = vmul.f32 %v3393, %v2766
  %v3402 = vmul.f32 %v3387, %v3394
  %v3403 = vadd.f32 %v3401, %v3402
  %v3404 = vtanh.pop %v3403
  %v3405 = vmul.f32 %v3400, %v3404
  %vm3406 = vcmp.gt.s32.totalorder %v847, 4
  %v3407 = vsel %vm3406, %v3405, 0.0
  %v3408 = vsel %vm3406, %v3403, 0.0
  %v3409 = vpack.c.bf16 %v3381, %v3381
  %v3411 = vrot.slane %v3409, 4
  %3413 = vst [vmem:[#allocation3 + $0x8] sm:$0xf0] %v3411
  %v3414 = vpack.c.bf16 %v3407, %v3407
  %3415 = vst [vmem:[#allocation4 + $0x10] sm:$0xf] %v3414
  %v3416 = vld [vmem:[#allocation2 + $0x80] sm:$0xf]
  %v3417 = vld [vmem:[#allocation2 + $0x88] sm:$0xf]
  %v3418 = vld [vmem:[#allocation2 + $0x90] sm:$0xf]
  %v3419 = vld [vmem:[#allocation2 + $0x98] sm:$0xf]
  %v3420 = vunpack.c.l.bf16 %v3416
  %v3421 = vunpack.c.l.bf16 %v3417
  %v3422 = vunpack.c.l.bf16 %v3418
  %v3423 = vunpack.c.l.bf16 %v3419
  %v3424 = vld [vmem:[%s4] sm:$0xff]
  %v3425 = vld [vmem:[%s4 + $0x8] sm:$0xff]
  %v3426 = vld [vmem:[%s4 + $0x10] sm:$0xff]
  %v3427 = vld [vmem:[%s4 + $0x18] sm:$0xff]
  %v3428 = vld [vmem:[%s4 + $0x20] sm:$0xff]
  %v3429 = vld [vmem:[%s4 + $0x28] sm:$0xff]
  %v3430 = vld [vmem:[%s4 + $0x30] sm:$0xff]
  %v3431 = vld [vmem:[%s4 + $0x38] sm:$0xff]
  %v3432 = vld [vmem:[%s4 + $0x40] sm:$0xff]
  %v3433 = vld [vmem:[%s4 + $0x48] sm:$0xff]
  %v3434 = vld [vmem:[%s4 + $0x50] sm:$0xff]
  %v3435 = vld [vmem:[%s4 + $0x58] sm:$0xff]
  %v3436 = vld [vmem:[%s4 + $0x60] sm:$0xff]
  %v3437 = vld [vmem:[%s4 + $0x68] sm:$0xff]
  %v3438 = vld [vmem:[%s4 + $0x70] sm:$0xff]
  %v3439 = vld [vmem:[%s4 + $0x78] sm:$0xff]
  %v3440 = vld [vmem:[%s4 + $0x80] sm:$0xff]
  %v3441 = vld [vmem:[%s4 + $0x88] sm:$0xff]
  %v3442 = vld [vmem:[%s4 + $0x90] sm:$0xff]
  %v3443 = vld [vmem:[%s4 + $0x98] sm:$0xff]
  %v3444 = vld [vmem:[%s4 + $0xa0] sm:$0xff]
  %v3445 = vld [vmem:[%s4 + $0xa8] sm:$0xff]
  %v3446 = vld [vmem:[%s4 + $0xb0] sm:$0xff]
  %v3447 = vld [vmem:[%s4 + $0xb8] sm:$0xff]
  %v3448 = vld [vmem:[%s4 + $0xc0] sm:$0xff]
  %v3449 = vld [vmem:[%s4 + $0xc8] sm:$0xff]
  %v3450 = vld [vmem:[%s4 + $0xd0] sm:$0xff]
  %v3451 = vld [vmem:[%s4 + $0xd8] sm:$0xff]
  %v3452 = vld [vmem:[%s4 + $0xe0] sm:$0xff]
  %v3453 = vld [vmem:[%s4 + $0xe8] sm:$0xff]
  %v3454 = vld [vmem:[%s4 + $0xf0] sm:$0xff]
  %v3455 = vld [vmem:[%s4 + $0xf8] sm:$0xff]
  %v3488 = vunpack.c.l.b16 %v3424
  %v3489 = vunpack.c.h.b16 %v3424
  %v3490 = vunpack.c.l.b16 %v3425
  %v3491 = vunpack.c.h.b16 %v3425
  %v3492 = vunpack.c.l.b16 %v3426
  %v3493 = vunpack.c.h.b16 %v3426
  %v3494 = vunpack.c.l.b16 %v3427
  %v3495 = vunpack.c.h.b16 %v3427
  %v3496 = vunpack.c.l.b16 %v3428
  %v3497 = vunpack.c.h.b16 %v3428
  %v3498 = vunpack.c.l.b16 %v3429
  %v3499 = vunpack.c.h.b16 %v3429
  %v3500 = vunpack.c.l.b16 %v3430
  %v3501 = vunpack.c.h.b16 %v3430
  %v3502 = vunpack.c.l.b16 %v3431
  %v3503 = vunpack.c.h.b16 %v3431
  %v3504 = vunpack.c.l.b16 %v3432
  %v3505 = vunpack.c.h.b16 %v3432
  %v3506 = vunpack.c.l.b16 %v3433
  %v3507 = vunpack.c.h.b16 %v3433
  %v3508 = vunpack.c.l.b16 %v3434
  %v3509 = vunpack.c.h.b16 %v3434
  %v3510 = vunpack.c.l.b16 %v3435
  %v3511 = vunpack.c.h.b16 %v3435
  %v3512 = vunpack.c.l.b16 %v3436
  %v3513 = vunpack.c.h.b16 %v3436
  %v3514 = vunpack.c.l.b16 %v3437
  %v3515 = vunpack.c.h.b16 %v3437
  %v3516 = vunpack.c.l.b16 %v3438
  %v3517 = vunpack.c.h.b16 %v3438
  %v3518 = vunpack.c.l.b16 %v3439
  %v3519 = vunpack.c.h.b16 %v3439
  %v3520 = vunpack.c.l.b16 %v3440
  %v3521 = vunpack.c.h.b16 %v3440
  %v3522 = vunpack.c.l.b16 %v3441
  %v3523 = vunpack.c.h.b16 %v3441
  %v3524 = vunpack.c.l.b16 %v3442
  %v3525 = vunpack.c.h.b16 %v3442
  %v3526 = vunpack.c.l.b16 %v3443
  %v3527 = vunpack.c.h.b16 %v3443
  %v3528 = vunpack.c.l.b16 %v3444
  %v3529 = vunpack.c.h.b16 %v3444
  %v3530 = vunpack.c.l.b16 %v3445
  %v3531 = vunpack.c.h.b16 %v3445
  %v3532 = vunpack.c.l.b16 %v3446
  %v3533 = vunpack.c.h.b16 %v3446
  %v3534 = vunpack.c.l.b16 %v3447
  %v3535 = vunpack.c.h.b16 %v3447
  %v3536 = vunpack.c.l.b16 %v3448
  %v3537 = vunpack.c.h.b16 %v3448
  %v3538 = vunpack.c.l.b16 %v3449
  %v3539 = vunpack.c.h.b16 %v3449
  %v3540 = vunpack.c.l.b16 %v3450
  %v3541 = vunpack.c.h.b16 %v3450
  %v3542 = vunpack.c.l.b16 %v3451
  %v3543 = vunpack.c.h.b16 %v3451
  %v3544 = vunpack.c.l.b16 %v3452
  %v3545 = vunpack.c.h.b16 %v3452
  %v3546 = vunpack.c.l.b16 %v3453
  %v3547 = vunpack.c.h.b16 %v3453
  %v3548 = vunpack.c.l.b16 %v3454
  %v3549 = vunpack.c.h.b16 %v3454
  %v3550 = vunpack.c.l.b16 %v3455
  %v3551 = vunpack.c.h.b16 %v3455
  %v3552 = vpack.c.b16 %v3492, %v3488
  %v3553 = vpack.c.b16 %v3493, %v3489
  %v3554 = vpack.c.b16 %v3494, %v3490
  %v3555 = vpack.c.b16 %v3495, %v3491
  %v3556 = vpack.c.b16 %v3500, %v3496
  %v3557 = vpack.c.b16 %v3501, %v3497
  %v3558 = vpack.c.b16 %v3502, %v3498
  %v3559 = vpack.c.b16 %v3503, %v3499
  %v3560 = vpack.c.b16 %v3508, %v3504
  %v3561 = vpack.c.b16 %v3509, %v3505
  %v3562 = vpack.c.b16 %v3510, %v3506
  %v3563 = vpack.c.b16 %v3511, %v3507
  %v3564 = vpack.c.b16 %v3516, %v3512
  %v3565 = vpack.c.b16 %v3517, %v3513
  %v3566 = vpack.c.b16 %v3518, %v3514
  %v3567 = vpack.c.b16 %v3519, %v3515
  %v3568 = vpack.c.b16 %v3524, %v3520
  %v3569 = vpack.c.b16 %v3525, %v3521
  %v3570 = vpack.c.b16 %v3526, %v3522
  %v3571 = vpack.c.b16 %v3527, %v3523
  %v3572 = vpack.c.b16 %v3532, %v3528
  %v3573 = vpack.c.b16 %v3533, %v3529
  %v3574 = vpack.c.b16 %v3534, %v3530
  %v3575 = vpack.c.b16 %v3535, %v3531
  %v3576 = vpack.c.b16 %v3540, %v3536
  %v3577 = vpack.c.b16 %v3541, %v3537
  %v3578 = vpack.c.b16 %v3542, %v3538
  %v3579 = vpack.c.b16 %v3543, %v3539
  %v3580 = vpack.c.b16 %v3548, %v3544
  %v3581 = vpack.c.b16 %v3549, %v3545
  %v3582 = vpack.c.b16 %v3550, %v3546
  %v3583 = vpack.c.b16 %v3551, %v3547
  %3616 = vmatprep.subr.bf16.mxu0 %v3553
  %3617 = vmatpush1.bf16.msra.mxu0 %v3552
  %3618 = vmatprep.subr.bf16.mxu0 %v3557
  %3619 = vmatpush1.bf16.msra.mxu0 %v3556
  %3620 = vmatprep.subr.bf16.mxu0 %v3561
  %3621 = vmatpush1.bf16.msra.mxu0 %v3560
  %3622 = vmatprep.subr.bf16.mxu0 %v3565
  %3623 = vmatpush1.bf16.msra.mxu0 %v3564
  %3624 = vmatprep.subr.bf16.mxu0 %v3569
  %3625 = vmatpush1.bf16.msra.mxu0 %v3568
  %3626 = vmatprep.subr.bf16.mxu0 %v3573
  %3627 = vmatpush1.bf16.msra.mxu0 %v3572
  %3628 = vmatprep.subr.bf16.mxu0 %v3577
  %3629 = vmatpush1.bf16.msra.mxu0 %v3576
  %3630 = vmatprep.subr.bf16.mxu0 %v3581
  %3631 = vmatpush1.bf16.msra.mxu0 %v3580
  %3632 = vmatprep.subr.bf16.mxu0 0
  %3633 = vmatpush1.bf16.msra.mxu0 0
  %3634 = vmatprep.subr.bf16.mxu0 0
  %3635 = vmatpush1.bf16.msra.mxu0 0
  %3636 = vmatprep.subr.bf16.mxu0 0
  %3637 = vmatpush1.bf16.msra.mxu0 0
  %3638 = vmatprep.subr.bf16.mxu0 0
  %3639 = vmatpush1.bf16.msra.mxu0 0
  %3640 = vmatprep.subr.bf16.mxu0 0
  %3641 = vmatpush1.bf16.msra.mxu0 0
  %3642 = vmatprep.subr.bf16.mxu0 0
  %3643 = vmatpush1.bf16.msra.mxu0 0
  %3644 = vmatprep.subr.bf16.mxu0 0
  %3645 = vmatpush1.bf16.msra.mxu0 0
  %3646 = vmatprep.subr.bf16.mxu0 0
  %3647 = vmatpush1.bf16.msra.mxu0 0
  %3648 = vmatprep.mubr.bf16.mxu0 0
  %3649 = vmatmul.mubr.bf16.gmra.mrb[0].mxu0 %v3409
  %v3650 = vpop.f32.mrb[0].mxu0
  %v3651 = vadd.f32 0.0, %v3650
  %v3652 = vpop.f32.mrb[0].mxu0
  %v3653 = vadd.f32 0.0, %v3652
  %v3654 = vpop.f32.mrb[0].mxu0
  %v3655 = vpop.f32.mrb[0].mxu0
  %3656 = vdwg.mxu0
  %3657 = vmatprep.subr.bf16.mxu0 %v3555
  %3658 = vmatpush1.bf16.msra.mxu0 %v3554
  %3659 = vmatprep.subr.bf16.mxu0 %v3559
  %3660 = vmatpush1.bf16.msra.mxu0 %v3558
  %3661 = vmatprep.subr.bf16.mxu0 %v3563
  %3662 = vmatpush1.bf16.msra.mxu0 %v3562
  %3663 = vmatprep.subr.bf16.mxu0 %v3567
  %3664 = vmatpush1.bf16.msra.mxu0 %v3566
  %3665 = vmatprep.subr.bf16.mxu0 %v3571
  %3666 = vmatpush1.bf16.msra.mxu0 %v3570
  %3667 = vmatprep.subr.bf16.mxu0 %v3575
  %3668 = vmatpush1.bf16.msra.mxu0 %v3574
  %3669 = vmatprep.subr.bf16.mxu0 %v3579
  %3670 = vmatpush1.bf16.msra.mxu0 %v3578
  %3671 = vmatprep.subr.bf16.mxu0 %v3583
  %3672 = vmatpush1.bf16.msra.mxu0 %v3582
  %3673 = vmatprep.subr.bf16.mxu0 0
  %3674 = vmatpush1.bf16.msra.mxu0 0
  %3675 = vmatprep.subr.bf16.mxu0 0
  %3676 = vmatpush1.bf16.msra.mxu0 0
  %3677 = vmatprep.subr.bf16.mxu0 0
  %3678 = vmatpush1.bf16.msra.mxu0 0
  %3679 = vmatprep.subr.bf16.mxu0 0
  %3680 = vmatpush1.bf16.msra.mxu0 0
  %3681 = vmatprep.subr.bf16.mxu0 0
  %3682 = vmatpush1.bf16.msra.mxu0 0
  %3683 = vmatprep.subr.bf16.mxu0 0
  %3684 = vmatpush1.bf16.msra.mxu0 0
  %3685 = vmatprep.subr.bf16.mxu0 0
  %3686 = vmatpush1.bf16.msra.mxu0 0
  %3687 = vmatprep.subr.bf16.mxu0 0
  %3688 = vmatpush1.bf16.msra.mxu0 0
  %3689 = vmatprep.mubr.bf16.mxu0 0
  %3690 = vmatmul.mubr.bf16.gmra.mrb[0].mxu0 %v3409
  %v3691 = vpop.f32.mrb[0].mxu0
  %v3692 = vadd.f32 0.0, %v3691
  %v3693 = vpop.f32.mrb[0].mxu0
  %v3694 = vadd.f32 0.0, %v3693
  %v3695 = vpop.f32.mrb[0].mxu0
  %v3696 = vpop.f32.mrb[0].mxu0
  %3697 = vdwg.mxu0
  %v3698 = vadd.f32 %v3420, %v3651
  %v3699 = vadd.f32 %v3421, %v3653
  %v3700 = vadd.f32 %v3422, %v3692
  %v3701 = vadd.f32 %v3423, %v3694
  %v3702 = vld [vmem:[#allocation2 + $0x60] sm:$0xf0]
  %v3703 = vld [vmem:[#allocation2 + $0x68] sm:$0xf0]
  %v3704 = vld [vmem:[#allocation2 + $0x70] sm:$0xf0]
  %v3705 = vld [vmem:[#allocation2 + $0x78] sm:$0xf0]
  %v3710 = vrot.slane %v3702, 4
  %v3711 = vrot.slane %v3703, 4
  %v3712 = vrot.slane %v3704, 4
  %v3713 = vrot.slane %v3705, 4
  %v3718 = vunpack.c.l.bf16 %v3710
  %v3719 = vunpack.c.l.bf16 %v3711
  %v3720 = vunpack.c.l.bf16 %v3712
  %v3721 = vunpack.c.l.bf16 %v3713
  %v3722 = vld [vmem:[%s5] sm:$0xff]
  %v3723 = vld [vmem:[%s5 + $0x8] sm:$0xff]
  %v3724 = vld [vmem:[%s5 + $0x10] sm:$0xff]
  %v3725 = vld [vmem:[%s5 + $0x18] sm:$0xff]
  %v3726 = vld [vmem:[%s5 + $0x20] sm:$0xff]
  %v3727 = vld [vmem:[%s5 + $0x28] sm:$0xff]
  %v3728 = vld [vmem:[%s5 + $0x30] sm:$0xff]
  %v3729 = vld [vmem:[%s5 + $0x38] sm:$0xff]
  %v3730 = vld [vmem:[%s5 + $0x40] sm:$0xff]
  %v3731 = vld [vmem:[%s5 + $0x48] sm:$0xff]
  %v3732 = vld [vmem:[%s5 + $0x50] sm:$0xff]
  %v3733 = vld [vmem:[%s5 + $0x58] sm:$0xff]
  %v3734 = vld [vmem:[%s5 + $0x60] sm:$0xff]
  %v3735 = vld [vmem:[%s5 + $0x68] sm:$0xff]
  %v3736 = vld [vmem:[%s5 + $0x70] sm:$0xff]
  %v3737 = vld [vmem:[%s5 + $0x78] sm:$0xff]
  %v3738 = vld [vmem:[%s5 + $0x80] sm:$0xff]
  %v3739 = vld [vmem:[%s5 + $0x88] sm:$0xff]
  %v3740 = vld [vmem:[%s5 + $0x90] sm:$0xff]
  %v3741 = vld [vmem:[%s5 + $0x98] sm:$0xff]
  %v3742 = vld [vmem:[%s5 + $0xa0] sm:$0xff]
  %v3743 = vld [vmem:[%s5 + $0xa8] sm:$0xff]
  %v3744 = vld [vmem:[%s5 + $0xb0] sm:$0xff]
  %v3745 = vld [vmem:[%s5 + $0xb8] sm:$0xff]
  %v3746 = vld [vmem:[%s5 + $0xc0] sm:$0xff]
  %v3747 = vld [vmem:[%s5 + $0xc8] sm:$0xff]
  %v3748 = vld [vmem:[%s5 + $0xd0] sm:$0xff]
  %v3749 = vld [vmem:[%s5 + $0xd8] sm:$0xff]
  %v3750 = vld [vmem:[%s5 + $0xe0] sm:$0xff]
  %v3751 = vld [vmem:[%s5 + $0xe8] sm:$0xff]
  %v3752 = vld [vmem:[%s5 + $0xf0] sm:$0xff]
  %v3753 = vld [vmem:[%s5 + $0xf8] sm:$0xff]
  %v3786 = vunpack.c.l.b16 %v3722
  %v3787 = vunpack.c.h.b16 %v3722
  %v3788 = vunpack.c.l.b16 %v3723
  %v3789 = vunpack.c.h.b16 %v3723
  %v3790 = vunpack.c.l.b16 %v3724
  %v3791 = vunpack.c.h.b16 %v3724
  %v3792 = vunpack.c.l.b16 %v3725
  %v3793 = vunpack.c.h.b16 %v3725
  %v3794 = vunpack.c.l.b16 %v3726
  %v3795 = vunpack.c.h.b16 %v3726
  %v3796 = vunpack.c.l.b16 %v3727
  %v3797 = vunpack.c.h.b16 %v3727
  %v3798 = vunpack.c.l.b16 %v3728
  %v3799 = vunpack.c.h.b16 %v3728
  %v3800 = vunpack.c.l.b16 %v3729
  %v3801 = vunpack.c.h.b16 %v3729
  %v3802 = vunpack.c.l.b16 %v3730
  %v3803 = vunpack.c.h.b16 %v3730
  %v3804 = vunpack.c.l.b16 %v3731
  %v3805 = vunpack.c.h.b16 %v3731
  %v3806 = vunpack.c.l.b16 %v3732
  %v3807 = vunpack.c.h.b16 %v3732
  %v3808 = vunpack.c.l.b16 %v3733
  %v3809 = vunpack.c.h.b16 %v3733
  %v3810 = vunpack.c.l.b16 %v3734
  %v3811 = vunpack.c.h.b16 %v3734
  %v3812 = vunpack.c.l.b16 %v3735
  %v3813 = vunpack.c.h.b16 %v3735
  %v3814 = vunpack.c.l.b16 %v3736
  %v3815 = vunpack.c.h.b16 %v3736
  %v3816 = vunpack.c.l.b16 %v3737
  %v3817 = vunpack.c.h.b16 %v3737
  %v3818 = vunpack.c.l.b16 %v3738
  %v3819 = vunpack.c.h.b16 %v3738
  %v3820 = vunpack.c.l.b16 %v3739
  %v3821 = vunpack.c.h.b16 %v3739
  %v3822 = vunpack.c.l.b16 %v3740
  %v3823 = vunpack.c.h.b16 %v3740
  %v3824 = vunpack.c.l.b16 %v3741
  %v3825 = vunpack.c.h.b16 %v3741
  %v3826 = vunpack.c.l.b16 %v3742
  %v3827 = vunpack.c.h.b16 %v3742
  %v3828 = vunpack.c.l.b16 %v3743
  %v3829 = vunpack.c.h.b16 %v3743
  %v3830 = vunpack.c.l.b16 %v3744
  %v3831 = vunpack.c.h.b16 %v3744
  %v3832 = vunpack.c.l.b16 %v3745
  %v3833 = vunpack.c.h.b16 %v3745
  %v3834 = vunpack.c.l.b16 %v3746
  %v3835 = vunpack.c.h.b16 %v3746
  %v3836 = vunpack.c.l.b16 %v3747
  %v3837 = vunpack.c.h.b16 %v3747
  %v3838 = vunpack.c.l.b16 %v3748
  %v3839 = vunpack.c.h.b16 %v3748
  %v3840 = vunpack.c.l.b16 %v3749
  %v3841 = vunpack.c.h.b16 %v3749
  %v3842 = vunpack.c.l.b16 %v3750
  %v3843 = vunpack.c.h.b16 %v3750
  %v3844 = vunpack.c.l.b16 %v3751
  %v3845 = vunpack.c.h.b16 %v3751
  %v3846 = vunpack.c.l.b16 %v3752
  %v3847 = vunpack.c.h.b16 %v3752
  %v3848 = vunpack.c.l.b16 %v3753
  %v3849 = vunpack.c.h.b16 %v3753
  %v3850 = vpack.c.b16 %v3790, %v3786
  %v3851 = vpack.c.b16 %v3791, %v3787
  %v3852 = vpack.c.b16 %v3792, %v3788
  %v3853 = vpack.c.b16 %v3793, %v3789
  %v3854 = vpack.c.b16 %v3798, %v3794
  %v3855 = vpack.c.b16 %v3799, %v3795
  %v3856 = vpack.c.b16 %v3800, %v3796
  %v3857 = vpack.c.b16 %v3801, %v3797
  %v3858 = vpack.c.b16 %v3806, %v3802
  %v3859 = vpack.c.b16 %v3807, %v3803
  %v3860 = vpack.c.b16 %v3808, %v3804
  %v3861 = vpack.c.b16 %v3809, %v3805
  %v3862 = vpack.c.b16 %v3814, %v3810
  %v3863 = vpack.c.b16 %v3815, %v3811
  %v3864 = vpack.c.b16 %v3816, %v3812
  %v3865 = vpack.c.b16 %v3817, %v3813
  %v3866 = vpack.c.b16 %v3822, %v3818
  %v3867 = vpack.c.b16 %v3823, %v3819
  %v3868 = vpack.c.b16 %v3824, %v3820
  %v3869 = vpack.c.b16 %v3825, %v3821
  %v3870 = vpack.c.b16 %v3830, %v3826
  %v3871 = vpack.c.b16 %v3831, %v3827
  %v3872 = vpack.c.b16 %v3832, %v3828
  %v3873 = vpack.c.b16 %v3833, %v3829
  %v3874 = vpack.c.b16 %v3838, %v3834
  %v3875 = vpack.c.b16 %v3839, %v3835
  %v3876 = vpack.c.b16 %v3840, %v3836
  %v3877 = vpack.c.b16 %v3841, %v3837
  %v3878 = vpack.c.b16 %v3846, %v3842
  %v3879 = vpack.c.b16 %v3847, %v3843
  %v3880 = vpack.c.b16 %v3848, %v3844
  %v3881 = vpack.c.b16 %v3849, %v3845
  %3914 = vmatprep.subr.bf16.mxu0 %v3851
  %3915 = vmatpush1.bf16.msra.mxu0 %v3850
  %3916 = vmatprep.subr.bf16.mxu0 %v3855
  %3917 = vmatpush1.bf16.msra.mxu0 %v3854
  %3918 = vmatprep.subr.bf16.mxu0 %v3859
  %3919 = vmatpush1.bf16.msra.mxu0 %v3858
  %3920 = vmatprep.subr.bf16.mxu0 %v3863
  %3921 = vmatpush1.bf16.msra.mxu0 %v3862
  %3922 = vmatprep.subr.bf16.mxu0 %v3867
  %3923 = vmatpush1.bf16.msra.mxu0 %v3866
  %3924 = vmatprep.subr.bf16.mxu0 %v3871
  %3925 = vmatpush1.bf16.msra.mxu0 %v3870
  %3926 = vmatprep.subr.bf16.mxu0 %v3875
  %3927 = vmatpush1.bf16.msra.mxu0 %v3874
  %3928 = vmatprep.subr.bf16.mxu0 %v3879
  %3929 = vmatpush1.bf16.msra.mxu0 %v3878
  %3930 = vmatprep.subr.bf16.mxu0 0
  %3931 = vmatpush1.bf16.msra.mxu0 0
  %3932 = vmatprep.subr.bf16.mxu0 0
  %3933 = vmatpush1.bf16.msra.mxu0 0
  %3934 = vmatprep.subr.bf16.mxu0 0
  %3935 = vmatpush1.bf16.msra.mxu0 0
  %3936 = vmatprep.subr.bf16.mxu0 0
  %3937 = vmatpush1.bf16.msra.mxu0 0
  %3938 = vmatprep.subr.bf16.mxu0 0
  %3939 = vmatpush1.bf16.msra.mxu0 0
  %3940 = vmatprep.subr.bf16.mxu0 0
  %3941 = vmatpush1.bf16.msra.mxu0 0
  %3942 = vmatprep.subr.bf16.mxu0 0
  %3943 = vmatpush1.bf16.msra.mxu0 0
  %3944 = vmatprep.subr.bf16.mxu0 0
  %3945 = vmatpush1.bf16.msra.mxu0 0
  %3946 = vmatprep.mubr.bf16.mxu0 0
  %3947 = vmatmul.mubr.bf16.gmra.mrb[0].mxu0 %v3414
  %v3948 = vpop.f32.mrb[0].mxu0
  %v3949 = vadd.f32 0.0, %v3948
  %v3950 = vpop.f32.mrb[0].mxu0
  %v3951 = vadd.f32 0.0, %v3950
  %v3952 = vpop.f32.mrb[0].mxu0
  %v3953 = vpop.f32.mrb[0].mxu0
  %3954 = vdwg.mxu0
  %3955 = vmatprep.subr.bf16.mxu0 %v3853
  %3956 = vmatpush1.bf16.msra.mxu0 %v3852
  %3957 = vmatprep.subr.bf16.mxu0 %v3857
  %3958 = vmatpush1.bf16.msra.mxu0 %v3856
  %3959 = vmatprep.subr.bf16.mxu0 %v3861
  %3960 = vmatpush1.bf16.msra.mxu0 %v3860
  %3961 = vmatprep.subr.bf16.mxu0 %v3865
  %3962 = vmatpush1.bf16.msra.mxu0 %v3864
  %3963 = vmatprep.subr.bf16.mxu0 %v3869
  %3964 = vmatpush1.bf16.msra.mxu0 %v3868
  %3965 = vmatprep.subr.bf16.mxu0 %v3873
  %3966 = vmatpush1.bf16.msra.mxu0 %v3872
  %3967 = vmatprep.subr.bf16.mxu0 %v3877
  %3968 = vmatpush1.bf16.msra.mxu0 %v3876
  %3969 = vmatprep.subr.bf16.mxu0 %v3881
  %3970 = vmatpush1.bf16.msra.mxu0 %v3880
  %3971 = vmatprep.subr.bf16.mxu0 0
  %3972 = vmatpush1.bf16.msra.mxu0 0
  %3973 = vmatprep.subr.bf16.mxu0 0
  %3974 = vmatpush1.bf16.msra.mxu0 0
  %3975 = vmatprep.subr.bf16.mxu0 0
  %3976 = vmatpush1.bf16.msra.mxu0 0
  %3977 = vmatprep.subr.bf16.mxu0 0
  %3978 = vmatpush1.bf16.msra.mxu0 0
  %3979 = vmatprep.subr.bf16.mxu0 0
  %3980 = vmatpush1.bf16.msra.mxu0 0
  %3981 = vmatprep.subr.bf16.mxu0 0
  %3982 = vmatpush1.bf16.msra.mxu0 0
  %3983 = vmatprep.subr.bf16.mxu0 0
  %3984 = vmatpush1.bf16.msra.mxu0 0
  %3985 = vmatprep.subr.bf16.mxu0 0
  %3986 = vmatpush1.bf16.msra.mxu0 0
  %3987 = vmatprep.mubr.bf16.mxu0 0
  %3988 = vmatmul.mubr.bf16.gmra.mrb[0].mxu0 %v3414
  %v3989 = vpop.f32.mrb[0].mxu0
  %v3990 = vadd.f32 0.0, %v3989
  %v3991 = vpop.f32.mrb[0].mxu0
  %v3992 = vadd.f32 0.0, %v3991
  %v3993 = vpop.f32.mrb[0].mxu0
  %v3994 = vpop.f32.mrb[0].mxu0
  %3995 = vdwg.mxu0
  %v3996 = vadd.f32 %v3718, %v3949
  %v3997 = vadd.f32 %v3719, %v3951
  %v3998 = vadd.f32 %v3720, %v3990
  %v3999 = vadd.f32 %v3721, %v3992
  %v4000 = vxor.u32 %v3698, 2147483648
  %v4001 = vmul.f32 %v4000, 1.442695
  %v4002 = vpow.pop %v4001
  %v4003 = vadd.f32 %v4002, 1.0
  %v4004 = vrcp.pop %v4003
  %v4005 = vmul.f32 1.0, %v4004
  %v4006 = vxor.u32 %v3699, 2147483648
  %v4007 = vmul.f32 %v4006, 1.442695
  %v4008 = vpow.pop %v4007
  %v4009 = vadd.f32 %v4008, 1.0
  %v4010 = vrcp.pop %v4009
  %v4011 = vmul.f32 1.0, %v4010
  %v4012 = vtanh.pop %v3700
  %v4013 = vxor.u32 %v3701, 2147483648
  %v4014 = vmul.f32 %v4013, 1.442695
  %v4015 = vpow.pop %v4014
  %v4016 = vadd.f32 %v4015, 1.0
  %v4017 = vrcp.pop %v4016
  %v4018 = vmul.f32 1.0, %v4017
  %v4019 = vmul.f32 %v4011, %v3379
  %v4020 = vmul.f32 %v4005, %v4012
  %v4021 = vadd.f32 %v4019, %v4020
  %v4022 = vtanh.pop %v4021
  %v4023 = vmul.f32 %v4018, %v4022
  %v4024 = vxor.u32 %v3996, 2147483648
  %v4025 = vmul.f32 %v4024, 1.442695
  %v4026 = vpow.pop %v4025
  %v4027 = vadd.f32 %v4026, 1.0
  %v4028 = vrcp.pop %v4027
  %v4029 = vmul.f32 1.0, %v4028
  %v4030 = vxor.u32 %v3997, 2147483648
  %v4031 = vmul.f32 %v4030, 1.442695
  %v4032 = vpow.pop %v4031
  %v4033 = vadd.f32 %v4032, 1.0
  %v4034 = vrcp.pop %v4033
  %v4035 = vmul.f32 1.0, %v4034
  %v4036 = vtanh.pop %v3998
  %v4037 = vxor.u32 %v3999, 2147483648
  %v4038 = vmul.f32 %v4037, 1.442695
  %v4039 = vpow.pop %v4038
  %v4040 = vadd.f32 %v4039, 1.0
  %v4041 = vrcp.pop %v4040
  %v4042 = vmul.f32 1.0, %v4041
  %v4043 = vmul.f32 %v4035, %v3408
  %v4044 = vmul.f32 %v4029, %v4036
  %v4045 = vadd.f32 %v4043, %v4044
  %v4046 = vtanh.pop %v4045
  %v4047 = vmul.f32 %v4042, %v4046
  %vm4048 = vcmp.gt.s32.totalorder %v847, 3
  %v4049 = vsel %vm4048, %v4047, 0.0
  %v4050 = vsel %vm4048, %v4045, 0.0
  %v4051 = vpack.c.bf16 %v4023, %v4023
  %4052 = vst [vmem:[#allocation3 + $0x10] sm:$0xf] %v4051
  %v4053 = vpack.c.bf16 %v4049, %v4049
  %v4055 = vrot.slane %v4053, 4
  %4057 = vst [vmem:[#allocation4 + $0x8] sm:$0xf0] %v4055
  %v4058 = vld [vmem:[#allocation2 + $0x80] sm:$0xf0]
  %v4059 = vld [vmem:[#allocation2 + $0x88] sm:$0xf0]
  %v4060 = vld [vmem:[#allocation2 + $0x90] sm:$0xf0]
  %v4061 = vld [vmem:[#allocation2 + $0x98] sm:$0xf0]
  %v4066 = vrot.slane %v4058, 4
  %v4067 = vrot.slane %v4059, 4
  %v4068 = vrot.slane %v4060, 4
  %v4069 = vrot.slane %v4061, 4
  %v4074 = vunpack.c.l.bf16 %v4066
  %v4075 = vunpack.c.l.bf16 %v4067
  %v4076 = vunpack.c.l.bf16 %v4068
  %v4077 = vunpack.c.l.bf16 %v4069
  %v4078 = vld [vmem:[%s4] sm:$0xff]
  %v4079 = vld [vmem:[%s4 + $0x8] sm:$0xff]
  %v4080 = vld [vmem:[%s4 + $0x10] sm:$0xff]
  %v4081 = vld [vmem:[%s4 + $0x18] sm:$0xff]
  %v4082 = vld [vmem:[%s4 + $0x20] sm:$0xff]
  %v4083 = vld [vmem:[%s4 + $0x28] sm:$0xff]
  %v4084 = vld [vmem:[%s4 + $0x30] sm:$0xff]
  %v4085 = vld [vmem:[%s4 + $0x38] sm:$0xff]
  %v4086 = vld [vmem:[%s4 + $0x40] sm:$0xff]
  %v4087 = vld [vmem:[%s4 + $0x48] sm:$0xff]
  %v4088 = vld [vmem:[%s4 + $0x50] sm:$0xff]
  %v4089 = vld [vmem:[%s4 + $0x58] sm:$0xff]
  %v4090 = vld [vmem:[%s4 + $0x60] sm:$0xff]
  %v4091 = vld [vmem:[%s4 + $0x68] sm:$0xff]
  %v4092 = vld [vmem:[%s4 + $0x70] sm:$0xff]
  %v4093 = vld [vmem:[%s4 + $0x78] sm:$0xff]
  %v4094 = vld [vmem:[%s4 + $0x80] sm:$0xff]
  %v4095 = vld [vmem:[%s4 + $0x88] sm:$0xff]
  %v4096 = vld [vmem:[%s4 + $0x90] sm:$0xff]
  %v4097 = vld [vmem:[%s4 + $0x98] sm:$0xff]
  %v4098 = vld [vmem:[%s4 + $0xa0] sm:$0xff]
  %v4099 = vld [vmem:[%s4 + $0xa8] sm:$0xff]
  %v4100 = vld [vmem:[%s4 + $0xb0] sm:$0xff]
  %v4101 = vld [vmem:[%s4 + $0xb8] sm:$0xff]
  %v4102 = vld [vmem:[%s4 + $0xc0] sm:$0xff]
  %v4103 = vld [vmem:[%s4 + $0xc8] sm:$0xff]
  %v4104 = vld [vmem:[%s4 + $0xd0] sm:$0xff]
  %v4105 = vld [vmem:[%s4 + $0xd8] sm:$0xff]
  %v4106 = vld [vmem:[%s4 + $0xe0] sm:$0xff]
  %v4107 = vld [vmem:[%s4 + $0xe8] sm:$0xff]
  %v4108 = vld [vmem:[%s4 + $0xf0] sm:$0xff]
  %v4109 = vld [vmem:[%s4 + $0xf8] sm:$0xff]
  %v4142 = vunpack.c.l.b16 %v4078
  %v4143 = vunpack.c.h.b16 %v4078
  %v4144 = vunpack.c.l.b16 %v4079
  %v4145 = vunpack.c.h.b16 %v4079
  %v4146 = vunpack.c.l.b16 %v4080
  %v4147 = vunpack.c.h.b16 %v4080
  %v4148 = vunpack.c.l.b16 %v4081
  %v4149 = vunpack.c.h.b16 %v4081
  %v4150 = vunpack.c.l.b16 %v4082
  %v4151 = vunpack.c.h.b16 %v4082
  %v4152 = vunpack.c.l.b16 %v4083
  %v4153 = vunpack.c.h.b16 %v4083
  %v4154 = vunpack.c.l.b16 %v4084
  %v4155 = vunpack.c.h.b16 %v4084
  %v4156 = vunpack.c.l.b16 %v4085
  %v4157 = vunpack.c.h.b16 %v4085
  %v4158 = vunpack.c.l.b16 %v4086
  %v4159 = vunpack.c.h.b16 %v4086
  %v4160 = vunpack.c.l.b16 %v4087
  %v4161 = vunpack.c.h.b16 %v4087
  %v4162 = vunpack.c.l.b16 %v4088
  %v4163 = vunpack.c.h.b16 %v4088
  %v4164 = vunpack.c.l.b16 %v4089
  %v4165 = vunpack.c.h.b16 %v4089
  %v4166 = vunpack.c.l.b16 %v4090
  %v4167 = vunpack.c.h.b16 %v4090
  %v4168 = vunpack.c.l.b16 %v4091
  %v4169 = vunpack.c.h.b16 %v4091
  %v4170 = vunpack.c.l.b16 %v4092
  %v4171 = vunpack.c.h.b16 %v4092
  %v4172 = vunpack.c.l.b16 %v4093
  %v4173 = vunpack.c.h.b16 %v4093
  %v4174 = vunpack.c.l.b16 %v4094
  %v4175 = vunpack.c.h.b16 %v4094
  %v4176 = vunpack.c.l.b16 %v4095
  %v4177 = vunpack.c.h.b16 %v4095
  %v4178 = vunpack.c.l.b16 %v4096
  %v4179 = vunpack.c.h.b16 %v4096
  %v4180 = vunpack.c.l.b16 %v4097
  %v4181 = vunpack.c.h.b16 %v4097
  %v4182 = vunpack.c.l.b16 %v4098
  %v4183 = vunpack.c.h.b16 %v4098
  %v4184 = vunpack.c.l.b16 %v4099
  %v4185 = vunpack.c.h.b16 %v4099
  %v4186 = vunpack.c.l.b16 %v4100
  %v4187 = vunpack.c.h.b16 %v4100
  %v4188 = vunpack.c.l.b16 %v4101
  %v4189 = vunpack.c.h.b16 %v4101
  %v4190 = vunpack.c.l.b16 %v4102
  %v4191 = vunpack.c.h.b16 %v4102
  %v4192 = vunpack.c.l.b16 %v4103
  %v4193 = vunpack.c.h.b16 %v4103
  %v4194 = vunpack.c.l.b16 %v4104
  %v4195 = vunpack.c.h.b16 %v4104
  %v4196 = vunpack.c.l.b16 %v4105
  %v4197 = vunpack.c.h.b16 %v4105
  %v4198 = vunpack.c.l.b16 %v4106
  %v4199 = vunpack.c.h.b16 %v4106
  %v4200 = vunpack.c.l.b16 %v4107
  %v4201 = vunpack.c.h.b16 %v4107
  %v4202 = vunpack.c.l.b16 %v4108
  %v4203 = vunpack.c.h.b16 %v4108
  %v4204 = vunpack.c.l.b16 %v4109
  %v4205 = vunpack.c.h.b16 %v4109
  %v4206 = vpack.c.b16 %v4146, %v4142
  %v4207 = vpack.c.b16 %v4147, %v4143
  %v4208 = vpack.c.b16 %v4148, %v4144
  %v4209 = vpack.c.b16 %v4149, %v4145
  %v4210 = vpack.c.b16 %v4154, %v4150
  %v4211 = vpack.c.b16 %v4155, %v4151
  %v4212 = vpack.c.b16 %v4156, %v4152
  %v4213 = vpack.c.b16 %v4157, %v4153
  %v4214 = vpack.c.b16 %v4162, %v4158
  %v4215 = vpack.c.b16 %v4163, %v4159
  %v4216 = vpack.c.b16 %v4164, %v4160
  %v4217 = vpack.c.b16 %v4165, %v4161
  %v4218 = vpack.c.b16 %v4170, %v4166
  %v4219 = vpack.c.b16 %v4171, %v4167
  %v4220 = vpack.c.b16 %v4172, %v4168
  %v4221 = vpack.c.b16 %v4173, %v4169
  %v4222 = vpack.c.b16 %v4178, %v4174
  %v4223 = vpack.c.b16 %v4179, %v4175
  %v4224 = vpack.c.b16 %v4180, %v4176
  %v4225 = vpack.c.b16 %v4181, %v4177
  %v4226 = vpack.c.b16 %v4186, %v4182
  %v4227 = vpack.c.b16 %v4187, %v4183
  %v4228 = vpack.c.b16 %v4188, %v4184
  %v4229 = vpack.c.b16 %v4189, %v4185
  %v4230 = vpack.c.b16 %v4194, %v4190
  %v4231 = vpack.c.b16 %v4195, %v4191
  %v4232 = vpack.c.b16 %v4196, %v4192
  %v4233 = vpack.c.b16 %v4197, %v4193
  %v4234 = vpack.c.b16 %v4202, %v4198
  %v4235 = vpack.c.b16 %v4203, %v4199
  %v4236 = vpack.c.b16 %v4204, %v4200
  %v4237 = vpack.c.b16 %v4205, %v4201
  %4270 = vmatprep.subr.bf16.mxu0 %v4207
  %4271 = vmatpush1.bf16.msra.mxu0 %v4206
  %4272 = vmatprep.subr.bf16.mxu0 %v4211
  %4273 = vmatpush1.bf16.msra.mxu0 %v4210
  %4274 = vmatprep.subr.bf16.mxu0 %v4215
  %4275 = vmatpush1.bf16.msra.mxu0 %v4214
  %4276 = vmatprep.subr.bf16.mxu0 %v4219
  %4277 = vmatpush1.bf16.msra.mxu0 %v4218
  %4278 = vmatprep.subr.bf16.mxu0 %v4223
  %4279 = vmatpush1.bf16.msra.mxu0 %v4222
  %4280 = vmatprep.subr.bf16.mxu0 %v4227
  %4281 = vmatpush1.bf16.msra.mxu0 %v4226
  %4282 = vmatprep.subr.bf16.mxu0 %v4231
  %4283 = vmatpush1.bf16.msra.mxu0 %v4230
  %4284 = vmatprep.subr.bf16.mxu0 %v4235
  %4285 = vmatpush1.bf16.msra.mxu0 %v4234
  %4286 = vmatprep.subr.bf16.mxu0 0
  %4287 = vmatpush1.bf16.msra.mxu0 0
  %4288 = vmatprep.subr.bf16.mxu0 0
  %4289 = vmatpush1.bf16.msra.mxu0 0
  %4290 = vmatprep.subr.bf16.mxu0 0
  %4291 = vmatpush1.bf16.msra.mxu0 0
  %4292 = vmatprep.subr.bf16.mxu0 0
  %4293 = vmatpush1.bf16.msra.mxu0 0
  %4294 = vmatprep.subr.bf16.mxu0 0
  %4295 = vmatpush1.bf16.msra.mxu0 0
  %4296 = vmatprep.subr.bf16.mxu0 0
  %4297 = vmatpush1.bf16.msra.mxu0 0
  %4298 = vmatprep.subr.bf16.mxu0 0
  %4299 = vmatpush1.bf16.msra.mxu0 0
  %4300 = vmatprep.subr.bf16.mxu0 0
  %4301 = vmatpush1.bf16.msra.mxu0 0
  %4302 = vmatprep.mubr.bf16.mxu0 0
  %4303 = vmatmul.mubr.bf16.gmra.mrb[0].mxu0 %v4051
  %v4304 = vpop.f32.mrb[0].mxu0
  %v4305 = vadd.f32 0.0, %v4304
  %v4306 = vpop.f32.mrb[0].mxu0
  %v4307 = vadd.f32 0.0, %v4306
  %v4308 = vpop.f32.mrb[0].mxu0
  %v4309 = vpop.f32.mrb[0].mxu0
  %4310 = vdwg.mxu0
  %4311 = vmatprep.subr.bf16.mxu0 %v4209
  %4312 = vmatpush1.bf16.msra.mxu0 %v4208
  %4313 = vmatprep.subr.bf16.mxu0 %v4213
  %4314 = vmatpush1.bf16.msra.mxu0 %v4212
  %4315 = vmatprep.subr.bf16.mxu0 %v4217
  %4316 = vmatpush1.bf16.msra.mxu0 %v4216
  %4317 = vmatprep.subr.bf16.mxu0 %v4221
  %4318 = vmatpush1.bf16.msra.mxu0 %v4220
  %4319 = vmatprep.subr.bf16.mxu0 %v4225
  %4320 = vmatpush1.bf16.msra.mxu0 %v4224
  %4321 = vmatprep.subr.bf16.mxu0 %v4229
  %4322 = vmatpush1.bf16.msra.mxu0 %v4228
  %4323 = vmatprep.subr.bf16.mxu0 %v4233
  %4324 = vmatpush1.bf16.msra.mxu0 %v4232
  %4325 = vmatprep.subr.bf16.mxu0 %v4237
  %4326 = vmatpush1.bf16.msra.mxu0 %v4236
  %4327 = vmatprep.subr.bf16.mxu0 0
  %4328 = vmatpush1.bf16.msra.mxu0 0
  %4329 = vmatprep.subr.bf16.mxu0 0
  %4330 = vmatpush1.bf16.msra.mxu0 0
  %4331 = vmatprep.subr.bf16.mxu0 0
  %4332 = vmatpush1.bf16.msra.mxu0 0
  %4333 = vmatprep.subr.bf16.mxu0 0
  %4334 = vmatpush1.bf16.msra.mxu0 0
  %4335 = vmatprep.subr.bf16.mxu0 0
  %4336 = vmatpush1.bf16.msra.mxu0 0
  %4337 = vmatprep.subr.bf16.mxu0 0
  %4338 = vmatpush1.bf16.msra.mxu0 0
  %4339 = vmatprep.subr.bf16.mxu0 0
  %4340 = vmatpush1.bf16.msra.mxu0 0
  %4341 = vmatprep.subr.bf16.mxu0 0
  %4342 = vmatpush1.bf16.msra.mxu0 0
  %4343 = vmatprep.mubr.bf16.mxu0 0
  %4344 = vmatmul.mubr.bf16.gmra.mrb[0].mxu0 %v4051
  %v4345 = vpop.f32.mrb[0].mxu0
  %v4346 = vadd.f32 0.0, %v4345
  %v4347 = vpop.f32.mrb[0].mxu0
  %v4348 = vadd.f32 0.0, %v4347
  %v4349 = vpop.f32.mrb[0].mxu0
  %v4350 = vpop.f32.mrb[0].mxu0
  %4351 = vdwg.mxu0
  %v4352 = vadd.f32 %v4074, %v4305
  %v4353 = vadd.f32 %v4075, %v4307
  %v4354 = vadd.f32 %v4076, %v4346
  %v4355 = vadd.f32 %v4077, %v4348
  %v4356 = vld [vmem:[#allocation2 + $0x60] sm:$0xf]
  %v4357 = vld [vmem:[#allocation2 + $0x68] sm:$0xf]
  %v4358 = vld [vmem:[#allocation2 + $0x70] sm:$0xf]
  %v4359 = vld [vmem:[#allocation2 + $0x78] sm:$0xf]
  %v4360 = vunpack.c.l.bf16 %v4356
  %v4361 = vunpack.c.l.bf16 %v4357
  %v4362 = vunpack.c.l.bf16 %v4358
  %v4363 = vunpack.c.l.bf16 %v4359
  %v4364 = vld [vmem:[%s5] sm:$0xff]
  %v4365 = vld [vmem:[%s5 + $0x8] sm:$0xff]
  %v4366 = vld [vmem:[%s5 + $0x10] sm:$0xff]
  %v4367 = vld [vmem:[%s5 + $0x18] sm:$0xff]
  %v4368 = vld [vmem:[%s5 + $0x20] sm:$0xff]
  %v4369 = vld [vmem:[%s5 + $0x28] sm:$0xff]
  %v4370 = vld [vmem:[%s5 + $0x30] sm:$0xff]
  %v4371 = vld [vmem:[%s5 + $0x38] sm:$0xff]
  %v4372 = vld [vmem:[%s5 + $0x40] sm:$0xff]
  %v4373 = vld [vmem:[%s5 + $0x48] sm:$0xff]
  %v4374 = vld [vmem:[%s5 + $0x50] sm:$0xff]
  %v4375 = vld [vmem:[%s5 + $0x58] sm:$0xff]
  %v4376 = vld [vmem:[%s5 + $0x60] sm:$0xff]
  %v4377 = vld [vmem:[%s5 + $0x68] sm:$0xff]
  %v4378 = vld [vmem:[%s5 + $0x70] sm:$0xff]
  %v4379 = vld [vmem:[%s5 + $0x78] sm:$0xff]
  %v4380 = vld [vmem:[%s5 + $0x80] sm:$0xff]
  %v4381 = vld [vmem:[%s5 + $0x88] sm:$0xff]
  %v4382 = vld [vmem:[%s5 + $0x90] sm:$0xff]
  %v4383 = vld [vmem:[%s5 + $0x98] sm:$0xff]
  %v4384 = vld [vmem:[%s5 + $0xa0] sm:$0xff]
  %v4385 = vld [vmem:[%s5 + $0xa8] sm:$0xff]
  %v4386 = vld [vmem:[%s5 + $0xb0] sm:$0xff]
  %v4387 = vld [vmem:[%s5 + $0xb8] sm:$0xff]
  %v4388 = vld [vmem:[%s5 + $0xc0] sm:$0xff]
  %v4389 = vld [vmem:[%s5 + $0xc8] sm:$0xff]
  %v4390 = vld [vmem:[%s5 + $0xd0] sm:$0xff]
  %v4391 = vld [vmem:[%s5 + $0xd8] sm:$0xff]
  %v4392 = vld [vmem:[%s5 + $0xe0] sm:$0xff]
  %v4393 = vld [vmem:[%s5 + $0xe8] sm:$0xff]
  %v4394 = vld [vmem:[%s5 + $0xf0] sm:$0xff]
  %v4395 = vld [vmem:[%s5 + $0xf8] sm:$0xff]
  %v4428 = vunpack.c.l.b16 %v4364
  %v4429 = vunpack.c.h.b16 %v4364
  %v4430 = vunpack.c.l.b16 %v4365
  %v4431 = vunpack.c.h.b16 %v4365
  %v4432 = vunpack.c.l.b16 %v4366
  %v4433 = vunpack.c.h.b16 %v4366
  %v4434 = vunpack.c.l.b16 %v4367
  %v4435 = vunpack.c.h.b16 %v4367
  %v4436 = vunpack.c.l.b16 %v4368
  %v4437 = vunpack.c.h.b16 %v4368
  %v4438 = vunpack.c.l.b16 %v4369
  %v4439 = vunpack.c.h.b16 %v4369
  %v4440 = vunpack.c.l.b16 %v4370
  %v4441 = vunpack.c.h.b16 %v4370
  %v4442 = vunpack.c.l.b16 %v4371
  %v4443 = vunpack.c.h.b16 %v4371
  %v4444 = vunpack.c.l.b16 %v4372
  %v4445 = vunpack.c.h.b16 %v4372
  %v4446 = vunpack.c.l.b16 %v4373
  %v4447 = vunpack.c.h.b16 %v4373
  %v4448 = vunpack.c.l.b16 %v4374
  %v4449 = vunpack.c.h.b16 %v4374
  %v4450 = vunpack.c.l.b16 %v4375
  %v4451 = vunpack.c.h.b16 %v4375
  %v4452 = vunpack.c.l.b16 %v4376
  %v4453 = vunpack.c.h.b16 %v4376
  %v4454 = vunpack.c.l.b16 %v4377
  %v4455 = vunpack.c.h.b16 %v4377
  %v4456 = vunpack.c.l.b16 %v4378
  %v4457 = vunpack.c.h.b16 %v4378
  %v4458 = vunpack.c.l.b16 %v4379
  %v4459 = vunpack.c.h.b16 %v4379
  %v4460 = vunpack.c.l.b16 %v4380
  %v4461 = vunpack.c.h.b16 %v4380
  %v4462 = vunpack.c.l.b16 %v4381
  %v4463 = vunpack.c.h.b16 %v4381
  %v4464 = vunpack.c.l.b16 %v4382
  %v4465 = vunpack.c.h.b16 %v4382
  %v4466 = vunpack.c.l.b16 %v4383
  %v4467 = vunpack.c.h.b16 %v4383
  %v4468 = vunpack.c.l.b16 %v4384
  %v4469 = vunpack.c.h.b16 %v4384
  %v4470 = vunpack.c.l.b16 %v4385
  %v4471 = vunpack.c.h.b16 %v4385
  %v4472 = vunpack.c.l.b16 %v4386
  %v4473 = vunpack.c.h.b16 %v4386
  %v4474 = vunpack.c.l.b16 %v4387
  %v4475 = vunpack.c.h.b16 %v4387
  %v4476 = vunpack.c.l.b16 %v4388
  %v4477 = vunpack.c.h.b16 %v4388
  %v4478 = vunpack.c.l.b16 %v4389
  %v4479 = vunpack.c.h.b16 %v4389
  %v4480 = vunpack.c.l.b16 %v4390
  %v4481 = vunpack.c.h.b16 %v4390
  %v4482 = vunpack.c.l.b16 %v4391
  %v4483 = vunpack.c.h.b16 %v4391
  %v4484 = vunpack.c.l.b16 %v4392
  %v4485 = vunpack.c.h.b16 %v4392
  %v4486 = vunpack.c.l.b16 %v4393
  %v4487 = vunpack.c.h.b16 %v4393
  %v4488 = vunpack.c.l.b16 %v4394
  %v4489 = vunpack.c.h.b16 %v4394
  %v4490 = vunpack.c.l.b16 %v4395
  %v4491 = vunpack.c.h.b16 %v4395
  %v4492 = vpack.c.b16 %v4432, %v4428
  %v4493 = vpack.c.b16 %v4433, %v4429
  %v4494 = vpack.c.b16 %v4434, %v4430
  %v4495 = vpack.c.b16 %v4435, %v4431
  %v4496 = vpack.c.b16 %v4440, %v4436
  %v4497 = vpack.c.b16 %v4441, %v4437
  %v4498 = vpack.c.b16 %v4442, %v4438
  %v4499 = vpack.c.b16 %v4443, %v4439
  %v4500 = vpack.c.b16 %v4448, %v4444
  %v4501 = vpack.c.b16 %v4449, %v4445
  %v4502 = vpack.c.b16 %v4450, %v4446
  %v4503 = vpack.c.b16 %v4451, %v4447
  %v4504 = vpack.c.b16 %v4456, %v4452
  %v4505 = vpack.c.b16 %v4457, %v4453
  %v4506 = vpack.c.b16 %v4458, %v4454
  %v4507 = vpack.c.b16 %v4459, %v4455
  %v4508 = vpack.c.b16 %v4464, %v4460
  %v4509 = vpack.c.b16 %v4465, %v4461
  %v4510 = vpack.c.b16 %v4466, %v4462
  %v4511 = vpack.c.b16 %v4467, %v4463
  %v4512 = vpack.c.b16 %v4472, %v4468
  %v4513 = vpack.c.b16 %v4473, %v4469
  %v4514 = vpack.c.b16 %v4474, %v4470
  %v4515 = vpack.c.b16 %v4475, %v4471
  %v4516 = vpack.c.b16 %v4480, %v4476
  %v4517 = vpack.c.b16 %v4481, %v4477
  %v4518 = vpack.c.b16 %v4482, %v4478
  %v4519 = vpack.c.b16 %v4483, %v4479
  %v4520 = vpack.c.b16 %v4488, %v4484
  %v4521 = vpack.c.b16 %v4489, %v4485
  %v4522 = vpack.c.b16 %v4490, %v4486
  %v4523 = vpack.c.b16 %v4491, %v4487
  %4556 = vmatprep.subr.bf16.mxu0 %v4493
  %4557 = vmatpush1.bf16.msra.mxu0 %v4492
  %4558 = vmatprep.subr.bf16.mxu0 %v4497
  %4559 = vmatpush1.bf16.msra.mxu0 %v4496
  %4560 = vmatprep.subr.bf16.mxu0 %v4501
  %4561 = vmatpush1.bf16.msra.mxu0 %v4500
  %4562 = vmatprep.subr.bf16.mxu0 %v4505
  %4563 = vmatpush1.bf16.msra.mxu0 %v4504
  %4564 = vmatprep.subr.bf16.mxu0 %v4509
  %4565 = vmatpush1.bf16.msra.mxu0 %v4508
  %4566 = vmatprep.subr.bf16.mxu0 %v4513
  %4567 = vmatpush1.bf16.msra.mxu0 %v4512
  %4568 = vmatprep.subr.bf16.mxu0 %v4517
  %4569 = vmatpush1.bf16.msra.mxu0 %v4516
  %4570 = vmatprep.subr.bf16.mxu0 %v4521
  %4571 = vmatpush1.bf16.msra.mxu0 %v4520
  %4572 = vmatprep.subr.bf16.mxu0 0
  %4573 = vmatpush1.bf16.msra.mxu0 0
  %4574 = vmatprep.subr.bf16.mxu0 0
  %4575 = vmatpush1.bf16.msra.mxu0 0
  %4576 = vmatprep.subr.bf16.mxu0 0
  %4577 = vmatpush1.bf16.msra.mxu0 0
  %4578 = vmatprep.subr.bf16.mxu0 0
  %4579 = vmatpush1.bf16.msra.mxu0 0
  %4580 = vmatprep.subr.bf16.mxu0 0
  %4581 = vmatpush1.bf16.msra.mxu0 0
  %4582 = vmatprep.subr.bf16.mxu0 0
  %4583 = vmatpush1.bf16.msra.mxu0 0
  %4584 = vmatprep.subr.bf16.mxu0 0
  %4585 = vmatpush1.bf16.msra.mxu0 0
  %4586 = vmatprep.subr.bf16.mxu0 0
  %4587 = vmatpush1.bf16.msra.mxu0 0
  %4588 = vmatprep.mubr.bf16.mxu0 0
  %4589 = vmatmul.mubr.bf16.gmra.mrb[0].mxu0 %v4053
  %v4590 = vpop.f32.mrb[0].mxu0
  %v4591 = vadd.f32 0.0, %v4590
  %v4592 = vpop.f32.mrb[0].mxu0
  %v4593 = vadd.f32 0.0, %v4592
  %v4594 = vpop.f32.mrb[0].mxu0
  %v4595 = vpop.f32.mrb[0].mxu0
  %4596 = vdwg.mxu0
  %4597 = vmatprep.subr.bf16.mxu0 %v4495
  %4598 = vmatpush1.bf16.msra.mxu0 %v4494
  %4599 = vmatprep.subr.bf16.mxu0 %v4499
  %4600 = vmatpush1.bf16.msra.mxu0 %v4498
  %4601 = vmatprep.subr.bf16.mxu0 %v4503
  %4602 = vmatpush1.bf16.msra.mxu0 %v4502
  %4603 = vmatprep.subr.bf16.mxu0 %v4507
  %4604 = vmatpush1.bf16.msra.mxu0 %v4506
  %4605 = vmatprep.subr.bf16.mxu0 %v4511
  %4606 = vmatpush1.bf16.msra.mxu0 %v4510
  %4607 = vmatprep.subr.bf16.mxu0 %v4515
  %4608 = vmatpush1.bf16.msra.mxu0 %v4514
  %4609 = vmatprep.subr.bf16.mxu0 %v4519
  %4610 = vmatpush1.bf16.msra.mxu0 %v4518
  %4611 = vmatprep.subr.bf16.mxu0 %v4523
  %4612 = vmatpush1.bf16.msra.mxu0 %v4522
  %4613 = vmatprep.subr.bf16.mxu0 0
  %4614 = vmatpush1.bf16.msra.mxu0 0
  %4615 = vmatprep.subr.bf16.mxu0 0
  %4616 = vmatpush1.bf16.msra.mxu0 0
  %4617 = vmatprep.subr.bf16.mxu0 0
  %4618 = vmatpush1.bf16.msra.mxu0 0
  %4619 = vmatprep.subr.bf16.mxu0 0
  %4620 = vmatpush1.bf16.msra.mxu0 0
  %4621 = vmatprep.subr.bf16.mxu0 0
  %4622 = vmatpush1.bf16.msra.mxu0 0
  %4623 = vmatprep.subr.bf16.mxu0 0
  %4624 = vmatpush1.bf16.msra.mxu0 0
  %4625 = vmatprep.subr.bf16.mxu0 0
  %4626 = vmatpush1.bf16.msra.mxu0 0
  %4627 = vmatprep.subr.bf16.mxu0 0
  %4628 = vmatpush1.bf16.msra.mxu0 0
  %4629 = vmatprep.mubr.bf16.mxu0 0
  %4630 = vmatmul.mubr.bf16.gmra.mrb[0].mxu0 %v4053
  %v4631 = vpop.f32.mrb[0].mxu0
  %v4632 = vadd.f32 0.0, %v4631
  %v4633 = vpop.f32.mrb[0].mxu0
  %v4634 = vadd.f32 0.0, %v4633
  %v4635 = vpop.f32.mrb[0].mxu0
  %v4636 = vpop.f32.mrb[0].mxu0
  %4637 = vdwg.mxu0
  %v4638 = vadd.f32 %v4360, %v4591
  %v4639 = vadd.f32 %v4361, %v4593
  %v4640 = vadd.f32 %v4362, %v4632
  %v4641 = vadd.f32 %v4363, %v4634
  %v4642 = vxor.u32 %v4352, 2147483648
  %v4643 = vmul.f32 %v4642, 1.442695
  %v4644 = vpow.pop %v4643
  %v4645 = vadd.f32 %v4644, 1.0
  %v4646 = vrcp.pop %v4645
  %v4647 = vmul.f32 1.0, %v4646
  %v4648 = vxor.u32 %v4353, 2147483648
  %v4649 = vmul.f32 %v4648, 1.442695
  %v4650 = vpow.pop %v4649
  %v4651 = vadd.f32 %v4650, 1.0
  %v4652 = vrcp.pop %v4651
  %v4653 = vmul.f32 1.0, %v4652
  %v4654 = vtanh.pop %v4354
  %v4655 = vxor.u32 %v4355, 2147483648
  %v4656 = vmul.f32 %v4655, 1.442695
  %v4657 = vpow.pop %v4656
  %v4658 = vadd.f32 %v4657, 1.0
  %v4659 = vrcp.pop %v4658
  %v4660 = vmul.f32 1.0, %v4659
  %v4661 = vmul.f32 %v4653, %v4021
  %v4662 = vmul.f32 %v4647, %v4654
  %v4663 = vadd.f32 %v4661, %v4662
  %v4664 = vtanh.pop %v4663
  %v4665 = vmul.f32 %v4660, %v4664
  %v4666 = vxor.u32 %v4638, 2147483648
  %v4667 = vmul.f32 %v4666, 1.442695
  %v4668 = vpow.pop %v4667
  %v4669 = vadd.f32 %v4668, 1.0
  %v4670 = vrcp.pop %v4669
  %v4671 = vmul.f32 1.0, %v4670
  %v4672 = vxor.u32 %v4639, 2147483648
  %v4673 = vmul.f32 %v4672, 1.442695
  %v4674 = vpow.pop %v4673
  %v4675 = vadd.f32 %v4674, 1.0
  %v4676 = vrcp.pop %v4675
  %v4677 = vmul.f32 1.0, %v4676
  %v4678 = vtanh.pop %v4640
  %v4679 = vxor.u32 %v4641, 2147483648
  %v4680 = vmul.f32 %v4679, 1.442695
  %v4681 = vpow.pop %v4680
  %v4682 = vadd.f32 %v4681, 1.0
  %v4683 = vrcp.pop %v4682
  %v4684 = vmul.f32 1.0, %v4683
  %v4685 = vmul.f32 %v4677, %v4050
  %v4686 = vmul.f32 %v4671, %v4678
  %v4687 = vadd.f32 %v4685, %v4686
  %v4688 = vtanh.pop %v4687
  %v4689 = vmul.f32 %v4684, %v4688
  %vm4690 = vcmp.gt.s32.totalorder %v847, 2
  %v4691 = vsel %vm4690, %v4689, 0.0
  %v4692 = vsel %vm4690, %v4687, 0.0
  %v4693 = vpack.c.bf16 %v4665, %v4665
  %v4695 = vrot.slane %v4693, 4
  %4697 = vst [vmem:[#allocation3 + $0x10] sm:$0xf0] %v4695
  %v4698 = vpack.c.bf16 %v4691, %v4691
  %4699 = vst [vmem:[#allocation4 + $0x8] sm:$0xf] %v4698
  %v4700 = vld [vmem:[#allocation2 + $0xc0] sm:$0xf]
  %v4701 = vld [vmem:[#allocation2 + $0xc8] sm:$0xf]
  %v4702 = vld [vmem:[#allocation2 + $0xd0] sm:$0xf]
  %v4703 = vld [vmem:[#allocation2 + $0xd8] sm:$0xf]
  %v4704 = vunpack.c.l.bf16 %v4700
  %v4705 = vunpack.c.l.bf16 %v4701
  %v4706 = vunpack.c.l.bf16 %v4702
  %v4707 = vunpack.c.l.bf16 %v4703
  %v4708 = vld [vmem:[%s4] sm:$0xff]
  %v4709 = vld [vmem:[%s4 + $0x8] sm:$0xff]
  %v4710 = vld [vmem:[%s4 + $0x10] sm:$0xff]
  %v4711 = vld [vmem:[%s4 + $0x18] sm:$0xff]
  %v4712 = vld [vmem:[%s4 + $0x20] sm:$0xff]
  %v4713 = vld [vmem:[%s4 + $0x28] sm:$0xff]
  %v4714 = vld [vmem:[%s4 + $0x30] sm:$0xff]
  %v4715 = vld [vmem:[%s4 + $0x38] sm:$0xff]
  %v4716 = vld [vmem:[%s4 + $0x40] sm:$0xff]
  %v4717 = vld [vmem:[%s4 + $0x48] sm:$0xff]
  %v4718 = vld [vmem:[%s4 + $0x50] sm:$0xff]
  %v4719 = vld [vmem:[%s4 + $0x58] sm:$0xff]
  %v4720 = vld [vmem:[%s4 + $0x60] sm:$0xff]
  %v4721 = vld [vmem:[%s4 + $0x68] sm:$0xff]
  %v4722 = vld [vmem:[%s4 + $0x70] sm:$0xff]
  %v4723 = vld [vmem:[%s4 + $0x78] sm:$0xff]
  %v4724 = vld [vmem:[%s4 + $0x80] sm:$0xff]
  %v4725 = vld [vmem:[%s4 + $0x88] sm:$0xff]
  %v4726 = vld [vmem:[%s4 + $0x90] sm:$0xff]
  %v4727 = vld [vmem:[%s4 + $0x98] sm:$0xff]
  %v4728 = vld [vmem:[%s4 + $0xa0] sm:$0xff]
  %v4729 = vld [vmem:[%s4 + $0xa8] sm:$0xff]
  %v4730 = vld [vmem:[%s4 + $0xb0] sm:$0xff]
  %v4731 = vld [vmem:[%s4 + $0xb8] sm:$0xff]
  %v4732 = vld [vmem:[%s4 + $0xc0] sm:$0xff]
  %v4733 = vld [vmem:[%s4 + $0xc8] sm:$0xff]
  %v4734 = vld [vmem:[%s4 + $0xd0] sm:$0xff]
  %v4735 = vld [vmem:[%s4 + $0xd8] sm:$0xff]
  %v4736 = vld [vmem:[%s4 + $0xe0] sm:$0xff]
  %v4737 = vld [vmem:[%s4 + $0xe8] sm:$0xff]
  %v4738 = vld [vmem:[%s4 + $0xf0] sm:$0xff]
  %v4739 = vld [vmem:[%s4 + $0xf8] sm:$0xff]
  %v4772 = vunpack.c.l.b16 %v4708
  %v4773 = vunpack.c.h.b16 %v4708
  %v4774 = vunpack.c.l.b16 %v4709
  %v4775 = vunpack.c.h.b16 %v4709
  %v4776 = vunpack.c.l.b16 %v4710
  %v4777 = vunpack.c.h.b16 %v4710
  %v4778 = vunpack.c.l.b16 %v4711
  %v4779 = vunpack.c.h.b16 %v4711
  %v4780 = vunpack.c.l.b16 %v4712
  %v4781 = vunpack.c.h.b16 %v4712
  %v4782 = vunpack.c.l.b16 %v4713
  %v4783 = vunpack.c.h.b16 %v4713
  %v4784 = vunpack.c.l.b16 %v4714
  %v4785 = vunpack.c.h.b16 %v4714
  %v4786 = vunpack.c.l.b16 %v4715
  %v4787 = vunpack.c.h.b16 %v4715
  %v4788 = vunpack.c.l.b16 %v4716
  %v4789 = vunpack.c.h.b16 %v4716
  %v4790 = vunpack.c.l.b16 %v4717
  %v4791 = vunpack.c.h.b16 %v4717
  %v4792 = vunpack.c.l.b16 %v4718
  %v4793 = vunpack.c.h.b16 %v4718
  %v4794 = vunpack.c.l.b16 %v4719
  %v4795 = vunpack.c.h.b16 %v4719
  %v4796 = vunpack.c.l.b16 %v4720
  %v4797 = vunpack.c.h.b16 %v4720
  %v4798 = vunpack.c.l.b16 %v4721
  %v4799 = vunpack.c.h.b16 %v4721
  %v4800 = vunpack.c.l.b16 %v4722
  %v4801 = vunpack.c.h.b16 %v4722
  %v4802 = vunpack.c.l.b16 %v4723
  %v4803 = vunpack.c.h.b16 %v4723
  %v4804 = vunpack.c.l.b16 %v4724
  %v4805 = vunpack.c.h.b16 %v4724
  %v4806 = vunpack.c.l.b16 %v4725
  %v4807 = vunpack.c.h.b16 %v4725
  %v4808 = vunpack.c.l.b16 %v4726
  %v4809 = vunpack.c.h.b16 %v4726
  %v4810 = vunpack.c.l.b16 %v4727
  %v4811 = vunpack.c.h.b16 %v4727
  %v4812 = vunpack.c.l.b16 %v4728
  %v4813 = vunpack.c.h.b16 %v4728
  %v4814 = vunpack.c.l.b16 %v4729
  %v4815 = vunpack.c.h.b16 %v4729
  %v4816 = vunpack.c.l.b16 %v4730
  %v4817 = vunpack.c.h.b16 %v4730
  %v4818 = vunpack.c.l.b16 %v4731
  %v4819 = vunpack.c.h.b16 %v4731
  %v4820 = vunpack.c.l.b16 %v4732
  %v4821 = vunpack.c.h.b16 %v4732
  %v4822 = vunpack.c.l.b16 %v4733
  %v4823 = vunpack.c.h.b16 %v4733
  %v4824 = vunpack.c.l.b16 %v4734
  %v4825 = vunpack.c.h.b16 %v4734
  %v4826 = vunpack.c.l.b16 %v4735
  %v4827 = vunpack.c.h.b16 %v4735
  %v4828 = vunpack.c.l.b16 %v4736
  %v4829 = vunpack.c.h.b16 %v4736
  %v4830 = vunpack.c.l.b16 %v4737
  %v4831 = vunpack.c.h.b16 %v4737
  %v4832 = vunpack.c.l.b16 %v4738
  %v4833 = vunpack.c.h.b16 %v4738
  %v4834 = vunpack.c.l.b16 %v4739
  %v4835 = vunpack.c.h.b16 %v4739
  %v4836 = vpack.c.b16 %v4776, %v4772
  %v4837 = vpack.c.b16 %v4777, %v4773
  %v4838 = vpack.c.b16 %v4778, %v4774
  %v4839 = vpack.c.b16 %v4779, %v4775
  %v4840 = vpack.c.b16 %v4784, %v4780
  %v4841 = vpack.c.b16 %v4785, %v4781
  %v4842 = vpack.c.b16 %v4786, %v4782
  %v4843 = vpack.c.b16 %v4787, %v4783
  %v4844 = vpack.c.b16 %v4792, %v4788
  %v4845 = vpack.c.b16 %v4793, %v4789
  %v4846 = vpack.c.b16 %v4794, %v4790
  %v4847 = vpack.c.b16 %v4795, %v4791
  %v4848 = vpack.c.b16 %v4800, %v4796
  %v4849 = vpack.c.b16 %v4801, %v4797
  %v4850 = vpack.c.b16 %v4802, %v4798
  %v4851 = vpack.c.b16 %v4803, %v4799
  %v4852 = vpack.c.b16 %v4808, %v4804
  %v4853 = vpack.c.b16 %v4809, %v4805
  %v4854 = vpack.c.b16 %v4810, %v4806
  %v4855 = vpack.c.b16 %v4811, %v4807
  %v4856 = vpack.c.b16 %v4816, %v4812
  %v4857 = vpack.c.b16 %v4817, %v4813
  %v4858 = vpack.c.b16 %v4818, %v4814
  %v4859 = vpack.c.b16 %v4819, %v4815
  %v4860 = vpack.c.b16 %v4824, %v4820
  %v4861 = vpack.c.b16 %v4825, %v4821
  %v4862 = vpack.c.b16 %v4826, %v4822
  %v4863 = vpack.c.b16 %v4827, %v4823
  %v4864 = vpack.c.b16 %v4832, %v4828
  %v4865 = vpack.c.b16 %v4833, %v4829
  %v4866 = vpack.c.b16 %v4834, %v4830
  %v4867 = vpack.c.b16 %v4835, %v4831
  %4900 = vmatprep.subr.bf16.mxu0 %v4837
  %4901 = vmatpush1.bf16.msra.mxu0 %v4836
  %4902 = vmatprep.subr.bf16.mxu0 %v4841
  %4903 = vmatpush1.bf16.msra.mxu0 %v4840
  %4904 = vmatprep.subr.bf16.mxu0 %v4845
  %4905 = vmatpush1.bf16.msra.mxu0 %v4844
  %4906 = vmatprep.subr.bf16.mxu0 %v4849
  %4907 = vmatpush1.bf16.msra.mxu0 %v4848
  %4908 = vmatprep.subr.bf16.mxu0 %v4853
  %4909 = vmatpush1.bf16.msra.mxu0 %v4852
  %4910 = vmatprep.subr.bf16.mxu0 %v4857
  %4911 = vmatpush1.bf16.msra.mxu0 %v4856
  %4912 = vmatprep.subr.bf16.mxu0 %v4861
  %4913 = vmatpush1.bf16.msra.mxu0 %v4860
  %4914 = vmatprep.subr.bf16.mxu0 %v4865
  %4915 = vmatpush1.bf16.msra.mxu0 %v4864
  %4916 = vmatprep.subr.bf16.mxu0 0
  %4917 = vmatpush1.bf16.msra.mxu0 0
  %4918 = vmatprep.subr.bf16.mxu0 0
  %4919 = vmatpush1.bf16.msra.mxu0 0
  %4920 = vmatprep.subr.bf16.mxu0 0
  %4921 = vmatpush1.bf16.msra.mxu0 0
  %4922 = vmatprep.subr.bf16.mxu0 0
  %4923 = vmatpush1.bf16.msra.mxu0 0
  %4924 = vmatprep.subr.bf16.mxu0 0
  %4925 = vmatpush1.bf16.msra.mxu0 0
  %4926 = vmatprep.subr.bf16.mxu0 0
  %4927 = vmatpush1.bf16.msra.mxu0 0
  %4928 = vmatprep.subr.bf16.mxu0 0
  %4929 = vmatpush1.bf16.msra.mxu0 0
  %4930 = vmatprep.subr.bf16.mxu0 0
  %4931 = vmatpush1.bf16.msra.mxu0 0
  %4932 = vmatprep.mubr.bf16.mxu0 0
  %4933 = vmatmul.mubr.bf16.gmra.mrb[0].mxu0 %v4693
  %v4934 = vpop.f32.mrb[0].mxu0
  %v4935 = vadd.f32 0.0, %v4934
  %v4936 = vpop.f32.mrb[0].mxu0
  %v4937 = vadd.f32 0.0, %v4936
  %v4938 = vpop.f32.mrb[0].mxu0
  %v4939 = vpop.f32.mrb[0].mxu0
  %4940 = vdwg.mxu0
  %4941 = vmatprep.subr.bf16.mxu0 %v4839
  %4942 = vmatpush1.bf16.msra.mxu0 %v4838
  %4943 = vmatprep.subr.bf16.mxu0 %v4843
  %4944 = vmatpush1.bf16.msra.mxu0 %v4842
  %4945 = vmatprep.subr.bf16.mxu0 %v4847
  %4946 = vmatpush1.bf16.msra.mxu0 %v4846
  %4947 = vmatprep.subr.bf16.mxu0 %v4851
  %4948 = vmatpush1.bf16.msra.mxu0 %v4850
  %4949 = vmatprep.subr.bf16.mxu0 %v4855
  %4950 = vmatpush1.bf16.msra.mxu0 %v4854
  %4951 = vmatprep.subr.bf16.mxu0 %v4859
  %4952 = vmatpush1.bf16.msra.mxu0 %v4858
  %4953 = vmatprep.subr.bf16.mxu0 %v4863
  %4954 = vmatpush1.bf16.msra.mxu0 %v4862
  %4955 = vmatprep.subr.bf16.mxu0 %v4867
  %4956 = vmatpush1.bf16.msra.mxu0 %v4866
  %4957 = vmatprep.subr.bf16.mxu0 0
  %4958 = vmatpush1.bf16.msra.mxu0 0
  %4959 = vmatprep.subr.bf16.mxu0 0
  %4960 = vmatpush1.bf16.msra.mxu0 0
  %4961 = vmatprep.subr.bf16.mxu0 0
  %4962 = vmatpush1.bf16.msra.mxu0 0
  %4963 = vmatprep.subr.bf16.mxu0 0
  %4964 = vmatpush1.bf16.msra.mxu0 0
  %4965 = vmatprep.subr.bf16.mxu0 0
  %4966 = vmatpush1.bf16.msra.mxu0 0
  %4967 = vmatprep.subr.bf16.mxu0 0
  %4968 = vmatpush1.bf16.msra.mxu0 0
  %4969 = vmatprep.subr.bf16.mxu0 0
  %4970 = vmatpush1.bf16.msra.mxu0 0
  %4971 = vmatprep.subr.bf16.mxu0 0
  %4972 = vmatpush1.bf16.msra.mxu0 0
  %4973 = vmatprep.mubr.bf16.mxu0 0
  %4974 = vmatmul.mubr.bf16.gmra.mrb[0].mxu0 %v4693
  %v4975 = vpop.f32.mrb[0].mxu0
  %v4976 = vadd.f32 0.0, %v4975
  %v4977 = vpop.f32.mrb[0].mxu0
  %v4978 = vadd.f32 0.0, %v4977
  %v4979 = vpop.f32.mrb[0].mxu0
  %v4980 = vpop.f32.mrb[0].mxu0
  %4981 = vdwg.mxu0
  %v4982 = vadd.f32 %v4704, %v4935
  %v4983 = vadd.f32 %v4705, %v4937
  %v4984 = vadd.f32 %v4706, %v4976
  %v4985 = vadd.f32 %v4707, %v4978
  %v4986 = vld [vmem:[#allocation2 + $0x20] sm:$0xf0]
  %v4987 = vld [vmem:[#allocation2 + $0x28] sm:$0xf0]
  %v4988 = vld [vmem:[#allocation2 + $0x30] sm:$0xf0]
  %v4989 = vld [vmem:[#allocation2 + $0x38] sm:$0xf0]
  %v4994 = vrot.slane %v4986, 4
  %v4995 = vrot.slane %v4987, 4
  %v4996 = vrot.slane %v4988, 4
  %v4997 = vrot.slane %v4989, 4
  %v5002 = vunpack.c.l.bf16 %v4994
  %v5003 = vunpack.c.l.bf16 %v4995
  %v5004 = vunpack.c.l.bf16 %v4996
  %v5005 = vunpack.c.l.bf16 %v4997
  %v5006 = vld [vmem:[%s5] sm:$0xff]
  %v5007 = vld [vmem:[%s5 + $0x8] sm:$0xff]
  %v5008 = vld [vmem:[%s5 + $0x10] sm:$0xff]
  %v5009 = vld [vmem:[%s5 + $0x18] sm:$0xff]
  %v5010 = vld [vmem:[%s5 + $0x20] sm:$0xff]
  %v5011 = vld [vmem:[%s5 + $0x28] sm:$0xff]
  %v5012 = vld [vmem:[%s5 + $0x30] sm:$0xff]
  %v5013 = vld [vmem:[%s5 + $0x38] sm:$0xff]
  %v5014 = vld [vmem:[%s5 + $0x40] sm:$0xff]
  %v5015 = vld [vmem:[%s5 + $0x48] sm:$0xff]
  %v5016 = vld [vmem:[%s5 + $0x50] sm:$0xff]
  %v5017 = vld [vmem:[%s5 + $0x58] sm:$0xff]
  %v5018 = vld [vmem:[%s5 + $0x60] sm:$0xff]
  %v5019 = vld [vmem:[%s5 + $0x68] sm:$0xff]
  %v5020 = vld [vmem:[%s5 + $0x70] sm:$0xff]
  %v5021 = vld [vmem:[%s5 + $0x78] sm:$0xff]
  %v5022 = vld [vmem:[%s5 + $0x80] sm:$0xff]
  %v5023 = vld [vmem:[%s5 + $0x88] sm:$0xff]
  %v5024 = vld [vmem:[%s5 + $0x90] sm:$0xff]
  %v5025 = vld [vmem:[%s5 + $0x98] sm:$0xff]
  %v5026 = vld [vmem:[%s5 + $0xa0] sm:$0xff]
  %v5027 = vld [vmem:[%s5 + $0xa8] sm:$0xff]
  %v5028 = vld [vmem:[%s5 + $0xb0] sm:$0xff]
  %v5029 = vld [vmem:[%s5 + $0xb8] sm:$0xff]
  %v5030 = vld [vmem:[%s5 + $0xc0] sm:$0xff]
  %v5031 = vld [vmem:[%s5 + $0xc8] sm:$0xff]
  %v5032 = vld [vmem:[%s5 + $0xd0] sm:$0xff]
  %v5033 = vld [vmem:[%s5 + $0xd8] sm:$0xff]
  %v5034 = vld [vmem:[%s5 + $0xe0] sm:$0xff]
  %v5035 = vld [vmem:[%s5 + $0xe8] sm:$0xff]
  %v5036 = vld [vmem:[%s5 + $0xf0] sm:$0xff]
  %v5037 = vld [vmem:[%s5 + $0xf8] sm:$0xff]
  %v5070 = vunpack.c.l.b16 %v5006
  %v5071 = vunpack.c.h.b16 %v5006
  %v5072 = vunpack.c.l.b16 %v5007
  %v5073 = vunpack.c.h.b16 %v5007
  %v5074 = vunpack.c.l.b16 %v5008
  %v5075 = vunpack.c.h.b16 %v5008
  %v5076 = vunpack.c.l.b16 %v5009
  %v5077 = vunpack.c.h.b16 %v5009
  %v5078 = vunpack.c.l.b16 %v5010
  %v5079 = vunpack.c.h.b16 %v5010
  %v5080 = vunpack.c.l.b16 %v5011
  %v5081 = vunpack.c.h.b16 %v5011
  %v5082 = vunpack.c.l.b16 %v5012
  %v5083 = vunpack.c.h.b16 %v5012
  %v5084 = vunpack.c.l.b16 %v5013
  %v5085 = vunpack.c.h.b16 %v5013
  %v5086 = vunpack.c.l.b16 %v5014
  %v5087 = vunpack.c.h.b16 %v5014
  %v5088 = vunpack.c.l.b16 %v5015
  %v5089 = vunpack.c.h.b16 %v5015
  %v5090 = vunpack.c.l.b16 %v5016
  %v5091 = vunpack.c.h.b16 %v5016
  %v5092 = vunpack.c.l.b16 %v5017
  %v5093 = vunpack.c.h.b16 %v5017
  %v5094 = vunpack.c.l.b16 %v5018
  %v5095 = vunpack.c.h.b16 %v5018
  %v5096 = vunpack.c.l.b16 %v5019
  %v5097 = vunpack.c.h.b16 %v5019
  %v5098 = vunpack.c.l.b16 %v5020
  %v5099 = vunpack.c.h.b16 %v5020
  %v5100 = vunpack.c.l.b16 %v5021
  %v5101 = vunpack.c.h.b16 %v5021
  %v5102 = vunpack.c.l.b16 %v5022
  %v5103 = vunpack.c.h.b16 %v5022
  %v5104 = vunpack.c.l.b16 %v5023
  %v5105 = vunpack.c.h.b16 %v5023
  %v5106 = vunpack.c.l.b16 %v5024
  %v5107 = vunpack.c.h.b16 %v5024
  %v5108 = vunpack.c.l.b16 %v5025
  %v5109 = vunpack.c.h.b16 %v5025
  %v5110 = vunpack.c.l.b16 %v5026
  %v5111 = vunpack.c.h.b16 %v5026
  %v5112 = vunpack.c.l.b16 %v5027
  %v5113 = vunpack.c.h.b16 %v5027
  %v5114 = vunpack.c.l.b16 %v5028
  %v5115 = vunpack.c.h.b16 %v5028
  %v5116 = vunpack.c.l.b16 %v5029
  %v5117 = vunpack.c.h.b16 %v5029
  %v5118 = vunpack.c.l.b16 %v5030
  %v5119 = vunpack.c.h.b16 %v5030
  %v5120 = vunpack.c.l.b16 %v5031
  %v5121 = vunpack.c.h.b16 %v5031
  %v5122 = vunpack.c.l.b16 %v5032
  %v5123 = vunpack.c.h.b16 %v5032
  %v5124 = vunpack.c.l.b16 %v5033
  %v5125 = vunpack.c.h.b16 %v5033
  %v5126 = vunpack.c.l.b16 %v5034
  %v5127 = vunpack.c.h.b16 %v5034
  %v5128 = vunpack.c.l.b16 %v5035
  %v5129 = vunpack.c.h.b16 %v5035
  %v5130 = vunpack.c.l.b16 %v5036
  %v5131 = vunpack.c.h.b16 %v5036
  %v5132 = vunpack.c.l.b16 %v5037
  %v5133 = vunpack.c.h.b16 %v5037
  %v5134 = vpack.c.b16 %v5074, %v5070
  %v5135 = vpack.c.b16 %v5075, %v5071
  %v5136 = vpack.c.b16 %v5076, %v5072
  %v5137 = vpack.c.b16 %v5077, %v5073
  %v5138 = vpack.c.b16 %v5082, %v5078
  %v5139 = vpack.c.b16 %v5083, %v5079
  %v5140 = vpack.c.b16 %v5084, %v5080
  %v5141 = vpack.c.b16 %v5085, %v5081
  %v5142 = vpack.c.b16 %v5090, %v5086
  %v5143 = vpack.c.b16 %v5091, %v5087
  %v5144 = vpack.c.b16 %v5092, %v5088
  %v5145 = vpack.c.b16 %v5093, %v5089
  %v5146 = vpack.c.b16 %v5098, %v5094
  %v5147 = vpack.c.b16 %v5099, %v5095
  %v5148 = vpack.c.b16 %v5100, %v5096
  %v5149 = vpack.c.b16 %v5101, %v5097
  %v5150 = vpack.c.b16 %v5106, %v5102
  %v5151 = vpack.c.b16 %v5107, %v5103
  %v5152 = vpack.c.b16 %v5108, %v5104
  %v5153 = vpack.c.b16 %v5109, %v5105
  %v5154 = vpack.c.b16 %v5114, %v5110
  %v5155 = vpack.c.b16 %v5115, %v5111
  %v5156 = vpack.c.b16 %v5116, %v5112
  %v5157 = vpack.c.b16 %v5117, %v5113
  %v5158 = vpack.c.b16 %v5122, %v5118
  %v5159 = vpack.c.b16 %v5123, %v5119
  %v5160 = vpack.c.b16 %v5124, %v5120
  %v5161 = vpack.c.b16 %v5125, %v5121
  %v5162 = vpack.c.b16 %v5130, %v5126
  %v5163 = vpack.c.b16 %v5131, %v5127
  %v5164 = vpack.c.b16 %v5132, %v5128
  %v5165 = vpack.c.b16 %v5133, %v5129
  %5198 = vmatprep.subr.bf16.mxu0 %v5135
  %5199 = vmatpush1.bf16.msra.mxu0 %v5134
  %5200 = vmatprep.subr.bf16.mxu0 %v5139
  %5201 = vmatpush1.bf16.msra.mxu0 %v5138
  %5202 = vmatprep.subr.bf16.mxu0 %v5143
  %5203 = vmatpush1.bf16.msra.mxu0 %v5142
  %5204 = vmatprep.subr.bf16.mxu0 %v5147
  %5205 = vmatpush1.bf16.msra.mxu0 %v5146
  %5206 = vmatprep.subr.bf16.mxu0 %v5151
  %5207 = vmatpush1.bf16.msra.mxu0 %v5150
  %5208 = vmatprep.subr.bf16.mxu0 %v5155
  %5209 = vmatpush1.bf16.msra.mxu0 %v5154
  %5210 = vmatprep.subr.bf16.mxu0 %v5159
  %5211 = vmatpush1.bf16.msra.mxu0 %v5158
  %5212 = vmatprep.subr.bf16.mxu0 %v5163
  %5213 = vmatpush1.bf16.msra.mxu0 %v5162
  %5214 = vmatprep.subr.bf16.mxu0 0
  %5215 = vmatpush1.bf16.msra.mxu0 0
  %5216 = vmatprep.subr.bf16.mxu0 0
  %5217 = vmatpush1.bf16.msra.mxu0 0
  %5218 = vmatprep.subr.bf16.mxu0 0
  %5219 = vmatpush1.bf16.msra.mxu0 0
  %5220 = vmatprep.subr.bf16.mxu0 0
  %5221 = vmatpush1.bf16.msra.mxu0 0
  %5222 = vmatprep.subr.bf16.mxu0 0
  %5223 = vmatpush1.bf16.msra.mxu0 0
  %5224 = vmatprep.subr.bf16.mxu0 0
  %5225 = vmatpush1.bf16.msra.mxu0 0
  %5226 = vmatprep.subr.bf16.mxu0 0
  %5227 = vmatpush1.bf16.msra.mxu0 0
  %5228 = vmatprep.subr.bf16.mxu0 0
  %5229 = vmatpush1.bf16.msra.mxu0 0
  %5230 = vmatprep.mubr.bf16.mxu0 0
  %5231 = vmatmul.mubr.bf16.gmra.mrb[0].mxu0 %v4698
  %v5232 = vpop.f32.mrb[0].mxu0
  %v5233 = vadd.f32 0.0, %v5232
  %v5234 = vpop.f32.mrb[0].mxu0
  %v5235 = vadd.f32 0.0, %v5234
  %v5236 = vpop.f32.mrb[0].mxu0
  %v5237 = vpop.f32.mrb[0].mxu0
  %5238 = vdwg.mxu0
  %5239 = vmatprep.subr.bf16.mxu0 %v5137
  %5240 = vmatpush1.bf16.msra.mxu0 %v5136
  %5241 = vmatprep.subr.bf16.mxu0 %v5141
  %5242 = vmatpush1.bf16.msra.mxu0 %v5140
  %5243 = vmatprep.subr.bf16.mxu0 %v5145
  %5244 = vmatpush1.bf16.msra.mxu0 %v5144
  %5245 = vmatprep.subr.bf16.mxu0 %v5149
  %5246 = vmatpush1.bf16.msra.mxu0 %v5148
  %5247 = vmatprep.subr.bf16.mxu0 %v5153
  %5248 = vmatpush1.bf16.msra.mxu0 %v5152
  %5249 = vmatprep.subr.bf16.mxu0 %v5157
  %5250 = vmatpush1.bf16.msra.mxu0 %v5156
  %5251 = vmatprep.subr.bf16.mxu0 %v5161
  %5252 = vmatpush1.bf16.msra.mxu0 %v5160
  %5253 = vmatprep.subr.bf16.mxu0 %v5165
  %5254 = vmatpush1.bf16.msra.mxu0 %v5164
  %5255 = vmatprep.subr.bf16.mxu0 0
  %5256 = vmatpush1.bf16.msra.mxu0 0
  %5257 = vmatprep.subr.bf16.mxu0 0
  %5258 = vmatpush1.bf16.msra.mxu0 0
  %5259 = vmatprep.subr.bf16.mxu0 0
  %5260 = vmatpush1.bf16.msra.mxu0 0
  %5261 = vmatprep.subr.bf16.mxu0 0
  %5262 = vmatpush1.bf16.msra.mxu0 0
  %5263 = vmatprep.subr.bf16.mxu0 0
  %5264 = vmatpush1.bf16.msra.mxu0 0
  %5265 = vmatprep.subr.bf16.mxu0 0
  %5266 = vmatpush1.bf16.msra.mxu0 0
  %5267 = vmatprep.subr.bf16.mxu0 0
  %5268 = vmatpush1.bf16.msra.mxu0 0
  %5269 = vmatprep.subr.bf16.mxu0 0
  %5270 = vmatpush1.bf16.msra.mxu0 0
  %5271 = vmatprep.mubr.bf16.mxu0 0
  %5272 = vmatmul.mubr.bf16.gmra.mrb[0].mxu0 %v4698
  %v5273 = vpop.f32.mrb[0].mxu0
  %v5274 = vadd.f32 0.0, %v5273
  %v5275 = vpop.f32.mrb[0].mxu0
  %v5276 = vadd.f32 0.0, %v5275
  %v5277 = vpop.f32.mrb[0].mxu0
  %v5278 = vpop.f32.mrb[0].mxu0
  %5279 = vdwg.mxu0
  %v5280 = vadd.f32 %v5002, %v5233
  %v5281 = vadd.f32 %v5003, %v5235
  %v5282 = vadd.f32 %v5004, %v5274
  %v5283 = vadd.f32 %v5005, %v5276
  %v5284 = vxor.u32 %v4982, 2147483648
  %v5285 = vmul.f32 %v5284, 1.442695
  %v5286 = vpow.pop %v5285
  %v5287 = vadd.f32 %v5286, 1.0
  %v5288 = vrcp.pop %v5287
  %v5289 = vmul.f32 1.0, %v5288
  %v5290 = vxor.u32 %v4983, 2147483648
  %v5291 = vmul.f32 %v5290, 1.442695
  %v5292 = vpow.pop %v5291
  %v5293 = vadd.f32 %v5292, 1.0
  %v5294 = vrcp.pop %v5293
  %v5295 = vmul.f32 1.0, %v5294
  %v5296 = vtanh.pop %v4984
  %v5297 = vxor.u32 %v4985, 2147483648
  %v5298 = vmul.f32 %v5297, 1.442695
  %v5299 = vpow.pop %v5298
  %v5300 = vadd.f32 %v5299, 1.0
  %v5301 = vrcp.pop %v5300
  %v5302 = vmul.f32 1.0, %v5301
  %v5303 = vmul.f32 %v5295, %v4663
  %v5304 = vmul.f32 %v5289, %v5296
  %v5305 = vadd.f32 %v5303, %v5304
  %v5306 = vtanh.pop %v5305
  %v5307 = vmul.f32 %v5302, %v5306
  %v5308 = vxor.u32 %v5280, 2147483648
  %v5309 = vmul.f32 %v5308, 1.442695
  %v5310 = vpow.pop %v5309
  %v5311 = vadd.f32 %v5310, 1.0
  %v5312 = vrcp.pop %v5311
  %v5313 = vmul.f32 1.0, %v5312
  %v5314 = vxor.u32 %v5281, 2147483648
  %v5315 = vmul.f32 %v5314, 1.442695
  %v5316 = vpow.pop %v5315
  %v5317 = vadd.f32 %v5316, 1.0
  %v5318 = vrcp.pop %v5317
  %v5319 = vmul.f32 1.0, %v5318
  %v5320 = vtanh.pop %v5282
  %v5321 = vxor.u32 %v5283, 2147483648
  %v5322 = vmul.f32 %v5321, 1.442695
  %v5323 = vpow.pop %v5322
  %v5324 = vadd.f32 %v5323, 1.0
  %v5325 = vrcp.pop %v5324
  %v5326 = vmul.f32 1.0, %v5325
  %v5327 = vmul.f32 %v5319, %v4692
  %v5328 = vmul.f32 %v5313, %v5320
  %v5329 = vadd.f32 %v5327, %v5328
  %v5330 = vtanh.pop %v5329
  %v5331 = vmul.f32 %v5326, %v5330
  %vm5332 = vcmp.gt.s32.totalorder %v847, 1
  %v5333 = vsel %vm5332, %v5331, 0.0
  %v5334 = vsel %vm5332, %v5329, 0.0
  %v5335 = vpack.c.bf16 %v5307, %v5307
  %5336 = vst [vmem:[#allocation3 + $0x18] sm:$0xf] %v5335
  %v5337 = vpack.c.bf16 %v5333, %v5333
  %v5339 = vrot.slane %v5337, 4
  %5341 = vst [vmem:[#allocation4] sm:$0xf0] %v5339
  %v5342 = vld [vmem:[#allocation2 + $0xc0] sm:$0xf0]
  %v5343 = vld [vmem:[#allocation2 + $0xc8] sm:$0xf0]
  %v5344 = vld [vmem:[#allocation2 + $0xd0] sm:$0xf0]
  %v5345 = vld [vmem:[#allocation2 + $0xd8] sm:$0xf0]
  %v5350 = vrot.slane %v5342, 4
  %v5351 = vrot.slane %v5343, 4
  %v5352 = vrot.slane %v5344, 4
  %v5353 = vrot.slane %v5345, 4
  %v5358 = vunpack.c.l.bf16 %v5350
  %v5359 = vunpack.c.l.bf16 %v5351
  %v5360 = vunpack.c.l.bf16 %v5352
  %v5361 = vunpack.c.l.bf16 %v5353
  %v5362 = vld [vmem:[%s4] sm:$0xff]
  %v5363 = vld [vmem:[%s4 + $0x8] sm:$0xff]
  %v5364 = vld [vmem:[%s4 + $0x10] sm:$0xff]
  %v5365 = vld [vmem:[%s4 + $0x18] sm:$0xff]
  %v5366 = vld [vmem:[%s4 + $0x20] sm:$0xff]
  %v5367 = vld [vmem:[%s4 + $0x28] sm:$0xff]
  %v5368 = vld [vmem:[%s4 + $0x30] sm:$0xff]
  %v5369 = vld [vmem:[%s4 + $0x38] sm:$0xff]
  %v5370 = vld [vmem:[%s4 + $0x40] sm:$0xff]
  %v5371 = vld [vmem:[%s4 + $0x48] sm:$0xff]
  %v5372 = vld [vmem:[%s4 + $0x50] sm:$0xff]
  %v5373 = vld [vmem:[%s4 + $0x58] sm:$0xff]
  %v5374 = vld [vmem:[%s4 + $0x60] sm:$0xff]
  %v5375 = vld [vmem:[%s4 + $0x68] sm:$0xff]
  %v5376 = vld [vmem:[%s4 + $0x70] sm:$0xff]
  %v5377 = vld [vmem:[%s4 + $0x78] sm:$0xff]
  %v5378 = vld [vmem:[%s4 + $0x80] sm:$0xff]
  %v5379 = vld [vmem:[%s4 + $0x88] sm:$0xff]
  %v5380 = vld [vmem:[%s4 + $0x90] sm:$0xff]
  %v5381 = vld [vmem:[%s4 + $0x98] sm:$0xff]
  %v5382 = vld [vmem:[%s4 + $0xa0] sm:$0xff]
  %v5383 = vld [vmem:[%s4 + $0xa8] sm:$0xff]
  %v5384 = vld [vmem:[%s4 + $0xb0] sm:$0xff]
  %v5385 = vld [vmem:[%s4 + $0xb8] sm:$0xff]
  %v5386 = vld [vmem:[%s4 + $0xc0] sm:$0xff]
  %v5387 = vld [vmem:[%s4 + $0xc8] sm:$0xff]
  %v5388 = vld [vmem:[%s4 + $0xd0] sm:$0xff]
  %v5389 = vld [vmem:[%s4 + $0xd8] sm:$0xff]
  %v5390 = vld [vmem:[%s4 + $0xe0] sm:$0xff]
  %v5391 = vld [vmem:[%s4 + $0xe8] sm:$0xff]
  %v5392 = vld [vmem:[%s4 + $0xf0] sm:$0xff]
  %v5393 = vld [vmem:[%s4 + $0xf8] sm:$0xff]
  %v5426 = vunpack.c.l.b16 %v5362
  %v5427 = vunpack.c.h.b16 %v5362
  %v5428 = vunpack.c.l.b16 %v5363
  %v5429 = vunpack.c.h.b16 %v5363
  %v5430 = vunpack.c.l.b16 %v5364
  %v5431 = vunpack.c.h.b16 %v5364
  %v5432 = vunpack.c.l.b16 %v5365
  %v5433 = vunpack.c.h.b16 %v5365
  %v5434 = vunpack.c.l.b16 %v5366
  %v5435 = vunpack.c.h.b16 %v5366
  %v5436 = vunpack.c.l.b16 %v5367
  %v5437 = vunpack.c.h.b16 %v5367
  %v5438 = vunpack.c.l.b16 %v5368
  %v5439 = vunpack.c.h.b16 %v5368
  %v5440 = vunpack.c.l.b16 %v5369
  %v5441 = vunpack.c.h.b16 %v5369
  %v5442 = vunpack.c.l.b16 %v5370
  %v5443 = vunpack.c.h.b16 %v5370
  %v5444 = vunpack.c.l.b16 %v5371
  %v5445 = vunpack.c.h.b16 %v5371
  %v5446 = vunpack.c.l.b16 %v5372
  %v5447 = vunpack.c.h.b16 %v5372
  %v5448 = vunpack.c.l.b16 %v5373
  %v5449 = vunpack.c.h.b16 %v5373
  %v5450 = vunpack.c.l.b16 %v5374
  %v5451 = vunpack.c.h.b16 %v5374
  %v5452 = vunpack.c.l.b16 %v5375
  %v5453 = vunpack.c.h.b16 %v5375
  %v5454 = vunpack.c.l.b16 %v5376
  %v5455 = vunpack.c.h.b16 %v5376
  %v5456 = vunpack.c.l.b16 %v5377
  %v5457 = vunpack.c.h.b16 %v5377
  %v5458 = vunpack.c.l.b16 %v5378
  %v5459 = vunpack.c.h.b16 %v5378
  %v5460 = vunpack.c.l.b16 %v5379
  %v5461 = vunpack.c.h.b16 %v5379
  %v5462 = vunpack.c.l.b16 %v5380
  %v5463 = vunpack.c.h.b16 %v5380
  %v5464 = vunpack.c.l.b16 %v5381
  %v5465 = vunpack.c.h.b16 %v5381
  %v5466 = vunpack.c.l.b16 %v5382
  %v5467 = vunpack.c.h.b16 %v5382
  %v5468 = vunpack.c.l.b16 %v5383
  %v5469 = vunpack.c.h.b16 %v5383
  %v5470 = vunpack.c.l.b16 %v5384
  %v5471 = vunpack.c.h.b16 %v5384
  %v5472 = vunpack.c.l.b16 %v5385
  %v5473 = vunpack.c.h.b16 %v5385
  %v5474 = vunpack.c.l.b16 %v5386
  %v5475 = vunpack.c.h.b16 %v5386
  %v5476 = vunpack.c.l.b16 %v5387
  %v5477 = vunpack.c.h.b16 %v5387
  %v5478 = vunpack.c.l.b16 %v5388
  %v5479 = vunpack.c.h.b16 %v5388
  %v5480 = vunpack.c.l.b16 %v5389
  %v5481 = vunpack.c.h.b16 %v5389
  %v5482 = vunpack.c.l.b16 %v5390
  %v5483 = vunpack.c.h.b16 %v5390
  %v5484 = vunpack.c.l.b16 %v5391
  %v5485 = vunpack.c.h.b16 %v5391
  %v5486 = vunpack.c.l.b16 %v5392
  %v5487 = vunpack.c.h.b16 %v5392
  %v5488 = vunpack.c.l.b16 %v5393
  %v5489 = vunpack.c.h.b16 %v5393
  %v5490 = vpack.c.b16 %v5430, %v5426
  %v5491 = vpack.c.b16 %v5431, %v5427
  %v5492 = vpack.c.b16 %v5432, %v5428
  %v5493 = vpack.c.b16 %v5433, %v5429
  %v5494 = vpack.c.b16 %v5438, %v5434
  %v5495 = vpack.c.b16 %v5439, %v5435
  %v5496 = vpack.c.b16 %v5440, %v5436
  %v5497 = vpack.c.b16 %v5441, %v5437
  %v5498 = vpack.c.b16 %v5446, %v5442
  %v5499 = vpack.c.b16 %v5447, %v5443
  %v5500 = vpack.c.b16 %v5448, %v5444
  %v5501 = vpack.c.b16 %v5449, %v5445
  %v5502 = vpack.c.b16 %v5454, %v5450
  %v5503 = vpack.c.b16 %v5455, %v5451
  %v5504 = vpack.c.b16 %v5456, %v5452
  %v5505 = vpack.c.b16 %v5457, %v5453
  %v5506 = vpack.c.b16 %v5462, %v5458
  %v5507 = vpack.c.b16 %v5463, %v5459
  %v5508 = vpack.c.b16 %v5464, %v5460
  %v5509 = vpack.c.b16 %v5465, %v5461
  %v5510 = vpack.c.b16 %v5470, %v5466
  %v5511 = vpack.c.b16 %v5471, %v5467
  %v5512 = vpack.c.b16 %v5472, %v5468
  %v5513 = vpack.c.b16 %v5473, %v5469
  %v5514 = vpack.c.b16 %v5478, %v5474
  %v5515 = vpack.c.b16 %v5479, %v5475
  %v5516 = vpack.c.b16 %v5480, %v5476
  %v5517 = vpack.c.b16 %v5481, %v5477
  %v5518 = vpack.c.b16 %v5486, %v5482
  %v5519 = vpack.c.b16 %v5487, %v5483
  %v5520 = vpack.c.b16 %v5488, %v5484
  %v5521 = vpack.c.b16 %v5489, %v5485
  %5554 = vmatprep.subr.bf16.mxu0 %v5491
  %5555 = vmatpush1.bf16.msra.mxu0 %v5490
  %5556 = vmatprep.subr.bf16.mxu0 %v5495
  %5557 = vmatpush1.bf16.msra.mxu0 %v5494
  %5558 = vmatprep.subr.bf16.mxu0 %v5499
  %5559 = vmatpush1.bf16.msra.mxu0 %v5498
  %5560 = vmatprep.subr.bf16.mxu0 %v5503
  %5561 = vmatpush1.bf16.msra.mxu0 %v5502
  %5562 = vmatprep.subr.bf16.mxu0 %v5507
  %5563 = vmatpush1.bf16.msra.mxu0 %v5506
  %5564 = vmatprep.subr.bf16.mxu0 %v5511
  %5565 = vmatpush1.bf16.msra.mxu0 %v5510
  %5566 = vmatprep.subr.bf16.mxu0 %v5515
  %5567 = vmatpush1.bf16.msra.mxu0 %v5514
  %5568 = vmatprep.subr.bf16.mxu0 %v5519
  %5569 = vmatpush1.bf16.msra.mxu0 %v5518
  %5570 = vmatprep.subr.bf16.mxu0 0
  %5571 = vmatpush1.bf16.msra.mxu0 0
  %5572 = vmatprep.subr.bf16.mxu0 0
  %5573 = vmatpush1.bf16.msra.mxu0 0
  %5574 = vmatprep.subr.bf16.mxu0 0
  %5575 = vmatpush1.bf16.msra.mxu0 0
  %5576 = vmatprep.subr.bf16.mxu0 0
  %5577 = vmatpush1.bf16.msra.mxu0 0
  %5578 = vmatprep.subr.bf16.mxu0 0
  %5579 = vmatpush1.bf16.msra.mxu0 0
  %5580 = vmatprep.subr.bf16.mxu0 0
  %5581 = vmatpush1.bf16.msra.mxu0 0
  %5582 = vmatprep.subr.bf16.mxu0 0
  %5583 = vmatpush1.bf16.msra.mxu0 0
  %5584 = vmatprep.subr.bf16.mxu0 0
  %5585 = vmatpush1.bf16.msra.mxu0 0
  %5586 = vmatprep.mubr.bf16.mxu0 0
  %5587 = vmatmul.mubr.bf16.gmra.mrb[0].mxu0 %v5335
  %v5588 = vpop.f32.mrb[0].mxu0
  %v5589 = vadd.f32 0.0, %v5588
  %v5590 = vpop.f32.mrb[0].mxu0
  %v5591 = vadd.f32 0.0, %v5590
  %v5592 = vpop.f32.mrb[0].mxu0
  %v5593 = vpop.f32.mrb[0].mxu0
  %5594 = vdwg.mxu0
  %5595 = vmatprep.subr.bf16.mxu0 %v5493
  %5596 = vmatpush1.bf16.msra.mxu0 %v5492
  %5597 = vmatprep.subr.bf16.mxu0 %v5497
  %5598 = vmatpush1.bf16.msra.mxu0 %v5496
  %5599 = vmatprep.subr.bf16.mxu0 %v5501
  %5600 = vmatpush1.bf16.msra.mxu0 %v5500
  %5601 = vmatprep.subr.bf16.mxu0 %v5505
  %5602 = vmatpush1.bf16.msra.mxu0 %v5504
  %5603 = vmatprep.subr.bf16.mxu0 %v5509
  %5604 = vmatpush1.bf16.msra.mxu0 %v5508
  %5605 = vmatprep.subr.bf16.mxu0 %v5513
  %5606 = vmatpush1.bf16.msra.mxu0 %v5512
  %5607 = vmatprep.subr.bf16.mxu0 %v5517
  %5608 = vmatpush1.bf16.msra.mxu0 %v5516
  %5609 = vmatprep.subr.bf16.mxu0 %v5521
  %5610 = vmatpush1.bf16.msra.mxu0 %v5520
  %5611 = vmatprep.subr.bf16.mxu0 0
  %5612 = vmatpush1.bf16.msra.mxu0 0
  %5613 = vmatprep.subr.bf16.mxu0 0
  %5614 = vmatpush1.bf16.msra.mxu0 0
  %5615 = vmatprep.subr.bf16.mxu0 0
  %5616 = vmatpush1.bf16.msra.mxu0 0
  %5617 = vmatprep.subr.bf16.mxu0 0
  %5618 = vmatpush1.bf16.msra.mxu0 0
  %5619 = vmatprep.subr.bf16.mxu0 0
  %5620 = vmatpush1.bf16.msra.mxu0 0
  %5621 = vmatprep.subr.bf16.mxu0 0
  %5622 = vmatpush1.bf16.msra.mxu0 0
  %5623 = vmatprep.subr.bf16.mxu0 0
  %5624 = vmatpush1.bf16.msra.mxu0 0
  %5625 = vmatprep.subr.bf16.mxu0 0
  %5626 = vmatpush1.bf16.msra.mxu0 0
  %5627 = vmatprep.mubr.bf16.mxu0 0
  %5628 = vmatmul.mubr.bf16.gmra.mrb[0].mxu0 %v5335
  %v5629 = vpop.f32.mrb[0].mxu0
  %v5630 = vadd.f32 0.0, %v5629
  %v5631 = vpop.f32.mrb[0].mxu0
  %v5632 = vadd.f32 0.0, %v5631
  %v5633 = vpop.f32.mrb[0].mxu0
  %v5634 = vpop.f32.mrb[0].mxu0
  %5635 = vdwg.mxu0
  %v5636 = vadd.f32 %v5358, %v5589
  %v5637 = vadd.f32 %v5359, %v5591
  %v5638 = vadd.f32 %v5360, %v5630
  %v5639 = vadd.f32 %v5361, %v5632
  %v5640 = vld [vmem:[#allocation2 + $0x20] sm:$0xf]
  %v5641 = vld [vmem:[#allocation2 + $0x28] sm:$0xf]
  %v5642 = vld [vmem:[#allocation2 + $0x30] sm:$0xf]
  %v5643 = vld [vmem:[#allocation2 + $0x38] sm:$0xf]
  %v5644 = vunpack.c.l.bf16 %v5640
  %v5645 = vunpack.c.l.bf16 %v5641
  %v5646 = vunpack.c.l.bf16 %v5642
  %v5647 = vunpack.c.l.bf16 %v5643
  %v5648 = vld [vmem:[%s5] sm:$0xff]
  %v5649 = vld [vmem:[%s5 + $0x8] sm:$0xff]
  %v5650 = vld [vmem:[%s5 + $0x10] sm:$0xff]
  %v5651 = vld [vmem:[%s5 + $0x18] sm:$0xff]
  %v5652 = vld [vmem:[%s5 + $0x20] sm:$0xff]
  %v5653 = vld [vmem:[%s5 + $0x28] sm:$0xff]
  %v5654 = vld [vmem:[%s5 + $0x30] sm:$0xff]
  %v5655 = vld [vmem:[%s5 + $0x38] sm:$0xff]
  %v5656 = vld [vmem:[%s5 + $0x40] sm:$0xff]
  %v5657 = vld [vmem:[%s5 + $0x48] sm:$0xff]
  %v5658 = vld [vmem:[%s5 + $0x50] sm:$0xff]
  %v5659 = vld [vmem:[%s5 + $0x58] sm:$0xff]
  %v5660 = vld [vmem:[%s5 + $0x60] sm:$0xff]
  %v5661 = vld [vmem:[%s5 + $0x68] sm:$0xff]
  %v5662 = vld [vmem:[%s5 + $0x70] sm:$0xff]
  %v5663 = vld [vmem:[%s5 + $0x78] sm:$0xff]
  %v5664 = vld [vmem:[%s5 + $0x80] sm:$0xff]
  %v5665 = vld [vmem:[%s5 + $0x88] sm:$0xff]
  %v5666 = vld [vmem:[%s5 + $0x90] sm:$0xff]
  %v5667 = vld [vmem:[%s5 + $0x98] sm:$0xff]
  %v5668 = vld [vmem:[%s5 + $0xa0] sm:$0xff]
  %v5669 = vld [vmem:[%s5 + $0xa8] sm:$0xff]
  %v5670 = vld [vmem:[%s5 + $0xb0] sm:$0xff]
  %v5671 = vld [vmem:[%s5 + $0xb8] sm:$0xff]
  %v5672 = vld [vmem:[%s5 + $0xc0] sm:$0xff]
  %v5673 = vld [vmem:[%s5 + $0xc8] sm:$0xff]
  %v5674 = vld [vmem:[%s5 + $0xd0] sm:$0xff]
  %v5675 = vld [vmem:[%s5 + $0xd8] sm:$0xff]
  %v5676 = vld [vmem:[%s5 + $0xe0] sm:$0xff]
  %v5677 = vld [vmem:[%s5 + $0xe8] sm:$0xff]
  %v5678 = vld [vmem:[%s5 + $0xf0] sm:$0xff]
  %v5679 = vld [vmem:[%s5 + $0xf8] sm:$0xff]
  %v5712 = vunpack.c.l.b16 %v5648
  %v5713 = vunpack.c.h.b16 %v5648
  %v5714 = vunpack.c.l.b16 %v5649
  %v5715 = vunpack.c.h.b16 %v5649
  %v5716 = vunpack.c.l.b16 %v5650
  %v5717 = vunpack.c.h.b16 %v5650
  %v5718 = vunpack.c.l.b16 %v5651
  %v5719 = vunpack.c.h.b16 %v5651
  %v5720 = vunpack.c.l.b16 %v5652
  %v5721 = vunpack.c.h.b16 %v5652
  %v5722 = vunpack.c.l.b16 %v5653
  %v5723 = vunpack.c.h.b16 %v5653
  %v5724 = vunpack.c.l.b16 %v5654
  %v5725 = vunpack.c.h.b16 %v5654
  %v5726 = vunpack.c.l.b16 %v5655
  %v5727 = vunpack.c.h.b16 %v5655
  %v5728 = vunpack.c.l.b16 %v5656
  %v5729 = vunpack.c.h.b16 %v5656
  %v5730 = vunpack.c.l.b16 %v5657
  %v5731 = vunpack.c.h.b16 %v5657
  %v5732 = vunpack.c.l.b16 %v5658
  %v5733 = vunpack.c.h.b16 %v5658
  %v5734 = vunpack.c.l.b16 %v5659
  %v5735 = vunpack.c.h.b16 %v5659
  %v5736 = vunpack.c.l.b16 %v5660
  %v5737 = vunpack.c.h.b16 %v5660
  %v5738 = vunpack.c.l.b16 %v5661
  %v5739 = vunpack.c.h.b16 %v5661
  %v5740 = vunpack.c.l.b16 %v5662
  %v5741 = vunpack.c.h.b16 %v5662
  %v5742 = vunpack.c.l.b16 %v5663
  %v5743 = vunpack.c.h.b16 %v5663
  %v5744 = vunpack.c.l.b16 %v5664
  %v5745 = vunpack.c.h.b16 %v5664
  %v5746 = vunpack.c.l.b16 %v5665
  %v5747 = vunpack.c.h.b16 %v5665
  %v5748 = vunpack.c.l.b16 %v5666
  %v5749 = vunpack.c.h.b16 %v5666
  %v5750 = vunpack.c.l.b16 %v5667
  %v5751 = vunpack.c.h.b16 %v5667
  %v5752 = vunpack.c.l.b16 %v5668
  %v5753 = vunpack.c.h.b16 %v5668
  %v5754 = vunpack.c.l.b16 %v5669
  %v5755 = vunpack.c.h.b16 %v5669
  %v5756 = vunpack.c.l.b16 %v5670
  %v5757 = vunpack.c.h.b16 %v5670
  %v5758 = vunpack.c.l.b16 %v5671
  %v5759 = vunpack.c.h.b16 %v5671
  %v5760 = vunpack.c.l.b16 %v5672
  %v5761 = vunpack.c.h.b16 %v5672
  %v5762 = vunpack.c.l.b16 %v5673
  %v5763 = vunpack.c.h.b16 %v5673
  %v5764 = vunpack.c.l.b16 %v5674
  %v5765 = vunpack.c.h.b16 %v5674
  %v5766 = vunpack.c.l.b16 %v5675
  %v5767 = vunpack.c.h.b16 %v5675
  %v5768 = vunpack.c.l.b16 %v5676
  %v5769 = vunpack.c.h.b16 %v5676
  %v5770 = vunpack.c.l.b16 %v5677
  %v5771 = vunpack.c.h.b16 %v5677
  %v5772 = vunpack.c.l.b16 %v5678
  %v5773 = vunpack.c.h.b16 %v5678
  %v5774 = vunpack.c.l.b16 %v5679
  %v5775 = vunpack.c.h.b16 %v5679
  %v5776 = vpack.c.b16 %v5716, %v5712
  %v5777 = vpack.c.b16 %v5717, %v5713
  %v5778 = vpack.c.b16 %v5718, %v5714
  %v5779 = vpack.c.b16 %v5719, %v5715
  %v5780 = vpack.c.b16 %v5724, %v5720
  %v5781 = vpack.c.b16 %v5725, %v5721
  %v5782 = vpack.c.b16 %v5726, %v5722
  %v5783 = vpack.c.b16 %v5727, %v5723
  %v5784 = vpack.c.b16 %v5732, %v5728
  %v5785 = vpack.c.b16 %v5733, %v5729
  %v5786 = vpack.c.b16 %v5734, %v5730
  %v5787 = vpack.c.b16 %v5735, %v5731
  %v5788 = vpack.c.b16 %v5740, %v5736
  %v5789 = vpack.c.b16 %v5741, %v5737
  %v5790 = vpack.c.b16 %v5742, %v5738
  %v5791 = vpack.c.b16 %v5743, %v5739
  %v5792 = vpack.c.b16 %v5748, %v5744
  %v5793 = vpack.c.b16 %v5749, %v5745
  %v5794 = vpack.c.b16 %v5750, %v5746
  %v5795 = vpack.c.b16 %v5751, %v5747
  %v5796 = vpack.c.b16 %v5756, %v5752
  %v5797 = vpack.c.b16 %v5757, %v5753
  %v5798 = vpack.c.b16 %v5758, %v5754
  %v5799 = vpack.c.b16 %v5759, %v5755
  %v5800 = vpack.c.b16 %v5764, %v5760
  %v5801 = vpack.c.b16 %v5765, %v5761
  %v5802 = vpack.c.b16 %v5766, %v5762
  %v5803 = vpack.c.b16 %v5767, %v5763
  %v5804 = vpack.c.b16 %v5772, %v5768
  %v5805 = vpack.c.b16 %v5773, %v5769
  %v5806 = vpack.c.b16 %v5774, %v5770
  %v5807 = vpack.c.b16 %v5775, %v5771
  %5840 = vmatprep.subr.bf16.mxu0 %v5777
  %5841 = vmatpush1.bf16.msra.mxu0 %v5776
  %5842 = vmatprep.subr.bf16.mxu0 %v5781
  %5843 = vmatpush1.bf16.msra.mxu0 %v5780
  %5844 = vmatprep.subr.bf16.mxu0 %v5785
  %5845 = vmatpush1.bf16.msra.mxu0 %v5784
  %5846 = vmatprep.subr.bf16.mxu0 %v5789
  %5847 = vmatpush1.bf16.msra.mxu0 %v5788
  %5848 = vmatprep.subr.bf16.mxu0 %v5793
  %5849 = vmatpush1.bf16.msra.mxu0 %v5792
  %5850 = vmatprep.subr.bf16.mxu0 %v5797
  %5851 = vmatpush1.bf16.msra.mxu0 %v5796
  %5852 = vmatprep.subr.bf16.mxu0 %v5801
  %5853 = vmatpush1.bf16.msra.mxu0 %v5800
  %5854 = vmatprep.subr.bf16.mxu0 %v5805
  %5855 = vmatpush1.bf16.msra.mxu0 %v5804
  %5856 = vmatprep.subr.bf16.mxu0 0
  %5857 = vmatpush1.bf16.msra.mxu0 0
  %5858 = vmatprep.subr.bf16.mxu0 0
  %5859 = vmatpush1.bf16.msra.mxu0 0
  %5860 = vmatprep.subr.bf16.mxu0 0
  %5861 = vmatpush1.bf16.msra.mxu0 0
  %5862 = vmatprep.subr.bf16.mxu0 0
  %5863 = vmatpush1.bf16.msra.mxu0 0
  %5864 = vmatprep.subr.bf16.mxu0 0
  %5865 = vmatpush1.bf16.msra.mxu0 0
  %5866 = vmatprep.subr.bf16.mxu0 0
  %5867 = vmatpush1.bf16.msra.mxu0 0
  %5868 = vmatprep.subr.bf16.mxu0 0
  %5869 = vmatpush1.bf16.msra.mxu0 0
  %5870 = vmatprep.subr.bf16.mxu0 0
  %5871 = vmatpush1.bf16.msra.mxu0 0
  %5872 = vmatprep.mubr.bf16.mxu0 0
  %5873 = vmatmul.mubr.bf16.gmra.mrb[0].mxu0 %v5337
  %v5874 = vpop.f32.mrb[0].mxu0
  %v5875 = vadd.f32 0.0, %v5874
  %v5876 = vpop.f32.mrb[0].mxu0
  %v5877 = vadd.f32 0.0, %v5876
  %v5878 = vpop.f32.mrb[0].mxu0
  %v5879 = vpop.f32.mrb[0].mxu0
  %5880 = vdwg.mxu0
  %5881 = vmatprep.subr.bf16.mxu0 %v5779
  %5882 = vmatpush1.bf16.msra.mxu0 %v5778
  %5883 = vmatprep.subr.bf16.mxu0 %v5783
  %5884 = vmatpush1.bf16.msra.mxu0 %v5782
  %5885 = vmatprep.subr.bf16.mxu0 %v5787
  %5886 = vmatpush1.bf16.msra.mxu0 %v5786
  %5887 = vmatprep.subr.bf16.mxu0 %v5791
  %5888 = vmatpush1.bf16.msra.mxu0 %v5790
  %5889 = vmatprep.subr.bf16.mxu0 %v5795
  %5890 = vmatpush1.bf16.msra.mxu0 %v5794
  %5891 = vmatprep.subr.bf16.mxu0 %v5799
  %5892 = vmatpush1.bf16.msra.mxu0 %v5798
  %5893 = vmatprep.subr.bf16.mxu0 %v5803
  %5894 = vmatpush1.bf16.msra.mxu0 %v5802
  %5895 = vmatprep.subr.bf16.mxu0 %v5807
  %5896 = vmatpush1.bf16.msra.mxu0 %v5806
  %5897 = vmatprep.subr.bf16.mxu0 0
  %5898 = vmatpush1.bf16.msra.mxu0 0
  %5899 = vmatprep.subr.bf16.mxu0 0
  %5900 = vmatpush1.bf16.msra.mxu0 0
  %5901 = vmatprep.subr.bf16.mxu0 0
  %5902 = vmatpush1.bf16.msra.mxu0 0
  %5903 = vmatprep.subr.bf16.mxu0 0
  %5904 = vmatpush1.bf16.msra.mxu0 0
  %5905 = vmatprep.subr.bf16.mxu0 0
  %5906 = vmatpush1.bf16.msra.mxu0 0
  %5907 = vmatprep.subr.bf16.mxu0 0
  %5908 = vmatpush1.bf16.msra.mxu0 0
  %5909 = vmatprep.subr.bf16.mxu0 0
  %5910 = vmatpush1.bf16.msra.mxu0 0
  %5911 = vmatprep.subr.bf16.mxu0 0
  %5912 = vmatpush1.bf16.msra.mxu0 0
  %5913 = vmatprep.mubr.bf16.mxu0 0
  %5914 = vmatmul.mubr.bf16.gmra.mrb[0].mxu0 %v5337
  %v5915 = vpop.f32.mrb[0].mxu0
  %v5916 = vadd.f32 0.0, %v5915
  %v5917 = vpop.f32.mrb[0].mxu0
  %v5918 = vadd.f32 0.0, %v5917
  %v5919 = vpop.f32.mrb[0].mxu0
  %v5920 = vpop.f32.mrb[0].mxu0
  %5921 = vdwg.mxu0
  %v5922 = vadd.f32 %v5644, %v5875
  %v5923 = vadd.f32 %v5645, %v5877
  %v5924 = vadd.f32 %v5646, %v5916
  %v5925 = vadd.f32 %v5647, %v5918
  %v5926 = vxor.u32 %v5636, 2147483648
  %v5927 = vmul.f32 %v5926, 1.442695
  %v5928 = vpow.pop %v5927
  %v5929 = vadd.f32 %v5928, 1.0
  %v5930 = vrcp.pop %v5929
  %v5931 = vmul.f32 1.0, %v5930
  %v5932 = vxor.u32 %v5637, 2147483648
  %v5933 = vmul.f32 %v5932, 1.442695
  %v5934 = vpow.pop %v5933
  %v5935 = vadd.f32 %v5934, 1.0
  %v5936 = vrcp.pop %v5935
  %v5937 = vmul.f32 1.0, %v5936
  %v5938 = vtanh.pop %v5638
  %v5939 = vxor.u32 %v5639, 2147483648
  %v5940 = vmul.f32 %v5939, 1.442695
  %v5941 = vpow.pop %v5940
  %v5942 = vadd.f32 %v5941, 1.0
  %v5943 = vrcp.pop %v5942
  %v5944 = vmul.f32 1.0, %v5943
  %v5945 = vmul.f32 %v5937, %v5305
  %v5946 = vmul.f32 %v5931, %v5938
  %v5947 = vadd.f32 %v5945, %v5946
  %v5948 = vtanh.pop %v5947
  %v5949 = vmul.f32 %v5944, %v5948
  %v5950 = vxor.u32 %v5922, 2147483648
  %v5951 = vmul.f32 %v5950, 1.442695
  %v5952 = vpow.pop %v5951
  %v5953 = vadd.f32 %v5952, 1.0
  %v5954 = vrcp.pop %v5953
  %v5955 = vmul.f32 1.0, %v5954
  %v5956 = vxor.u32 %v5923, 2147483648
  %v5957 = vmul.f32 %v5956, 1.442695
  %v5958 = vpow.pop %v5957
  %v5959 = vadd.f32 %v5958, 1.0
  %v5960 = vrcp.pop %v5959
  %v5961 = vmul.f32 1.0, %v5960
  %v5962 = vtanh.pop %v5924
  %v5963 = vxor.u32 %v5925, 2147483648
  %v5964 = vmul.f32 %v5963, 1.442695
  %v5965 = vpow.pop %v5964
  %v5966 = vadd.f32 %v5965, 1.0
  %v5967 = vrcp.pop %v5966
  %v5968 = vmul.f32 1.0, %v5967
  %v5969 = vmul.f32 %v5961, %v5334
  %v5970 = vmul.f32 %v5955, %v5962
  %v5971 = vadd.f32 %v5969, %v5970
  %v5972 = vtanh.pop %v5971
  %v5973 = vmul.f32 %v5968, %v5972
  %vm5974 = vcmp.gt.s32.totalorder %v847, 0
  %v5975 = vsel %vm5974, %v5973, 0.0
  %v5976 = vpack.c.bf16 %v5949, %v5949
  %v5978 = vrot.slane %v5976, 4
  %5980 = vst [vmem:[#allocation3 + $0x18] sm:$0xf0] %v5978
  %v5981 = vpack.c.bf16 %v5975, %v5975
  %5982 = vst [vmem:[#allocation4] sm:$0xf] %v5981
  %v5983 = vld [vmem:[#allocation3] sm:$0xff]
  %v5984 = vld [vmem:[#allocation3 + $0x8] sm:$0xff]
  %v5985 = vld [vmem:[#allocation3 + $0x10] sm:$0xff]
  %v5986 = vld [vmem:[#allocation3 + $0x18] sm:$0xff]
  %v5987 = vld [vmem:[%s6] sm:$0xf]
  %v5988 = vld [vmem:[%s6 + $0x4] sm:$0xf]
  %v5989 = vld [vmem:[%s6 + $0x8] sm:$0xf]
  %v5990 = vld [vmem:[%s6 + $0xc] sm:$0xf]
  %v5991 = vld [vmem:[%s6 + $0x10] sm:$0xf]
  %v5992 = vld [vmem:[%s6 + $0x14] sm:$0xf]
  %v5993 = vld [vmem:[%s6 + $0x18] sm:$0xf]
  %v5994 = vld [vmem:[%s6 + $0x1c] sm:$0xf]
  %v5995 = vld [vmem:[%s6 + $0x20] sm:$0xf]
  %v5996 = vld [vmem:[%s6 + $0x24] sm:$0xf]
  %v5997 = vld [vmem:[%s6 + $0x28] sm:$0xf]
  %v5998 = vld [vmem:[%s6 + $0x2c] sm:$0xf]
  %v5999 = vld [vmem:[%s6 + $0x30] sm:$0xf]
  %v6000 = vld [vmem:[%s6 + $0x34] sm:$0xf]
  %v6001 = vld [vmem:[%s6 + $0x38] sm:$0xf]
  %v6002 = vld [vmem:[%s6 + $0x3c] sm:$0xf]
  %v6003 = vld [vmem:[#allocation4] sm:$0xff]
  %v6004 = vld [vmem:[#allocation4 + $0x8] sm:$0xff]
  %v6005 = vld [vmem:[#allocation4 + $0x10] sm:$0xff]
  %v6006 = vld [vmem:[#allocation4 + $0x18] sm:$0xff]
  %v6007 = vld [vmem:[%s7] sm:$0xf]
  %v6008 = vld [vmem:[%s7 + $0x4] sm:$0xf]
  %v6009 = vld [vmem:[%s7 + $0x8] sm:$0xf]
  %v6010 = vld [vmem:[%s7 + $0xc] sm:$0xf]
  %v6011 = vld [vmem:[%s7 + $0x10] sm:$0xf]
  %v6012 = vld [vmem:[%s7 + $0x14] sm:$0xf]
  %v6013 = vld [vmem:[%s7 + $0x18] sm:$0xf]
  %v6014 = vld [vmem:[%s7 + $0x1c] sm:$0xf]
  %v6015 = vld [vmem:[%s7 + $0x20] sm:$0xf]
  %v6016 = vld [vmem:[%s7 + $0x24] sm:$0xf]
  %v6017 = vld [vmem:[%s7 + $0x28] sm:$0xf]
  %v6018 = vld [vmem:[%s7 + $0x2c] sm:$0xf]
  %v6019 = vld [vmem:[%s7 + $0x30] sm:$0xf]
  %v6020 = vld [vmem:[%s7 + $0x34] sm:$0xf]
  %v6021 = vld [vmem:[%s7 + $0x38] sm:$0xf]
  %v6022 = vld [vmem:[%s7 + $0x3c] sm:$0xf]
  %v6039 = vunpack.c.l.b16 %v6007
  %v6040 = vunpack.c.l.b16 %v6008
  %v6041 = vunpack.c.l.b16 %v6009
  %v6042 = vunpack.c.l.b16 %v6010
  %v6043 = vunpack.c.l.b16 %v6011
  %v6044 = vunpack.c.l.b16 %v6012
  %v6045 = vunpack.c.l.b16 %v6013
  %v6046 = vunpack.c.l.b16 %v6014
  %v6047 = vunpack.c.l.b16 %v6015
  %v6048 = vunpack.c.l.b16 %v6016
  %v6049 = vunpack.c.l.b16 %v6017
  %v6050 = vunpack.c.l.b16 %v6018
  %v6051 = vunpack.c.l.b16 %v6019
  %v6052 = vunpack.c.l.b16 %v6020
  %v6053 = vunpack.c.l.b16 %v6021
  %v6054 = vunpack.c.l.b16 %v6022
  %v6055 = vpack.c.b16 %v6040, %v6039
  %v6056 = vpack.c.b16 %v6042, %v6041
  %v6057 = vpack.c.b16 %v6044, %v6043
  %v6058 = vpack.c.b16 %v6046, %v6045
  %v6059 = vpack.c.b16 %v6048, %v6047
  %v6060 = vpack.c.b16 %v6050, %v6049
  %v6061 = vpack.c.b16 %v6052, %v6051
  %v6062 = vpack.c.b16 %v6054, %v6053
  %6071 = vmatprep.subr.bf16.mxu0 0
  %6072 = vmatpush1.bf16.msra.mxu0 %v6055
  %6073 = vmatprep.subr.bf16.mxu0 0
  %6074 = vmatpush1.bf16.msra.mxu0 %v6056
  %6075 = vmatprep.subr.bf16.mxu0 0
  %6076 = vmatpush1.bf16.msra.mxu0 %v6057
  %6077 = vmatprep.subr.bf16.mxu0 0
  %6078 = vmatpush1.bf16.msra.mxu0 %v6058
  %6079 = vmatprep.subr.bf16.mxu0 0
  %6080 = vmatpush1.bf16.msra.mxu0 %v6059
  %6081 = vmatprep.subr.bf16.mxu0 0
  %6082 = vmatpush1.bf16.msra.mxu0 %v6060
  %6083 = vmatprep.subr.bf16.mxu0 0
  %6084 = vmatpush1.bf16.msra.mxu0 %v6061
  %6085 = vmatprep.subr.bf16.mxu0 0
  %6086 = vmatpush1.bf16.msra.mxu0 %v6062
  %6087 = vmatprep.subr.bf16.mxu0 0
  %6088 = vmatpush1.bf16.msra.mxu0 0
  %6089 = vmatprep.subr.bf16.mxu0 0
  %6090 = vmatpush1.bf16.msra.mxu0 0
  %6091 = vmatprep.subr.bf16.mxu0 0
  %6092 = vmatpush1.bf16.msra.mxu0 0
  %6093 = vmatprep.subr.bf16.mxu0 0
  %6094 = vmatpush1.bf16.msra.mxu0 0
  %6095 = vmatprep.subr.bf16.mxu0 0
  %6096 = vmatpush1.bf16.msra.mxu0 0
  %6097 = vmatprep.subr.bf16.mxu0 0
  %6098 = vmatpush1.bf16.msra.mxu0 0
  %6099 = vmatprep.subr.bf16.mxu0 0
  %6100 = vmatpush1.bf16.msra.mxu0 0
  %6101 = vmatprep.subr.bf16.mxu0 0
  %6102 = vmatpush1.bf16.msra.mxu0 0
  %6103 = vmatprep.mubr.bf16.mxu0 0
  %6104 = vmatmul.mubr.bf16.gmra.mrb[0].mxu0 %v6003
  %v6105 = vpop.f32.mrb[0].mxu0
  %v6106 = vadd.f32 0.0, %v6105
  %v6107 = vpop.f32.mrb[0].mxu0
  %v6108 = vpop.f32.mrb[0].mxu0
  %v6109 = vadd.f32 0.0, %v6108
  %v6110 = vpop.f32.mrb[0].mxu0
  %6111 = vmatprep.mubr.bf16.mxu0 0
  %6112 = vmatmul.mubr.bf16.gmra.mrb[0].mxu0 %v6004
  %v6113 = vpop.f32.mrb[0].mxu0
  %v6114 = vadd.f32 0.0, %v6113
  %v6115 = vpop.f32.mrb[0].mxu0
  %v6116 = vpop.f32.mrb[0].mxu0
  %v6117 = vadd.f32 0.0, %v6116
  %v6118 = vpop.f32.mrb[0].mxu0
  %6119 = vmatprep.mubr.bf16.mxu0 0
  %6120 = vmatmul.mubr.bf16.gmra.mrb[0].mxu0 %v6005
  %v6121 = vpop.f32.mrb[0].mxu0
  %v6122 = vadd.f32 0.0, %v6121
  %v6123 = vpop.f32.mrb[0].mxu0
  %v6124 = vpop.f32.mrb[0].mxu0
  %v6125 = vadd.f32 0.0, %v6124
  %v6126 = vpop.f32.mrb[0].mxu0
  %6127 = vmatprep.mubr.bf16.mxu0 0
  %6128 = vmatmul.mubr.bf16.gmra.mrb[0].mxu0 %v6006
  %v6129 = vpop.f32.mrb[0].mxu0
  %v6130 = vadd.f32 0.0, %v6129
  %v6131 = vpop.f32.mrb[0].mxu0
  %v6132 = vpop.f32.mrb[0].mxu0
  %v6133 = vadd.f32 0.0, %v6132
  %v6134 = vpop.f32.mrb[0].mxu0
  %6135 = vdwg.mxu0
  %v6152 = vunpack.c.l.b16 %v5987
  %v6153 = vunpack.c.l.b16 %v5988
  %v6154 = vunpack.c.l.b16 %v5989
  %v6155 = vunpack.c.l.b16 %v5990
  %v6156 = vunpack.c.l.b16 %v5991
  %v6157 = vunpack.c.l.b16 %v5992
  %v6158 = vunpack.c.l.b16 %v5993
  %v6159 = vunpack.c.l.b16 %v5994
  %v6160 = vunpack.c.l.b16 %v5995
  %v6161 = vunpack.c.l.b16 %v5996
  %v6162 = vunpack.c.l.b16 %v5997
  %v6163 = vunpack.c.l.b16 %v5998
  %v6164 = vunpack.c.l.b16 %v5999
  %v6165 = vunpack.c.l.b16 %v6000
  %v6166 = vunpack.c.l.b16 %v6001
  %v6167 = vunpack.c.l.b16 %v6002
  %v6168 = vpack.c.b16 %v6153, %v6152
  %v6169 = vpack.c.b16 %v6155, %v6154
  %v6170 = vpack.c.b16 %v6157, %v6156
  %v6171 = vpack.c.b16 %v6159, %v6158
  %v6172 = vpack.c.b16 %v6161, %v6160
  %v6173 = vpack.c.b16 %v6163, %v6162
  %v6174 = vpack.c.b16 %v6165, %v6164
  %v6175 = vpack.c.b16 %v6167, %v6166
  %6184 = vmatprep.subr.bf16.mxu0 0
  %6185 = vmatpush1.bf16.msra.mxu0 %v6168
  %6186 = vmatprep.subr.bf16.mxu0 0
  %6187 = vmatpush1.bf16.msra.mxu0 %v6169
  %6188 = vmatprep.subr.bf16.mxu0 0
  %6189 = vmatpush1.bf16.msra.mxu0 %v6170
  %6190 = vmatprep.subr.bf16.mxu0 0
  %6191 = vmatpush1.bf16.msra.mxu0 %v6171
  %6192 = vmatprep.subr.bf16.mxu0 0
  %6193 = vmatpush1.bf16.msra.mxu0 %v6172
  %6194 = vmatprep.subr.bf16.mxu0 0
  %6195 = vmatpush1.bf16.msra.mxu0 %v6173
  %6196 = vmatprep.subr.bf16.mxu0 0
  %6197 = vmatpush1.bf16.msra.mxu0 %v6174
  %6198 = vmatprep.subr.bf16.mxu0 0
  %6199 = vmatpush1.bf16.msra.mxu0 %v6175
  %6200 = vmatprep.subr.bf16.mxu0 0
  %6201 = vmatpush1.bf16.msra.mxu0 0
  %6202 = vmatprep.subr.bf16.mxu0 0
  %6203 = vmatpush1.bf16.msra.mxu0 0
  %6204 = vmatprep.subr.bf16.mxu0 0
  %6205 = vmatpush1.bf16.msra.mxu0 0
  %6206 = vmatprep.subr.bf16.mxu0 0
  %6207 = vmatpush1.bf16.msra.mxu0 0
  %6208 = vmatprep.subr.bf16.mxu0 0
  %6209 = vmatpush1.bf16.msra.mxu0 0
  %6210 = vmatprep.subr.bf16.mxu0 0
  %6211 = vmatpush1.bf16.msra.mxu0 0
  %6212 = vmatprep.subr.bf16.mxu0 0
  %6213 = vmatpush1.bf16.msra.mxu0 0
  %6214 = vmatprep.subr.bf16.mxu0 0
  %6215 = vmatpush1.bf16.msra.mxu0 0
  %6216 = vmatprep.mubr.bf16.mxu0 0
  %6217 = vmatmul.mubr.bf16.gmra.mrb[0].mxu0 %v5983
  %v6218 = vpop.f32.mrb[0].mxu0
  %v6219 = vadd.f32 %v6106, %v6218
  %v6220 = vpop.f32.mrb[0].mxu0
  %v6221 = vpop.f32.mrb[0].mxu0
  %v6222 = vadd.f32 %v6109, %v6221
  %v6223 = vpop.f32.mrb[0].mxu0
  %6224 = vmatprep.mubr.bf16.mxu0 0
  %6225 = vmatmul.mubr.bf16.gmra.mrb[0].mxu0 %v5984
  %v6226 = vpop.f32.mrb[0].mxu0
  %v6227 = vadd.f32 %v6114, %v6226
  %v6228 = vpop.f32.mrb[0].mxu0
  %v6229 = vpop.f32.mrb[0].mxu0
  %v6230 = vadd.f32 %v6117, %v6229
  %v6231 = vpop.f32.mrb[0].mxu0
  %6232 = vmatprep.mubr.bf16.mxu0 0
  %6233 = vmatmul.mubr.bf16.gmra.mrb[0].mxu0 %v5985
  %v6234 = vpop.f32.mrb[0].mxu0
  %v6235 = vadd.f32 %v6122, %v6234
  %v6236 = vpop.f32.mrb[0].mxu0
  %v6237 = vpop.f32.mrb[0].mxu0
  %v6238 = vadd.f32 %v6125, %v6237
  %v6239 = vpop.f32.mrb[0].mxu0
  %6240 = vmatprep.mubr.bf16.mxu0 0
  %6241 = vmatmul.mubr.bf16.gmra.mrb[0].mxu0 %v5986
  %v6242 = vpop.f32.mrb[0].mxu0
  %v6243 = vadd.f32 %v6130, %v6242
  %v6244 = vpop.f32.mrb[0].mxu0
  %v6245 = vpop.f32.mrb[0].mxu0
  %v6246 = vadd.f32 %v6133, %v6245
  %v6247 = vpop.f32.mrb[0].mxu0
  %6248 = vdwg.mxu0
  %v6249 = vld [vmem:[%s8] sm:$0x1]
  %v6251 = vlaneseq
  %v6252 = vshrl.u32 %v6251, 7
  %v6253 = vsub.s32 0, %v6252
  %v6254 = vrot.slane %v6249, %v6253
  %v6256 = vadd.f32 %v6219, %v6254
  %v6257 = vadd.f32 %v6222, %v6254
  %v6258 = vadd.f32 %v6227, %v6254
  %v6259 = vadd.f32 %v6230, %v6254
  %v6260 = vadd.f32 %v6235, %v6254
  %v6261 = vadd.f32 %v6238, %v6254
  %v6262 = vadd.f32 %v6243, %v6254
  %v6263 = vadd.f32 %v6246, %v6254
  %6264 = vst [vmem:[%s9] sm:$0xff] %v6256
  %6265 = vst [vmem:[%s9 + $0x8] sm:$0xff] %v6257
  %6266 = vst [vmem:[%s9 + $0x10] sm:$0xff] %v6258
  %6267 = vst [vmem:[%s9 + $0x18] sm:$0xff] %v6259
  %6268 = vst [vmem:[%s9 + $0x20] sm:$0xff] %v6260
  %6269 = vst [vmem:[%s9 + $0x28] sm:$0xff] %v6261
  %6270 = vst [vmem:[%s9 + $0x30] sm:$0xff] %v6262
  %6271 = vst [vmem:[%s9 + $0x38] sm:$0xff] %v6263
  // Predicated region
  $region38: #{bilstm_forward.1} parent=0 // pred_check
    _
  $region39: #{bilstm_forward.1} parent=0 // pred_check_branch
    %6273 = sbr.rel (0) target = $region41
  $region40: #{bilstm_forward.1} parent=0 // pred_region
    _
  $region41: #{bilstm_forward.1} parent=0 // pred_fallthru
    _
  // Predicated region
  $region42: #{bilstm_forward.1} parent=0 // pred_check
    _
  $region43: #{bilstm_forward.1} parent=0 // pred_check_branch
    %6275 = sbr.rel (0) target = $region45
  $region44: #{bilstm_forward.1} parent=0 // pred_region
    _
  $region45: #{bilstm_forward.1} parent=0 // pred_fallthru
    _

</llo_original>
